<compile_context>
chip_gen: v7x
topology: tpu7x:2x2x1
jax: 0.10.0
libtpu: 0.0.40
codegen_flags: <defaults>
</compile_context>

<pallas_src>
import jax
import jax.numpy as jnp
from jax.experimental import pallas as pl
from jax.experimental.pallas import tpu as pltpu

H = 64                 # GRU hidden size (fixed by the module)
NCMD = 6               # number of command branches / GRUs
G = NCMD * H           # 384: fused hidden width (all 6 branches side by side)


def _gru_wp_kernel(x_ref, tp_ref, maskt_ref, bias_ref, lk_ref,
                   wih_ref, whh_ref, bih_ref, bhh_ref,
                   wenc_ref, benc_ref, wdec_ref,
                   out_ref, gx_ref, hs_ref):
    """Single program; all 6 command branches fused on the lane axis.

    Shapes (BS = padded batch, TB = T*BS):
      x_ref     (TB, D)   f32   time-major flattened input
      tp_ref    (BS, 2)   f32
      maskt_ref (BS, G)   f32   command mask tiled across each branch's 64 lanes
      bias_ref  (TB, 2)   f32   mask @ bdec, tiled over time
      lk_ref    (TB, TB)  f32   kron(tril(ones(T,T)), I_BS)  (cumsum-as-matmul)
      wih_ref   (D, 3G)   bf16  gate-major / branch-within-gate
      whh_ref   (G, 3G)   bf16  block-diagonal over branches
      bih/bhh   (1, 3G)   f32
      wenc_ref  (2, G)    f32   encoder weight replicated per branch
      benc_ref  (1, G)    f32
      wdec_ref  (G, 2)    bf16  per-branch decoders stacked vertically
      out_ref   (TB, 2)   f32
      gx_ref    (TB, 3G)  f32   scratch: hoisted input projection
      hs_ref    (TB, G)   f32   scratch: masked hidden states
    """
    BS = tp_ref.shape[0]
    TB = out_ref.shape[0]
    T = TB // BS

    tp = tp_ref[...]
    maskt = maskt_ref[...]
    whh = whh_ref[...]
    bhh = bhh_ref[...]
    wenc = wenc_ref[...]
    benc = benc_ref[...]

    # h0 = encoder(target_point): K=2, so two VPU broadcast-FMAs (no MXU pass).
    h = tp[:, 0:1] * wenc[0:1, :] + tp[:, 1:2] * wenc[1:2, :] + benc      # (BS, G)

    # Hoisted input projection: one bf16 MXU matmul for all branches and
    # timesteps, staged in VMEM scratch so per-step loads are small aligned
    # slices instead of one huge live value.
    gx_ref[...] = jnp.dot(x_ref[...].astype(jnp.bfloat16), wih_ref[...],
                          preferred_element_type=jnp.float32) + bih_ref[...]

    # Fused GRU recurrence (small static T -> fully unrolled).  Only the
    # h-dependent bf16 matmul sits on the serial critical path.
    for t in range(T):
        row = t * BS
        gx = gx_ref[row:row + BS, :]                                      # (BS, 3G)
        gh = jnp.dot(h.astype(jnp.bfloat16), whh,
                     preferred_element_type=jnp.float32) + bhh            # (BS, 3G)
        r = jax.nn.sigmoid(gx[:, :G] + gh[:, :G])
        z = jax.nn.sigmoid(gx[:, G:2 * G] + gh[:, G:2 * G])
        n = jnp.tanh(gx[:, 2 * G:] + r * gh[:, 2 * G:])
        h = (1.0 - z) * n + z * h                                         # (BS, G)
        hs_ref[row:row + BS, :] = h * maskt       # mask folded in before decode

    # Decoder: one bf16 matmul over the mask-combined hidden states of all
    # timesteps, plus the mask-combined decoder bias.
    dec = jnp.dot(hs_ref[...].astype(jnp.bfloat16), wdec_ref[...],
                  preferred_element_type=jnp.float32) + bias_ref[...]     # (TB, 2)

    # Cumulative sum over waypoints as a single tiny MXU matmul; single store.
    out_ref[...] = jnp.dot(lk_ref[...], dec, preferred_element_type=jnp.float32)


def pack_params(params, waypoints, bs_pad):
    """One-time (cacheable) repacking of per-branch weights into fused layouts.

    Call once and reuse the result across forward calls: the zero-inflated
    block-diagonal whh, the bf16 casts and the cumsum operator are NOT rebuilt
    or re-uploaded per call.
    """
    wih, whh = params["wih"], params["whh"]          # (6,D,3H), (6,H,3H)
    bih, bhh = params["bih"], params["bhh"]          # (6,3H), (6,3H)
    wenc, benc = params["wenc"], params["benc"]      # (2,H), (1,H)
    wdec, bdec = params["wdec"], params["bdec"]      # (6,H,2), (6,2)
    D = wih.shape[1]
    eye = jnp.eye(NCMD, dtype=jnp.float32)

    # Gate-major / branch-within-gate column order: col = g*G + i*H + j.
    wih_cat = wih.reshape(NCMD, D, 3, H).transpose(1, 2, 0, 3).reshape(D, 3 * G)
    bih_cat = bih.reshape(NCMD, 3, H).transpose(1, 0, 2).reshape(1, 3 * G)
    bhh_cat = bhh.reshape(NCMD, 3, H).transpose(1, 0, 2).reshape(1, 3 * G)

    # Block-diagonal hidden-to-hidden: rows i*H+k, cols g*G + i*H + j.
    whh_bd = jnp.einsum("nkgj,nm->nkgmj",
                        whh.reshape(NCMD, H, 3, H), eye).reshape(G, 3 * G)

    # Per-branch decoders stacked vertically; the mask is folded into h.
    wdec_stack = wdec.reshape(G, 2)

    # Encoder replicated across branches -> h0 comes out already branch-fused.
    wenc_cat = jnp.tile(wenc, (1, NCMD))             # (2, G)
    benc_cat = jnp.tile(benc, (1, NCMD))             # (1, G)

    # Cumsum-as-matmul operator for rows ordered t*bs_pad + b.
    T = waypoints
    l_kron = jnp.kron(jnp.tril(jnp.ones((T, T), jnp.float32)),
                      jnp.eye(bs_pad, dtype=jnp.float32))                # (TB, TB)

    return dict(
        wih=wih_cat.astype(jnp.bfloat16),
        whh=whh_bd.astype(jnp.bfloat16),
        bih=bih_cat, bhh=bhh_cat,
        wenc=wenc_cat, benc=benc_cat,
        wdec=wdec_stack.astype(jnp.bfloat16),
        bdec=bdec.astype(jnp.float32),
        l_kron=l_kron,
    )


def gru_waypoints_predictor(x, target_point, measurements, packed):
    """Pallas implementation of GRUWaypointsPredictorWithCommand.forward.

    `packed` must come from pack_params() (built once, reused across calls).
    """
    bs, T, D = x.shape
    bs_pad = packed["l_kron"].shape[0] // T
    assert bs <= bs_pad and bs_pad % 8 == 0, "batch must fit the packed padding"
    pad = bs_pad - bs

    # Pad batch to the f32 sublane granularity so all per-step slices are
    # (8,128)-tile aligned; padded rows are masked to zero and sliced off.
    x_p = jnp.pad(x, ((0, pad), (0, 0), (0, 0)))
    tp_p = jnp.pad(target_point, ((0, pad), (0, 0)))
    mask = jnp.pad(measurements[:, :NCMD].astype(jnp.float32), ((0, pad), (0, 0)))

    x_tm = jnp.transpose(x_p, (1, 0, 2)).reshape(T * bs_pad, D)   # time-major
    mask_tiled = jnp.repeat(mask, H, axis=1)                      # (bs_pad, G)
    dec_bias = jnp.tile(mask @ packed["bdec"], (T, 1))            # (T*bs_pad, 2)

    args = (x_tm, tp_p, mask_tiled, dec_bias, packed["l_kron"],
            packed["wih"], packed["whh"], packed["bih"], packed["bhh"],
            packed["wenc"], packed["benc"], packed["wdec"])

    TB = T * bs_pad
    flops = (2 * TB * D * 3 * G        # input projection
             + 2 * TB * G * 3 * G      # recurrence (block-diagonal)
             + 2 * TB * G * 2          # decoder
             + 2 * TB * TB * 2)        # cumsum matmul
    bytes_accessed = sum(a.size * a.dtype.itemsize for a in args) + TB * 2 * 4

    out_flat = pl.pallas_call(
        _gru_wp_kernel,
        out_shape=jax.ShapeDtypeStruct((TB, 2), jnp.float32),
        in_specs=[pl.BlockSpec(memory_space=pltpu.MemorySpace.VMEM)] * len(args),
        out_specs=pl.BlockSpec(memory_space=pltpu.MemorySpace.VMEM),
        scratch_shapes=[pltpu.VMEM((TB, 3 * G), jnp.float32),   # gx staging
                        pltpu.VMEM((TB, G), jnp.float32)],      # masked hiddens
        cost_estimate=pl.CostEstimate(flops=flops,
                                      transcendentals=3 * TB * G,
                                      bytes_accessed=bytes_accessed),
    )(*args)

    out = out_flat.reshape(T, bs_pad, 2)[:, :bs, :]
    return jnp.transpose(out, (1, 0, 2))                          # (bs, T, 2)


def init_params(key, input_dim):
    """Deterministic synthetic parameters (PyTorch-like uniform init)."""
    ks = jax.random.split(key, 8)
    bound_g = 1.0 / jnp.sqrt(H)      # GRU init bound
    bound_e = 1.0 / jnp.sqrt(2.0)    # Linear(2, 64)
    bound_d = 1.0 / jnp.sqrt(H)      # Linear(64, 2)
    u = lambda k, shape, b: jax.random.uniform(k, shape, jnp.float32, -b, b)
    return dict(
        wih=u(ks[0], (NCMD, input_dim, 3 * H), bound_g),
        whh=u(ks[1], (NCMD, H, 3 * H), bound_g),
        bih=u(ks[2], (NCMD, 3 * H), bound_g),
        bhh=u(ks[3], (NCMD, 3 * H), bound_g),
        wenc=u(ks[4], (2, H), bound_e),
        benc=u(ks[5], (1, H), bound_e),
        wdec=u(ks[6], (NCMD, H, 2), bound_d),
        bdec=u(ks[7], (NCMD, 2), bound_d),
    )


def reference_forward(x, target_point, measurements, params):
    """Pure-JAX f32 mirror of the PyTorch forward (for validation)."""
    bs, T, _ = x.shape
    z0 = target_point @ params["wenc"] + params["benc"][0]           # (bs, H)
    outs = []
    for i in range(NCMD):
        h = z0
        hs = []
        for t in range(T):
            gx = x[:, t, :] @ params["wih"][i] + params["bih"][i]
            gh = h @ params["whh"][i] + params["bhh"][i]
            r = jax.nn.sigmoid(gx[:, :H] + gh[:, :H])
            zt = jax.nn.sigmoid(gx[:, H:2 * H] + gh[:, H:2 * H])
            n = jnp.tanh(gx[:, 2 * H:] + r * gh[:, 2 * H:])
            h = (1.0 - zt) * n + zt * h
            hs.append(h)
        seq = jnp.stack(hs, axis=1)                                   # (bs, T, H)
        dec = seq @ params["wdec"][i] + params["bdec"][i]             # (bs, T, 2)
        outs.append(jnp.cumsum(dec, axis=1))
    outs = jnp.stack(outs, axis=1)                                    # (bs, 6, T, 2)
    mask = measurements[:, :NCMD, None, None]
    return jnp.sum(outs * mask, axis=1)                               # (bs, T, 2)


if __name__ == "__main__":
    key = jax.random.PRNGKey(0)
    k_x, k_tp, k_ms, k_p = jax.random.split(key, 4)

    bs, waypoints, input_dim = 2, 10, 64
    x = jax.random.normal(k_x, (bs, waypoints, input_dim), jnp.float32)
    target_point = jax.random.normal(k_tp, (bs, 2), jnp.float32)
    measurements = jax.random.uniform(k_ms, (bs, NCMD), jnp.float32)

    params = init_params(k_p, input_dim)

    # Pack once (cached / reused across calls) -- not part of the per-call path.
    bs_pad = max(8, ((bs + 7) // 8) * 8)
    packed = pack_params(params, waypoints, bs_pad)
    packed = jax.tree_util.tree_map(jax.block_until_ready, packed)

    fwd = jax.jit(gru_waypoints_predictor)
    out = fwd(x, target_point, measurements, packed)
    out = jax.block_until_ready(out)

    ref = reference_forward(x, target_point, measurements, params)
    assert out.shape == (bs, waypoints, 2)
    err = jnp.max(jnp.abs(out - ref))
    # bf16 MXU path compounds over the 10-step recurrence + cumsum -> loosened
    # tolerance vs. the pure-f32 reference (structural bugs would be O(1)).
    assert jnp.allclose(out, ref, rtol=5e-2, atol=1e-1), (
        f"mismatch: max abs err = {err}")

    print("KERNEL_OK")
</pallas_src>

<mosaic_0001>
module attributes {stable_mosaic.version = 11 : i64} {
  func.func @_gru_wp_kernel(%arg0: memref<80x64xf32, #tpu.memory_space<vmem>>, %arg1: memref<8x2xf32, #tpu.memory_space<vmem>>, %arg2: memref<8x384xf32, #tpu.memory_space<vmem>>, %arg3: memref<80x2xf32, #tpu.memory_space<vmem>>, %arg4: memref<80x80xf32, #tpu.memory_space<vmem>>, %arg5: memref<64x1152xbf16, #tpu.memory_space<vmem>>, %arg6: memref<384x1152xbf16, #tpu.memory_space<vmem>>, %arg7: memref<1x1152xf32, #tpu.memory_space<vmem>>, %arg8: memref<1x1152xf32, #tpu.memory_space<vmem>>, %arg9: memref<2x384xf32, #tpu.memory_space<vmem>>, %arg10: memref<1x384xf32, #tpu.memory_space<vmem>>, %arg11: memref<384x2xbf16, #tpu.memory_space<vmem>>, %arg12: memref<80x2xf32, #tpu.memory_space<vmem>>, %arg13: memref<80x1152xf32, #tpu.memory_space<vmem>>, %arg14: memref<80x384xf32, #tpu.memory_space<vmem>>) attributes {dimension_semantics = [], scalar_prefetch = 0 : i64, scratch_operands = 2 : i64, tpu.core_type = #tpu.core_type<tc>} {
    %c0 = arith.constant 0 : index
    %c0_0 = arith.constant 0 : index
    %0 = vector.load %arg1[%c0, %c0_0] : memref<8x2xf32, #tpu.memory_space<vmem>>, vector<8x2xf32>
    %c0_1 = arith.constant 0 : index
    %c0_2 = arith.constant 0 : index
    %1 = vector.load %arg2[%c0_1, %c0_2] : memref<8x384xf32, #tpu.memory_space<vmem>>, vector<8x384xf32>
    %c0_3 = arith.constant 0 : index
    %c0_4 = arith.constant 0 : index
    %2 = vector.load %arg6[%c0_3, %c0_4] : memref<384x1152xbf16, #tpu.memory_space<vmem>>, vector<384x1152xbf16>
    %c0_5 = arith.constant 0 : index
    %c0_6 = arith.constant 0 : index
    %3 = vector.load %arg8[%c0_5, %c0_6] : memref<1x1152xf32, #tpu.memory_space<vmem>>, vector<1x1152xf32>
    %c0_7 = arith.constant 0 : index
    %c0_8 = arith.constant 0 : index
    %4 = vector.load %arg9[%c0_7, %c0_8] : memref<2x384xf32, #tpu.memory_space<vmem>>, vector<2x384xf32>
    %c0_9 = arith.constant 0 : index
    %c0_10 = arith.constant 0 : index
    %5 = vector.load %arg10[%c0_9, %c0_10] : memref<1x384xf32, #tpu.memory_space<vmem>>, vector<1x384xf32>
    %6 = vector.extract_strided_slice %0 {offsets = [0, 0], sizes = [8, 1], strides = [1, 1]} : vector<8x2xf32> to vector<8x1xf32>
    %7 = vector.extract_strided_slice %4 {offsets = [0, 0], sizes = [1, 384], strides = [1, 1]} : vector<2x384xf32> to vector<1x384xf32>
    %8 = vector.broadcast %6 : vector<8x1xf32> to vector<8x384xf32>
    %9 = vector.broadcast %7 : vector<1x384xf32> to vector<8x384xf32>
    %10 = arith.mulf %8, %9 : vector<8x384xf32>
    %11 = vector.extract_strided_slice %0 {offsets = [0, 1], sizes = [8, 1], strides = [1, 1]} : vector<8x2xf32> to vector<8x1xf32>
    %12 = vector.extract_strided_slice %4 {offsets = [1, 0], sizes = [1, 384], strides = [1, 1]} : vector<2x384xf32> to vector<1x384xf32>
    %13 = vector.broadcast %11 : vector<8x1xf32> to vector<8x384xf32>
    %14 = vector.broadcast %12 : vector<1x384xf32> to vector<8x384xf32>
    %15 = arith.mulf %13, %14 : vector<8x384xf32>
    %16 = arith.addf %10, %15 : vector<8x384xf32>
    %17 = vector.broadcast %5 : vector<1x384xf32> to vector<8x384xf32>
    %18 = arith.addf %16, %17 : vector<8x384xf32>
    %c0_11 = arith.constant 0 : index
    %c0_12 = arith.constant 0 : index
    %19 = vector.load %arg0[%c0_11, %c0_12] : memref<80x64xf32, #tpu.memory_space<vmem>>, vector<80x64xf32>
    %20 = arith.truncf %19 : vector<80x64xf32> to vector<80x64xbf16>
    %c0_13 = arith.constant 0 : index
    %c0_14 = arith.constant 0 : index
    %21 = vector.load %arg5[%c0_13, %c0_14] : memref<64x1152xbf16, #tpu.memory_space<vmem>>, vector<64x1152xbf16>
    %cst = arith.constant dense<0.000000e+00> : vector<80x1152xf32>
    %22 = tpu.matmul %20, %21, %cst {dimension_numbers = #tpu.dot_dimension_numbers<[1], [0], [0], [1], [0, 0, 1, 1], [], []>} : vector<80x64xbf16>, vector<64x1152xbf16>, vector<80x1152xf32> -> vector<80x1152xf32>
    %c0_15 = arith.constant 0 : index
    %c0_16 = arith.constant 0 : index
    %23 = vector.load %arg7[%c0_15, %c0_16] : memref<1x1152xf32, #tpu.memory_space<vmem>>, vector<1x1152xf32>
    %24 = vector.broadcast %23 : vector<1x1152xf32> to vector<80x1152xf32>
    %25 = arith.addf %22, %24 : vector<80x1152xf32>
    %c0_17 = arith.constant 0 : index
    %c0_18 = arith.constant 0 : index
    %26 = vector.load %arg13[%c0_17, %c0_18] : memref<80x1152xf32, #tpu.memory_space<vmem>>, vector<80x1152xf32>
    tpu.vector_store %arg13[%c0_17, %c0_18], %25 {strides = array<i32>} : memref<80x1152xf32, #tpu.memory_space<vmem>>, vector<80x1152xf32>,
    %c0_19 = arith.constant 0 : index
    %c0_20 = arith.constant 0 : index
    %27 = vector.load %arg13[%c0_19, %c0_20] : memref<80x1152xf32, #tpu.memory_space<vmem>>, vector<8x1152xf32>
    %28 = arith.truncf %18 : vector<8x384xf32> to vector<8x384xbf16>
    %cst_21 = arith.constant dense<0.000000e+00> : vector<8x1152xf32>
    %29 = tpu.matmul %28, %2, %cst_21 {dimension_numbers = #tpu.dot_dimension_numbers<[1], [0], [0], [1], [0, 0, 1, 1], [], []>} : vector<8x384xbf16>, vector<384x1152xbf16>, vector<8x1152xf32> -> vector<8x1152xf32>
    %30 = vector.broadcast %3 : vector<1x1152xf32> to vector<8x1152xf32>
    %31 = arith.addf %29, %30 : vector<8x1152xf32>
    %32 = vector.extract_strided_slice %27 {offsets = [0, 0], sizes = [8, 384], strides = [1, 1]} : vector<8x1152xf32> to vector<8x384xf32>
    %33 = vector.extract_strided_slice %31 {offsets = [0, 0], sizes = [8, 384], strides = [1, 1]} : vector<8x1152xf32> to vector<8x384xf32>
    %34 = arith.addf %32, %33 : vector<8x384xf32>
    %35 = arith.negf %34 : vector<8x384xf32>
    %36 = math.exp %35 : vector<8x384xf32>
    %cst_22 = arith.constant 1.000000e+00 : f32
    %37 = vector.broadcast %cst_22 : f32 to vector<8x384xf32>
    %38 = arith.addf %37, %36 : vector<8x384xf32>
    %39 = arith.divf %37, %38 : vector<8x384xf32>
    %40 = vector.extract_strided_slice %27 {offsets = [0, 384], sizes = [8, 384], strides = [1, 1]} : vector<8x1152xf32> to vector<8x384xf32>
    %41 = vector.extract_strided_slice %31 {offsets = [0, 384], sizes = [8, 384], strides = [1, 1]} : vector<8x1152xf32> to vector<8x384xf32>
    %42 = arith.addf %40, %41 : vector<8x384xf32>
    %43 = arith.negf %42 : vector<8x384xf32>
    %44 = math.exp %43 : vector<8x384xf32>
    %cst_23 = arith.constant 1.000000e+00 : f32
    %45 = vector.broadcast %cst_23 : f32 to vector<8x384xf32>
    %46 = arith.addf %45, %44 : vector<8x384xf32>
    %47 = arith.divf %45, %46 : vector<8x384xf32>
    %48 = vector.extract_strided_slice %27 {offsets = [0, 768], sizes = [8, 384], strides = [1, 1]} : vector<8x1152xf32> to vector<8x384xf32>
    %49 = vector.extract_strided_slice %31 {offsets = [0, 768], sizes = [8, 384], strides = [1, 1]} : vector<8x1152xf32> to vector<8x384xf32>
    %50 = arith.mulf %39, %49 : vector<8x384xf32>
    %51 = arith.addf %48, %50 : vector<8x384xf32>
    %52 = math.tanh %51 : vector<8x384xf32>
    %cst_24 = arith.constant 1.000000e+00 : f32
    %53 = vector.broadcast %cst_24 : f32 to vector<8x384xf32>
    %54 = arith.subf %53, %47 : vector<8x384xf32>
    %55 = arith.mulf %54, %52 : vector<8x384xf32>
    %56 = arith.mulf %47, %18 : vector<8x384xf32>
    %57 = arith.addf %55, %56 : vector<8x384xf32>
    %58 = arith.mulf %57, %1 : vector<8x384xf32>
    %c0_25 = arith.constant 0 : index
    %c0_26 = arith.constant 0 : index
    %59 = vector.load %arg14[%c0_25, %c0_26] : memref<80x384xf32, #tpu.memory_space<vmem>>, vector<8x384xf32>
    tpu.vector_store %arg14[%c0_25, %c0_26], %58 {strides = array<i32>} : memref<80x384xf32, #tpu.memory_space<vmem>>, vector<8x384xf32>,
    %c8 = arith.constant 8 : index
    %c0_27 = arith.constant 0 : index
    %60 = vector.load %arg13[%c8, %c0_27] : memref<80x1152xf32, #tpu.memory_space<vmem>>, vector<8x1152xf32>
    %61 = arith.truncf %57 : vector<8x384xf32> to vector<8x384xbf16>
    %cst_28 = arith.constant dense<0.000000e+00> : vector<8x1152xf32>
    %62 = tpu.matmul %61, %2, %cst_28 {dimension_numbers = #tpu.dot_dimension_numbers<[1], [0], [0], [1], [0, 0, 1, 1], [], []>} : vector<8x384xbf16>, vector<384x1152xbf16>, vector<8x1152xf32> -> vector<8x1152xf32>
    %63 = vector.broadcast %3 : vector<1x1152xf32> to vector<8x1152xf32>
    %64 = arith.addf %62, %63 : vector<8x1152xf32>
    %65 = vector.extract_strided_slice %60 {offsets = [0, 0], sizes = [8, 384], strides = [1, 1]} : vector<8x1152xf32> to vector<8x384xf32>
    %66 = vector.extract_strided_slice %64 {offsets = [0, 0], sizes = [8, 384], strides = [1, 1]} : vector<8x1152xf32> to vector<8x384xf32>
    %67 = arith.addf %65, %66 : vector<8x384xf32>
    %68 = arith.negf %67 : vector<8x384xf32>
    %69 = math.exp %68 : vector<8x384xf32>
    %cst_29 = arith.constant 1.000000e+00 : f32
    %70 = vector.broadcast %cst_29 : f32 to vector<8x384xf32>
    %71 = arith.addf %70, %69 : vector<8x384xf32>
    %72 = arith.divf %70, %71 : vector<8x384xf32>
    %73 = vector.extract_strided_slice %60 {offsets = [0, 384], sizes = [8, 384], strides = [1, 1]} : vector<8x1152xf32> to vector<8x384xf32>
    %74 = vector.extract_strided_slice %64 {offsets = [0, 384], sizes = [8, 384], strides = [1, 1]} : vector<8x1152xf32> to vector<8x384xf32>
    %75 = arith.addf %73, %74 : vector<8x384xf32>
    %76 = arith.negf %75 : vector<8x384xf32>
    %77 = math.exp %76 : vector<8x384xf32>
    %cst_30 = arith.constant 1.000000e+00 : f32
    %78 = vector.broadcast %cst_30 : f32 to vector<8x384xf32>
    %79 = arith.addf %78, %77 : vector<8x384xf32>
    %80 = arith.divf %78, %79 : vector<8x384xf32>
    %81 = vector.extract_strided_slice %60 {offsets = [0, 768], sizes = [8, 384], strides = [1, 1]} : vector<8x1152xf32> to vector<8x384xf32>
    %82 = vector.extract_strided_slice %64 {offsets = [0, 768], sizes = [8, 384], strides = [1, 1]} : vector<8x1152xf32> to vector<8x384xf32>
    %83 = arith.mulf %72, %82 : vector<8x384xf32>
    %84 = arith.addf %81, %83 : vector<8x384xf32>
    %85 = math.tanh %84 : vector<8x384xf32>
    %cst_31 = arith.constant 1.000000e+00 : f32
    %86 = vector.broadcast %cst_31 : f32 to vector<8x384xf32>
    %87 = arith.subf %86, %80 : vector<8x384xf32>
    %88 = arith.mulf %87, %85 : vector<8x384xf32>
    %89 = arith.mulf %80, %57 : vector<8x384xf32>
    %90 = arith.addf %88, %89 : vector<8x384xf32>
    %91 = arith.mulf %90, %1 : vector<8x384xf32>
    %c8_32 = arith.constant 8 : index
    %c0_33 = arith.constant 0 : index
    %92 = vector.load %arg14[%c8_32, %c0_33] : memref<80x384xf32, #tpu.memory_space<vmem>>, vector<8x384xf32>
    tpu.vector_store %arg14[%c8_32, %c0_33], %91 {strides = array<i32>} : memref<80x384xf32, #tpu.memory_space<vmem>>, vector<8x384xf32>,
    %c16 = arith.constant 16 : index
    %c0_34 = arith.constant 0 : index
    %93 = vector.load %arg13[%c16, %c0_34] : memref<80x1152xf32, #tpu.memory_space<vmem>>, vector<8x1152xf32>
    %94 = arith.truncf %90 : vector<8x384xf32> to vector<8x384xbf16>
    %cst_35 = arith.constant dense<0.000000e+00> : vector<8x1152xf32>
    %95 = tpu.matmul %94, %2, %cst_35 {dimension_numbers = #tpu.dot_dimension_numbers<[1], [0], [0], [1], [0, 0, 1, 1], [], []>} : vector<8x384xbf16>, vector<384x1152xbf16>, vector<8x1152xf32> -> vector<8x1152xf32>
    %96 = vector.broadcast %3 : vector<1x1152xf32> to vector<8x1152xf32>
    %97 = arith.addf %95, %96 : vector<8x1152xf32>
    %98 = vector.extract_strided_slice %93 {offsets = [0, 0], sizes = [8, 384], strides = [1, 1]} : vector<8x1152xf32> to vector<8x384xf32>
    %99 = vector.extract_strided_slice %97 {offsets = [0, 0], sizes = [8, 384], strides = [1, 1]} : vector<8x1152xf32> to vector<8x384xf32>
    %100 = arith.addf %98, %99 : vector<8x384xf32>
    %101 = arith.negf %100 : vector<8x384xf32>
    %102 = math.exp %101 : vector<8x384xf32>
    %cst_36 = arith.constant 1.000000e+00 : f32
    %103 = vector.broadcast %cst_36 : f32 to vector<8x384xf32>
    %104 = arith.addf %103, %102 : vector<8x384xf32>
    %105 = arith.divf %103, %104 : vector<8x384xf32>
    %106 = vector.extract_strided_slice %93 {offsets = [0, 384], sizes = [8, 384], strides = [1, 1]} : vector<8x1152xf32> to vector<8x384xf32>
    %107 = vector.extract_strided_slice %97 {offsets = [0, 384], sizes = [8, 384], strides = [1, 1]} : vector<8x1152xf32> to vector<8x384xf32>
    %108 = arith.addf %106, %107 : vector<8x384xf32>
    %109 = arith.negf %108 : vector<8x384xf32>
    %110 = math.exp %109 : vector<8x384xf32>
    %cst_37 = arith.constant 1.000000e+00 : f32
    %111 = vector.broadcast %cst_37 : f32 to vector<8x384xf32>
    %112 = arith.addf %111, %110 : vector<8x384xf32>
    %113 = arith.divf %111, %112 : vector<8x384xf32>
    %114 = vector.extract_strided_slice %93 {offsets = [0, 768], sizes = [8, 384], strides = [1, 1]} : vector<8x1152xf32> to vector<8x384xf32>
    %115 = vector.extract_strided_slice %97 {offsets = [0, 768], sizes = [8, 384], strides = [1, 1]} : vector<8x1152xf32> to vector<8x384xf32>
    %116 = arith.mulf %105, %115 : vector<8x384xf32>
    %117 = arith.addf %114, %116 : vector<8x384xf32>
    %118 = math.tanh %117 : vector<8x384xf32>
    %cst_38 = arith.constant 1.000000e+00 : f32
    %119 = vector.broadcast %cst_38 : f32 to vector<8x384xf32>
    %120 = arith.subf %119, %113 : vector<8x384xf32>
    %121 = arith.mulf %120, %118 : vector<8x384xf32>
    %122 = arith.mulf %113, %90 : vector<8x384xf32>
    %123 = arith.addf %121, %122 : vector<8x384xf32>
    %124 = arith.mulf %123, %1 : vector<8x384xf32>
    %c16_39 = arith.constant 16 : index
    %c0_40 = arith.constant 0 : index
    %125 = vector.load %arg14[%c16_39, %c0_40] : memref<80x384xf32, #tpu.memory_space<vmem>>, vector<8x384xf32>
    tpu.vector_store %arg14[%c16_39, %c0_40], %124 {strides = array<i32>} : memref<80x384xf32, #tpu.memory_space<vmem>>, vector<8x384xf32>,
    %c24 = arith.constant 24 : index
    %c0_41 = arith.constant 0 : index
    %126 = vector.load %arg13[%c24, %c0_41] : memref<80x1152xf32, #tpu.memory_space<vmem>>, vector<8x1152xf32>
    %127 = arith.truncf %123 : vector<8x384xf32> to vector<8x384xbf16>
    %cst_42 = arith.constant dense<0.000000e+00> : vector<8x1152xf32>
    %128 = tpu.matmul %127, %2, %cst_42 {dimension_numbers = #tpu.dot_dimension_numbers<[1], [0], [0], [1], [0, 0, 1, 1], [], []>} : vector<8x384xbf16>, vector<384x1152xbf16>, vector<8x1152xf32> -> vector<8x1152xf32>
    %129 = vector.broadcast %3 : vector<1x1152xf32> to vector<8x1152xf32>
    %130 = arith.addf %128, %129 : vector<8x1152xf32>
    %131 = vector.extract_strided_slice %126 {offsets = [0, 0], sizes = [8, 384], strides = [1, 1]} : vector<8x1152xf32> to vector<8x384xf32>
    %132 = vector.extract_strided_slice %130 {offsets = [0, 0], sizes = [8, 384], strides = [1, 1]} : vector<8x1152xf32> to vector<8x384xf32>
    %133 = arith.addf %131, %132 : vector<8x384xf32>
    %134 = arith.negf %133 : vector<8x384xf32>
    %135 = math.exp %134 : vector<8x384xf32>
    %cst_43 = arith.constant 1.000000e+00 : f32
    %136 = vector.broadcast %cst_43 : f32 to vector<8x384xf32>
    %137 = arith.addf %136, %135 : vector<8x384xf32>
    %138 = arith.divf %136, %137 : vector<8x384xf32>
    %139 = vector.extract_strided_slice %126 {offsets = [0, 384], sizes = [8, 384], strides = [1, 1]} : vector<8x1152xf32> to vector<8x384xf32>
    %140 = vector.extract_strided_slice %130 {offsets = [0, 384], sizes = [8, 384], strides = [1, 1]} : vector<8x1152xf32> to vector<8x384xf32>
    %141 = arith.addf %139, %140 : vector<8x384xf32>
    %142 = arith.negf %141 : vector<8x384xf32>
    %143 = math.exp %142 : vector<8x384xf32>
    %cst_44 = arith.constant 1.000000e+00 : f32
    %144 = vector.broadcast %cst_44 : f32 to vector<8x384xf32>
    %145 = arith.addf %144, %143 : vector<8x384xf32>
    %146 = arith.divf %144, %145 : vector<8x384xf32>
    %147 = vector.extract_strided_slice %126 {offsets = [0, 768], sizes = [8, 384], strides = [1, 1]} : vector<8x1152xf32> to vector<8x384xf32>
    %148 = vector.extract_strided_slice %130 {offsets = [0, 768], sizes = [8, 384], strides = [1, 1]} : vector<8x1152xf32> to vector<8x384xf32>
    %149 = arith.mulf %138, %148 : vector<8x384xf32>
    %150 = arith.addf %147, %149 : vector<8x384xf32>
    %151 = math.tanh %150 : vector<8x384xf32>
    %cst_45 = arith.constant 1.000000e+00 : f32
    %152 = vector.broadcast %cst_45 : f32 to vector<8x384xf32>
    %153 = arith.subf %152, %146 : vector<8x384xf32>
    %154 = arith.mulf %153, %151 : vector<8x384xf32>
    %155 = arith.mulf %146, %123 : vector<8x384xf32>
    %156 = arith.addf %154, %155 : vector<8x384xf32>
    %157 = arith.mulf %156, %1 : vector<8x384xf32>
    %c24_46 = arith.constant 24 : index
    %c0_47 = arith.constant 0 : index
    %158 = vector.load %arg14[%c24_46, %c0_47] : memref<80x384xf32, #tpu.memory_space<vmem>>, vector<8x384xf32>
    tpu.vector_store %arg14[%c24_46, %c0_47], %157 {strides = array<i32>} : memref<80x384xf32, #tpu.memory_space<vmem>>, vector<8x384xf32>,
    %c32 = arith.constant 32 : index
    %c0_48 = arith.constant 0 : index
    %159 = vector.load %arg13[%c32, %c0_48] : memref<80x1152xf32, #tpu.memory_space<vmem>>, vector<8x1152xf32>
    %160 = arith.truncf %156 : vector<8x384xf32> to vector<8x384xbf16>
    %cst_49 = arith.constant dense<0.000000e+00> : vector<8x1152xf32>
    %161 = tpu.matmul %160, %2, %cst_49 {dimension_numbers = #tpu.dot_dimension_numbers<[1], [0], [0], [1], [0, 0, 1, 1], [], []>} : vector<8x384xbf16>, vector<384x1152xbf16>, vector<8x1152xf32> -> vector<8x1152xf32>
    %162 = vector.broadcast %3 : vector<1x1152xf32> to vector<8x1152xf32>
    %163 = arith.addf %161, %162 : vector<8x1152xf32>
    %164 = vector.extract_strided_slice %159 {offsets = [0, 0], sizes = [8, 384], strides = [1, 1]} : vector<8x1152xf32> to vector<8x384xf32>
    %165 = vector.extract_strided_slice %163 {offsets = [0, 0], sizes = [8, 384], strides = [1, 1]} : vector<8x1152xf32> to vector<8x384xf32>
    %166 = arith.addf %164, %165 : vector<8x384xf32>
    %167 = arith.negf %166 : vector<8x384xf32>
    %168 = math.exp %167 : vector<8x384xf32>
    %cst_50 = arith.constant 1.000000e+00 : f32
    %169 = vector.broadcast %cst_50 : f32 to vector<8x384xf32>
    %170 = arith.addf %169, %168 : vector<8x384xf32>
    %171 = arith.divf %169, %170 : vector<8x384xf32>
    %172 = vector.extract_strided_slice %159 {offsets = [0, 384], sizes = [8, 384], strides = [1, 1]} : vector<8x1152xf32> to vector<8x384xf32>
    %173 = vector.extract_strided_slice %163 {offsets = [0, 384], sizes = [8, 384], strides = [1, 1]} : vector<8x1152xf32> to vector<8x384xf32>
    %174 = arith.addf %172, %173 : vector<8x384xf32>
    %175 = arith.negf %174 : vector<8x384xf32>
    %176 = math.exp %175 : vector<8x384xf32>
    %cst_51 = arith.constant 1.000000e+00 : f32
    %177 = vector.broadcast %cst_51 : f32 to vector<8x384xf32>
    %178 = arith.addf %177, %176 : vector<8x384xf32>
    %179 = arith.divf %177, %178 : vector<8x384xf32>
    %180 = vector.extract_strided_slice %159 {offsets = [0, 768], sizes = [8, 384], strides = [1, 1]} : vector<8x1152xf32> to vector<8x384xf32>
    %181 = vector.extract_strided_slice %163 {offsets = [0, 768], sizes = [8, 384], strides = [1, 1]} : vector<8x1152xf32> to vector<8x384xf32>
    %182 = arith.mulf %171, %181 : vector<8x384xf32>
    %183 = arith.addf %180, %182 : vector<8x384xf32>
    %184 = math.tanh %183 : vector<8x384xf32>
    %cst_52 = arith.constant 1.000000e+00 : f32
    %185 = vector.broadcast %cst_52 : f32 to vector<8x384xf32>
    %186 = arith.subf %185, %179 : vector<8x384xf32>
    %187 = arith.mulf %186, %184 : vector<8x384xf32>
    %188 = arith.mulf %179, %156 : vector<8x384xf32>
    %189 = arith.addf %187, %188 : vector<8x384xf32>
    %190 = arith.mulf %189, %1 : vector<8x384xf32>
    %c32_53 = arith.constant 32 : index
    %c0_54 = arith.constant 0 : index
    %191 = vector.load %arg14[%c32_53, %c0_54] : memref<80x384xf32, #tpu.memory_space<vmem>>, vector<8x384xf32>
    tpu.vector_store %arg14[%c32_53, %c0_54], %190 {strides = array<i32>} : memref<80x384xf32, #tpu.memory_space<vmem>>, vector<8x384xf32>,
    %c40 = arith.constant 40 : index
    %c0_55 = arith.constant 0 : index
    %192 = vector.load %arg13[%c40, %c0_55] : memref<80x1152xf32, #tpu.memory_space<vmem>>, vector<8x1152xf32>
    %193 = arith.truncf %189 : vector<8x384xf32> to vector<8x384xbf16>
    %cst_56 = arith.constant dense<0.000000e+00> : vector<8x1152xf32>
    %194 = tpu.matmul %193, %2, %cst_56 {dimension_numbers = #tpu.dot_dimension_numbers<[1], [0], [0], [1], [0, 0, 1, 1], [], []>} : vector<8x384xbf16>, vector<384x1152xbf16>, vector<8x1152xf32> -> vector<8x1152xf32>
    %195 = vector.broadcast %3 : vector<1x1152xf32> to vector<8x1152xf32>
    %196 = arith.addf %194, %195 : vector<8x1152xf32>
    %197 = vector.extract_strided_slice %192 {offsets = [0, 0], sizes = [8, 384], strides = [1, 1]} : vector<8x1152xf32> to vector<8x384xf32>
    %198 = vector.extract_strided_slice %196 {offsets = [0, 0], sizes = [8, 384], strides = [1, 1]} : vector<8x1152xf32> to vector<8x384xf32>
    %199 = arith.addf %197, %198 : vector<8x384xf32>
    %200 = arith.negf %199 : vector<8x384xf32>
    %201 = math.exp %200 : vector<8x384xf32>
    %cst_57 = arith.constant 1.000000e+00 : f32
    %202 = vector.broadcast %cst_57 : f32 to vector<8x384xf32>
    %203 = arith.addf %202, %201 : vector<8x384xf32>
    %204 = arith.divf %202, %203 : vector<8x384xf32>
    %205 = vector.extract_strided_slice %192 {offsets = [0, 384], sizes = [8, 384], strides = [1, 1]} : vector<8x1152xf32> to vector<8x384xf32>
    %206 = vector.extract_strided_slice %196 {offsets = [0, 384], sizes = [8, 384], strides = [1, 1]} : vector<8x1152xf32> to vector<8x384xf32>
    %207 = arith.addf %205, %206 : vector<8x384xf32>
    %208 = arith.negf %207 : vector<8x384xf32>
    %209 = math.exp %208 : vector<8x384xf32>
    %cst_58 = arith.constant 1.000000e+00 : f32
    %210 = vector.broadcast %cst_58 : f32 to vector<8x384xf32>
    %211 = arith.addf %210, %209 : vector<8x384xf32>
    %212 = arith.divf %210, %211 : vector<8x384xf32>
    %213 = vector.extract_strided_slice %192 {offsets = [0, 768], sizes = [8, 384], strides = [1, 1]} : vector<8x1152xf32> to vector<8x384xf32>
    %214 = vector.extract_strided_slice %196 {offsets = [0, 768], sizes = [8, 384], strides = [1, 1]} : vector<8x1152xf32> to vector<8x384xf32>
    %215 = arith.mulf %204, %214 : vector<8x384xf32>
    %216 = arith.addf %213, %215 : vector<8x384xf32>
    %217 = math.tanh %216 : vector<8x384xf32>
    %cst_59 = arith.constant 1.000000e+00 : f32
    %218 = vector.broadcast %cst_59 : f32 to vector<8x384xf32>
    %219 = arith.subf %218, %212 : vector<8x384xf32>
    %220 = arith.mulf %219, %217 : vector<8x384xf32>
    %221 = arith.mulf %212, %189 : vector<8x384xf32>
    %222 = arith.addf %220, %221 : vector<8x384xf32>
    %223 = arith.mulf %222, %1 : vector<8x384xf32>
    %c40_60 = arith.constant 40 : index
    %c0_61 = arith.constant 0 : index
    %224 = vector.load %arg14[%c40_60, %c0_61] : memref<80x384xf32, #tpu.memory_space<vmem>>, vector<8x384xf32>
    tpu.vector_store %arg14[%c40_60, %c0_61], %223 {strides = array<i32>} : memref<80x384xf32, #tpu.memory_space<vmem>>, vector<8x384xf32>,
    %c48 = arith.constant 48 : index
    %c0_62 = arith.constant 0 : index
    %225 = vector.load %arg13[%c48, %c0_62] : memref<80x1152xf32, #tpu.memory_space<vmem>>, vector<8x1152xf32>
    %226 = arith.truncf %222 : vector<8x384xf32> to vector<8x384xbf16>
    %cst_63 = arith.constant dense<0.000000e+00> : vector<8x1152xf32>
    %227 = tpu.matmul %226, %2, %cst_63 {dimension_numbers = #tpu.dot_dimension_numbers<[1], [0], [0], [1], [0, 0, 1, 1], [], []>} : vector<8x384xbf16>, vector<384x1152xbf16>, vector<8x1152xf32> -> vector<8x1152xf32>
    %228 = vector.broadcast %3 : vector<1x1152xf32> to vector<8x1152xf32>
    %229 = arith.addf %227, %228 : vector<8x1152xf32>
    %230 = vector.extract_strided_slice %225 {offsets = [0, 0], sizes = [8, 384], strides = [1, 1]} : vector<8x1152xf32> to vector<8x384xf32>
    %231 = vector.extract_strided_slice %229 {offsets = [0, 0], sizes = [8, 384], strides = [1, 1]} : vector<8x1152xf32> to vector<8x384xf32>
    %232 = arith.addf %230, %231 : vector<8x384xf32>
    %233 = arith.negf %232 : vector<8x384xf32>
    %234 = math.exp %233 : vector<8x384xf32>
    %cst_64 = arith.constant 1.000000e+00 : f32
    %235 = vector.broadcast %cst_64 : f32 to vector<8x384xf32>
    %236 = arith.addf %235, %234 : vector<8x384xf32>
    %237 = arith.divf %235, %236 : vector<8x384xf32>
    %238 = vector.extract_strided_slice %225 {offsets = [0, 384], sizes = [8, 384], strides = [1, 1]} : vector<8x1152xf32> to vector<8x384xf32>
    %239 = vector.extract_strided_slice %229 {offsets = [0, 384], sizes = [8, 384], strides = [1, 1]} : vector<8x1152xf32> to vector<8x384xf32>
    %240 = arith.addf %238, %239 : vector<8x384xf32>
    %241 = arith.negf %240 : vector<8x384xf32>
    %242 = math.exp %241 : vector<8x384xf32>
    %cst_65 = arith.constant 1.000000e+00 : f32
    %243 = vector.broadcast %cst_65 : f32 to vector<8x384xf32>
    %244 = arith.addf %243, %242 : vector<8x384xf32>
    %245 = arith.divf %243, %244 : vector<8x384xf32>
    %246 = vector.extract_strided_slice %225 {offsets = [0, 768], sizes = [8, 384], strides = [1, 1]} : vector<8x1152xf32> to vector<8x384xf32>
    %247 = vector.extract_strided_slice %229 {offsets = [0, 768], sizes = [8, 384], strides = [1, 1]} : vector<8x1152xf32> to vector<8x384xf32>
    %248 = arith.mulf %237, %247 : vector<8x384xf32>
    %249 = arith.addf %246, %248 : vector<8x384xf32>
    %250 = math.tanh %249 : vector<8x384xf32>
    %cst_66 = arith.constant 1.000000e+00 : f32
    %251 = vector.broadcast %cst_66 : f32 to vector<8x384xf32>
    %252 = arith.subf %251, %245 : vector<8x384xf32>
    %253 = arith.mulf %252, %250 : vector<8x384xf32>
    %254 = arith.mulf %245, %222 : vector<8x384xf32>
    %255 = arith.addf %253, %254 : vector<8x384xf32>
    %256 = arith.mulf %255, %1 : vector<8x384xf32>
    %c48_67 = arith.constant 48 : index
    %c0_68 = arith.constant 0 : index
    %257 = vector.load %arg14[%c48_67, %c0_68] : memref<80x384xf32, #tpu.memory_space<vmem>>, vector<8x384xf32>
    tpu.vector_store %arg14[%c48_67, %c0_68], %256 {strides = array<i32>} : memref<80x384xf32, #tpu.memory_space<vmem>>, vector<8x384xf32>,
    %c56 = arith.constant 56 : index
    %c0_69 = arith.constant 0 : index
    %258 = vector.load %arg13[%c56, %c0_69] : memref<80x1152xf32, #tpu.memory_space<vmem>>, vector<8x1152xf32>
    %259 = arith.truncf %255 : vector<8x384xf32> to vector<8x384xbf16>
    %cst_70 = arith.constant dense<0.000000e+00> : vector<8x1152xf32>
    %260 = tpu.matmul %259, %2, %cst_70 {dimension_numbers = #tpu.dot_dimension_numbers<[1], [0], [0], [1], [0, 0, 1, 1], [], []>} : vector<8x384xbf16>, vector<384x1152xbf16>, vector<8x1152xf32> -> vector<8x1152xf32>
    %261 = vector.broadcast %3 : vector<1x1152xf32> to vector<8x1152xf32>
    %262 = arith.addf %260, %261 : vector<8x1152xf32>
    %263 = vector.extract_strided_slice %258 {offsets = [0, 0], sizes = [8, 384], strides = [1, 1]} : vector<8x1152xf32> to vector<8x384xf32>
    %264 = vector.extract_strided_slice %262 {offsets = [0, 0], sizes = [8, 384], strides = [1, 1]} : vector<8x1152xf32> to vector<8x384xf32>
    %265 = arith.addf %263, %264 : vector<8x384xf32>
    %266 = arith.negf %265 : vector<8x384xf32>
    %267 = math.exp %266 : vector<8x384xf32>
    %cst_71 = arith.constant 1.000000e+00 : f32
    %268 = vector.broadcast %cst_71 : f32 to vector<8x384xf32>
    %269 = arith.addf %268, %267 : vector<8x384xf32>
    %270 = arith.divf %268, %269 : vector<8x384xf32>
    %271 = vector.extract_strided_slice %258 {offsets = [0, 384], sizes = [8, 384], strides = [1, 1]} : vector<8x1152xf32> to vector<8x384xf32>
    %272 = vector.extract_strided_slice %262 {offsets = [0, 384], sizes = [8, 384], strides = [1, 1]} : vector<8x1152xf32> to vector<8x384xf32>
    %273 = arith.addf %271, %272 : vector<8x384xf32>
    %274 = arith.negf %273 : vector<8x384xf32>
    %275 = math.exp %274 : vector<8x384xf32>
    %cst_72 = arith.constant 1.000000e+00 : f32
    %276 = vector.broadcast %cst_72 : f32 to vector<8x384xf32>
    %277 = arith.addf %276, %275 : vector<8x384xf32>
    %278 = arith.divf %276, %277 : vector<8x384xf32>
    %279 = vector.extract_strided_slice %258 {offsets = [0, 768], sizes = [8, 384], strides = [1, 1]} : vector<8x1152xf32> to vector<8x384xf32>
    %280 = vector.extract_strided_slice %262 {offsets = [0, 768], sizes = [8, 384], strides = [1, 1]} : vector<8x1152xf32> to vector<8x384xf32>
    %281 = arith.mulf %270, %280 : vector<8x384xf32>
    %282 = arith.addf %279, %281 : vector<8x384xf32>
    %283 = math.tanh %282 : vector<8x384xf32>
    %cst_73 = arith.constant 1.000000e+00 : f32
    %284 = vector.broadcast %cst_73 : f32 to vector<8x384xf32>
    %285 = arith.subf %284, %278 : vector<8x384xf32>
    %286 = arith.mulf %285, %283 : vector<8x384xf32>
    %287 = arith.mulf %278, %255 : vector<8x384xf32>
    %288 = arith.addf %286, %287 : vector<8x384xf32>
    %289 = arith.mulf %288, %1 : vector<8x384xf32>
    %c56_74 = arith.constant 56 : index
    %c0_75 = arith.constant 0 : index
    %290 = vector.load %arg14[%c56_74, %c0_75] : memref<80x384xf32, #tpu.memory_space<vmem>>, vector<8x384xf32>
    tpu.vector_store %arg14[%c56_74, %c0_75], %289 {strides = array<i32>} : memref<80x384xf32, #tpu.memory_space<vmem>>, vector<8x384xf32>,
    %c64 = arith.constant 64 : index
    %c0_76 = arith.constant 0 : index
    %291 = vector.load %arg13[%c64, %c0_76] : memref<80x1152xf32, #tpu.memory_space<vmem>>, vector<8x1152xf32>
    %292 = arith.truncf %288 : vector<8x384xf32> to vector<8x384xbf16>
    %cst_77 = arith.constant dense<0.000000e+00> : vector<8x1152xf32>
    %293 = tpu.matmul %292, %2, %cst_77 {dimension_numbers = #tpu.dot_dimension_numbers<[1], [0], [0], [1], [0, 0, 1, 1], [], []>} : vector<8x384xbf16>, vector<384x1152xbf16>, vector<8x1152xf32> -> vector<8x1152xf32>
    %294 = vector.broadcast %3 : vector<1x1152xf32> to vector<8x1152xf32>
    %295 = arith.addf %293, %294 : vector<8x1152xf32>
    %296 = vector.extract_strided_slice %291 {offsets = [0, 0], sizes = [8, 384], strides = [1, 1]} : vector<8x1152xf32> to vector<8x384xf32>
    %297 = vector.extract_strided_slice %295 {offsets = [0, 0], sizes = [8, 384], strides = [1, 1]} : vector<8x1152xf32> to vector<8x384xf32>
    %298 = arith.addf %296, %297 : vector<8x384xf32>
    %299 = arith.negf %298 : vector<8x384xf32>
    %300 = math.exp %299 : vector<8x384xf32>
    %cst_78 = arith.constant 1.000000e+00 : f32
    %301 = vector.broadcast %cst_78 : f32 to vector<8x384xf32>
    %302 = arith.addf %301, %300 : vector<8x384xf32>
    %303 = arith.divf %301, %302 : vector<8x384xf32>
    %304 = vector.extract_strided_slice %291 {offsets = [0, 384], sizes = [8, 384], strides = [1, 1]} : vector<8x1152xf32> to vector<8x384xf32>
    %305 = vector.extract_strided_slice %295 {offsets = [0, 384], sizes = [8, 384], strides = [1, 1]} : vector<8x1152xf32> to vector<8x384xf32>
    %306 = arith.addf %304, %305 : vector<8x384xf32>
    %307 = arith.negf %306 : vector<8x384xf32>
    %308 = math.exp %307 : vector<8x384xf32>
    %cst_79 = arith.constant 1.000000e+00 : f32
    %309 = vector.broadcast %cst_79 : f32 to vector<8x384xf32>
    %310 = arith.addf %309, %308 : vector<8x384xf32>
    %311 = arith.divf %309, %310 : vector<8x384xf32>
    %312 = vector.extract_strided_slice %291 {offsets = [0, 768], sizes = [8, 384], strides = [1, 1]} : vector<8x1152xf32> to vector<8x384xf32>
    %313 = vector.extract_strided_slice %295 {offsets = [0, 768], sizes = [8, 384], strides = [1, 1]} : vector<8x1152xf32> to vector<8x384xf32>
    %314 = arith.mulf %303, %313 : vector<8x384xf32>
    %315 = arith.addf %312, %314 : vector<8x384xf32>
    %316 = math.tanh %315 : vector<8x384xf32>
    %cst_80 = arith.constant 1.000000e+00 : f32
    %317 = vector.broadcast %cst_80 : f32 to vector<8x384xf32>
    %318 = arith.subf %317, %311 : vector<8x384xf32>
    %319 = arith.mulf %318, %316 : vector<8x384xf32>
    %320 = arith.mulf %311, %288 : vector<8x384xf32>
    %321 = arith.addf %319, %320 : vector<8x384xf32>
    %322 = arith.mulf %321, %1 : vector<8x384xf32>
    %c64_81 = arith.constant 64 : index
    %c0_82 = arith.constant 0 : index
    %323 = vector.load %arg14[%c64_81, %c0_82] : memref<80x384xf32, #tpu.memory_space<vmem>>, vector<8x384xf32>
    tpu.vector_store %arg14[%c64_81, %c0_82], %322 {strides = array<i32>} : memref<80x384xf32, #tpu.memory_space<vmem>>, vector<8x384xf32>,
    %c72 = arith.constant 72 : index
    %c0_83 = arith.constant 0 : index
    %324 = vector.load %arg13[%c72, %c0_83] : memref<80x1152xf32, #tpu.memory_space<vmem>>, vector<8x1152xf32>
    %325 = arith.truncf %321 : vector<8x384xf32> to vector<8x384xbf16>
    %cst_84 = arith.constant dense<0.000000e+00> : vector<8x1152xf32>
    %326 = tpu.matmul %325, %2, %cst_84 {dimension_numbers = #tpu.dot_dimension_numbers<[1], [0], [0], [1], [0, 0, 1, 1], [], []>} : vector<8x384xbf16>, vector<384x1152xbf16>, vector<8x1152xf32> -> vector<8x1152xf32>
    %327 = vector.broadcast %3 : vector<1x1152xf32> to vector<8x1152xf32>
    %328 = arith.addf %326, %327 : vector<8x1152xf32>
    %329 = vector.extract_strided_slice %324 {offsets = [0, 0], sizes = [8, 384], strides = [1, 1]} : vector<8x1152xf32> to vector<8x384xf32>
    %330 = vector.extract_strided_slice %328 {offsets = [0, 0], sizes = [8, 384], strides = [1, 1]} : vector<8x1152xf32> to vector<8x384xf32>
    %331 = arith.addf %329, %330 : vector<8x384xf32>
    %332 = arith.negf %331 : vector<8x384xf32>
    %333 = math.exp %332 : vector<8x384xf32>
    %cst_85 = arith.constant 1.000000e+00 : f32
    %334 = vector.broadcast %cst_85 : f32 to vector<8x384xf32>
    %335 = arith.addf %334, %333 : vector<8x384xf32>
    %336 = arith.divf %334, %335 : vector<8x384xf32>
    %337 = vector.extract_strided_slice %324 {offsets = [0, 384], sizes = [8, 384], strides = [1, 1]} : vector<8x1152xf32> to vector<8x384xf32>
    %338 = vector.extract_strided_slice %328 {offsets = [0, 384], sizes = [8, 384], strides = [1, 1]} : vector<8x1152xf32> to vector<8x384xf32>
    %339 = arith.addf %337, %338 : vector<8x384xf32>
    %340 = arith.negf %339 : vector<8x384xf32>
    %341 = math.exp %340 : vector<8x384xf32>
    %cst_86 = arith.constant 1.000000e+00 : f32
    %342 = vector.broadcast %cst_86 : f32 to vector<8x384xf32>
    %343 = arith.addf %342, %341 : vector<8x384xf32>
    %344 = arith.divf %342, %343 : vector<8x384xf32>
    %345 = vector.extract_strided_slice %324 {offsets = [0, 768], sizes = [8, 384], strides = [1, 1]} : vector<8x1152xf32> to vector<8x384xf32>
    %346 = vector.extract_strided_slice %328 {offsets = [0, 768], sizes = [8, 384], strides = [1, 1]} : vector<8x1152xf32> to vector<8x384xf32>
    %347 = arith.mulf %336, %346 : vector<8x384xf32>
    %348 = arith.addf %345, %347 : vector<8x384xf32>
    %349 = math.tanh %348 : vector<8x384xf32>
    %cst_87 = arith.constant 1.000000e+00 : f32
    %350 = vector.broadcast %cst_87 : f32 to vector<8x384xf32>
    %351 = arith.subf %350, %344 : vector<8x384xf32>
    %352 = arith.mulf %351, %349 : vector<8x384xf32>
    %353 = arith.mulf %344, %321 : vector<8x384xf32>
    %354 = arith.addf %352, %353 : vector<8x384xf32>
    %355 = arith.mulf %354, %1 : vector<8x384xf32>
    %c72_88 = arith.constant 72 : index
    %c0_89 = arith.constant 0 : index
    %356 = vector.load %arg14[%c72_88, %c0_89] : memref<80x384xf32, #tpu.memory_space<vmem>>, vector<8x384xf32>
    tpu.vector_store %arg14[%c72_88, %c0_89], %355 {strides = array<i32>} : memref<80x384xf32, #tpu.memory_space<vmem>>, vector<8x384xf32>,
    %c0_90 = arith.constant 0 : index
    %c0_91 = arith.constant 0 : index
    %357 = vector.load %arg14[%c0_90, %c0_91] : memref<80x384xf32, #tpu.memory_space<vmem>>, vector<80x384xf32>
    %358 = arith.truncf %357 : vector<80x384xf32> to vector<80x384xbf16>
    %c0_92 = arith.constant 0 : index
    %c0_93 = arith.constant 0 : index
    %359 = vector.load %arg11[%c0_92, %c0_93] : memref<384x2xbf16, #tpu.memory_space<vmem>>, vector<384x2xbf16>
    %cst_94 = arith.constant dense<0.000000e+00> : vector<80x2xf32>
    %360 = tpu.matmul %358, %359, %cst_94 {dimension_numbers = #tpu.dot_dimension_numbers<[1], [0], [0], [1], [0, 0, 1, 1], [], []>} : vector<80x384xbf16>, vector<384x2xbf16>, vector<80x2xf32> -> vector<80x2xf32>
    %c0_95 = arith.constant 0 : index
    %c0_96 = arith.constant 0 : index
    %361 = vector.load %arg3[%c0_95, %c0_96] : memref<80x2xf32, #tpu.memory_space<vmem>>, vector<80x2xf32>
    %362 = arith.addf %360, %361 : vector<80x2xf32>
    %c0_97 = arith.constant 0 : index
    %c0_98 = arith.constant 0 : index
    %363 = vector.load %arg4[%c0_97, %c0_98] : memref<80x80xf32, #tpu.memory_space<vmem>>, vector<80x80xf32>
    %cst_99 = arith.constant dense<0.000000e+00> : vector<80x2xf32>
    %364 = tpu.matmul %363, %362, %cst_99 {dimension_numbers = #tpu.dot_dimension_numbers<[1], [0], [0], [1], [0, 0, 1, 1], [], []>} : vector<80x80xf32>, vector<80x2xf32>, vector<80x2xf32> -> vector<80x2xf32>
    %c0_100 = arith.constant 0 : index
    %c0_101 = arith.constant 0 : index
    %365 = vector.load %arg12[%c0_100, %c0_101] : memref<80x2xf32, #tpu.memory_space<vmem>>, vector<80x2xf32>
    tpu.vector_store %arg12[%c0_100, %c0_101], %364 {strides = array<i32>} : memref<80x2xf32, #tpu.memory_space<vmem>>, vector<80x2xf32>,
    return
  }
}

</mosaic_0001>

<llo_original>
// kernel: gru_waypoints_predictor.1
$region0: #{gru_waypoints_predictor.1}
  #allocation0 [shape = 'u32[]', space=smem, size = 0x4, offset = 0x4, fixed_abs, tag = 'smem constant byte address 0x4 - core index']
  #allocation1 [shape = 'u32[144,128]{1,0:T(1,128)}', space=vmem, size = 0x12000, scoped, tag = 'internal scratch']
  #allocation2 [shape = 'f32[80,1152]{1,0:T(8,128)}', space=vmem, size = 0x5a000, scoped, tag = 'scratch operand']
  #allocation3 [shape = 'f32[80,384]{1,0:T(8,128)}', space=vmem, size = 0x1e000, scoped, tag = 'scratch operand']
  %s0 = inlined_call_operand.vmem [shape: f32[80,64], index: 0, kind: input, shape index: {}]
  %s1 = inlined_call_operand.vmem [shape: f32[8,2], index: 1, kind: input, shape index: {}]
  %s2 = inlined_call_operand.vmem [shape: f32[8,384], index: 2, kind: input, shape index: {}]
  %s3 = inlined_call_operand.vmem [shape: f32[80,2], index: 3, kind: input, shape index: {}]
  %s4 = inlined_call_operand.vmem [shape: f32[80,80], index: 4, kind: input, shape index: {}]
  %s5 = inlined_call_operand.vmem [shape: bf16[64,1152], index: 5, kind: input, shape index: {}]
  %s6 = inlined_call_operand.hbm [shape: bf16[384,1152], index: 6, kind: input, shape index: {}]
  %s7 = inlined_call_operand.vmem [shape: f32[1,1152], index: 7, kind: input, shape index: {}]
  %s8 = inlined_call_operand.vmem [shape: f32[1,1152], index: 8, kind: input, shape index: {}]
  %s9 = inlined_call_operand.vmem [shape: f32[2,384], index: 9, kind: input, shape index: {}]
  %s10 = inlined_call_operand.vmem [shape: f32[1,384], index: 10, kind: input, shape index: {}]
  %s11 = inlined_call_operand.vmem [shape: bf16[384,2], index: 11, kind: input, shape index: {}]
  %s12 = inlined_call_operand.vmem [shape: f32[80,2], index: 12, kind: output, shape index: {}]
  %s13 = sld [smem:[#allocation0]]
  $region62: #{gru_waypoints_predictor.1} parent=0
    _
  %s15 = ssub.s32 1, %s13
  %s16 = scalar_select 0, %s15, %s13
  $region1: #{gru_waypoints_predictor.1} parent=0
    #allocation4 [shape = 'u8[884736]{0}', space=vmem, size = 0xd8000, scoped, tag = 'input window, operand 6, single buffered']
    #allocation5 [shape = 's32[1]{0}', space=sflag, size = 0x4, scoped, tag = 'scoped memory for gru_waypoints_predictor.1']
    %17 = vsyncpa [#allocation5], 0
    // Predicated region
    $region2: #{gru_waypoints_predictor.1} parent=1 // pred_check
      _
    $region3: #{gru_waypoints_predictor.1} parent=1 // pred_check_branch
      %19 = sbr.rel (0) target = $region5
    $region4: #{gru_waypoints_predictor.1} parent=1 // pred_region
      _
    $region5: #{gru_waypoints_predictor.1} parent=1 // pred_fallthru
      _
    // Predicated region
    $region6: #{gru_waypoints_predictor.1} parent=1 // pred_check
      _
    $region7: #{gru_waypoints_predictor.1} parent=1 // pred_check_branch
      %21 = sbr.rel (0) target = $region9
    $region8: #{gru_waypoints_predictor.1} parent=1 // pred_region
      _
    $region9: #{gru_waypoints_predictor.1} parent=1 // pred_fallthru
      _
    // Predicated region
    $region10: #{gru_waypoints_predictor.1} parent=1 // pred_check
      _
    $region11: #{gru_waypoints_predictor.1} parent=1 // pred_check_branch
      %23 = sbr.rel (0) target = $region13
    $region12: #{gru_waypoints_predictor.1} parent=1 // pred_region
      _
    $region13: #{gru_waypoints_predictor.1} parent=1 // pred_fallthru
      _
    // Predicated region
    $region14: #{gru_waypoints_predictor.1} parent=1 // pred_check
      _
    $region15: #{gru_waypoints_predictor.1} parent=1 // pred_check_branch
      %25 = sbr.rel (0) target = $region17
    $region16: #{gru_waypoints_predictor.1} parent=1 // pred_region
      _
    $region17: #{gru_waypoints_predictor.1} parent=1 // pred_fallthru
      _
    // Predicated region
    $region18: #{gru_waypoints_predictor.1} parent=1 // pred_check
      _
    $region19: #{gru_waypoints_predictor.1} parent=1 // pred_check_branch
      %27 = sbr.rel (0) target = $region21
    $region20: #{gru_waypoints_predictor.1} parent=1 // pred_region
      _
    $region21: #{gru_waypoints_predictor.1} parent=1 // pred_fallthru
      _
    // Predicated region
    $region22: #{gru_waypoints_predictor.1} parent=1 // pred_check
      _
    $region23: #{gru_waypoints_predictor.1} parent=1 // pred_check_branch
      %29 = sbr.rel (0) target = $region25
    $region24: #{gru_waypoints_predictor.1} parent=1 // pred_region
      _
    $region25: #{gru_waypoints_predictor.1} parent=1 // pred_fallthru
      _
    // Predicated region
    $region26: #{gru_waypoints_predictor.1} parent=1 // pred_check
      _
    $region27: #{gru_waypoints_predictor.1} parent=1 // pred_check_branch
      %31 = sbr.rel (0) target = $region29
    $region28: #{gru_waypoints_predictor.1} parent=1 // pred_region
      %s33 = ssub.s32 27648, 27648
      %34 = vsyncadd [#allocation5], %s33
      %s35 = sshll.u32 [#allocation4], 4
      %s36 = int_to_ptr.vmem [resolvable:$true] %s35
      %41 = dma.hbm_to_vmem [thread:$0]  %s6, 27648, %s36, [#allocation5], 576, 576, 36
    $region29: #{gru_waypoints_predictor.1} parent=1 // pred_fallthru
      _
    // Predicated region
    $region30: #{gru_waypoints_predictor.1} parent=1 // pred_check
      _
    $region31: #{gru_waypoints_predictor.1} parent=1 // pred_check_branch
      %43 = sbr.rel (0) target = $region33
    $region32: #{gru_waypoints_predictor.1} parent=1 // pred_region
      _
    $region33: #{gru_waypoints_predictor.1} parent=1 // pred_fallthru
      _
    // Predicated region
    $region34: #{gru_waypoints_predictor.1} parent=1 // pred_check
      _
    $region35: #{gru_waypoints_predictor.1} parent=1 // pred_check_branch
      %45 = sbr.rel (0) target = $region37
    $region36: #{gru_waypoints_predictor.1} parent=1 // pred_region
      _
    $region37: #{gru_waypoints_predictor.1} parent=1 // pred_fallthru
      _
    // Predicated region
    $region38: #{gru_waypoints_predictor.1} parent=1 // pred_check
      _
    $region39: #{gru_waypoints_predictor.1} parent=1 // pred_check_branch
      %47 = sbr.rel (0) target = $region41
    $region40: #{gru_waypoints_predictor.1} parent=1 // pred_region
      _
    $region41: #{gru_waypoints_predictor.1} parent=1 // pred_fallthru
      _
    // Predicated region
    $region42: #{gru_waypoints_predictor.1} parent=1 // pred_check
      _
    $region43: #{gru_waypoints_predictor.1} parent=1 // pred_check_branch
      %49 = sbr.rel (0) target = $region45
    $region44: #{gru_waypoints_predictor.1} parent=1 // pred_region
      _
    $region45: #{gru_waypoints_predictor.1} parent=1 // pred_fallthru
      _
    // Predicated region
    $region46: #{gru_waypoints_predictor.1} parent=1 // pred_check
      _
    $region47: #{gru_waypoints_predictor.1} parent=1 // pred_check_branch
      %51 = sbr.rel (0) target = $region49
    $region48: #{gru_waypoints_predictor.1} parent=1 // pred_region
      _
    $region49: #{gru_waypoints_predictor.1} parent=1 // pred_fallthru
      _
    // Predicated region
    $region50: #{gru_waypoints_predictor.1} parent=1 // pred_check
      _
    $region51: #{gru_waypoints_predictor.1} parent=1 // pred_check_branch
      %53 = sbr.rel (0) target = $region53
    $region52: #{gru_waypoints_predictor.1} parent=1 // pred_region
      %54 = dma.done [#allocation5], 27648
    $region53: #{gru_waypoints_predictor.1} parent=1 // pred_fallthru
      _
    %v56 = vld [vmem:[%s1] sm:$0xff]
    %v57 = vld [vmem:[%s2] sm:$0xff]
    %v58 = vld [vmem:[%s2 + $0x8] sm:$0xff]
    %v59 = vld [vmem:[%s2 + $0x10] sm:$0xff]
    %v60 = vld [vmem:[#allocation4] sm:$0xff]
    %v61 = vld [vmem:[#allocation4 + $0x8] sm:$0xff]
    %v62 = vld [vmem:[#allocation4 + $0x10] sm:$0xff]
    %v63 = vld [vmem:[#allocation4 + $0x18] sm:$0xff]
    %v64 = vld [vmem:[#allocation4 + $0x20] sm:$0xf]
    %v65 = vld [vmem:[#allocation4 + $0x24] sm:$0xff]
    %v66 = vld [vmem:[#allocation4 + $0x2c] sm:$0xff]
    %v67 = vld [vmem:[#allocation4 + $0x34] sm:$0xff]
    %v68 = vld [vmem:[#allocation4 + $0x3c] sm:$0xff]
    %v69 = vld [vmem:[#allocation4 + $0x44] sm:$0xf]
    %v70 = vld [vmem:[#allocation4 + $0x48] sm:$0xff]
    %v71 = vld [vmem:[#allocation4 + $0x50] sm:$0xff]
    %v72 = vld [vmem:[#allocation4 + $0x58] sm:$0xff]
    %v73 = vld [vmem:[#allocation4 + $0x60] sm:$0xff]
    %v74 = vld [vmem:[#allocation4 + $0x68] sm:$0xf]
    %v75 = vld [vmem:[#allocation4 + $0x6c] sm:$0xff]
    %v76 = vld [vmem:[#allocation4 + $0x74] sm:$0xff]
    %v77 = vld [vmem:[#allocation4 + $0x7c] sm:$0xff]
    %v78 = vld [vmem:[#allocation4 + $0x84] sm:$0xff]
    %v79 = vld [vmem:[#allocation4 + $0x8c] sm:$0xf]
    %v80 = vld [vmem:[#allocation4 + $0x90] sm:$0xff]
    %v81 = vld [vmem:[#allocation4 + $0x98] sm:$0xff]
    %v82 = vld [vmem:[#allocation4 + $0xa0] sm:$0xff]
    %v83 = vld [vmem:[#allocation4 + $0xa8] sm:$0xff]
    %v84 = vld [vmem:[#allocation4 + $0xb0] sm:$0xf]
    %v85 = vld [vmem:[#allocation4 + $0xb4] sm:$0xff]
    %v86 = vld [vmem:[#allocation4 + $0xbc] sm:$0xff]
    %v87 = vld [vmem:[#allocation4 + $0xc4] sm:$0xff]
    %v88 = vld [vmem:[#allocation4 + $0xcc] sm:$0xff]
    %v89 = vld [vmem:[#allocation4 + $0xd4] sm:$0xf]
    %v90 = vld [vmem:[#allocation4 + $0xd8] sm:$0xff]
    %v91 = vld [vmem:[#allocation4 + $0xe0] sm:$0xff]
    %v92 = vld [vmem:[#allocation4 + $0xe8] sm:$0xff]
    %v93 = vld [vmem:[#allocation4 + $0xf0] sm:$0xff]
    %v94 = vld [vmem:[#allocation4 + $0xf8] sm:$0xf]
    %v95 = vld [vmem:[#allocation4 + $0xfc] sm:$0xff]
    %v96 = vld [vmem:[#allocation4 + $0x104] sm:$0xff]
    %v97 = vld [vmem:[#allocation4 + $0x10c] sm:$0xff]
    %v98 = vld [vmem:[#allocation4 + $0x114] sm:$0xff]
    %v99 = vld [vmem:[#allocation4 + $0x11c] sm:$0xf]
    %v100 = vld [vmem:[#allocation4 + $0x120] sm:$0xff]
    %v101 = vld [vmem:[#allocation4 + $0x128] sm:$0xff]
    %v102 = vld [vmem:[#allocation4 + $0x130] sm:$0xff]
    %v103 = vld [vmem:[#allocation4 + $0x138] sm:$0xff]
    %v104 = vld [vmem:[#allocation4 + $0x140] sm:$0xf]
    %v105 = vld [vmem:[#allocation4 + $0x144] sm:$0xff]
    %v106 = vld [vmem:[#allocation4 + $0x14c] sm:$0xff]
    %v107 = vld [vmem:[#allocation4 + $0x154] sm:$0xff]
    %v108 = vld [vmem:[#allocation4 + $0x15c] sm:$0xff]
    %v109 = vld [vmem:[#allocation4 + $0x164] sm:$0xf]
    %v110 = vld [vmem:[#allocation4 + $0x168] sm:$0xff]
    %v111 = vld [vmem:[#allocation4 + $0x170] sm:$0xff]
    %v112 = vld [vmem:[#allocation4 + $0x178] sm:$0xff]
    %v113 = vld [vmem:[#allocation4 + $0x180] sm:$0xff]
    %v114 = vld [vmem:[#allocation4 + $0x188] sm:$0xf]
    %v115 = vld [vmem:[#allocation4 + $0x18c] sm:$0xff]
    %v116 = vld [vmem:[#allocation4 + $0x194] sm:$0xff]
    %v117 = vld [vmem:[#allocation4 + $0x19c] sm:$0xff]
    %v118 = vld [vmem:[#allocation4 + $0x1a4] sm:$0xff]
    %v119 = vld [vmem:[#allocation4 + $0x1ac] sm:$0xf]
    %v120 = vld [vmem:[#allocation4 + $0x1b0] sm:$0xff]
    %v121 = vld [vmem:[#allocation4 + $0x1b8] sm:$0xff]
    %v122 = vld [vmem:[#allocation4 + $0x1c0] sm:$0xff]
    %v123 = vld [vmem:[#allocation4 + $0x1c8] sm:$0xff]
    %v124 = vld [vmem:[#allocation4 + $0x1d0] sm:$0xf]
    %v125 = vld [vmem:[#allocation4 + $0x1d4] sm:$0xff]
    %v126 = vld [vmem:[#allocation4 + $0x1dc] sm:$0xff]
    %v127 = vld [vmem:[#allocation4 + $0x1e4] sm:$0xff]
    %v128 = vld [vmem:[#allocation4 + $0x1ec] sm:$0xff]
    %v129 = vld [vmem:[#allocation4 + $0x1f4] sm:$0xf]
    %v130 = vld [vmem:[#allocation4 + $0x1f8] sm:$0xff]
    %v131 = vld [vmem:[#allocation4 + $0x200] sm:$0xff]
    %v132 = vld [vmem:[#allocation4 + $0x208] sm:$0xff]
    %v133 = vld [vmem:[#allocation4 + $0x210] sm:$0xff]
    %v134 = vld [vmem:[#allocation4 + $0x218] sm:$0xf]
    %v135 = vld [vmem:[#allocation4 + $0x21c] sm:$0xff]
    %v136 = vld [vmem:[#allocation4 + $0x224] sm:$0xff]
    %v137 = vld [vmem:[#allocation4 + $0x22c] sm:$0xff]
    %v138 = vld [vmem:[#allocation4 + $0x234] sm:$0xff]
    %v139 = vld [vmem:[#allocation4 + $0x23c] sm:$0xf]
    %v140 = vld [vmem:[#allocation4 + $0x240] sm:$0xff]
    %v141 = vld [vmem:[#allocation4 + $0x248] sm:$0xff]
    %v142 = vld [vmem:[#allocation4 + $0x250] sm:$0xff]
    %v143 = vld [vmem:[#allocation4 + $0x258] sm:$0xff]
    %v144 = vld [vmem:[#allocation4 + $0x260] sm:$0xf]
    %v145 = vld [vmem:[#allocation4 + $0x264] sm:$0xff]
    %v146 = vld [vmem:[#allocation4 + $0x26c] sm:$0xff]
    %v147 = vld [vmem:[#allocation4 + $0x274] sm:$0xff]
    %v148 = vld [vmem:[#allocation4 + $0x27c] sm:$0xff]
    %v149 = vld [vmem:[#allocation4 + $0x284] sm:$0xf]
    %v150 = vld [vmem:[#allocation4 + $0x288] sm:$0xff]
    %v151 = vld [vmem:[#allocation4 + $0x290] sm:$0xff]
    %v152 = vld [vmem:[#allocation4 + $0x298] sm:$0xff]
    %v153 = vld [vmem:[#allocation4 + $0x2a0] sm:$0xff]
    %v154 = vld [vmem:[#allocation4 + $0x2a8] sm:$0xf]
    %v155 = vld [vmem:[#allocation4 + $0x2ac] sm:$0xff]
    %v156 = vld [vmem:[#allocation4 + $0x2b4] sm:$0xff]
    %v157 = vld [vmem:[#allocation4 + $0x2bc] sm:$0xff]
    %v158 = vld [vmem:[#allocation4 + $0x2c4] sm:$0xff]
    %v159 = vld [vmem:[#allocation4 + $0x2cc] sm:$0xf]
    %v160 = vld [vmem:[#allocation4 + $0x2d0] sm:$0xff]
    %v161 = vld [vmem:[#allocation4 + $0x2d8] sm:$0xff]
    %v162 = vld [vmem:[#allocation4 + $0x2e0] sm:$0xff]
    %v163 = vld [vmem:[#allocation4 + $0x2e8] sm:$0xff]
    %v164 = vld [vmem:[#allocation4 + $0x2f0] sm:$0xf]
    %v165 = vld [vmem:[#allocation4 + $0x2f4] sm:$0xff]
    %v166 = vld [vmem:[#allocation4 + $0x2fc] sm:$0xff]
    %v167 = vld [vmem:[#allocation4 + $0x304] sm:$0xff]
    %v168 = vld [vmem:[#allocation4 + $0x30c] sm:$0xff]
    %v169 = vld [vmem:[#allocation4 + $0x314] sm:$0xf]
    %v170 = vld [vmem:[#allocation4 + $0x318] sm:$0xff]
    %v171 = vld [vmem:[#allocation4 + $0x320] sm:$0xff]
    %v172 = vld [vmem:[#allocation4 + $0x328] sm:$0xff]
    %v173 = vld [vmem:[#allocation4 + $0x330] sm:$0xff]
    %v174 = vld [vmem:[#allocation4 + $0x338] sm:$0xf]
    %v175 = vld [vmem:[#allocation4 + $0x33c] sm:$0xff]
    %v176 = vld [vmem:[#allocation4 + $0x344] sm:$0xff]
    %v177 = vld [vmem:[#allocation4 + $0x34c] sm:$0xff]
    %v178 = vld [vmem:[#allocation4 + $0x354] sm:$0xff]
    %v179 = vld [vmem:[#allocation4 + $0x35c] sm:$0xf]
    %v180 = vld [vmem:[#allocation4 + $0x360] sm:$0xff]
    %v181 = vld [vmem:[#allocation4 + $0x368] sm:$0xff]
    %v182 = vld [vmem:[#allocation4 + $0x370] sm:$0xff]
    %v183 = vld [vmem:[#allocation4 + $0x378] sm:$0xff]
    %v184 = vld [vmem:[#allocation4 + $0x380] sm:$0xf]
    %v185 = vld [vmem:[#allocation4 + $0x384] sm:$0xff]
    %v186 = vld [vmem:[#allocation4 + $0x38c] sm:$0xff]
    %v187 = vld [vmem:[#allocation4 + $0x394] sm:$0xff]
    %v188 = vld [vmem:[#allocation4 + $0x39c] sm:$0xff]
    %v189 = vld [vmem:[#allocation4 + $0x3a4] sm:$0xf]
    %v190 = vld [vmem:[#allocation4 + $0x3a8] sm:$0xff]
    %v191 = vld [vmem:[#allocation4 + $0x3b0] sm:$0xff]
    %v192 = vld [vmem:[#allocation4 + $0x3b8] sm:$0xff]
    %v193 = vld [vmem:[#allocation4 + $0x3c0] sm:$0xff]
    %v194 = vld [vmem:[#allocation4 + $0x3c8] sm:$0xf]
    %v195 = vld [vmem:[#allocation4 + $0x3cc] sm:$0xff]
    %v196 = vld [vmem:[#allocation4 + $0x3d4] sm:$0xff]
    %v197 = vld [vmem:[#allocation4 + $0x3dc] sm:$0xff]
    %v198 = vld [vmem:[#allocation4 + $0x3e4] sm:$0xff]
    %v199 = vld [vmem:[#allocation4 + $0x3ec] sm:$0xf]
    %v200 = vld [vmem:[#allocation4 + $0x3f0] sm:$0xff]
    %v201 = vld [vmem:[#allocation4 + $0x3f8] sm:$0xff]
    %v202 = vld [vmem:[#allocation4 + $0x400] sm:$0xff]
    %v203 = vld [vmem:[#allocation4 + $0x408] sm:$0xff]
    %v204 = vld [vmem:[#allocation4 + $0x410] sm:$0xf]
    %v205 = vld [vmem:[#allocation4 + $0x414] sm:$0xff]
    %v206 = vld [vmem:[#allocation4 + $0x41c] sm:$0xff]
    %v207 = vld [vmem:[#allocation4 + $0x424] sm:$0xff]
    %v208 = vld [vmem:[#allocation4 + $0x42c] sm:$0xff]
    %v209 = vld [vmem:[#allocation4 + $0x434] sm:$0xf]
    %v210 = vld [vmem:[#allocation4 + $0x438] sm:$0xff]
    %v211 = vld [vmem:[#allocation4 + $0x440] sm:$0xff]
    %v212 = vld [vmem:[#allocation4 + $0x448] sm:$0xff]
    %v213 = vld [vmem:[#allocation4 + $0x450] sm:$0xff]
    %v214 = vld [vmem:[#allocation4 + $0x458] sm:$0xf]
    %v215 = vld [vmem:[#allocation4 + $0x45c] sm:$0xff]
    %v216 = vld [vmem:[#allocation4 + $0x464] sm:$0xff]
    %v217 = vld [vmem:[#allocation4 + $0x46c] sm:$0xff]
    %v218 = vld [vmem:[#allocation4 + $0x474] sm:$0xff]
    %v219 = vld [vmem:[#allocation4 + $0x47c] sm:$0xf]
    %v220 = vld [vmem:[#allocation4 + $0x480] sm:$0xff]
    %v221 = vld [vmem:[#allocation4 + $0x488] sm:$0xff]
    %v222 = vld [vmem:[#allocation4 + $0x490] sm:$0xff]
    %v223 = vld [vmem:[#allocation4 + $0x498] sm:$0xff]
    %v224 = vld [vmem:[#allocation4 + $0x4a0] sm:$0xf]
    %v225 = vld [vmem:[#allocation4 + $0x4a4] sm:$0xff]
    %v226 = vld [vmem:[#allocation4 + $0x4ac] sm:$0xff]
    %v227 = vld [vmem:[#allocation4 + $0x4b4] sm:$0xff]
    %v228 = vld [vmem:[#allocation4 + $0x4bc] sm:$0xff]
    %v229 = vld [vmem:[#allocation4 + $0x4c4] sm:$0xf]
    %v230 = vld [vmem:[#allocation4 + $0x4c8] sm:$0xff]
    %v231 = vld [vmem:[#allocation4 + $0x4d0] sm:$0xff]
    %v232 = vld [vmem:[#allocation4 + $0x4d8] sm:$0xff]
    %v233 = vld [vmem:[#allocation4 + $0x4e0] sm:$0xff]
    %v234 = vld [vmem:[#allocation4 + $0x4e8] sm:$0xf]
    %v235 = vld [vmem:[#allocation4 + $0x4ec] sm:$0xff]
    %v236 = vld [vmem:[#allocation4 + $0x4f4] sm:$0xff]
    %v237 = vld [vmem:[#allocation4 + $0x4fc] sm:$0xff]
    %v238 = vld [vmem:[#allocation4 + $0x504] sm:$0xff]
    %v239 = vld [vmem:[#allocation4 + $0x50c] sm:$0xf]
    %v240 = vld [vmem:[#allocation4 + $0x510] sm:$0xff]
    %v241 = vld [vmem:[#allocation4 + $0x518] sm:$0xff]
    %v242 = vld [vmem:[#allocation4 + $0x520] sm:$0xff]
    %v243 = vld [vmem:[#allocation4 + $0x528] sm:$0xff]
    %v244 = vld [vmem:[#allocation4 + $0x530] sm:$0xf]
    %v245 = vld [vmem:[#allocation4 + $0x534] sm:$0xff]
    %v246 = vld [vmem:[#allocation4 + $0x53c] sm:$0xff]
    %v247 = vld [vmem:[#allocation4 + $0x544] sm:$0xff]
    %v248 = vld [vmem:[#allocation4 + $0x54c] sm:$0xff]
    %v249 = vld [vmem:[#allocation4 + $0x554] sm:$0xf]
    %v250 = vld [vmem:[#allocation4 + $0x558] sm:$0xff]
    %v251 = vld [vmem:[#allocation4 + $0x560] sm:$0xff]
    %v252 = vld [vmem:[#allocation4 + $0x568] sm:$0xff]
    %v253 = vld [vmem:[#allocation4 + $0x570] sm:$0xff]
    %v254 = vld [vmem:[#allocation4 + $0x578] sm:$0xf]
    %v255 = vld [vmem:[#allocation4 + $0x57c] sm:$0xff]
    %v256 = vld [vmem:[#allocation4 + $0x584] sm:$0xff]
    %v257 = vld [vmem:[#allocation4 + $0x58c] sm:$0xff]
    %v258 = vld [vmem:[#allocation4 + $0x594] sm:$0xff]
    %v259 = vld [vmem:[#allocation4 + $0x59c] sm:$0xf]
    %v260 = vld [vmem:[#allocation4 + $0x5a0] sm:$0xff]
    %v261 = vld [vmem:[#allocation4 + $0x5a8] sm:$0xff]
    %v262 = vld [vmem:[#allocation4 + $0x5b0] sm:$0xff]
    %v263 = vld [vmem:[#allocation4 + $0x5b8] sm:$0xff]
    %v264 = vld [vmem:[#allocation4 + $0x5c0] sm:$0xf]
    %v265 = vld [vmem:[#allocation4 + $0x5c4] sm:$0xff]
    %v266 = vld [vmem:[#allocation4 + $0x5cc] sm:$0xff]
    %v267 = vld [vmem:[#allocation4 + $0x5d4] sm:$0xff]
    %v268 = vld [vmem:[#allocation4 + $0x5dc] sm:$0xff]
    %v269 = vld [vmem:[#allocation4 + $0x5e4] sm:$0xf]
    %v270 = vld [vmem:[#allocation4 + $0x5e8] sm:$0xff]
    %v271 = vld [vmem:[#allocation4 + $0x5f0] sm:$0xff]
    %v272 = vld [vmem:[#allocation4 + $0x5f8] sm:$0xff]
    %v273 = vld [vmem:[#allocation4 + $0x600] sm:$0xff]
    %v274 = vld [vmem:[#allocation4 + $0x608] sm:$0xf]
    %v275 = vld [vmem:[#allocation4 + $0x60c] sm:$0xff]
    %v276 = vld [vmem:[#allocation4 + $0x614] sm:$0xff]
    %v277 = vld [vmem:[#allocation4 + $0x61c] sm:$0xff]
    %v278 = vld [vmem:[#allocation4 + $0x624] sm:$0xff]
    %v279 = vld [vmem:[#allocation4 + $0x62c] sm:$0xf]
    %v280 = vld [vmem:[#allocation4 + $0x630] sm:$0xff]
    %v281 = vld [vmem:[#allocation4 + $0x638] sm:$0xff]
    %v282 = vld [vmem:[#allocation4 + $0x640] sm:$0xff]
    %v283 = vld [vmem:[#allocation4 + $0x648] sm:$0xff]
    %v284 = vld [vmem:[#allocation4 + $0x650] sm:$0xf]
    %v285 = vld [vmem:[#allocation4 + $0x654] sm:$0xff]
    %v286 = vld [vmem:[#allocation4 + $0x65c] sm:$0xff]
    %v287 = vld [vmem:[#allocation4 + $0x664] sm:$0xff]
    %v288 = vld [vmem:[#allocation4 + $0x66c] sm:$0xff]
    %v289 = vld [vmem:[#allocation4 + $0x674] sm:$0xf]
    %v290 = vld [vmem:[#allocation4 + $0x678] sm:$0xff]
    %v291 = vld [vmem:[#allocation4 + $0x680] sm:$0xff]
    %v292 = vld [vmem:[#allocation4 + $0x688] sm:$0xff]
    %v293 = vld [vmem:[#allocation4 + $0x690] sm:$0xff]
    %v294 = vld [vmem:[#allocation4 + $0x698] sm:$0xf]
    %v295 = vld [vmem:[#allocation4 + $0x69c] sm:$0xff]
    %v296 = vld [vmem:[#allocation4 + $0x6a4] sm:$0xff]
    %v297 = vld [vmem:[#allocation4 + $0x6ac] sm:$0xff]
    %v298 = vld [vmem:[#allocation4 + $0x6b4] sm:$0xff]
    %v299 = vld [vmem:[#allocation4 + $0x6bc] sm:$0xf]
    %v300 = vld [vmem:[%s8] sm:$0xff]
    %v301 = vld [vmem:[%s8 + $0x8] sm:$0x1]
    %v302 = vld [vmem:[%s9] sm:$0x3f]
    %v303 = vld [vmem:[%s10] sm:$0x7]
    %305 = vset.pattern.permute.xlu0 0
    %306 = vperm.xlu0 %305, %v56
    %v307 = vpop.permute.xlu0 %306
    %v310 = vlaneseq
    %v311 = vshrl.u32 %v310, 7
    %v312 = vsub.s32 0, %v311
    %v313 = vrot.slane %v302, %v312
    %v314 = vlaneseq
    %v315 = vshrl.u32 %v314, 7
    %v316 = vsub.s32 2, %v315
    %v317 = vrot.slane %v302, %v316
    %v318 = vlaneseq
    %v319 = vshrl.u32 %v318, 7
    %v320 = vsub.s32 4, %v319
    %v321 = vrot.slane %v302, %v320
    %v325 = vlaneseq
    %v326 = vshrl.u32 %v325, 7
    %v327 = vsub.s32 0, %v326
    %v328 = vrot.slane %v313, %v327
    %v329 = vlaneseq
    %v330 = vshrl.u32 %v329, 7
    %v331 = vsub.s32 0, %v330
    %v332 = vrot.slane %v317, %v331
    %v333 = vlaneseq
    %v334 = vshrl.u32 %v333, 7
    %v335 = vsub.s32 0, %v334
    %v336 = vrot.slane %v321, %v335
    %v337 = vmul.f32 %v307, %v328
    %v338 = vmul.f32 %v307, %v332
    %v339 = vmul.f32 %v307, %v336
    %340 = vset.pattern.permute.xlu0 1
    %341 = vperm.xlu0 %340, %v56
    %v342 = vpop.permute.xlu0 %341
    %v344 = vlaneseq
    %v345 = vshrl.u32 %v344, 7
    %v346 = vsub.s32 1, %v345
    %v347 = vrot.slane %v302, %v346
    %v348 = vlaneseq
    %v349 = vshrl.u32 %v348, 7
    %v350 = vsub.s32 3, %v349
    %v351 = vrot.slane %v302, %v350
    %v352 = vlaneseq
    %v353 = vshrl.u32 %v352, 7
    %v354 = vsub.s32 5, %v353
    %v355 = vrot.slane %v302, %v354
    %v359 = vlaneseq
    %v360 = vshrl.u32 %v359, 7
    %v361 = vsub.s32 1, %v360
    %v362 = vrot.slane %v347, %v361
    %v363 = vlaneseq
    %v364 = vshrl.u32 %v363, 7
    %v365 = vsub.s32 1, %v364
    %v366 = vrot.slane %v351, %v365
    %v367 = vlaneseq
    %v368 = vshrl.u32 %v367, 7
    %v369 = vsub.s32 1, %v368
    %v370 = vrot.slane %v355, %v369
    %v371 = vmul.f32 %v342, %v362
    %v372 = vmul.f32 %v342, %v366
    %v373 = vmul.f32 %v342, %v370
    %v374 = vadd.f32 %v337, %v371
    %v375 = vadd.f32 %v338, %v372
    %v376 = vadd.f32 %v339, %v373
    %v378 = vlaneseq
    %v379 = vshrl.u32 %v378, 7
    %v380 = vsub.s32 0, %v379
    %v381 = vrot.slane %v303, %v380
    %v382 = vlaneseq
    %v383 = vshrl.u32 %v382, 7
    %v384 = vsub.s32 1, %v383
    %v385 = vrot.slane %v303, %v384
    %v386 = vlaneseq
    %v387 = vshrl.u32 %v386, 7
    %v388 = vsub.s32 2, %v387
    %v389 = vrot.slane %v303, %v388
    %v393 = vadd.f32 %v374, %v381
    %v394 = vadd.f32 %v375, %v385
    %v395 = vadd.f32 %v376, %v389
    %v396 = vld [vmem:[%s0] sm:$0xff]
    %v397 = vld [vmem:[%s0 + $0x8] sm:$0xff]
    %v398 = vld [vmem:[%s0 + $0x10] sm:$0xff]
    %v399 = vld [vmem:[%s0 + $0x18] sm:$0xff]
    %v400 = vld [vmem:[%s0 + $0x20] sm:$0xff]
    %v401 = vld [vmem:[%s0 + $0x28] sm:$0xff]
    %v402 = vld [vmem:[%s0 + $0x30] sm:$0xff]
    %v403 = vld [vmem:[%s0 + $0x38] sm:$0xff]
    %v404 = vld [vmem:[%s0 + $0x40] sm:$0xff]
    %v405 = vld [vmem:[%s0 + $0x48] sm:$0xff]
    %v406 = vpack.c.bf16 %v397, %v396
    %v407 = vpack.c.bf16 %v399, %v398
    %v408 = vpack.c.bf16 %v401, %v400
    %v409 = vpack.c.bf16 %v403, %v402
    %v410 = vpack.c.bf16 %v405, %v404
    %v411 = vld [vmem:[%s5] sm:$0xff]
    %v412 = vld [vmem:[%s5 + $0x8] sm:$0xff]
    %v413 = vld [vmem:[%s5 + $0x10] sm:$0xff]
    %v414 = vld [vmem:[%s5 + $0x18] sm:$0xff]
    %v415 = vld [vmem:[%s5 + $0x20] sm:$0xf]
    %v416 = vld [vmem:[%s5 + $0x24] sm:$0xff]
    %v417 = vld [vmem:[%s5 + $0x2c] sm:$0xff]
    %v418 = vld [vmem:[%s5 + $0x34] sm:$0xff]
    %v419 = vld [vmem:[%s5 + $0x3c] sm:$0xff]
    %v420 = vld [vmem:[%s5 + $0x44] sm:$0xf]
    %v421 = vld [vmem:[%s5 + $0x48] sm:$0xff]
    %v422 = vld [vmem:[%s5 + $0x50] sm:$0xff]
    %v423 = vld [vmem:[%s5 + $0x58] sm:$0xff]
    %v424 = vld [vmem:[%s5 + $0x60] sm:$0xff]
    %v425 = vld [vmem:[%s5 + $0x68] sm:$0xf]
    %v426 = vld [vmem:[%s5 + $0x6c] sm:$0xff]
    %v427 = vld [vmem:[%s5 + $0x74] sm:$0xff]
    %v428 = vld [vmem:[%s5 + $0x7c] sm:$0xff]
    %v429 = vld [vmem:[%s5 + $0x84] sm:$0xff]
    %v430 = vld [vmem:[%s5 + $0x8c] sm:$0xf]
    %v431 = vld [vmem:[%s5 + $0x90] sm:$0xff]
    %v432 = vld [vmem:[%s5 + $0x98] sm:$0xff]
    %v433 = vld [vmem:[%s5 + $0xa0] sm:$0xff]
    %v434 = vld [vmem:[%s5 + $0xa8] sm:$0xff]
    %v435 = vld [vmem:[%s5 + $0xb0] sm:$0xf]
    %v436 = vld [vmem:[%s5 + $0xb4] sm:$0xff]
    %v437 = vld [vmem:[%s5 + $0xbc] sm:$0xff]
    %v438 = vld [vmem:[%s5 + $0xc4] sm:$0xff]
    %v439 = vld [vmem:[%s5 + $0xcc] sm:$0xff]
    %v440 = vld [vmem:[%s5 + $0xd4] sm:$0xf]
    %v441 = vld [vmem:[%s5 + $0xd8] sm:$0xff]
    %v442 = vld [vmem:[%s5 + $0xe0] sm:$0xff]
    %v443 = vld [vmem:[%s5 + $0xe8] sm:$0xff]
    %v444 = vld [vmem:[%s5 + $0xf0] sm:$0xff]
    %v445 = vld [vmem:[%s5 + $0xf8] sm:$0xf]
    %v446 = vld [vmem:[%s5 + $0xfc] sm:$0xff]
    %v447 = vld [vmem:[%s5 + $0x104] sm:$0xff]
    %v448 = vld [vmem:[%s5 + $0x10c] sm:$0xff]
    %v449 = vld [vmem:[%s5 + $0x114] sm:$0xff]
    %v450 = vld [vmem:[%s5 + $0x11c] sm:$0xf]
    %v451 = vld [vmem:[%s7] sm:$0xff]
    %v452 = vld [vmem:[%s7 + $0x8] sm:$0x1]
    %v455 = vlaneseq
    %v456 = vshrl.u32 %v455, 7
    %v457 = vsub.s32 0, %v456
    %v458 = vrot.slane %v451, %v457
    %v459 = vlaneseq
    %v460 = vshrl.u32 %v459, 7
    %v461 = vsub.s32 1, %v460
    %v462 = vrot.slane %v451, %v461
    %v463 = vlaneseq
    %v464 = vshrl.u32 %v463, 7
    %v465 = vsub.s32 2, %v464
    %v466 = vrot.slane %v451, %v465
    %v467 = vlaneseq
    %v468 = vshrl.u32 %v467, 7
    %v469 = vsub.s32 3, %v468
    %v470 = vrot.slane %v451, %v469
    %v471 = vlaneseq
    %v472 = vshrl.u32 %v471, 7
    %v473 = vsub.s32 4, %v472
    %v474 = vrot.slane %v451, %v473
    %v475 = vlaneseq
    %v476 = vshrl.u32 %v475, 7
    %v477 = vsub.s32 5, %v476
    %v478 = vrot.slane %v451, %v477
    %v479 = vlaneseq
    %v480 = vshrl.u32 %v479, 7
    %v481 = vsub.s32 6, %v480
    %v482 = vrot.slane %v451, %v481
    %v483 = vlaneseq
    %v484 = vshrl.u32 %v483, 7
    %v485 = vsub.s32 7, %v484
    %v486 = vrot.slane %v451, %v485
    %v487 = vlaneseq
    %v488 = vshrl.u32 %v487, 7
    %v489 = vsub.s32 0, %v488
    %v490 = vrot.slane %v452, %v489
    %v540 = vunpack.c.l.b16 %v411
    %v541 = vunpack.c.h.b16 %v411
    %v542 = vunpack.c.l.b16 %v412
    %v543 = vunpack.c.h.b16 %v412
    %v544 = vunpack.c.l.b16 %v413
    %v545 = vunpack.c.h.b16 %v413
    %v546 = vunpack.c.l.b16 %v414
    %v547 = vunpack.c.h.b16 %v414
    %v548 = vunpack.c.l.b16 %v415
    %v549 = vunpack.c.l.b16 %v416
    %v550 = vunpack.c.h.b16 %v416
    %v551 = vunpack.c.l.b16 %v417
    %v552 = vunpack.c.h.b16 %v417
    %v553 = vunpack.c.l.b16 %v418
    %v554 = vunpack.c.h.b16 %v418
    %v555 = vunpack.c.l.b16 %v419
    %v556 = vunpack.c.h.b16 %v419
    %v557 = vunpack.c.l.b16 %v420
    %v558 = vunpack.c.l.b16 %v421
    %v559 = vunpack.c.h.b16 %v421
    %v560 = vunpack.c.l.b16 %v422
    %v561 = vunpack.c.h.b16 %v422
    %v562 = vunpack.c.l.b16 %v423
    %v563 = vunpack.c.h.b16 %v423
    %v564 = vunpack.c.l.b16 %v424
    %v565 = vunpack.c.h.b16 %v424
    %v566 = vunpack.c.l.b16 %v425
    %v567 = vunpack.c.l.b16 %v426
    %v568 = vunpack.c.h.b16 %v426
    %v569 = vunpack.c.l.b16 %v427
    %v570 = vunpack.c.h.b16 %v427
    %v571 = vunpack.c.l.b16 %v428
    %v572 = vunpack.c.h.b16 %v428
    %v573 = vunpack.c.l.b16 %v429
    %v574 = vunpack.c.h.b16 %v429
    %v575 = vunpack.c.l.b16 %v430
    %v576 = vunpack.c.l.b16 %v431
    %v577 = vunpack.c.h.b16 %v431
    %v578 = vunpack.c.l.b16 %v432
    %v579 = vunpack.c.h.b16 %v432
    %v580 = vunpack.c.l.b16 %v433
    %v581 = vunpack.c.h.b16 %v433
    %v582 = vunpack.c.l.b16 %v434
    %v583 = vunpack.c.h.b16 %v434
    %v584 = vunpack.c.l.b16 %v435
    %v585 = vunpack.c.l.b16 %v436
    %v586 = vunpack.c.h.b16 %v436
    %v587 = vunpack.c.l.b16 %v437
    %v588 = vunpack.c.h.b16 %v437
    %v589 = vunpack.c.l.b16 %v438
    %v590 = vunpack.c.h.b16 %v438
    %v591 = vunpack.c.l.b16 %v439
    %v592 = vunpack.c.h.b16 %v439
    %v593 = vunpack.c.l.b16 %v440
    %v594 = vunpack.c.l.b16 %v441
    %v595 = vunpack.c.h.b16 %v441
    %v596 = vunpack.c.l.b16 %v442
    %v597 = vunpack.c.h.b16 %v442
    %v598 = vunpack.c.l.b16 %v443
    %v599 = vunpack.c.h.b16 %v443
    %v600 = vunpack.c.l.b16 %v444
    %v601 = vunpack.c.h.b16 %v444
    %v602 = vunpack.c.l.b16 %v445
    %v603 = vunpack.c.l.b16 %v446
    %v604 = vunpack.c.h.b16 %v446
    %v605 = vunpack.c.l.b16 %v447
    %v606 = vunpack.c.h.b16 %v447
    %v607 = vunpack.c.l.b16 %v448
    %v608 = vunpack.c.h.b16 %v448
    %v609 = vunpack.c.l.b16 %v449
    %v610 = vunpack.c.h.b16 %v449
    %v611 = vunpack.c.l.b16 %v450
    %v612 = vpack.c.b16 %v549, %v540
    %v613 = vpack.c.b16 %v550, %v541
    %v614 = vpack.c.b16 %v551, %v542
    %v615 = vpack.c.b16 %v552, %v543
    %v616 = vpack.c.b16 %v553, %v544
    %v617 = vpack.c.b16 %v554, %v545
    %v618 = vpack.c.b16 %v555, %v546
    %v619 = vpack.c.b16 %v556, %v547
    %v620 = vpack.c.b16 %v557, %v548
    %v621 = vpack.c.b16 %v567, %v558
    %v622 = vpack.c.b16 %v568, %v559
    %v623 = vpack.c.b16 %v569, %v560
    %v624 = vpack.c.b16 %v570, %v561
    %v625 = vpack.c.b16 %v571, %v562
    %v626 = vpack.c.b16 %v572, %v563
    %v627 = vpack.c.b16 %v573, %v564
    %v628 = vpack.c.b16 %v574, %v565
    %v629 = vpack.c.b16 %v575, %v566
    %v630 = vpack.c.b16 %v585, %v576
    %v631 = vpack.c.b16 %v586, %v577
    %v632 = vpack.c.b16 %v587, %v578
    %v633 = vpack.c.b16 %v588, %v579
    %v634 = vpack.c.b16 %v589, %v580
    %v635 = vpack.c.b16 %v590, %v581
    %v636 = vpack.c.b16 %v591, %v582
    %v637 = vpack.c.b16 %v592, %v583
    %v638 = vpack.c.b16 %v593, %v584
    %v639 = vpack.c.b16 %v603, %v594
    %v640 = vpack.c.b16 %v604, %v595
    %v641 = vpack.c.b16 %v605, %v596
    %v642 = vpack.c.b16 %v606, %v597
    %v643 = vpack.c.b16 %v607, %v598
    %v644 = vpack.c.b16 %v608, %v599
    %v645 = vpack.c.b16 %v609, %v600
    %v646 = vpack.c.b16 %v610, %v601
    %v647 = vpack.c.b16 %v611, %v602
    %vm684 = vcmask 523264
    %v686 = vsel %vm684, %v406, 0
    %v689 = vsel %vm684, %v407, 0
    %v692 = vsel %vm684, %v408, 0
    %v695 = vsel %vm684, %v409, 0
    %v698 = vsel %vm684, %v410, 0
    %700 = vmatprep.subr.bf16.mxu0 %v613
    %701 = vmatpush1.bf16.msra.mxu0 %v612
    %702 = vmatprep.subr.bf16.mxu0 %v622
    %703 = vmatpush1.bf16.msra.mxu0 %v621
    %704 = vmatprep.subr.bf16.mxu0 %v631
    %705 = vmatpush1.bf16.msra.mxu0 %v630
    %706 = vmatprep.subr.bf16.mxu0 %v640
    %707 = vmatpush1.bf16.msra.mxu0 %v639
    %708 = vmatprep.subr.bf16.mxu0 0
    %709 = vmatpush1.bf16.msra.mxu0 0
    %710 = vmatprep.subr.bf16.mxu0 0
    %711 = vmatpush1.bf16.msra.mxu0 0
    %712 = vmatprep.subr.bf16.mxu0 0
    %713 = vmatpush1.bf16.msra.mxu0 0
    %714 = vmatprep.subr.bf16.mxu0 0
    %715 = vmatpush1.bf16.msra.mxu0 0
    %716 = vmatprep.subr.bf16.mxu0 0
    %717 = vmatpush1.bf16.msra.mxu0 0
    %718 = vmatprep.subr.bf16.mxu0 0
    %719 = vmatpush1.bf16.msra.mxu0 0
    %720 = vmatprep.subr.bf16.mxu0 0
    %721 = vmatpush1.bf16.msra.mxu0 0
    %722 = vmatprep.subr.bf16.mxu0 0
    %723 = vmatpush1.bf16.msra.mxu0 0
    %724 = vmatprep.subr.bf16.mxu0 0
    %725 = vmatpush1.bf16.msra.mxu0 0
    %726 = vmatprep.subr.bf16.mxu0 0
    %727 = vmatpush1.bf16.msra.mxu0 0
    %728 = vmatprep.subr.bf16.mxu0 0
    %729 = vmatpush1.bf16.msra.mxu0 0
    %730 = vmatprep.subr.bf16.mxu0 0
    %731 = vmatpush1.bf16.msra.mxu0 0
    %732 = vmatprep.mubr.bf16.mxu0 0
    %733 = vmatmul.mubr.bf16.gmra.mrb[0].mxu0 %v686
    %v734 = vpop.f32.mrb[0].mxu0
    %v735 = vadd.f32 %v458, %v734
    %v736 = vpop.f32.mrb[0].mxu0
    %v737 = vadd.f32 %v462, %v736
    %v738 = vpop.f32.mrb[0].mxu0
    %v739 = vadd.f32 %v458, %v738
    %v740 = vpop.f32.mrb[0].mxu0
    %v741 = vadd.f32 %v462, %v740
    %742 = vmatprep.mubr.bf16.mxu0 0
    %743 = vmatmul.mubr.bf16.gmra.mrb[0].mxu0 %v689
    %v744 = vpop.f32.mrb[0].mxu0
    %v745 = vadd.f32 %v458, %v744
    %v746 = vpop.f32.mrb[0].mxu0
    %v747 = vadd.f32 %v462, %v746
    %v748 = vpop.f32.mrb[0].mxu0
    %v749 = vadd.f32 %v458, %v748
    %v750 = vpop.f32.mrb[0].mxu0
    %v751 = vadd.f32 %v462, %v750
    %752 = vmatprep.mubr.bf16.mxu0 0
    %753 = vmatmul.mubr.bf16.gmra.mrb[0].mxu0 %v692
    %v754 = vpop.f32.mrb[0].mxu0
    %v755 = vadd.f32 %v458, %v754
    %v756 = vpop.f32.mrb[0].mxu0
    %v757 = vadd.f32 %v462, %v756
    %v758 = vpop.f32.mrb[0].mxu0
    %v759 = vadd.f32 %v458, %v758
    %v760 = vpop.f32.mrb[0].mxu0
    %v761 = vadd.f32 %v462, %v760
    %762 = vmatprep.mubr.bf16.mxu0 0
    %763 = vmatmul.mubr.bf16.gmra.mrb[0].mxu0 %v695
    %v764 = vpop.f32.mrb[0].mxu0
    %v765 = vadd.f32 %v458, %v764
    %v766 = vpop.f32.mrb[0].mxu0
    %v767 = vadd.f32 %v462, %v766
    %v768 = vpop.f32.mrb[0].mxu0
    %v769 = vadd.f32 %v458, %v768
    %v770 = vpop.f32.mrb[0].mxu0
    %v771 = vadd.f32 %v462, %v770
    %772 = vmatprep.mubr.bf16.mxu0 0
    %773 = vmatmul.mubr.bf16.gmra.mrb[0].mxu0 %v698
    %v774 = vpop.f32.mrb[0].mxu0
    %v775 = vadd.f32 %v458, %v774
    %v776 = vpop.f32.mrb[0].mxu0
    %v777 = vadd.f32 %v462, %v776
    %v778 = vpop.f32.mrb[0].mxu0
    %v779 = vadd.f32 %v458, %v778
    %v780 = vpop.f32.mrb[0].mxu0
    %v781 = vadd.f32 %v462, %v780
    %782 = vdwg.mxu0
    %783 = vmatprep.subr.bf16.mxu0 %v615
    %784 = vmatpush1.bf16.msra.mxu0 %v614
    %785 = vmatprep.subr.bf16.mxu0 %v624
    %786 = vmatpush1.bf16.msra.mxu0 %v623
    %787 = vmatprep.subr.bf16.mxu0 %v633
    %788 = vmatpush1.bf16.msra.mxu0 %v632
    %789 = vmatprep.subr.bf16.mxu0 %v642
    %790 = vmatpush1.bf16.msra.mxu0 %v641
    %791 = vmatprep.subr.bf16.mxu0 0
    %792 = vmatpush1.bf16.msra.mxu0 0
    %793 = vmatprep.subr.bf16.mxu0 0
    %794 = vmatpush1.bf16.msra.mxu0 0
    %795 = vmatprep.subr.bf16.mxu0 0
    %796 = vmatpush1.bf16.msra.mxu0 0
    %797 = vmatprep.subr.bf16.mxu0 0
    %798 = vmatpush1.bf16.msra.mxu0 0
    %799 = vmatprep.subr.bf16.mxu0 0
    %800 = vmatpush1.bf16.msra.mxu0 0
    %801 = vmatprep.subr.bf16.mxu0 0
    %802 = vmatpush1.bf16.msra.mxu0 0
    %803 = vmatprep.subr.bf16.mxu0 0
    %804 = vmatpush1.bf16.msra.mxu0 0
    %805 = vmatprep.subr.bf16.mxu0 0
    %806 = vmatpush1.bf16.msra.mxu0 0
    %807 = vmatprep.subr.bf16.mxu0 0
    %808 = vmatpush1.bf16.msra.mxu0 0
    %809 = vmatprep.subr.bf16.mxu0 0
    %810 = vmatpush1.bf16.msra.mxu0 0
    %811 = vmatprep.subr.bf16.mxu0 0
    %812 = vmatpush1.bf16.msra.mxu0 0
    %813 = vmatprep.subr.bf16.mxu0 0
    %814 = vmatpush1.bf16.msra.mxu0 0
    %815 = vmatprep.mubr.bf16.mxu0 0
    %816 = vmatmul.mubr.bf16.gmra.mrb[0].mxu0 %v686
    %v817 = vpop.f32.mrb[0].mxu0
    %v818 = vadd.f32 %v466, %v817
    %v819 = vpop.f32.mrb[0].mxu0
    %v820 = vadd.f32 %v470, %v819
    %v821 = vpop.f32.mrb[0].mxu0
    %v822 = vadd.f32 %v466, %v821
    %v823 = vpop.f32.mrb[0].mxu0
    %v824 = vadd.f32 %v470, %v823
    %825 = vmatprep.mubr.bf16.mxu0 0
    %826 = vmatmul.mubr.bf16.gmra.mrb[0].mxu0 %v689
    %v827 = vpop.f32.mrb[0].mxu0
    %v828 = vadd.f32 %v466, %v827
    %v829 = vpop.f32.mrb[0].mxu0
    %v830 = vadd.f32 %v470, %v829
    %v831 = vpop.f32.mrb[0].mxu0
    %v832 = vadd.f32 %v466, %v831
    %v833 = vpop.f32.mrb[0].mxu0
    %v834 = vadd.f32 %v470, %v833
    %835 = vmatprep.mubr.bf16.mxu0 0
    %836 = vmatmul.mubr.bf16.gmra.mrb[0].mxu0 %v692
    %v837 = vpop.f32.mrb[0].mxu0
    %v838 = vadd.f32 %v466, %v837
    %v839 = vpop.f32.mrb[0].mxu0
    %v840 = vadd.f32 %v470, %v839
    %v841 = vpop.f32.mrb[0].mxu0
    %v842 = vadd.f32 %v466, %v841
    %v843 = vpop.f32.mrb[0].mxu0
    %v844 = vadd.f32 %v470, %v843
    %845 = vmatprep.mubr.bf16.mxu0 0
    %846 = vmatmul.mubr.bf16.gmra.mrb[0].mxu0 %v695
    %v847 = vpop.f32.mrb[0].mxu0
    %v848 = vadd.f32 %v466, %v847
    %v849 = vpop.f32.mrb[0].mxu0
    %v850 = vadd.f32 %v470, %v849
    %v851 = vpop.f32.mrb[0].mxu0
    %v852 = vadd.f32 %v466, %v851
    %v853 = vpop.f32.mrb[0].mxu0
    %v854 = vadd.f32 %v470, %v853
    %855 = vmatprep.mubr.bf16.mxu0 0
    %856 = vmatmul.mubr.bf16.gmra.mrb[0].mxu0 %v698
    %v857 = vpop.f32.mrb[0].mxu0
    %v858 = vadd.f32 %v466, %v857
    %v859 = vpop.f32.mrb[0].mxu0
    %v860 = vadd.f32 %v470, %v859
    %v861 = vpop.f32.mrb[0].mxu0
    %v862 = vadd.f32 %v466, %v861
    %v863 = vpop.f32.mrb[0].mxu0
    %v864 = vadd.f32 %v470, %v863
    %865 = vdwg.mxu0
    %866 = vmatprep.subr.bf16.mxu0 %v617
    %867 = vmatpush1.bf16.msra.mxu0 %v616
    %868 = vmatprep.subr.bf16.mxu0 %v626
    %869 = vmatpush1.bf16.msra.mxu0 %v625
    %870 = vmatprep.subr.bf16.mxu0 %v635
    %871 = vmatpush1.bf16.msra.mxu0 %v634
    %872 = vmatprep.subr.bf16.mxu0 %v644
    %873 = vmatpush1.bf16.msra.mxu0 %v643
    %874 = vmatprep.subr.bf16.mxu0 0
    %875 = vmatpush1.bf16.msra.mxu0 0
    %876 = vmatprep.subr.bf16.mxu0 0
    %877 = vmatpush1.bf16.msra.mxu0 0
    %878 = vmatprep.subr.bf16.mxu0 0
    %879 = vmatpush1.bf16.msra.mxu0 0
    %880 = vmatprep.subr.bf16.mxu0 0
    %881 = vmatpush1.bf16.msra.mxu0 0
    %882 = vmatprep.subr.bf16.mxu0 0
    %883 = vmatpush1.bf16.msra.mxu0 0
    %884 = vmatprep.subr.bf16.mxu0 0
    %885 = vmatpush1.bf16.msra.mxu0 0
    %886 = vmatprep.subr.bf16.mxu0 0
    %887 = vmatpush1.bf16.msra.mxu0 0
    %888 = vmatprep.subr.bf16.mxu0 0
    %889 = vmatpush1.bf16.msra.mxu0 0
    %890 = vmatprep.subr.bf16.mxu0 0
    %891 = vmatpush1.bf16.msra.mxu0 0
    %892 = vmatprep.subr.bf16.mxu0 0
    %893 = vmatpush1.bf16.msra.mxu0 0
    %894 = vmatprep.subr.bf16.mxu0 0
    %895 = vmatpush1.bf16.msra.mxu0 0
    %896 = vmatprep.subr.bf16.mxu0 0
    %897 = vmatpush1.bf16.msra.mxu0 0
    %898 = vmatprep.mubr.bf16.mxu0 0
    %899 = vmatmul.mubr.bf16.gmra.mrb[0].mxu0 %v686
    %v900 = vpop.f32.mrb[0].mxu0
    %v901 = vadd.f32 %v474, %v900
    %v902 = vpop.f32.mrb[0].mxu0
    %v903 = vadd.f32 %v478, %v902
    %v904 = vpop.f32.mrb[0].mxu0
    %v905 = vadd.f32 %v474, %v904
    %v906 = vpop.f32.mrb[0].mxu0
    %v907 = vadd.f32 %v478, %v906
    %908 = vmatprep.mubr.bf16.mxu0 0
    %909 = vmatmul.mubr.bf16.gmra.mrb[0].mxu0 %v689
    %v910 = vpop.f32.mrb[0].mxu0
    %v911 = vadd.f32 %v474, %v910
    %v912 = vpop.f32.mrb[0].mxu0
    %v913 = vadd.f32 %v478, %v912
    %v914 = vpop.f32.mrb[0].mxu0
    %v915 = vadd.f32 %v474, %v914
    %v916 = vpop.f32.mrb[0].mxu0
    %v917 = vadd.f32 %v478, %v916
    %918 = vmatprep.mubr.bf16.mxu0 0
    %919 = vmatmul.mubr.bf16.gmra.mrb[0].mxu0 %v692
    %v920 = vpop.f32.mrb[0].mxu0
    %v921 = vadd.f32 %v474, %v920
    %v922 = vpop.f32.mrb[0].mxu0
    %v923 = vadd.f32 %v478, %v922
    %v924 = vpop.f32.mrb[0].mxu0
    %v925 = vadd.f32 %v474, %v924
    %v926 = vpop.f32.mrb[0].mxu0
    %v927 = vadd.f32 %v478, %v926
    %928 = vmatprep.mubr.bf16.mxu0 0
    %929 = vmatmul.mubr.bf16.gmra.mrb[0].mxu0 %v695
    %v930 = vpop.f32.mrb[0].mxu0
    %v931 = vadd.f32 %v474, %v930
    %v932 = vpop.f32.mrb[0].mxu0
    %v933 = vadd.f32 %v478, %v932
    %v934 = vpop.f32.mrb[0].mxu0
    %v935 = vadd.f32 %v474, %v934
    %v936 = vpop.f32.mrb[0].mxu0
    %v937 = vadd.f32 %v478, %v936
    %938 = vmatprep.mubr.bf16.mxu0 0
    %939 = vmatmul.mubr.bf16.gmra.mrb[0].mxu0 %v698
    %v940 = vpop.f32.mrb[0].mxu0
    %v941 = vadd.f32 %v474, %v940
    %v942 = vpop.f32.mrb[0].mxu0
    %v943 = vadd.f32 %v478, %v942
    %v944 = vpop.f32.mrb[0].mxu0
    %v945 = vadd.f32 %v474, %v944
    %v946 = vpop.f32.mrb[0].mxu0
    %v947 = vadd.f32 %v478, %v946
    %948 = vdwg.mxu0
    %949 = vmatprep.subr.bf16.mxu0 %v619
    %950 = vmatpush1.bf16.msra.mxu0 %v618
    %951 = vmatprep.subr.bf16.mxu0 %v628
    %952 = vmatpush1.bf16.msra.mxu0 %v627
    %953 = vmatprep.subr.bf16.mxu0 %v637
    %954 = vmatpush1.bf16.msra.mxu0 %v636
    %955 = vmatprep.subr.bf16.mxu0 %v646
    %956 = vmatpush1.bf16.msra.mxu0 %v645
    %957 = vmatprep.subr.bf16.mxu0 0
    %958 = vmatpush1.bf16.msra.mxu0 0
    %959 = vmatprep.subr.bf16.mxu0 0
    %960 = vmatpush1.bf16.msra.mxu0 0
    %961 = vmatprep.subr.bf16.mxu0 0
    %962 = vmatpush1.bf16.msra.mxu0 0
    %963 = vmatprep.subr.bf16.mxu0 0
    %964 = vmatpush1.bf16.msra.mxu0 0
    %965 = vmatprep.subr.bf16.mxu0 0
    %966 = vmatpush1.bf16.msra.mxu0 0
    %967 = vmatprep.subr.bf16.mxu0 0
    %968 = vmatpush1.bf16.msra.mxu0 0
    %969 = vmatprep.subr.bf16.mxu0 0
    %970 = vmatpush1.bf16.msra.mxu0 0
    %971 = vmatprep.subr.bf16.mxu0 0
    %972 = vmatpush1.bf16.msra.mxu0 0
    %973 = vmatprep.subr.bf16.mxu0 0
    %974 = vmatpush1.bf16.msra.mxu0 0
    %975 = vmatprep.subr.bf16.mxu0 0
    %976 = vmatpush1.bf16.msra.mxu0 0
    %977 = vmatprep.subr.bf16.mxu0 0
    %978 = vmatpush1.bf16.msra.mxu0 0
    %979 = vmatprep.subr.bf16.mxu0 0
    %980 = vmatpush1.bf16.msra.mxu0 0
    %981 = vmatprep.mubr.bf16.mxu0 0
    %982 = vmatmul.mubr.bf16.gmra.mrb[0].mxu0 %v686
    %v983 = vpop.f32.mrb[0].mxu0
    %v984 = vadd.f32 %v482, %v983
    %v985 = vpop.f32.mrb[0].mxu0
    %v986 = vadd.f32 %v486, %v985
    %v987 = vpop.f32.mrb[0].mxu0
    %v988 = vadd.f32 %v482, %v987
    %v989 = vpop.f32.mrb[0].mxu0
    %v990 = vadd.f32 %v486, %v989
    %991 = vmatprep.mubr.bf16.mxu0 0
    %992 = vmatmul.mubr.bf16.gmra.mrb[0].mxu0 %v689
    %v993 = vpop.f32.mrb[0].mxu0
    %v994 = vadd.f32 %v482, %v993
    %v995 = vpop.f32.mrb[0].mxu0
    %v996 = vadd.f32 %v486, %v995
    %v997 = vpop.f32.mrb[0].mxu0
    %v998 = vadd.f32 %v482, %v997
    %v999 = vpop.f32.mrb[0].mxu0
    %v1000 = vadd.f32 %v486, %v999
    %1001 = vmatprep.mubr.bf16.mxu0 0
    %1002 = vmatmul.mubr.bf16.gmra.mrb[0].mxu0 %v692
    %v1003 = vpop.f32.mrb[0].mxu0
    %v1004 = vadd.f32 %v482, %v1003
    %v1005 = vpop.f32.mrb[0].mxu0
    %v1006 = vadd.f32 %v486, %v1005
    %v1007 = vpop.f32.mrb[0].mxu0
    %v1008 = vadd.f32 %v482, %v1007
    %v1009 = vpop.f32.mrb[0].mxu0
    %v1010 = vadd.f32 %v486, %v1009
    %1011 = vmatprep.mubr.bf16.mxu0 0
    %1012 = vmatmul.mubr.bf16.gmra.mrb[0].mxu0 %v695
    %v1013 = vpop.f32.mrb[0].mxu0
    %v1014 = vadd.f32 %v482, %v1013
    %v1015 = vpop.f32.mrb[0].mxu0
    %v1016 = vadd.f32 %v486, %v1015
    %v1017 = vpop.f32.mrb[0].mxu0
    %v1018 = vadd.f32 %v482, %v1017
    %v1019 = vpop.f32.mrb[0].mxu0
    %v1020 = vadd.f32 %v486, %v1019
    %1021 = vmatprep.mubr.bf16.mxu0 0
    %1022 = vmatmul.mubr.bf16.gmra.mrb[0].mxu0 %v698
    %v1023 = vpop.f32.mrb[0].mxu0
    %v1024 = vadd.f32 %v482, %v1023
    %v1025 = vpop.f32.mrb[0].mxu0
    %v1026 = vadd.f32 %v486, %v1025
    %v1027 = vpop.f32.mrb[0].mxu0
    %v1028 = vadd.f32 %v482, %v1027
    %v1029 = vpop.f32.mrb[0].mxu0
    %v1030 = vadd.f32 %v486, %v1029
    %1031 = vdwg.mxu0
    %1032 = vmatprep.subr.bf16.mxu0 0
    %1033 = vmatpush1.bf16.msra.mxu0 %v620
    %1034 = vmatprep.subr.bf16.mxu0 0
    %1035 = vmatpush1.bf16.msra.mxu0 %v629
    %1036 = vmatprep.subr.bf16.mxu0 0
    %1037 = vmatpush1.bf16.msra.mxu0 %v638
    %1038 = vmatprep.subr.bf16.mxu0 0
    %1039 = vmatpush1.bf16.msra.mxu0 %v647
    %1040 = vmatprep.subr.bf16.mxu0 0
    %1041 = vmatpush1.bf16.msra.mxu0 0
    %1042 = vmatprep.subr.bf16.mxu0 0
    %1043 = vmatpush1.bf16.msra.mxu0 0
    %1044 = vmatprep.subr.bf16.mxu0 0
    %1045 = vmatpush1.bf16.msra.mxu0 0
    %1046 = vmatprep.subr.bf16.mxu0 0
    %1047 = vmatpush1.bf16.msra.mxu0 0
    %1048 = vmatprep.subr.bf16.mxu0 0
    %1049 = vmatpush1.bf16.msra.mxu0 0
    %1050 = vmatprep.subr.bf16.mxu0 0
    %1051 = vmatpush1.bf16.msra.mxu0 0
    %1052 = vmatprep.subr.bf16.mxu0 0
    %1053 = vmatpush1.bf16.msra.mxu0 0
    %1054 = vmatprep.subr.bf16.mxu0 0
    %1055 = vmatpush1.bf16.msra.mxu0 0
    %1056 = vmatprep.subr.bf16.mxu0 0
    %1057 = vmatpush1.bf16.msra.mxu0 0
    %1058 = vmatprep.subr.bf16.mxu0 0
    %1059 = vmatpush1.bf16.msra.mxu0 0
    %1060 = vmatprep.subr.bf16.mxu0 0
    %1061 = vmatpush1.bf16.msra.mxu0 0
    %1062 = vmatprep.subr.bf16.mxu0 0
    %1063 = vmatpush1.bf16.msra.mxu0 0
    %1064 = vmatprep.mubr.bf16.mxu0 0
    %1065 = vmatmul.mubr.bf16.gmra.mrb[0].mxu0 %v686
    %v1066 = vpop.f32.mrb[0].mxu0
    %v1067 = vadd.f32 %v490, %v1066
    %v1068 = vpop.f32.mrb[0].mxu0
    %v1069 = vpop.f32.mrb[0].mxu0
    %v1070 = vadd.f32 %v490, %v1069
    %v1071 = vpop.f32.mrb[0].mxu0
    %1072 = vmatprep.mubr.bf16.mxu0 0
    %1073 = vmatmul.mubr.bf16.gmra.mrb[0].mxu0 %v689
    %v1074 = vpop.f32.mrb[0].mxu0
    %v1075 = vadd.f32 %v490, %v1074
    %v1076 = vpop.f32.mrb[0].mxu0
    %v1077 = vpop.f32.mrb[0].mxu0
    %v1078 = vadd.f32 %v490, %v1077
    %v1079 = vpop.f32.mrb[0].mxu0
    %1080 = vmatprep.mubr.bf16.mxu0 0
    %1081 = vmatmul.mubr.bf16.gmra.mrb[0].mxu0 %v692
    %v1082 = vpop.f32.mrb[0].mxu0
    %v1083 = vadd.f32 %v490, %v1082
    %v1084 = vpop.f32.mrb[0].mxu0
    %v1085 = vpop.f32.mrb[0].mxu0
    %v1086 = vadd.f32 %v490, %v1085
    %v1087 = vpop.f32.mrb[0].mxu0
    %1088 = vmatprep.mubr.bf16.mxu0 0
    %1089 = vmatmul.mubr.bf16.gmra.mrb[0].mxu0 %v695
    %v1090 = vpop.f32.mrb[0].mxu0
    %v1091 = vadd.f32 %v490, %v1090
    %v1092 = vpop.f32.mrb[0].mxu0
    %v1093 = vpop.f32.mrb[0].mxu0
    %v1094 = vadd.f32 %v490, %v1093
    %v1095 = vpop.f32.mrb[0].mxu0
    %1096 = vmatprep.mubr.bf16.mxu0 0
    %1097 = vmatmul.mubr.bf16.gmra.mrb[0].mxu0 %v698
    %v1098 = vpop.f32.mrb[0].mxu0
    %v1099 = vadd.f32 %v490, %v1098
    %v1100 = vpop.f32.mrb[0].mxu0
    %v1101 = vpop.f32.mrb[0].mxu0
    %v1102 = vadd.f32 %v490, %v1101
    %v1103 = vpop.f32.mrb[0].mxu0
    %1104 = vdwg.mxu0
    %1105 = vst [vmem:[#allocation2] sm:$0xff] %v735
    %1106 = vst [vmem:[#allocation2 + $0x8] sm:$0xff] %v737
    %1107 = vst [vmem:[#allocation2 + $0x10] sm:$0xff] %v818
    %1108 = vst [vmem:[#allocation2 + $0x18] sm:$0xff] %v820
    %1109 = vst [vmem:[#allocation2 + $0x20] sm:$0xff] %v901
    %1110 = vst [vmem:[#allocation2 + $0x28] sm:$0xff] %v903
    %1111 = vst [vmem:[#allocation2 + $0x30] sm:$0xff] %v984
    %1112 = vst [vmem:[#allocation2 + $0x38] sm:$0xff] %v986
    %1113 = vst [vmem:[#allocation2 + $0x40] sm:$0xff] %v1067
    %1114 = vst [vmem:[#allocation2 + $0x48] sm:$0xff] %v739
    %1115 = vst [vmem:[#allocation2 + $0x50] sm:$0xff] %v741
    %1116 = vst [vmem:[#allocation2 + $0x58] sm:$0xff] %v822
    %1117 = vst [vmem:[#allocation2 + $0x60] sm:$0xff] %v824
    %1118 = vst [vmem:[#allocation2 + $0x68] sm:$0xff] %v905
    %1119 = vst [vmem:[#allocation2 + $0x70] sm:$0xff] %v907
    %1120 = vst [vmem:[#allocation2 + $0x78] sm:$0xff] %v988
    %1121 = vst [vmem:[#allocation2 + $0x80] sm:$0xff] %v990
    %1122 = vst [vmem:[#allocation2 + $0x88] sm:$0xff] %v1070
    %1123 = vst [vmem:[#allocation2 + $0x90] sm:$0xff] %v745
    %1124 = vst [vmem:[#allocation2 + $0x98] sm:$0xff] %v747
    %1125 = vst [vmem:[#allocation2 + $0xa0] sm:$0xff] %v828
    %1126 = vst [vmem:[#allocation2 + $0xa8] sm:$0xff] %v830
    %1127 = vst [vmem:[#allocation2 + $0xb0] sm:$0xff] %v911
    %1128 = vst [vmem:[#allocation2 + $0xb8] sm:$0xff] %v913
    %1129 = vst [vmem:[#allocation2 + $0xc0] sm:$0xff] %v994
    %1130 = vst [vmem:[#allocation2 + $0xc8] sm:$0xff] %v996
    %1131 = vst [vmem:[#allocation2 + $0xd0] sm:$0xff] %v1075
    %1132 = vst [vmem:[#allocation2 + $0xd8] sm:$0xff] %v749
    %1133 = vst [vmem:[#allocation2 + $0xe0] sm:$0xff] %v751
    %1134 = vst [vmem:[#allocation2 + $0xe8] sm:$0xff] %v832
    %1135 = vst [vmem:[#allocation2 + $0xf0] sm:$0xff] %v834
    %1136 = vst [vmem:[#allocation2 + $0xf8] sm:$0xff] %v915
    %1137 = vst [vmem:[#allocation2 + $0x100] sm:$0xff] %v917
    %1138 = vst [vmem:[#allocation2 + $0x108] sm:$0xff] %v998
    %1139 = vst [vmem:[#allocation2 + $0x110] sm:$0xff] %v1000
    %1140 = vst [vmem:[#allocation2 + $0x118] sm:$0xff] %v1078
    %1141 = vst [vmem:[#allocation2 + $0x120] sm:$0xff] %v755
    %1142 = vst [vmem:[#allocation2 + $0x128] sm:$0xff] %v757
    %1143 = vst [vmem:[#allocation2 + $0x130] sm:$0xff] %v838
    %1144 = vst [vmem:[#allocation2 + $0x138] sm:$0xff] %v840
    %1145 = vst [vmem:[#allocation2 + $0x140] sm:$0xff] %v921
    %1146 = vst [vmem:[#allocation2 + $0x148] sm:$0xff] %v923
    %1147 = vst [vmem:[#allocation2 + $0x150] sm:$0xff] %v1004
    %1148 = vst [vmem:[#allocation2 + $0x158] sm:$0xff] %v1006
    %1149 = vst [vmem:[#allocation2 + $0x160] sm:$0xff] %v1083
    %1150 = vst [vmem:[#allocation2 + $0x168] sm:$0xff] %v759
    %1151 = vst [vmem:[#allocation2 + $0x170] sm:$0xff] %v761
    %1152 = vst [vmem:[#allocation2 + $0x178] sm:$0xff] %v842
    %1153 = vst [vmem:[#allocation2 + $0x180] sm:$0xff] %v844
    %1154 = vst [vmem:[#allocation2 + $0x188] sm:$0xff] %v925
    %1155 = vst [vmem:[#allocation2 + $0x190] sm:$0xff] %v927
    %1156 = vst [vmem:[#allocation2 + $0x198] sm:$0xff] %v1008
    %1157 = vst [vmem:[#allocation2 + $0x1a0] sm:$0xff] %v1010
    %1158 = vst [vmem:[#allocation2 + $0x1a8] sm:$0xff] %v1086
    %1159 = vst [vmem:[#allocation2 + $0x1b0] sm:$0xff] %v765
    %1160 = vst [vmem:[#allocation2 + $0x1b8] sm:$0xff] %v767
    %1161 = vst [vmem:[#allocation2 + $0x1c0] sm:$0xff] %v848
    %1162 = vst [vmem:[#allocation2 + $0x1c8] sm:$0xff] %v850
    %1163 = vst [vmem:[#allocation2 + $0x1d0] sm:$0xff] %v931
    %1164 = vst [vmem:[#allocation2 + $0x1d8] sm:$0xff] %v933
    %1165 = vst [vmem:[#allocation2 + $0x1e0] sm:$0xff] %v1014
    %1166 = vst [vmem:[#allocation2 + $0x1e8] sm:$0xff] %v1016
    %1167 = vst [vmem:[#allocation2 + $0x1f0] sm:$0xff] %v1091
    %1168 = vst [vmem:[#allocation2 + $0x1f8] sm:$0xff] %v769
    %1169 = vst [vmem:[#allocation2 + $0x200] sm:$0xff] %v771
    %1170 = vst [vmem:[#allocation2 + $0x208] sm:$0xff] %v852
    %1171 = vst [vmem:[#allocation2 + $0x210] sm:$0xff] %v854
    %1172 = vst [vmem:[#allocation2 + $0x218] sm:$0xff] %v935
    %1173 = vst [vmem:[#allocation2 + $0x220] sm:$0xff] %v937
    %1174 = vst [vmem:[#allocation2 + $0x228] sm:$0xff] %v1018
    %1175 = vst [vmem:[#allocation2 + $0x230] sm:$0xff] %v1020
    %1176 = vst [vmem:[#allocation2 + $0x238] sm:$0xff] %v1094
    %1177 = vst [vmem:[#allocation2 + $0x240] sm:$0xff] %v775
    %1178 = vst [vmem:[#allocation2 + $0x248] sm:$0xff] %v777
    %1179 = vst [vmem:[#allocation2 + $0x250] sm:$0xff] %v858
    %1180 = vst [vmem:[#allocation2 + $0x258] sm:$0xff] %v860
    %1181 = vst [vmem:[#allocation2 + $0x260] sm:$0xff] %v941
    %1182 = vst [vmem:[#allocation2 + $0x268] sm:$0xff] %v943
    %1183 = vst [vmem:[#allocation2 + $0x270] sm:$0xff] %v1024
    %1184 = vst [vmem:[#allocation2 + $0x278] sm:$0xff] %v1026
    %1185 = vst [vmem:[#allocation2 + $0x280] sm:$0xff] %v1099
    %1186 = vst [vmem:[#allocation2 + $0x288] sm:$0xff] %v779
    %1187 = vst [vmem:[#allocation2 + $0x290] sm:$0xff] %v781
    %1188 = vst [vmem:[#allocation2 + $0x298] sm:$0xff] %v862
    %1189 = vst [vmem:[#allocation2 + $0x2a0] sm:$0xff] %v864
    %1190 = vst [vmem:[#allocation2 + $0x2a8] sm:$0xff] %v945
    %1191 = vst [vmem:[#allocation2 + $0x2b0] sm:$0xff] %v947
    %1192 = vst [vmem:[#allocation2 + $0x2b8] sm:$0xff] %v1028
    %1193 = vst [vmem:[#allocation2 + $0x2c0] sm:$0xff] %v1030
    %1194 = vst [vmem:[#allocation2 + $0x2c8] sm:$0xff] %v1102
    %v1195 = vld [vmem:[#allocation2] sm:$0xff]
    %v1196 = vld [vmem:[#allocation2 + $0x8] sm:$0xff]
    %v1197 = vld [vmem:[#allocation2 + $0x10] sm:$0xff]
    %v1198 = vld [vmem:[#allocation2 + $0x18] sm:$0xff]
    %v1199 = vld [vmem:[#allocation2 + $0x20] sm:$0xff]
    %v1200 = vld [vmem:[#allocation2 + $0x28] sm:$0xff]
    %v1201 = vld [vmem:[#allocation2 + $0x30] sm:$0xff]
    %v1202 = vld [vmem:[#allocation2 + $0x38] sm:$0xff]
    %v1203 = vld [vmem:[#allocation2 + $0x40] sm:$0xff]
    %v1204 = vpack.c.bf16 %v393, %v393
    %v1205 = vpack.c.bf16 %v394, %v394
    %v1206 = vpack.c.bf16 %v395, %v395
    %v1209 = vlaneseq
    %v1210 = vshrl.u32 %v1209, 7
    %v1211 = vsub.s32 0, %v1210
    %v1212 = vrot.slane %v300, %v1211
    %v1213 = vlaneseq
    %v1214 = vshrl.u32 %v1213, 7
    %v1215 = vsub.s32 1, %v1214
    %v1216 = vrot.slane %v300, %v1215
    %v1217 = vlaneseq
    %v1218 = vshrl.u32 %v1217, 7
    %v1219 = vsub.s32 2, %v1218
    %v1220 = vrot.slane %v300, %v1219
    %v1221 = vlaneseq
    %v1222 = vshrl.u32 %v1221, 7
    %v1223 = vsub.s32 3, %v1222
    %v1224 = vrot.slane %v300, %v1223
    %v1225 = vlaneseq
    %v1226 = vshrl.u32 %v1225, 7
    %v1227 = vsub.s32 4, %v1226
    %v1228 = vrot.slane %v300, %v1227
    %v1229 = vlaneseq
    %v1230 = vshrl.u32 %v1229, 7
    %v1231 = vsub.s32 5, %v1230
    %v1232 = vrot.slane %v300, %v1231
    %v1233 = vlaneseq
    %v1234 = vshrl.u32 %v1233, 7
    %v1235 = vsub.s32 6, %v1234
    %v1236 = vrot.slane %v300, %v1235
    %v1237 = vlaneseq
    %v1238 = vshrl.u32 %v1237, 7
    %v1239 = vsub.s32 7, %v1238
    %v1240 = vrot.slane %v300, %v1239
    %v1241 = vlaneseq
    %v1242 = vshrl.u32 %v1241, 7
    %v1243 = vsub.s32 0, %v1242
    %v1244 = vrot.slane %v301, %v1243
    %v1494 = vunpack.c.l.b16 %v60
    %v1495 = vunpack.c.h.b16 %v60
    %v1496 = vunpack.c.l.b16 %v61
    %v1497 = vunpack.c.h.b16 %v61
    %v1498 = vunpack.c.l.b16 %v62
    %v1499 = vunpack.c.h.b16 %v62
    %v1500 = vunpack.c.l.b16 %v63
    %v1501 = vunpack.c.h.b16 %v63
    %v1502 = vunpack.c.l.b16 %v64
    %v1503 = vunpack.c.l.b16 %v65
    %v1504 = vunpack.c.h.b16 %v65
    %v1505 = vunpack.c.l.b16 %v66
    %v1506 = vunpack.c.h.b16 %v66
    %v1507 = vunpack.c.l.b16 %v67
    %v1508 = vunpack.c.h.b16 %v67
    %v1509 = vunpack.c.l.b16 %v68
    %v1510 = vunpack.c.h.b16 %v68
    %v1511 = vunpack.c.l.b16 %v69
    %v1512 = vunpack.c.l.b16 %v70
    %v1513 = vunpack.c.h.b16 %v70
    %v1514 = vunpack.c.l.b16 %v71
    %v1515 = vunpack.c.h.b16 %v71
    %v1516 = vunpack.c.l.b16 %v72
    %v1517 = vunpack.c.h.b16 %v72
    %v1518 = vunpack.c.l.b16 %v73
    %v1519 = vunpack.c.h.b16 %v73
    %v1520 = vunpack.c.l.b16 %v74
    %v1521 = vunpack.c.l.b16 %v75
    %v1522 = vunpack.c.h.b16 %v75
    %v1523 = vunpack.c.l.b16 %v76
    %v1524 = vunpack.c.h.b16 %v76
    %v1525 = vunpack.c.l.b16 %v77
    %v1526 = vunpack.c.h.b16 %v77
    %v1527 = vunpack.c.l.b16 %v78
    %v1528 = vunpack.c.h.b16 %v78
    %v1529 = vunpack.c.l.b16 %v79
    %v1530 = vunpack.c.l.b16 %v80
    %v1531 = vunpack.c.h.b16 %v80
    %v1532 = vunpack.c.l.b16 %v81
    %v1533 = vunpack.c.h.b16 %v81
    %v1534 = vunpack.c.l.b16 %v82
    %v1535 = vunpack.c.h.b16 %v82
    %v1536 = vunpack.c.l.b16 %v83
    %v1537 = vunpack.c.h.b16 %v83
    %v1538 = vunpack.c.l.b16 %v84
    %v1539 = vunpack.c.l.b16 %v85
    %v1540 = vunpack.c.h.b16 %v85
    %v1541 = vunpack.c.l.b16 %v86
    %v1542 = vunpack.c.h.b16 %v86
    %v1543 = vunpack.c.l.b16 %v87
    %v1544 = vunpack.c.h.b16 %v87
    %v1545 = vunpack.c.l.b16 %v88
    %v1546 = vunpack.c.h.b16 %v88
    %v1547 = vunpack.c.l.b16 %v89
    %v1548 = vunpack.c.l.b16 %v90
    %v1549 = vunpack.c.h.b16 %v90
    %v1550 = vunpack.c.l.b16 %v91
    %v1551 = vunpack.c.h.b16 %v91
    %v1552 = vunpack.c.l.b16 %v92
    %v1553 = vunpack.c.h.b16 %v92
    %v1554 = vunpack.c.l.b16 %v93
    %v1555 = vunpack.c.h.b16 %v93
    %v1556 = vunpack.c.l.b16 %v94
    %v1557 = vunpack.c.l.b16 %v95
    %v1558 = vunpack.c.h.b16 %v95
    %v1559 = vunpack.c.l.b16 %v96
    %v1560 = vunpack.c.h.b16 %v96
    %v1561 = vunpack.c.l.b16 %v97
    %v1562 = vunpack.c.h.b16 %v97
    %v1563 = vunpack.c.l.b16 %v98
    %v1564 = vunpack.c.h.b16 %v98
    %v1565 = vunpack.c.l.b16 %v99
    %v1566 = vunpack.c.l.b16 %v100
    %v1567 = vunpack.c.h.b16 %v100
    %v1568 = vunpack.c.l.b16 %v101
    %v1569 = vunpack.c.h.b16 %v101
    %v1570 = vunpack.c.l.b16 %v102
    %v1571 = vunpack.c.h.b16 %v102
    %v1572 = vunpack.c.l.b16 %v103
    %v1573 = vunpack.c.h.b16 %v103
    %v1574 = vunpack.c.l.b16 %v104
    %v1575 = vunpack.c.l.b16 %v105
    %v1576 = vunpack.c.h.b16 %v105
    %v1577 = vunpack.c.l.b16 %v106
    %v1578 = vunpack.c.h.b16 %v106
    %v1579 = vunpack.c.l.b16 %v107
    %v1580 = vunpack.c.h.b16 %v107
    %v1581 = vunpack.c.l.b16 %v108
    %v1582 = vunpack.c.h.b16 %v108
    %v1583 = vunpack.c.l.b16 %v109
    %v1584 = vunpack.c.l.b16 %v110
    %v1585 = vunpack.c.h.b16 %v110
    %v1586 = vunpack.c.l.b16 %v111
    %v1587 = vunpack.c.h.b16 %v111
    %v1588 = vunpack.c.l.b16 %v112
    %v1589 = vunpack.c.h.b16 %v112
    %v1590 = vunpack.c.l.b16 %v113
    %v1591 = vunpack.c.h.b16 %v113
    %v1592 = vunpack.c.l.b16 %v114
    %v1593 = vunpack.c.l.b16 %v115
    %v1594 = vunpack.c.h.b16 %v115
    %v1595 = vunpack.c.l.b16 %v116
    %v1596 = vunpack.c.h.b16 %v116
    %v1597 = vunpack.c.l.b16 %v117
    %v1598 = vunpack.c.h.b16 %v117
    %v1599 = vunpack.c.l.b16 %v118
    %v1600 = vunpack.c.h.b16 %v118
    %v1601 = vunpack.c.l.b16 %v119
    %v1602 = vunpack.c.l.b16 %v120
    %v1603 = vunpack.c.h.b16 %v120
    %v1604 = vunpack.c.l.b16 %v121
    %v1605 = vunpack.c.h.b16 %v121
    %v1606 = vunpack.c.l.b16 %v122
    %v1607 = vunpack.c.h.b16 %v122
    %v1608 = vunpack.c.l.b16 %v123
    %v1609 = vunpack.c.h.b16 %v123
    %v1610 = vunpack.c.l.b16 %v124
    %v1611 = vunpack.c.l.b16 %v125
    %v1612 = vunpack.c.h.b16 %v125
    %v1613 = vunpack.c.l.b16 %v126
    %v1614 = vunpack.c.h.b16 %v126
    %v1615 = vunpack.c.l.b16 %v127
    %v1616 = vunpack.c.h.b16 %v127
    %v1617 = vunpack.c.l.b16 %v128
    %v1618 = vunpack.c.h.b16 %v128
    %v1619 = vunpack.c.l.b16 %v129
    %v1620 = vunpack.c.l.b16 %v130
    %v1621 = vunpack.c.h.b16 %v130
    %v1622 = vunpack.c.l.b16 %v131
    %v1623 = vunpack.c.h.b16 %v131
    %v1624 = vunpack.c.l.b16 %v132
    %v1625 = vunpack.c.h.b16 %v132
    %v1626 = vunpack.c.l.b16 %v133
    %v1627 = vunpack.c.h.b16 %v133
    %v1628 = vunpack.c.l.b16 %v134
    %v1629 = vunpack.c.l.b16 %v135
    %v1630 = vunpack.c.h.b16 %v135
    %v1631 = vunpack.c.l.b16 %v136
    %v1632 = vunpack.c.h.b16 %v136
    %v1633 = vunpack.c.l.b16 %v137
    %v1634 = vunpack.c.h.b16 %v137
    %v1635 = vunpack.c.l.b16 %v138
    %v1636 = vunpack.c.h.b16 %v138
    %v1637 = vunpack.c.l.b16 %v139
    %v1638 = vunpack.c.l.b16 %v140
    %v1639 = vunpack.c.h.b16 %v140
    %v1640 = vunpack.c.l.b16 %v141
    %v1641 = vunpack.c.h.b16 %v141
    %v1642 = vunpack.c.l.b16 %v142
    %v1643 = vunpack.c.h.b16 %v142
    %v1644 = vunpack.c.l.b16 %v143
    %v1645 = vunpack.c.h.b16 %v143
    %v1646 = vunpack.c.l.b16 %v144
    %v1647 = vunpack.c.l.b16 %v145
    %v1648 = vunpack.c.h.b16 %v145
    %v1649 = vunpack.c.l.b16 %v146
    %v1650 = vunpack.c.h.b16 %v146
    %v1651 = vunpack.c.l.b16 %v147
    %v1652 = vunpack.c.h.b16 %v147
    %v1653 = vunpack.c.l.b16 %v148
    %v1654 = vunpack.c.h.b16 %v148
    %v1655 = vunpack.c.l.b16 %v149
    %v1656 = vunpack.c.l.b16 %v150
    %v1657 = vunpack.c.h.b16 %v150
    %v1658 = vunpack.c.l.b16 %v151
    %v1659 = vunpack.c.h.b16 %v151
    %v1660 = vunpack.c.l.b16 %v152
    %v1661 = vunpack.c.h.b16 %v152
    %v1662 = vunpack.c.l.b16 %v153
    %v1663 = vunpack.c.h.b16 %v153
    %v1664 = vunpack.c.l.b16 %v154
    %v1665 = vunpack.c.l.b16 %v155
    %v1666 = vunpack.c.h.b16 %v155
    %v1667 = vunpack.c.l.b16 %v156
    %v1668 = vunpack.c.h.b16 %v156
    %v1669 = vunpack.c.l.b16 %v157
    %v1670 = vunpack.c.h.b16 %v157
    %v1671 = vunpack.c.l.b16 %v158
    %v1672 = vunpack.c.h.b16 %v158
    %v1673 = vunpack.c.l.b16 %v159
    %v1674 = vunpack.c.l.b16 %v160
    %v1675 = vunpack.c.h.b16 %v160
    %v1676 = vunpack.c.l.b16 %v161
    %v1677 = vunpack.c.h.b16 %v161
    %v1678 = vunpack.c.l.b16 %v162
    %v1679 = vunpack.c.h.b16 %v162
    %v1680 = vunpack.c.l.b16 %v163
    %v1681 = vunpack.c.h.b16 %v163
    %v1682 = vunpack.c.l.b16 %v164
    %v1683 = vunpack.c.l.b16 %v165
    %v1684 = vunpack.c.h.b16 %v165
    %v1685 = vunpack.c.l.b16 %v166
    %v1686 = vunpack.c.h.b16 %v166
    %v1687 = vunpack.c.l.b16 %v167
    %v1688 = vunpack.c.h.b16 %v167
    %v1689 = vunpack.c.l.b16 %v168
    %v1690 = vunpack.c.h.b16 %v168
    %v1691 = vunpack.c.l.b16 %v169
    %v1692 = vunpack.c.l.b16 %v170
    %v1693 = vunpack.c.h.b16 %v170
    %v1694 = vunpack.c.l.b16 %v171
    %v1695 = vunpack.c.h.b16 %v171
    %v1696 = vunpack.c.l.b16 %v172
    %v1697 = vunpack.c.h.b16 %v172
    %v1698 = vunpack.c.l.b16 %v173
    %v1699 = vunpack.c.h.b16 %v173
    %v1700 = vunpack.c.l.b16 %v174
    %v1701 = vunpack.c.l.b16 %v175
    %v1702 = vunpack.c.h.b16 %v175
    %v1703 = vunpack.c.l.b16 %v176
    %v1704 = vunpack.c.h.b16 %v176
    %v1705 = vunpack.c.l.b16 %v177
    %v1706 = vunpack.c.h.b16 %v177
    %v1707 = vunpack.c.l.b16 %v178
    %v1708 = vunpack.c.h.b16 %v178
    %v1709 = vunpack.c.l.b16 %v179
    %v1710 = vunpack.c.l.b16 %v180
    %v1711 = vunpack.c.h.b16 %v180
    %v1712 = vunpack.c.l.b16 %v181
    %v1713 = vunpack.c.h.b16 %v181
    %v1714 = vunpack.c.l.b16 %v182
    %v1715 = vunpack.c.h.b16 %v182
    %v1716 = vunpack.c.l.b16 %v183
    %v1717 = vunpack.c.h.b16 %v183
    %v1718 = vunpack.c.l.b16 %v184
    %v1719 = vunpack.c.l.b16 %v185
    %v1720 = vunpack.c.h.b16 %v185
    %v1721 = vunpack.c.l.b16 %v186
    %v1722 = vunpack.c.h.b16 %v186
    %v1723 = vunpack.c.l.b16 %v187
    %v1724 = vunpack.c.h.b16 %v187
    %v1725 = vunpack.c.l.b16 %v188
    %v1726 = vunpack.c.h.b16 %v188
    %v1727 = vunpack.c.l.b16 %v189
    %v1728 = vunpack.c.l.b16 %v190
    %v1729 = vunpack.c.h.b16 %v190
    %v1730 = vunpack.c.l.b16 %v191
    %v1731 = vunpack.c.h.b16 %v191
    %v1732 = vunpack.c.l.b16 %v192
    %v1733 = vunpack.c.h.b16 %v192
    %v1734 = vunpack.c.l.b16 %v193
    %v1735 = vunpack.c.h.b16 %v193
    %v1736 = vunpack.c.l.b16 %v194
    %v1737 = vunpack.c.l.b16 %v195
    %v1738 = vunpack.c.h.b16 %v195
    %v1739 = vunpack.c.l.b16 %v196
    %v1740 = vunpack.c.h.b16 %v196
    %v1741 = vunpack.c.l.b16 %v197
    %v1742 = vunpack.c.h.b16 %v197
    %v1743 = vunpack.c.l.b16 %v198
    %v1744 = vunpack.c.h.b16 %v198
    %v1745 = vunpack.c.l.b16 %v199
    %v1746 = vunpack.c.l.b16 %v200
    %v1747 = vunpack.c.h.b16 %v200
    %v1748 = vunpack.c.l.b16 %v201
    %v1749 = vunpack.c.h.b16 %v201
    %v1750 = vunpack.c.l.b16 %v202
    %v1751 = vunpack.c.h.b16 %v202
    %v1752 = vunpack.c.l.b16 %v203
    %v1753 = vunpack.c.h.b16 %v203
    %v1754 = vunpack.c.l.b16 %v204
    %v1755 = vunpack.c.l.b16 %v205
    %v1756 = vunpack.c.h.b16 %v205
    %v1757 = vunpack.c.l.b16 %v206
    %v1758 = vunpack.c.h.b16 %v206
    %v1759 = vunpack.c.l.b16 %v207
    %v1760 = vunpack.c.h.b16 %v207
    %v1761 = vunpack.c.l.b16 %v208
    %v1762 = vunpack.c.h.b16 %v208
    %v1763 = vunpack.c.l.b16 %v209
    %v1764 = vunpack.c.l.b16 %v210
    %v1765 = vunpack.c.h.b16 %v210
    %v1766 = vunpack.c.l.b16 %v211
    %v1767 = vunpack.c.h.b16 %v211
    %v1768 = vunpack.c.l.b16 %v212
    %v1769 = vunpack.c.h.b16 %v212
    %v1770 = vunpack.c.l.b16 %v213
    %v1771 = vunpack.c.h.b16 %v213
    %v1772 = vunpack.c.l.b16 %v214
    %v1773 = vunpack.c.l.b16 %v215
    %v1774 = vunpack.c.h.b16 %v215
    %v1775 = vunpack.c.l.b16 %v216
    %v1776 = vunpack.c.h.b16 %v216
    %v1777 = vunpack.c.l.b16 %v217
    %v1778 = vunpack.c.h.b16 %v217
    %v1779 = vunpack.c.l.b16 %v218
    %v1780 = vunpack.c.h.b16 %v218
    %v1781 = vunpack.c.l.b16 %v219
    %v1782 = vunpack.c.l.b16 %v220
    %v1783 = vunpack.c.h.b16 %v220
    %v1784 = vunpack.c.l.b16 %v221
    %v1785 = vunpack.c.h.b16 %v221
    %v1786 = vunpack.c.l.b16 %v222
    %v1787 = vunpack.c.h.b16 %v222
    %v1788 = vunpack.c.l.b16 %v223
    %v1789 = vunpack.c.h.b16 %v223
    %v1790 = vunpack.c.l.b16 %v224
    %v1791 = vunpack.c.l.b16 %v225
    %v1792 = vunpack.c.h.b16 %v225
    %v1793 = vunpack.c.l.b16 %v226
    %v1794 = vunpack.c.h.b16 %v226
    %v1795 = vunpack.c.l.b16 %v227
    %v1796 = vunpack.c.h.b16 %v227
    %v1797 = vunpack.c.l.b16 %v228
    %v1798 = vunpack.c.h.b16 %v228
    %v1799 = vunpack.c.l.b16 %v229
    %v1800 = vunpack.c.l.b16 %v230
    %v1801 = vunpack.c.h.b16 %v230
    %v1802 = vunpack.c.l.b16 %v231
    %v1803 = vunpack.c.h.b16 %v231
    %v1804 = vunpack.c.l.b16 %v232
    %v1805 = vunpack.c.h.b16 %v232
    %v1806 = vunpack.c.l.b16 %v233
    %v1807 = vunpack.c.h.b16 %v233
    %v1808 = vunpack.c.l.b16 %v234
    %v1809 = vunpack.c.l.b16 %v235
    %v1810 = vunpack.c.h.b16 %v235
    %v1811 = vunpack.c.l.b16 %v236
    %v1812 = vunpack.c.h.b16 %v236
    %v1813 = vunpack.c.l.b16 %v237
    %v1814 = vunpack.c.h.b16 %v237
    %v1815 = vunpack.c.l.b16 %v238
    %v1816 = vunpack.c.h.b16 %v238
    %v1817 = vunpack.c.l.b16 %v239
    %v1818 = vunpack.c.l.b16 %v240
    %v1819 = vunpack.c.h.b16 %v240
    %v1820 = vunpack.c.l.b16 %v241
    %v1821 = vunpack.c.h.b16 %v241
    %v1822 = vunpack.c.l.b16 %v242
    %v1823 = vunpack.c.h.b16 %v242
    %v1824 = vunpack.c.l.b16 %v243
    %v1825 = vunpack.c.h.b16 %v243
    %v1826 = vunpack.c.l.b16 %v244
    %v1827 = vunpack.c.l.b16 %v245
    %v1828 = vunpack.c.h.b16 %v245
    %v1829 = vunpack.c.l.b16 %v246
    %v1830 = vunpack.c.h.b16 %v246
    %v1831 = vunpack.c.l.b16 %v247
    %v1832 = vunpack.c.h.b16 %v247
    %v1833 = vunpack.c.l.b16 %v248
    %v1834 = vunpack.c.h.b16 %v248
    %v1835 = vunpack.c.l.b16 %v249
    %v1836 = vunpack.c.l.b16 %v250
    %v1837 = vunpack.c.h.b16 %v250
    %v1838 = vunpack.c.l.b16 %v251
    %v1839 = vunpack.c.h.b16 %v251
    %v1840 = vunpack.c.l.b16 %v252
    %v1841 = vunpack.c.h.b16 %v252
    %v1842 = vunpack.c.l.b16 %v253
    %v1843 = vunpack.c.h.b16 %v253
    %v1844 = vunpack.c.l.b16 %v254
    %v1845 = vunpack.c.l.b16 %v255
    %v1846 = vunpack.c.h.b16 %v255
    %v1847 = vunpack.c.l.b16 %v256
    %v1848 = vunpack.c.h.b16 %v256
    %v1849 = vunpack.c.l.b16 %v257
    %v1850 = vunpack.c.h.b16 %v257
    %v1851 = vunpack.c.l.b16 %v258
    %v1852 = vunpack.c.h.b16 %v258
    %v1853 = vunpack.c.l.b16 %v259
    %v1854 = vunpack.c.l.b16 %v260
    %v1855 = vunpack.c.h.b16 %v260
    %v1856 = vunpack.c.l.b16 %v261
    %v1857 = vunpack.c.h.b16 %v261
    %v1858 = vunpack.c.l.b16 %v262
    %v1859 = vunpack.c.h.b16 %v262
    %v1860 = vunpack.c.l.b16 %v263
    %v1861 = vunpack.c.h.b16 %v263
    %v1862 = vunpack.c.l.b16 %v264
    %v1863 = vunpack.c.l.b16 %v265
    %v1864 = vunpack.c.h.b16 %v265
    %v1865 = vunpack.c.l.b16 %v266
    %v1866 = vunpack.c.h.b16 %v266
    %v1867 = vunpack.c.l.b16 %v267
    %v1868 = vunpack.c.h.b16 %v267
    %v1869 = vunpack.c.l.b16 %v268
    %v1870 = vunpack.c.h.b16 %v268
    %v1871 = vunpack.c.l.b16 %v269
    %v1872 = vunpack.c.l.b16 %v270
    %v1873 = vunpack.c.h.b16 %v270
    %v1874 = vunpack.c.l.b16 %v271
    %v1875 = vunpack.c.h.b16 %v271
    %v1876 = vunpack.c.l.b16 %v272
    %v1877 = vunpack.c.h.b16 %v272
    %v1878 = vunpack.c.l.b16 %v273
    %v1879 = vunpack.c.h.b16 %v273
    %v1880 = vunpack.c.l.b16 %v274
    %v1881 = vunpack.c.l.b16 %v275
    %v1882 = vunpack.c.h.b16 %v275
    %v1883 = vunpack.c.l.b16 %v276
    %v1884 = vunpack.c.h.b16 %v276
    %v1885 = vunpack.c.l.b16 %v277
    %v1886 = vunpack.c.h.b16 %v277
    %v1887 = vunpack.c.l.b16 %v278
    %v1888 = vunpack.c.h.b16 %v278
    %v1889 = vunpack.c.l.b16 %v279
    %v1890 = vunpack.c.l.b16 %v280
    %v1891 = vunpack.c.h.b16 %v280
    %v1892 = vunpack.c.l.b16 %v281
    %v1893 = vunpack.c.h.b16 %v281
    %v1894 = vunpack.c.l.b16 %v282
    %v1895 = vunpack.c.h.b16 %v282
    %v1896 = vunpack.c.l.b16 %v283
    %v1897 = vunpack.c.h.b16 %v283
    %v1898 = vunpack.c.l.b16 %v284
    %v1899 = vunpack.c.l.b16 %v285
    %v1900 = vunpack.c.h.b16 %v285
    %v1901 = vunpack.c.l.b16 %v286
    %v1902 = vunpack.c.h.b16 %v286
    %v1903 = vunpack.c.l.b16 %v287
    %v1904 = vunpack.c.h.b16 %v287
    %v1905 = vunpack.c.l.b16 %v288
    %v1906 = vunpack.c.h.b16 %v288
    %v1907 = vunpack.c.l.b16 %v289
    %v1908 = vunpack.c.l.b16 %v290
    %v1909 = vunpack.c.h.b16 %v290
    %v1910 = vunpack.c.l.b16 %v291
    %v1911 = vunpack.c.h.b16 %v291
    %v1912 = vunpack.c.l.b16 %v292
    %v1913 = vunpack.c.h.b16 %v292
    %v1914 = vunpack.c.l.b16 %v293
    %v1915 = vunpack.c.h.b16 %v293
    %v1916 = vunpack.c.l.b16 %v294
    %v1917 = vunpack.c.l.b16 %v295
    %v1918 = vunpack.c.h.b16 %v295
    %v1919 = vunpack.c.l.b16 %v296
    %v1920 = vunpack.c.h.b16 %v296
    %v1921 = vunpack.c.l.b16 %v297
    %v1922 = vunpack.c.h.b16 %v297
    %v1923 = vunpack.c.l.b16 %v298
    %v1924 = vunpack.c.h.b16 %v298
    %v1925 = vunpack.c.l.b16 %v299
    %v1926 = vpack.c.b16 %v1503, %v1494
    %v1927 = vpack.c.b16 %v1504, %v1495
    %v1928 = vpack.c.b16 %v1505, %v1496
    %v1929 = vpack.c.b16 %v1506, %v1497
    %v1930 = vpack.c.b16 %v1507, %v1498
    %v1931 = vpack.c.b16 %v1508, %v1499
    %v1932 = vpack.c.b16 %v1509, %v1500
    %v1933 = vpack.c.b16 %v1510, %v1501
    %v1934 = vpack.c.b16 %v1511, %v1502
    %v1935 = vpack.c.b16 %v1521, %v1512
    %v1936 = vpack.c.b16 %v1522, %v1513
    %v1937 = vpack.c.b16 %v1523, %v1514
    %v1938 = vpack.c.b16 %v1524, %v1515
    %v1939 = vpack.c.b16 %v1525, %v1516
    %v1940 = vpack.c.b16 %v1526, %v1517
    %v1941 = vpack.c.b16 %v1527, %v1518
    %v1942 = vpack.c.b16 %v1528, %v1519
    %v1943 = vpack.c.b16 %v1529, %v1520
    %v1944 = vpack.c.b16 %v1539, %v1530
    %v1945 = vpack.c.b16 %v1540, %v1531
    %v1946 = vpack.c.b16 %v1541, %v1532
    %v1947 = vpack.c.b16 %v1542, %v1533
    %v1948 = vpack.c.b16 %v1543, %v1534
    %v1949 = vpack.c.b16 %v1544, %v1535
    %v1950 = vpack.c.b16 %v1545, %v1536
    %v1951 = vpack.c.b16 %v1546, %v1537
    %v1952 = vpack.c.b16 %v1547, %v1538
    %v1953 = vpack.c.b16 %v1557, %v1548
    %v1954 = vpack.c.b16 %v1558, %v1549
    %v1955 = vpack.c.b16 %v1559, %v1550
    %v1956 = vpack.c.b16 %v1560, %v1551
    %v1957 = vpack.c.b16 %v1561, %v1552
    %v1958 = vpack.c.b16 %v1562, %v1553
    %v1959 = vpack.c.b16 %v1563, %v1554
    %v1960 = vpack.c.b16 %v1564, %v1555
    %v1961 = vpack.c.b16 %v1565, %v1556
    %v1962 = vpack.c.b16 %v1575, %v1566
    %v1963 = vpack.c.b16 %v1576, %v1567
    %v1964 = vpack.c.b16 %v1577, %v1568
    %v1965 = vpack.c.b16 %v1578, %v1569
    %v1966 = vpack.c.b16 %v1579, %v1570
    %v1967 = vpack.c.b16 %v1580, %v1571
    %v1968 = vpack.c.b16 %v1581, %v1572
    %v1969 = vpack.c.b16 %v1582, %v1573
    %v1970 = vpack.c.b16 %v1583, %v1574
    %v1971 = vpack.c.b16 %v1593, %v1584
    %v1972 = vpack.c.b16 %v1594, %v1585
    %v1973 = vpack.c.b16 %v1595, %v1586
    %v1974 = vpack.c.b16 %v1596, %v1587
    %v1975 = vpack.c.b16 %v1597, %v1588
    %v1976 = vpack.c.b16 %v1598, %v1589
    %v1977 = vpack.c.b16 %v1599, %v1590
    %v1978 = vpack.c.b16 %v1600, %v1591
    %v1979 = vpack.c.b16 %v1601, %v1592
    %v1980 = vpack.c.b16 %v1611, %v1602
    %v1981 = vpack.c.b16 %v1612, %v1603
    %v1982 = vpack.c.b16 %v1613, %v1604
    %v1983 = vpack.c.b16 %v1614, %v1605
    %v1984 = vpack.c.b16 %v1615, %v1606
    %v1985 = vpack.c.b16 %v1616, %v1607
    %v1986 = vpack.c.b16 %v1617, %v1608
    %v1987 = vpack.c.b16 %v1618, %v1609
    %v1988 = vpack.c.b16 %v1619, %v1610
    %v1989 = vpack.c.b16 %v1629, %v1620
    %v1990 = vpack.c.b16 %v1630, %v1621
    %v1991 = vpack.c.b16 %v1631, %v1622
    %v1992 = vpack.c.b16 %v1632, %v1623
    %v1993 = vpack.c.b16 %v1633, %v1624
    %v1994 = vpack.c.b16 %v1634, %v1625
    %v1995 = vpack.c.b16 %v1635, %v1626
    %v1996 = vpack.c.b16 %v1636, %v1627
    %v1997 = vpack.c.b16 %v1637, %v1628
    %v1998 = vpack.c.b16 %v1647, %v1638
    %v1999 = vpack.c.b16 %v1648, %v1639
    %v2000 = vpack.c.b16 %v1649, %v1640
    %v2001 = vpack.c.b16 %v1650, %v1641
    %v2002 = vpack.c.b16 %v1651, %v1642
    %v2003 = vpack.c.b16 %v1652, %v1643
    %v2004 = vpack.c.b16 %v1653, %v1644
    %v2005 = vpack.c.b16 %v1654, %v1645
    %v2006 = vpack.c.b16 %v1655, %v1646
    %v2007 = vpack.c.b16 %v1665, %v1656
    %v2008 = vpack.c.b16 %v1666, %v1657
    %v2009 = vpack.c.b16 %v1667, %v1658
    %v2010 = vpack.c.b16 %v1668, %v1659
    %v2011 = vpack.c.b16 %v1669, %v1660
    %v2012 = vpack.c.b16 %v1670, %v1661
    %v2013 = vpack.c.b16 %v1671, %v1662
    %v2014 = vpack.c.b16 %v1672, %v1663
    %v2015 = vpack.c.b16 %v1673, %v1664
    %v2016 = vpack.c.b16 %v1683, %v1674
    %v2017 = vpack.c.b16 %v1684, %v1675
    %v2018 = vpack.c.b16 %v1685, %v1676
    %v2019 = vpack.c.b16 %v1686, %v1677
    %v2020 = vpack.c.b16 %v1687, %v1678
    %v2021 = vpack.c.b16 %v1688, %v1679
    %v2022 = vpack.c.b16 %v1689, %v1680
    %v2023 = vpack.c.b16 %v1690, %v1681
    %v2024 = vpack.c.b16 %v1691, %v1682
    %v2025 = vpack.c.b16 %v1701, %v1692
    %v2026 = vpack.c.b16 %v1702, %v1693
    %v2027 = vpack.c.b16 %v1703, %v1694
    %v2028 = vpack.c.b16 %v1704, %v1695
    %v2029 = vpack.c.b16 %v1705, %v1696
    %v2030 = vpack.c.b16 %v1706, %v1697
    %v2031 = vpack.c.b16 %v1707, %v1698
    %v2032 = vpack.c.b16 %v1708, %v1699
    %v2033 = vpack.c.b16 %v1709, %v1700
    %v2034 = vpack.c.b16 %v1719, %v1710
    %v2035 = vpack.c.b16 %v1720, %v1711
    %v2036 = vpack.c.b16 %v1721, %v1712
    %v2037 = vpack.c.b16 %v1722, %v1713
    %v2038 = vpack.c.b16 %v1723, %v1714
    %v2039 = vpack.c.b16 %v1724, %v1715
    %v2040 = vpack.c.b16 %v1725, %v1716
    %v2041 = vpack.c.b16 %v1726, %v1717
    %v2042 = vpack.c.b16 %v1727, %v1718
    %v2043 = vpack.c.b16 %v1737, %v1728
    %v2044 = vpack.c.b16 %v1738, %v1729
    %v2045 = vpack.c.b16 %v1739, %v1730
    %v2046 = vpack.c.b16 %v1740, %v1731
    %v2047 = vpack.c.b16 %v1741, %v1732
    %v2048 = vpack.c.b16 %v1742, %v1733
    %v2049 = vpack.c.b16 %v1743, %v1734
    %v2050 = vpack.c.b16 %v1744, %v1735
    %v2051 = vpack.c.b16 %v1745, %v1736
    %v2052 = vpack.c.b16 %v1755, %v1746
    %v2053 = vpack.c.b16 %v1756, %v1747
    %v2054 = vpack.c.b16 %v1757, %v1748
    %v2055 = vpack.c.b16 %v1758, %v1749
    %v2056 = vpack.c.b16 %v1759, %v1750
    %v2057 = vpack.c.b16 %v1760, %v1751
    %v2058 = vpack.c.b16 %v1761, %v1752
    %v2059 = vpack.c.b16 %v1762, %v1753
    %v2060 = vpack.c.b16 %v1763, %v1754
    %v2061 = vpack.c.b16 %v1773, %v1764
    %v2062 = vpack.c.b16 %v1774, %v1765
    %v2063 = vpack.c.b16 %v1775, %v1766
    %v2064 = vpack.c.b16 %v1776, %v1767
    %v2065 = vpack.c.b16 %v1777, %v1768
    %v2066 = vpack.c.b16 %v1778, %v1769
    %v2067 = vpack.c.b16 %v1779, %v1770
    %v2068 = vpack.c.b16 %v1780, %v1771
    %v2069 = vpack.c.b16 %v1781, %v1772
    %v2070 = vpack.c.b16 %v1791, %v1782
    %v2071 = vpack.c.b16 %v1792, %v1783
    %v2072 = vpack.c.b16 %v1793, %v1784
    %v2073 = vpack.c.b16 %v1794, %v1785
    %v2074 = vpack.c.b16 %v1795, %v1786
    %v2075 = vpack.c.b16 %v1796, %v1787
    %v2076 = vpack.c.b16 %v1797, %v1788
    %v2077 = vpack.c.b16 %v1798, %v1789
    %v2078 = vpack.c.b16 %v1799, %v1790
    %v2079 = vpack.c.b16 %v1809, %v1800
    %v2080 = vpack.c.b16 %v1810, %v1801
    %v2081 = vpack.c.b16 %v1811, %v1802
    %v2082 = vpack.c.b16 %v1812, %v1803
    %v2083 = vpack.c.b16 %v1813, %v1804
    %v2084 = vpack.c.b16 %v1814, %v1805
    %v2085 = vpack.c.b16 %v1815, %v1806
    %v2086 = vpack.c.b16 %v1816, %v1807
    %v2087 = vpack.c.b16 %v1817, %v1808
    %v2088 = vpack.c.b16 %v1827, %v1818
    %v2089 = vpack.c.b16 %v1828, %v1819
    %v2090 = vpack.c.b16 %v1829, %v1820
    %v2091 = vpack.c.b16 %v1830, %v1821
    %v2092 = vpack.c.b16 %v1831, %v1822
    %v2093 = vpack.c.b16 %v1832, %v1823
    %v2094 = vpack.c.b16 %v1833, %v1824
    %v2095 = vpack.c.b16 %v1834, %v1825
    %v2096 = vpack.c.b16 %v1835, %v1826
    %v2097 = vpack.c.b16 %v1845, %v1836
    %v2098 = vpack.c.b16 %v1846, %v1837
    %v2099 = vpack.c.b16 %v1847, %v1838
    %v2100 = vpack.c.b16 %v1848, %v1839
    %v2101 = vpack.c.b16 %v1849, %v1840
    %v2102 = vpack.c.b16 %v1850, %v1841
    %v2103 = vpack.c.b16 %v1851, %v1842
    %v2104 = vpack.c.b16 %v1852, %v1843
    %v2105 = vpack.c.b16 %v1853, %v1844
    %v2106 = vpack.c.b16 %v1863, %v1854
    %v2107 = vpack.c.b16 %v1864, %v1855
    %v2108 = vpack.c.b16 %v1865, %v1856
    %v2109 = vpack.c.b16 %v1866, %v1857
    %v2110 = vpack.c.b16 %v1867, %v1858
    %v2111 = vpack.c.b16 %v1868, %v1859
    %v2112 = vpack.c.b16 %v1869, %v1860
    %v2113 = vpack.c.b16 %v1870, %v1861
    %v2114 = vpack.c.b16 %v1871, %v1862
    %v2115 = vpack.c.b16 %v1881, %v1872
    %v2116 = vpack.c.b16 %v1882, %v1873
    %v2117 = vpack.c.b16 %v1883, %v1874
    %v2118 = vpack.c.b16 %v1884, %v1875
    %v2119 = vpack.c.b16 %v1885, %v1876
    %v2120 = vpack.c.b16 %v1886, %v1877
    %v2121 = vpack.c.b16 %v1887, %v1878
    %v2122 = vpack.c.b16 %v1888, %v1879
    %v2123 = vpack.c.b16 %v1889, %v1880
    %v2124 = vpack.c.b16 %v1899, %v1890
    %v2125 = vpack.c.b16 %v1900, %v1891
    %v2126 = vpack.c.b16 %v1901, %v1892
    %v2127 = vpack.c.b16 %v1902, %v1893
    %v2128 = vpack.c.b16 %v1903, %v1894
    %v2129 = vpack.c.b16 %v1904, %v1895
    %v2130 = vpack.c.b16 %v1905, %v1896
    %v2131 = vpack.c.b16 %v1906, %v1897
    %v2132 = vpack.c.b16 %v1907, %v1898
    %v2133 = vpack.c.b16 %v1917, %v1908
    %v2134 = vpack.c.b16 %v1918, %v1909
    %v2135 = vpack.c.b16 %v1919, %v1910
    %v2136 = vpack.c.b16 %v1920, %v1911
    %v2137 = vpack.c.b16 %v1921, %v1912
    %v2138 = vpack.c.b16 %v1922, %v1913
    %v2139 = vpack.c.b16 %v1923, %v1914
    %v2140 = vpack.c.b16 %v1924, %v1915
    %v2141 = vpack.c.b16 %v1925, %v1916
    %2358 = vmatprep.subr.bf16.mxu0 %v1927
    %2359 = vmatpush1.bf16.msra.mxu0 %v1926
    %2360 = vmatprep.subr.bf16.mxu0 %v1936
    %2361 = vmatpush1.bf16.msra.mxu0 %v1935
    %2362 = vmatprep.subr.bf16.mxu0 %v1945
    %2363 = vmatpush1.bf16.msra.mxu0 %v1944
    %2364 = vmatprep.subr.bf16.mxu0 %v1954
    %2365 = vmatpush1.bf16.msra.mxu0 %v1953
    %2366 = vmatprep.subr.bf16.mxu0 %v1963
    %2367 = vmatpush1.bf16.msra.mxu0 %v1962
    %2368 = vmatprep.subr.bf16.mxu0 %v1972
    %2369 = vmatpush1.bf16.msra.mxu0 %v1971
    %2370 = vmatprep.subr.bf16.mxu0 %v1981
    %2371 = vmatpush1.bf16.msra.mxu0 %v1980
    %2372 = vmatprep.subr.bf16.mxu0 %v1990
    %2373 = vmatpush1.bf16.msra.mxu0 %v1989
    %2374 = vmatprep.subr.bf16.mxu0 %v1999
    %2375 = vmatpush1.bf16.msra.mxu0 %v1998
    %2376 = vmatprep.subr.bf16.mxu0 %v2008
    %2377 = vmatpush1.bf16.msra.mxu0 %v2007
    %2378 = vmatprep.subr.bf16.mxu0 %v2017
    %2379 = vmatpush1.bf16.msra.mxu0 %v2016
    %2380 = vmatprep.subr.bf16.mxu0 %v2026
    %2381 = vmatpush1.bf16.msra.mxu0 %v2025
    %2382 = vmatprep.subr.bf16.mxu0 %v2035
    %2383 = vmatpush1.bf16.msra.mxu0 %v2034
    %2384 = vmatprep.subr.bf16.mxu0 %v2044
    %2385 = vmatpush1.bf16.msra.mxu0 %v2043
    %2386 = vmatprep.subr.bf16.mxu0 %v2053
    %2387 = vmatpush1.bf16.msra.mxu0 %v2052
    %2388 = vmatprep.subr.bf16.mxu0 %v2062
    %2389 = vmatpush1.bf16.msra.mxu0 %v2061
    %2390 = vmatprep.mubr.bf16.mxu0 %v1205
    %2391 = vmatmul.mubr.bf16.gmra.mrb[0].mxu0 %v1204
    %v2392 = vpop.f32.mrb[0].mxu0
    %v2393 = vadd.f32 %v1212, %v2392
    %v2394 = vpop.f32.mrb[0].mxu0
    %v2395 = vadd.f32 %v1216, %v2394
    %v2396 = vpop.f32.mrb[0].mxu0
    %v2397 = vpop.f32.mrb[0].mxu0
    %2398 = vdwg.mxu0
    %2399 = vmatprep.subr.bf16.mxu0 %v2071
    %2400 = vmatpush1.bf16.msra.mxu0 %v2070
    %2401 = vmatprep.subr.bf16.mxu0 %v2080
    %2402 = vmatpush1.bf16.msra.mxu0 %v2079
    %2403 = vmatprep.subr.bf16.mxu0 %v2089
    %2404 = vmatpush1.bf16.msra.mxu0 %v2088
    %2405 = vmatprep.subr.bf16.mxu0 %v2098
    %2406 = vmatpush1.bf16.msra.mxu0 %v2097
    %2407 = vmatprep.subr.bf16.mxu0 %v2107
    %2408 = vmatpush1.bf16.msra.mxu0 %v2106
    %2409 = vmatprep.subr.bf16.mxu0 %v2116
    %2410 = vmatpush1.bf16.msra.mxu0 %v2115
    %2411 = vmatprep.subr.bf16.mxu0 %v2125
    %2412 = vmatpush1.bf16.msra.mxu0 %v2124
    %2413 = vmatprep.subr.bf16.mxu0 %v2134
    %2414 = vmatpush1.bf16.msra.mxu0 %v2133
    %2415 = vmatprep.subr.bf16.mxu0 0
    %2416 = vmatpush1.bf16.msra.mxu0 0
    %2417 = vmatprep.subr.bf16.mxu0 0
    %2418 = vmatpush1.bf16.msra.mxu0 0
    %2419 = vmatprep.subr.bf16.mxu0 0
    %2420 = vmatpush1.bf16.msra.mxu0 0
    %2421 = vmatprep.subr.bf16.mxu0 0
    %2422 = vmatpush1.bf16.msra.mxu0 0
    %2423 = vmatprep.subr.bf16.mxu0 0
    %2424 = vmatpush1.bf16.msra.mxu0 0
    %2425 = vmatprep.subr.bf16.mxu0 0
    %2426 = vmatpush1.bf16.msra.mxu0 0
    %2427 = vmatprep.subr.bf16.mxu0 0
    %2428 = vmatpush1.bf16.msra.mxu0 0
    %2429 = vmatprep.subr.bf16.mxu0 0
    %2430 = vmatpush1.bf16.msra.mxu0 0
    %2431 = vmatprep.mubr.bf16.mxu0 0
    %2432 = vmatmul.mubr.bf16.gmra.mrb[0].mxu0 %v1206
    %v2433 = vpop.f32.mrb[0].mxu0
    %v2434 = vadd.f32 %v2393, %v2433
    %v2435 = vpop.f32.mrb[0].mxu0
    %v2436 = vadd.f32 %v2395, %v2435
    %v2437 = vpop.f32.mrb[0].mxu0
    %v2438 = vpop.f32.mrb[0].mxu0
    %2439 = vdwg.mxu0
    %2440 = vmatprep.subr.bf16.mxu0 %v1929
    %2441 = vmatpush1.bf16.msra.mxu0 %v1928
    %2442 = vmatprep.subr.bf16.mxu0 %v1938
    %2443 = vmatpush1.bf16.msra.mxu0 %v1937
    %2444 = vmatprep.subr.bf16.mxu0 %v1947
    %2445 = vmatpush1.bf16.msra.mxu0 %v1946
    %2446 = vmatprep.subr.bf16.mxu0 %v1956
    %2447 = vmatpush1.bf16.msra.mxu0 %v1955
    %2448 = vmatprep.subr.bf16.mxu0 %v1965
    %2449 = vmatpush1.bf16.msra.mxu0 %v1964
    %2450 = vmatprep.subr.bf16.mxu0 %v1974
    %2451 = vmatpush1.bf16.msra.mxu0 %v1973
    %2452 = vmatprep.subr.bf16.mxu0 %v1983
    %2453 = vmatpush1.bf16.msra.mxu0 %v1982
    %2454 = vmatprep.subr.bf16.mxu0 %v1992
    %2455 = vmatpush1.bf16.msra.mxu0 %v1991
    %2456 = vmatprep.subr.bf16.mxu0 %v2001
    %2457 = vmatpush1.bf16.msra.mxu0 %v2000
    %2458 = vmatprep.subr.bf16.mxu0 %v2010
    %2459 = vmatpush1.bf16.msra.mxu0 %v2009
    %2460 = vmatprep.subr.bf16.mxu0 %v2019
    %2461 = vmatpush1.bf16.msra.mxu0 %v2018
    %2462 = vmatprep.subr.bf16.mxu0 %v2028
    %2463 = vmatpush1.bf16.msra.mxu0 %v2027
    %2464 = vmatprep.subr.bf16.mxu0 %v2037
    %2465 = vmatpush1.bf16.msra.mxu0 %v2036
    %2466 = vmatprep.subr.bf16.mxu0 %v2046
    %2467 = vmatpush1.bf16.msra.mxu0 %v2045
    %2468 = vmatprep.subr.bf16.mxu0 %v2055
    %2469 = vmatpush1.bf16.msra.mxu0 %v2054
    %2470 = vmatprep.subr.bf16.mxu0 %v2064
    %2471 = vmatpush1.bf16.msra.mxu0 %v2063
    %2472 = vmatprep.mubr.bf16.mxu0 %v1205
    %2473 = vmatmul.mubr.bf16.gmra.mrb[0].mxu0 %v1204
    %v2474 = vpop.f32.mrb[0].mxu0
    %v2475 = vadd.f32 %v1220, %v2474
    %v2476 = vpop.f32.mrb[0].mxu0
    %v2477 = vadd.f32 %v1224, %v2476
    %v2478 = vpop.f32.mrb[0].mxu0
    %v2479 = vpop.f32.mrb[0].mxu0
    %2480 = vdwg.mxu0
    %2481 = vmatprep.subr.bf16.mxu0 %v2073
    %2482 = vmatpush1.bf16.msra.mxu0 %v2072
    %2483 = vmatprep.subr.bf16.mxu0 %v2082
    %2484 = vmatpush1.bf16.msra.mxu0 %v2081
    %2485 = vmatprep.subr.bf16.mxu0 %v2091
    %2486 = vmatpush1.bf16.msra.mxu0 %v2090
    %2487 = vmatprep.subr.bf16.mxu0 %v2100
    %2488 = vmatpush1.bf16.msra.mxu0 %v2099
    %2489 = vmatprep.subr.bf16.mxu0 %v2109
    %2490 = vmatpush1.bf16.msra.mxu0 %v2108
    %2491 = vmatprep.subr.bf16.mxu0 %v2118
    %2492 = vmatpush1.bf16.msra.mxu0 %v2117
    %2493 = vmatprep.subr.bf16.mxu0 %v2127
    %2494 = vmatpush1.bf16.msra.mxu0 %v2126
    %2495 = vmatprep.subr.bf16.mxu0 %v2136
    %2496 = vmatpush1.bf16.msra.mxu0 %v2135
    %2497 = vmatprep.subr.bf16.mxu0 0
    %2498 = vmatpush1.bf16.msra.mxu0 0
    %2499 = vmatprep.subr.bf16.mxu0 0
    %2500 = vmatpush1.bf16.msra.mxu0 0
    %2501 = vmatprep.subr.bf16.mxu0 0
    %2502 = vmatpush1.bf16.msra.mxu0 0
    %2503 = vmatprep.subr.bf16.mxu0 0
    %2504 = vmatpush1.bf16.msra.mxu0 0
    %2505 = vmatprep.subr.bf16.mxu0 0
    %2506 = vmatpush1.bf16.msra.mxu0 0
    %2507 = vmatprep.subr.bf16.mxu0 0
    %2508 = vmatpush1.bf16.msra.mxu0 0
    %2509 = vmatprep.subr.bf16.mxu0 0
    %2510 = vmatpush1.bf16.msra.mxu0 0
    %2511 = vmatprep.subr.bf16.mxu0 0
    %2512 = vmatpush1.bf16.msra.mxu0 0
    %2513 = vmatprep.mubr.bf16.mxu0 0
    %2514 = vmatmul.mubr.bf16.gmra.mrb[0].mxu0 %v1206
    %v2515 = vpop.f32.mrb[0].mxu0
    %v2516 = vadd.f32 %v2475, %v2515
    %v2517 = vpop.f32.mrb[0].mxu0
    %v2518 = vadd.f32 %v2477, %v2517
    %v2519 = vpop.f32.mrb[0].mxu0
    %v2520 = vpop.f32.mrb[0].mxu0
    %2521 = vdwg.mxu0
    %2522 = vmatprep.subr.bf16.mxu0 %v1931
    %2523 = vmatpush1.bf16.msra.mxu0 %v1930
    %2524 = vmatprep.subr.bf16.mxu0 %v1940
    %2525 = vmatpush1.bf16.msra.mxu0 %v1939
    %2526 = vmatprep.subr.bf16.mxu0 %v1949
    %2527 = vmatpush1.bf16.msra.mxu0 %v1948
    %2528 = vmatprep.subr.bf16.mxu0 %v1958
    %2529 = vmatpush1.bf16.msra.mxu0 %v1957
    %2530 = vmatprep.subr.bf16.mxu0 %v1967
    %2531 = vmatpush1.bf16.msra.mxu0 %v1966
    %2532 = vmatprep.subr.bf16.mxu0 %v1976
    %2533 = vmatpush1.bf16.msra.mxu0 %v1975
    %2534 = vmatprep.subr.bf16.mxu0 %v1985
    %2535 = vmatpush1.bf16.msra.mxu0 %v1984
    %2536 = vmatprep.subr.bf16.mxu0 %v1994
    %2537 = vmatpush1.bf16.msra.mxu0 %v1993
    %2538 = vmatprep.subr.bf16.mxu0 %v2003
    %2539 = vmatpush1.bf16.msra.mxu0 %v2002
    %2540 = vmatprep.subr.bf16.mxu0 %v2012
    %2541 = vmatpush1.bf16.msra.mxu0 %v2011
    %2542 = vmatprep.subr.bf16.mxu0 %v2021
    %2543 = vmatpush1.bf16.msra.mxu0 %v2020
    %2544 = vmatprep.subr.bf16.mxu0 %v2030
    %2545 = vmatpush1.bf16.msra.mxu0 %v2029
    %2546 = vmatprep.subr.bf16.mxu0 %v2039
    %2547 = vmatpush1.bf16.msra.mxu0 %v2038
    %2548 = vmatprep.subr.bf16.mxu0 %v2048
    %2549 = vmatpush1.bf16.msra.mxu0 %v2047
    %2550 = vmatprep.subr.bf16.mxu0 %v2057
    %2551 = vmatpush1.bf16.msra.mxu0 %v2056
    %2552 = vmatprep.subr.bf16.mxu0 %v2066
    %2553 = vmatpush1.bf16.msra.mxu0 %v2065
    %2554 = vmatprep.mubr.bf16.mxu0 %v1205
    %2555 = vmatmul.mubr.bf16.gmra.mrb[0].mxu0 %v1204
    %v2556 = vpop.f32.mrb[0].mxu0
    %v2557 = vadd.f32 %v1228, %v2556
    %v2558 = vpop.f32.mrb[0].mxu0
    %v2559 = vadd.f32 %v1232, %v2558
    %v2560 = vpop.f32.mrb[0].mxu0
    %v2561 = vpop.f32.mrb[0].mxu0
    %2562 = vdwg.mxu0
    %2563 = vmatprep.subr.bf16.mxu0 %v2075
    %2564 = vmatpush1.bf16.msra.mxu0 %v2074
    %2565 = vmatprep.subr.bf16.mxu0 %v2084
    %2566 = vmatpush1.bf16.msra.mxu0 %v2083
    %2567 = vmatprep.subr.bf16.mxu0 %v2093
    %2568 = vmatpush1.bf16.msra.mxu0 %v2092
    %2569 = vmatprep.subr.bf16.mxu0 %v2102
    %2570 = vmatpush1.bf16.msra.mxu0 %v2101
    %2571 = vmatprep.subr.bf16.mxu0 %v2111
    %2572 = vmatpush1.bf16.msra.mxu0 %v2110
    %2573 = vmatprep.subr.bf16.mxu0 %v2120
    %2574 = vmatpush1.bf16.msra.mxu0 %v2119
    %2575 = vmatprep.subr.bf16.mxu0 %v2129
    %2576 = vmatpush1.bf16.msra.mxu0 %v2128
    %2577 = vmatprep.subr.bf16.mxu0 %v2138
    %2578 = vmatpush1.bf16.msra.mxu0 %v2137
    %2579 = vmatprep.subr.bf16.mxu0 0
    %2580 = vmatpush1.bf16.msra.mxu0 0
    %2581 = vmatprep.subr.bf16.mxu0 0
    %2582 = vmatpush1.bf16.msra.mxu0 0
    %2583 = vmatprep.subr.bf16.mxu0 0
    %2584 = vmatpush1.bf16.msra.mxu0 0
    %2585 = vmatprep.subr.bf16.mxu0 0
    %2586 = vmatpush1.bf16.msra.mxu0 0
    %2587 = vmatprep.subr.bf16.mxu0 0
    %2588 = vmatpush1.bf16.msra.mxu0 0
    %2589 = vmatprep.subr.bf16.mxu0 0
    %2590 = vmatpush1.bf16.msra.mxu0 0
    %2591 = vmatprep.subr.bf16.mxu0 0
    %2592 = vmatpush1.bf16.msra.mxu0 0
    %2593 = vmatprep.subr.bf16.mxu0 0
    %2594 = vmatpush1.bf16.msra.mxu0 0
    %2595 = vmatprep.mubr.bf16.mxu0 0
    %2596 = vmatmul.mubr.bf16.gmra.mrb[0].mxu0 %v1206
    %v2597 = vpop.f32.mrb[0].mxu0
    %v2598 = vadd.f32 %v2557, %v2597
    %v2599 = vpop.f32.mrb[0].mxu0
    %v2600 = vadd.f32 %v2559, %v2599
    %v2601 = vpop.f32.mrb[0].mxu0
    %v2602 = vpop.f32.mrb[0].mxu0
    %2603 = vdwg.mxu0
    %2604 = vmatprep.subr.bf16.mxu0 %v1933
    %2605 = vmatpush1.bf16.msra.mxu0 %v1932
    %2606 = vmatprep.subr.bf16.mxu0 %v1942
    %2607 = vmatpush1.bf16.msra.mxu0 %v1941
    %2608 = vmatprep.subr.bf16.mxu0 %v1951
    %2609 = vmatpush1.bf16.msra.mxu0 %v1950
    %2610 = vmatprep.subr.bf16.mxu0 %v1960
    %2611 = vmatpush1.bf16.msra.mxu0 %v1959
    %2612 = vmatprep.subr.bf16.mxu0 %v1969
    %2613 = vmatpush1.bf16.msra.mxu0 %v1968
    %2614 = vmatprep.subr.bf16.mxu0 %v1978
    %2615 = vmatpush1.bf16.msra.mxu0 %v1977
    %2616 = vmatprep.subr.bf16.mxu0 %v1987
    %2617 = vmatpush1.bf16.msra.mxu0 %v1986
    %2618 = vmatprep.subr.bf16.mxu0 %v1996
    %2619 = vmatpush1.bf16.msra.mxu0 %v1995
    %2620 = vmatprep.subr.bf16.mxu0 %v2005
    %2621 = vmatpush1.bf16.msra.mxu0 %v2004
    %2622 = vmatprep.subr.bf16.mxu0 %v2014
    %2623 = vmatpush1.bf16.msra.mxu0 %v2013
    %2624 = vmatprep.subr.bf16.mxu0 %v2023
    %2625 = vmatpush1.bf16.msra.mxu0 %v2022
    %2626 = vmatprep.subr.bf16.mxu0 %v2032
    %2627 = vmatpush1.bf16.msra.mxu0 %v2031
    %2628 = vmatprep.subr.bf16.mxu0 %v2041
    %2629 = vmatpush1.bf16.msra.mxu0 %v2040
    %2630 = vmatprep.subr.bf16.mxu0 %v2050
    %2631 = vmatpush1.bf16.msra.mxu0 %v2049
    %2632 = vmatprep.subr.bf16.mxu0 %v2059
    %2633 = vmatpush1.bf16.msra.mxu0 %v2058
    %2634 = vmatprep.subr.bf16.mxu0 %v2068
    %2635 = vmatpush1.bf16.msra.mxu0 %v2067
    %2636 = vmatprep.mubr.bf16.mxu0 %v1205
    %2637 = vmatmul.mubr.bf16.gmra.mrb[0].mxu0 %v1204
    %v2638 = vpop.f32.mrb[0].mxu0
    %v2639 = vadd.f32 %v1236, %v2638
    %v2640 = vpop.f32.mrb[0].mxu0
    %v2641 = vadd.f32 %v1240, %v2640
    %v2642 = vpop.f32.mrb[0].mxu0
    %v2643 = vpop.f32.mrb[0].mxu0
    %2644 = vdwg.mxu0
    %2645 = vmatprep.subr.bf16.mxu0 %v2077
    %2646 = vmatpush1.bf16.msra.mxu0 %v2076
    %2647 = vmatprep.subr.bf16.mxu0 %v2086
    %2648 = vmatpush1.bf16.msra.mxu0 %v2085
    %2649 = vmatprep.subr.bf16.mxu0 %v2095
    %2650 = vmatpush1.bf16.msra.mxu0 %v2094
    %2651 = vmatprep.subr.bf16.mxu0 %v2104
    %2652 = vmatpush1.bf16.msra.mxu0 %v2103
    %2653 = vmatprep.subr.bf16.mxu0 %v2113
    %2654 = vmatpush1.bf16.msra.mxu0 %v2112
    %2655 = vmatprep.subr.bf16.mxu0 %v2122
    %2656 = vmatpush1.bf16.msra.mxu0 %v2121
    %2657 = vmatprep.subr.bf16.mxu0 %v2131
    %2658 = vmatpush1.bf16.msra.mxu0 %v2130
    %2659 = vmatprep.subr.bf16.mxu0 %v2140
    %2660 = vmatpush1.bf16.msra.mxu0 %v2139
    %2661 = vmatprep.subr.bf16.mxu0 0
    %2662 = vmatpush1.bf16.msra.mxu0 0
    %2663 = vmatprep.subr.bf16.mxu0 0
    %2664 = vmatpush1.bf16.msra.mxu0 0
    %2665 = vmatprep.subr.bf16.mxu0 0
    %2666 = vmatpush1.bf16.msra.mxu0 0
    %2667 = vmatprep.subr.bf16.mxu0 0
    %2668 = vmatpush1.bf16.msra.mxu0 0
    %2669 = vmatprep.subr.bf16.mxu0 0
    %2670 = vmatpush1.bf16.msra.mxu0 0
    %2671 = vmatprep.subr.bf16.mxu0 0
    %2672 = vmatpush1.bf16.msra.mxu0 0
    %2673 = vmatprep.subr.bf16.mxu0 0
    %2674 = vmatpush1.bf16.msra.mxu0 0
    %2675 = vmatprep.subr.bf16.mxu0 0
    %2676 = vmatpush1.bf16.msra.mxu0 0
    %2677 = vmatprep.mubr.bf16.mxu0 0
    %2678 = vmatmul.mubr.bf16.gmra.mrb[0].mxu0 %v1206
    %v2679 = vpop.f32.mrb[0].mxu0
    %v2680 = vadd.f32 %v2639, %v2679
    %v2681 = vpop.f32.mrb[0].mxu0
    %v2682 = vadd.f32 %v2641, %v2681
    %v2683 = vpop.f32.mrb[0].mxu0
    %v2684 = vpop.f32.mrb[0].mxu0
    %2685 = vdwg.mxu0
    %2686 = vmatprep.subr.bf16.mxu0 0
    %2687 = vmatpush1.bf16.msra.mxu0 %v1934
    %2688 = vmatprep.subr.bf16.mxu0 0
    %2689 = vmatpush1.bf16.msra.mxu0 %v1943
    %2690 = vmatprep.subr.bf16.mxu0 0
    %2691 = vmatpush1.bf16.msra.mxu0 %v1952
    %2692 = vmatprep.subr.bf16.mxu0 0
    %2693 = vmatpush1.bf16.msra.mxu0 %v1961
    %2694 = vmatprep.subr.bf16.mxu0 0
    %2695 = vmatpush1.bf16.msra.mxu0 %v1970
    %2696 = vmatprep.subr.bf16.mxu0 0
    %2697 = vmatpush1.bf16.msra.mxu0 %v1979
    %2698 = vmatprep.subr.bf16.mxu0 0
    %2699 = vmatpush1.bf16.msra.mxu0 %v1988
    %2700 = vmatprep.subr.bf16.mxu0 0
    %2701 = vmatpush1.bf16.msra.mxu0 %v1997
    %2702 = vmatprep.subr.bf16.mxu0 0
    %2703 = vmatpush1.bf16.msra.mxu0 %v2006
    %2704 = vmatprep.subr.bf16.mxu0 0
    %2705 = vmatpush1.bf16.msra.mxu0 %v2015
    %2706 = vmatprep.subr.bf16.mxu0 0
    %2707 = vmatpush1.bf16.msra.mxu0 %v2024
    %2708 = vmatprep.subr.bf16.mxu0 0
    %2709 = vmatpush1.bf16.msra.mxu0 %v2033
    %2710 = vmatprep.subr.bf16.mxu0 0
    %2711 = vmatpush1.bf16.msra.mxu0 %v2042
    %2712 = vmatprep.subr.bf16.mxu0 0
    %2713 = vmatpush1.bf16.msra.mxu0 %v2051
    %2714 = vmatprep.subr.bf16.mxu0 0
    %2715 = vmatpush1.bf16.msra.mxu0 %v2060
    %2716 = vmatprep.subr.bf16.mxu0 0
    %2717 = vmatpush1.bf16.msra.mxu0 %v2069
    %2718 = vmatprep.mubr.bf16.mxu0 %v1205
    %2719 = vmatmul.mubr.bf16.gmra.mrb[0].mxu0 %v1204
    %v2720 = vpop.f32.mrb[0].mxu0
    %v2721 = vadd.f32 %v1244, %v2720
    %v2722 = vpop.f32.mrb[0].mxu0
    %v2723 = vpop.f32.mrb[0].mxu0
    %v2724 = vpop.f32.mrb[0].mxu0
    %2725 = vdwg.mxu0
    %2726 = vmatprep.subr.bf16.mxu0 0
    %2727 = vmatpush1.bf16.msra.mxu0 %v2078
    %2728 = vmatprep.subr.bf16.mxu0 0
    %2729 = vmatpush1.bf16.msra.mxu0 %v2087
    %2730 = vmatprep.subr.bf16.mxu0 0
    %2731 = vmatpush1.bf16.msra.mxu0 %v2096
    %2732 = vmatprep.subr.bf16.mxu0 0
    %2733 = vmatpush1.bf16.msra.mxu0 %v2105
    %2734 = vmatprep.subr.bf16.mxu0 0
    %2735 = vmatpush1.bf16.msra.mxu0 %v2114
    %2736 = vmatprep.subr.bf16.mxu0 0
    %2737 = vmatpush1.bf16.msra.mxu0 %v2123
    %2738 = vmatprep.subr.bf16.mxu0 0
    %2739 = vmatpush1.bf16.msra.mxu0 %v2132
    %2740 = vmatprep.subr.bf16.mxu0 0
    %2741 = vmatpush1.bf16.msra.mxu0 %v2141
    %2742 = vmatprep.subr.bf16.mxu0 0
    %2743 = vmatpush1.bf16.msra.mxu0 0
    %2744 = vmatprep.subr.bf16.mxu0 0
    %2745 = vmatpush1.bf16.msra.mxu0 0
    %2746 = vmatprep.subr.bf16.mxu0 0
    %2747 = vmatpush1.bf16.msra.mxu0 0
    %2748 = vmatprep.subr.bf16.mxu0 0
    %2749 = vmatpush1.bf16.msra.mxu0 0
    %2750 = vmatprep.subr.bf16.mxu0 0
    %2751 = vmatpush1.bf16.msra.mxu0 0
    %2752 = vmatprep.subr.bf16.mxu0 0
    %2753 = vmatpush1.bf16.msra.mxu0 0
    %2754 = vmatprep.subr.bf16.mxu0 0
    %2755 = vmatpush1.bf16.msra.mxu0 0
    %2756 = vmatprep.subr.bf16.mxu0 0
    %2757 = vmatpush1.bf16.msra.mxu0 0
    %2758 = vmatprep.mubr.bf16.mxu0 0
    %2759 = vmatmul.mubr.bf16.gmra.mrb[0].mxu0 %v1206
    %v2760 = vpop.f32.mrb[0].mxu0
    %v2761 = vadd.f32 %v2721, %v2760
    %v2762 = vpop.f32.mrb[0].mxu0
    %v2763 = vpop.f32.mrb[0].mxu0
    %v2764 = vpop.f32.mrb[0].mxu0
    %2765 = vdwg.mxu0
    %v2766 = vadd.f32 %v1195, %v2434
    %v2767 = vadd.f32 %v1196, %v2436
    %v2768 = vadd.f32 %v1197, %v2516
    %v2769 = vxor.u32 %v2766, 2147483648
    %v2770 = vxor.u32 %v2767, 2147483648
    %v2771 = vxor.u32 %v2768, 2147483648
    %v2772 = vmul.f32 %v2769, 1.442695
    %v2773 = vpow.pop %v2772
    %v2774 = vmul.f32 %v2770, 1.442695
    %v2775 = vpow.pop %v2774
    %v2776 = vmul.f32 %v2771, 1.442695
    %v2777 = vpow.pop %v2776
    %v2778 = vadd.f32 %v2773, 1.0
    %v2779 = vadd.f32 %v2775, 1.0
    %v2780 = vadd.f32 %v2777, 1.0
    %v2781 = vrcp.pop %v2778
    %v2782 = vmul.f32 1.0, %v2781
    %v2783 = vrcp.pop %v2779
    %v2784 = vmul.f32 1.0, %v2783
    %v2785 = vrcp.pop %v2780
    %v2786 = vmul.f32 1.0, %v2785
    %v2787 = vadd.f32 %v1198, %v2518
    %v2788 = vadd.f32 %v1199, %v2598
    %v2789 = vadd.f32 %v1200, %v2600
    %v2790 = vxor.u32 %v2787, 2147483648
    %v2791 = vxor.u32 %v2788, 2147483648
    %v2792 = vxor.u32 %v2789, 2147483648
    %v2793 = vmul.f32 %v2790, 1.442695
    %v2794 = vpow.pop %v2793
    %v2795 = vmul.f32 %v2791, 1.442695
    %v2796 = vpow.pop %v2795
    %v2797 = vmul.f32 %v2792, 1.442695
    %v2798 = vpow.pop %v2797
    %v2799 = vadd.f32 %v2794, 1.0
    %v2800 = vadd.f32 %v2796, 1.0
    %v2801 = vadd.f32 %v2798, 1.0
    %v2802 = vrcp.pop %v2799
    %v2803 = vmul.f32 1.0, %v2802
    %v2804 = vrcp.pop %v2800
    %v2805 = vmul.f32 1.0, %v2804
    %v2806 = vrcp.pop %v2801
    %v2807 = vmul.f32 1.0, %v2806
    %v2808 = vmul.f32 %v2782, %v2680
    %v2809 = vmul.f32 %v2784, %v2682
    %v2810 = vmul.f32 %v2786, %v2761
    %v2811 = vadd.f32 %v1201, %v2808
    %v2812 = vadd.f32 %v1202, %v2809
    %v2813 = vadd.f32 %v1203, %v2810
    %v2814 = vtanh.pop %v2811
    %v2815 = vtanh.pop %v2812
    %v2816 = vtanh.pop %v2813
    %v2817 = vsub.f32 1.0, %v2803
    %v2818 = vsub.f32 1.0, %v2805
    %v2819 = vsub.f32 1.0, %v2807
    %v2820 = vmul.f32 %v2817, %v2814
    %v2821 = vmul.f32 %v2818, %v2815
    %v2822 = vmul.f32 %v2819, %v2816
    %v2823 = vmul.f32 %v2803, %v393
    %v2824 = vmul.f32 %v2805, %v394
    %v2825 = vmul.f32 %v2807, %v395
    %v2826 = vadd.f32 %v2820, %v2823
    %v2827 = vadd.f32 %v2821, %v2824
    %v2828 = vadd.f32 %v2822, %v2825
    %v2829 = vmul.f32 %v2826, %v57
    %v2830 = vmul.f32 %v2827, %v58
    %v2831 = vmul.f32 %v2828, %v59
    %2832 = vst [vmem:[#allocation3] sm:$0xff] %v2829
    %2833 = vst [vmem:[#allocation3 + $0x8] sm:$0xff] %v2830
    %2834 = vst [vmem:[#allocation3 + $0x10] sm:$0xff] %v2831
    %v2835 = vld [vmem:[#allocation2 + $0x48] sm:$0xff]
    %v2836 = vld [vmem:[#allocation2 + $0x50] sm:$0xff]
    %v2837 = vld [vmem:[#allocation2 + $0x58] sm:$0xff]
    %v2838 = vld [vmem:[#allocation2 + $0x60] sm:$0xff]
    %v2839 = vld [vmem:[#allocation2 + $0x68] sm:$0xff]
    %v2840 = vld [vmem:[#allocation2 + $0x70] sm:$0xff]
    %v2841 = vld [vmem:[#allocation2 + $0x78] sm:$0xff]
    %v2842 = vld [vmem:[#allocation2 + $0x80] sm:$0xff]
    %v2843 = vld [vmem:[#allocation2 + $0x88] sm:$0xff]
    %v2844 = vpack.c.bf16 %v2826, %v2826
    %v2845 = vpack.c.bf16 %v2827, %v2827
    %v2846 = vpack.c.bf16 %v2828, %v2828
    %2847 = vmatprep.subr.bf16.mxu0 %v1927
    %2848 = vmatpush1.bf16.msra.mxu0 %v1926
    %2849 = vmatprep.subr.bf16.mxu0 %v1936
    %2850 = vmatpush1.bf16.msra.mxu0 %v1935
    %2851 = vmatprep.subr.bf16.mxu0 %v1945
    %2852 = vmatpush1.bf16.msra.mxu0 %v1944
    %2853 = vmatprep.subr.bf16.mxu0 %v1954
    %2854 = vmatpush1.bf16.msra.mxu0 %v1953
    %2855 = vmatprep.subr.bf16.mxu0 %v1963
    %2856 = vmatpush1.bf16.msra.mxu0 %v1962
    %2857 = vmatprep.subr.bf16.mxu0 %v1972
    %2858 = vmatpush1.bf16.msra.mxu0 %v1971
    %2859 = vmatprep.subr.bf16.mxu0 %v1981
    %2860 = vmatpush1.bf16.msra.mxu0 %v1980
    %2861 = vmatprep.subr.bf16.mxu0 %v1990
    %2862 = vmatpush1.bf16.msra.mxu0 %v1989
    %2863 = vmatprep.subr.bf16.mxu0 %v1999
    %2864 = vmatpush1.bf16.msra.mxu0 %v1998
    %2865 = vmatprep.subr.bf16.mxu0 %v2008
    %2866 = vmatpush1.bf16.msra.mxu0 %v2007
    %2867 = vmatprep.subr.bf16.mxu0 %v2017
    %2868 = vmatpush1.bf16.msra.mxu0 %v2016
    %2869 = vmatprep.subr.bf16.mxu0 %v2026
    %2870 = vmatpush1.bf16.msra.mxu0 %v2025
    %2871 = vmatprep.subr.bf16.mxu0 %v2035
    %2872 = vmatpush1.bf16.msra.mxu0 %v2034
    %2873 = vmatprep.subr.bf16.mxu0 %v2044
    %2874 = vmatpush1.bf16.msra.mxu0 %v2043
    %2875 = vmatprep.subr.bf16.mxu0 %v2053
    %2876 = vmatpush1.bf16.msra.mxu0 %v2052
    %2877 = vmatprep.subr.bf16.mxu0 %v2062
    %2878 = vmatpush1.bf16.msra.mxu0 %v2061
    %2879 = vmatprep.mubr.bf16.mxu0 %v2845
    %2880 = vmatmul.mubr.bf16.gmra.mrb[0].mxu0 %v2844
    %v2881 = vpop.f32.mrb[0].mxu0
    %v2882 = vadd.f32 %v1212, %v2881
    %v2883 = vpop.f32.mrb[0].mxu0
    %v2884 = vadd.f32 %v1216, %v2883
    %v2885 = vpop.f32.mrb[0].mxu0
    %v2886 = vpop.f32.mrb[0].mxu0
    %2887 = vdwg.mxu0
    %2888 = vmatprep.subr.bf16.mxu0 %v2071
    %2889 = vmatpush1.bf16.msra.mxu0 %v2070
    %2890 = vmatprep.subr.bf16.mxu0 %v2080
    %2891 = vmatpush1.bf16.msra.mxu0 %v2079
    %2892 = vmatprep.subr.bf16.mxu0 %v2089
    %2893 = vmatpush1.bf16.msra.mxu0 %v2088
    %2894 = vmatprep.subr.bf16.mxu0 %v2098
    %2895 = vmatpush1.bf16.msra.mxu0 %v2097
    %2896 = vmatprep.subr.bf16.mxu0 %v2107
    %2897 = vmatpush1.bf16.msra.mxu0 %v2106
    %2898 = vmatprep.subr.bf16.mxu0 %v2116
    %2899 = vmatpush1.bf16.msra.mxu0 %v2115
    %2900 = vmatprep.subr.bf16.mxu0 %v2125
    %2901 = vmatpush1.bf16.msra.mxu0 %v2124
    %2902 = vmatprep.subr.bf16.mxu0 %v2134
    %2903 = vmatpush1.bf16.msra.mxu0 %v2133
    %2904 = vmatprep.subr.bf16.mxu0 0
    %2905 = vmatpush1.bf16.msra.mxu0 0
    %2906 = vmatprep.subr.bf16.mxu0 0
    %2907 = vmatpush1.bf16.msra.mxu0 0
    %2908 = vmatprep.subr.bf16.mxu0 0
    %2909 = vmatpush1.bf16.msra.mxu0 0
    %2910 = vmatprep.subr.bf16.mxu0 0
    %2911 = vmatpush1.bf16.msra.mxu0 0
    %2912 = vmatprep.subr.bf16.mxu0 0
    %2913 = vmatpush1.bf16.msra.mxu0 0
    %2914 = vmatprep.subr.bf16.mxu0 0
    %2915 = vmatpush1.bf16.msra.mxu0 0
    %2916 = vmatprep.subr.bf16.mxu0 0
    %2917 = vmatpush1.bf16.msra.mxu0 0
    %2918 = vmatprep.subr.bf16.mxu0 0
    %2919 = vmatpush1.bf16.msra.mxu0 0
    %2920 = vmatprep.mubr.bf16.mxu0 0
    %2921 = vmatmul.mubr.bf16.gmra.mrb[0].mxu0 %v2846
    %v2922 = vpop.f32.mrb[0].mxu0
    %v2923 = vadd.f32 %v2882, %v2922
    %v2924 = vpop.f32.mrb[0].mxu0
    %v2925 = vadd.f32 %v2884, %v2924
    %v2926 = vpop.f32.mrb[0].mxu0
    %v2927 = vpop.f32.mrb[0].mxu0
    %2928 = vdwg.mxu0
    %2929 = vmatprep.subr.bf16.mxu0 %v1929
    %2930 = vmatpush1.bf16.msra.mxu0 %v1928
    %2931 = vmatprep.subr.bf16.mxu0 %v1938
    %2932 = vmatpush1.bf16.msra.mxu0 %v1937
    %2933 = vmatprep.subr.bf16.mxu0 %v1947
    %2934 = vmatpush1.bf16.msra.mxu0 %v1946
    %2935 = vmatprep.subr.bf16.mxu0 %v1956
    %2936 = vmatpush1.bf16.msra.mxu0 %v1955
    %2937 = vmatprep.subr.bf16.mxu0 %v1965
    %2938 = vmatpush1.bf16.msra.mxu0 %v1964
    %2939 = vmatprep.subr.bf16.mxu0 %v1974
    %2940 = vmatpush1.bf16.msra.mxu0 %v1973
    %2941 = vmatprep.subr.bf16.mxu0 %v1983
    %2942 = vmatpush1.bf16.msra.mxu0 %v1982
    %2943 = vmatprep.subr.bf16.mxu0 %v1992
    %2944 = vmatpush1.bf16.msra.mxu0 %v1991
    %2945 = vmatprep.subr.bf16.mxu0 %v2001
    %2946 = vmatpush1.bf16.msra.mxu0 %v2000
    %2947 = vmatprep.subr.bf16.mxu0 %v2010
    %2948 = vmatpush1.bf16.msra.mxu0 %v2009
    %2949 = vmatprep.subr.bf16.mxu0 %v2019
    %2950 = vmatpush1.bf16.msra.mxu0 %v2018
    %2951 = vmatprep.subr.bf16.mxu0 %v2028
    %2952 = vmatpush1.bf16.msra.mxu0 %v2027
    %2953 = vmatprep.subr.bf16.mxu0 %v2037
    %2954 = vmatpush1.bf16.msra.mxu0 %v2036
    %2955 = vmatprep.subr.bf16.mxu0 %v2046
    %2956 = vmatpush1.bf16.msra.mxu0 %v2045
    %2957 = vmatprep.subr.bf16.mxu0 %v2055
    %2958 = vmatpush1.bf16.msra.mxu0 %v2054
    %2959 = vmatprep.subr.bf16.mxu0 %v2064
    %2960 = vmatpush1.bf16.msra.mxu0 %v2063
    %2961 = vmatprep.mubr.bf16.mxu0 %v2845
    %2962 = vmatmul.mubr.bf16.gmra.mrb[0].mxu0 %v2844
    %v2963 = vpop.f32.mrb[0].mxu0
    %v2964 = vadd.f32 %v1220, %v2963
    %v2965 = vpop.f32.mrb[0].mxu0
    %v2966 = vadd.f32 %v1224, %v2965
    %v2967 = vpop.f32.mrb[0].mxu0
    %v2968 = vpop.f32.mrb[0].mxu0
    %2969 = vdwg.mxu0
    %2970 = vmatprep.subr.bf16.mxu0 %v2073
    %2971 = vmatpush1.bf16.msra.mxu0 %v2072
    %2972 = vmatprep.subr.bf16.mxu0 %v2082
    %2973 = vmatpush1.bf16.msra.mxu0 %v2081
    %2974 = vmatprep.subr.bf16.mxu0 %v2091
    %2975 = vmatpush1.bf16.msra.mxu0 %v2090
    %2976 = vmatprep.subr.bf16.mxu0 %v2100
    %2977 = vmatpush1.bf16.msra.mxu0 %v2099
    %2978 = vmatprep.subr.bf16.mxu0 %v2109
    %2979 = vmatpush1.bf16.msra.mxu0 %v2108
    %2980 = vmatprep.subr.bf16.mxu0 %v2118
    %2981 = vmatpush1.bf16.msra.mxu0 %v2117
    %2982 = vmatprep.subr.bf16.mxu0 %v2127
    %2983 = vmatpush1.bf16.msra.mxu0 %v2126
    %2984 = vmatprep.subr.bf16.mxu0 %v2136
    %2985 = vmatpush1.bf16.msra.mxu0 %v2135
    %2986 = vmatprep.subr.bf16.mxu0 0
    %2987 = vmatpush1.bf16.msra.mxu0 0
    %2988 = vmatprep.subr.bf16.mxu0 0
    %2989 = vmatpush1.bf16.msra.mxu0 0
    %2990 = vmatprep.subr.bf16.mxu0 0
    %2991 = vmatpush1.bf16.msra.mxu0 0
    %2992 = vmatprep.subr.bf16.mxu0 0
    %2993 = vmatpush1.bf16.msra.mxu0 0
    %2994 = vmatprep.subr.bf16.mxu0 0
    %2995 = vmatpush1.bf16.msra.mxu0 0
    %2996 = vmatprep.subr.bf16.mxu0 0
    %2997 = vmatpush1.bf16.msra.mxu0 0
    %2998 = vmatprep.subr.bf16.mxu0 0
    %2999 = vmatpush1.bf16.msra.mxu0 0
    %3000 = vmatprep.subr.bf16.mxu0 0
    %3001 = vmatpush1.bf16.msra.mxu0 0
    %3002 = vmatprep.mubr.bf16.mxu0 0
    %3003 = vmatmul.mubr.bf16.gmra.mrb[0].mxu0 %v2846
    %v3004 = vpop.f32.mrb[0].mxu0
    %v3005 = vadd.f32 %v2964, %v3004
    %v3006 = vpop.f32.mrb[0].mxu0
    %v3007 = vadd.f32 %v2966, %v3006
    %v3008 = vpop.f32.mrb[0].mxu0
    %v3009 = vpop.f32.mrb[0].mxu0
    %3010 = vdwg.mxu0
    %3011 = vmatprep.subr.bf16.mxu0 %v1931
    %3012 = vmatpush1.bf16.msra.mxu0 %v1930
    %3013 = vmatprep.subr.bf16.mxu0 %v1940
    %3014 = vmatpush1.bf16.msra.mxu0 %v1939
    %3015 = vmatprep.subr.bf16.mxu0 %v1949
    %3016 = vmatpush1.bf16.msra.mxu0 %v1948
    %3017 = vmatprep.subr.bf16.mxu0 %v1958
    %3018 = vmatpush1.bf16.msra.mxu0 %v1957
    %3019 = vmatprep.subr.bf16.mxu0 %v1967
    %3020 = vmatpush1.bf16.msra.mxu0 %v1966
    %3021 = vmatprep.subr.bf16.mxu0 %v1976
    %3022 = vmatpush1.bf16.msra.mxu0 %v1975
    %3023 = vmatprep.subr.bf16.mxu0 %v1985
    %3024 = vmatpush1.bf16.msra.mxu0 %v1984
    %3025 = vmatprep.subr.bf16.mxu0 %v1994
    %3026 = vmatpush1.bf16.msra.mxu0 %v1993
    %3027 = vmatprep.subr.bf16.mxu0 %v2003
    %3028 = vmatpush1.bf16.msra.mxu0 %v2002
    %3029 = vmatprep.subr.bf16.mxu0 %v2012
    %3030 = vmatpush1.bf16.msra.mxu0 %v2011
    %3031 = vmatprep.subr.bf16.mxu0 %v2021
    %3032 = vmatpush1.bf16.msra.mxu0 %v2020
    %3033 = vmatprep.subr.bf16.mxu0 %v2030
    %3034 = vmatpush1.bf16.msra.mxu0 %v2029
    %3035 = vmatprep.subr.bf16.mxu0 %v2039
    %3036 = vmatpush1.bf16.msra.mxu0 %v2038
    %3037 = vmatprep.subr.bf16.mxu0 %v2048
    %3038 = vmatpush1.bf16.msra.mxu0 %v2047
    %3039 = vmatprep.subr.bf16.mxu0 %v2057
    %3040 = vmatpush1.bf16.msra.mxu0 %v2056
    %3041 = vmatprep.subr.bf16.mxu0 %v2066
    %3042 = vmatpush1.bf16.msra.mxu0 %v2065
    %3043 = vmatprep.mubr.bf16.mxu0 %v2845
    %3044 = vmatmul.mubr.bf16.gmra.mrb[0].mxu0 %v2844
    %v3045 = vpop.f32.mrb[0].mxu0
    %v3046 = vadd.f32 %v1228, %v3045
    %v3047 = vpop.f32.mrb[0].mxu0
    %v3048 = vadd.f32 %v1232, %v3047
    %v3049 = vpop.f32.mrb[0].mxu0
    %v3050 = vpop.f32.mrb[0].mxu0
    %3051 = vdwg.mxu0
    %3052 = vmatprep.subr.bf16.mxu0 %v2075
    %3053 = vmatpush1.bf16.msra.mxu0 %v2074
    %3054 = vmatprep.subr.bf16.mxu0 %v2084
    %3055 = vmatpush1.bf16.msra.mxu0 %v2083
    %3056 = vmatprep.subr.bf16.mxu0 %v2093
    %3057 = vmatpush1.bf16.msra.mxu0 %v2092
    %3058 = vmatprep.subr.bf16.mxu0 %v2102
    %3059 = vmatpush1.bf16.msra.mxu0 %v2101
    %3060 = vmatprep.subr.bf16.mxu0 %v2111
    %3061 = vmatpush1.bf16.msra.mxu0 %v2110
    %3062 = vmatprep.subr.bf16.mxu0 %v2120
    %3063 = vmatpush1.bf16.msra.mxu0 %v2119
    %3064 = vmatprep.subr.bf16.mxu0 %v2129
    %3065 = vmatpush1.bf16.msra.mxu0 %v2128
    %3066 = vmatprep.subr.bf16.mxu0 %v2138
    %3067 = vmatpush1.bf16.msra.mxu0 %v2137
    %3068 = vmatprep.subr.bf16.mxu0 0
    %3069 = vmatpush1.bf16.msra.mxu0 0
    %3070 = vmatprep.subr.bf16.mxu0 0
    %3071 = vmatpush1.bf16.msra.mxu0 0
    %3072 = vmatprep.subr.bf16.mxu0 0
    %3073 = vmatpush1.bf16.msra.mxu0 0
    %3074 = vmatprep.subr.bf16.mxu0 0
    %3075 = vmatpush1.bf16.msra.mxu0 0
    %3076 = vmatprep.subr.bf16.mxu0 0
    %3077 = vmatpush1.bf16.msra.mxu0 0
    %3078 = vmatprep.subr.bf16.mxu0 0
    %3079 = vmatpush1.bf16.msra.mxu0 0
    %3080 = vmatprep.subr.bf16.mxu0 0
    %3081 = vmatpush1.bf16.msra.mxu0 0
    %3082 = vmatprep.subr.bf16.mxu0 0
    %3083 = vmatpush1.bf16.msra.mxu0 0
    %3084 = vmatprep.mubr.bf16.mxu0 0
    %3085 = vmatmul.mubr.bf16.gmra.mrb[0].mxu0 %v2846
    %v3086 = vpop.f32.mrb[0].mxu0
    %v3087 = vadd.f32 %v3046, %v3086
    %v3088 = vpop.f32.mrb[0].mxu0
    %v3089 = vadd.f32 %v3048, %v3088
    %v3090 = vpop.f32.mrb[0].mxu0
    %v3091 = vpop.f32.mrb[0].mxu0
    %3092 = vdwg.mxu0
    %3093 = vmatprep.subr.bf16.mxu0 %v1933
    %3094 = vmatpush1.bf16.msra.mxu0 %v1932
    %3095 = vmatprep.subr.bf16.mxu0 %v1942
    %3096 = vmatpush1.bf16.msra.mxu0 %v1941
    %3097 = vmatprep.subr.bf16.mxu0 %v1951
    %3098 = vmatpush1.bf16.msra.mxu0 %v1950
    %3099 = vmatprep.subr.bf16.mxu0 %v1960
    %3100 = vmatpush1.bf16.msra.mxu0 %v1959
    %3101 = vmatprep.subr.bf16.mxu0 %v1969
    %3102 = vmatpush1.bf16.msra.mxu0 %v1968
    %3103 = vmatprep.subr.bf16.mxu0 %v1978
    %3104 = vmatpush1.bf16.msra.mxu0 %v1977
    %3105 = vmatprep.subr.bf16.mxu0 %v1987
    %3106 = vmatpush1.bf16.msra.mxu0 %v1986
    %3107 = vmatprep.subr.bf16.mxu0 %v1996
    %3108 = vmatpush1.bf16.msra.mxu0 %v1995
    %3109 = vmatprep.subr.bf16.mxu0 %v2005
    %3110 = vmatpush1.bf16.msra.mxu0 %v2004
    %3111 = vmatprep.subr.bf16.mxu0 %v2014
    %3112 = vmatpush1.bf16.msra.mxu0 %v2013
    %3113 = vmatprep.subr.bf16.mxu0 %v2023
    %3114 = vmatpush1.bf16.msra.mxu0 %v2022
    %3115 = vmatprep.subr.bf16.mxu0 %v2032
    %3116 = vmatpush1.bf16.msra.mxu0 %v2031
    %3117 = vmatprep.subr.bf16.mxu0 %v2041
    %3118 = vmatpush1.bf16.msra.mxu0 %v2040
    %3119 = vmatprep.subr.bf16.mxu0 %v2050
    %3120 = vmatpush1.bf16.msra.mxu0 %v2049
    %3121 = vmatprep.subr.bf16.mxu0 %v2059
    %3122 = vmatpush1.bf16.msra.mxu0 %v2058
    %3123 = vmatprep.subr.bf16.mxu0 %v2068
    %3124 = vmatpush1.bf16.msra.mxu0 %v2067
    %3125 = vmatprep.mubr.bf16.mxu0 %v2845
    %3126 = vmatmul.mubr.bf16.gmra.mrb[0].mxu0 %v2844
    %v3127 = vpop.f32.mrb[0].mxu0
    %v3128 = vadd.f32 %v1236, %v3127
    %v3129 = vpop.f32.mrb[0].mxu0
    %v3130 = vadd.f32 %v1240, %v3129
    %v3131 = vpop.f32.mrb[0].mxu0
    %v3132 = vpop.f32.mrb[0].mxu0
    %3133 = vdwg.mxu0
    %3134 = vmatprep.subr.bf16.mxu0 %v2077
    %3135 = vmatpush1.bf16.msra.mxu0 %v2076
    %3136 = vmatprep.subr.bf16.mxu0 %v2086
    %3137 = vmatpush1.bf16.msra.mxu0 %v2085
    %3138 = vmatprep.subr.bf16.mxu0 %v2095
    %3139 = vmatpush1.bf16.msra.mxu0 %v2094
    %3140 = vmatprep.subr.bf16.mxu0 %v2104
    %3141 = vmatpush1.bf16.msra.mxu0 %v2103
    %3142 = vmatprep.subr.bf16.mxu0 %v2113
    %3143 = vmatpush1.bf16.msra.mxu0 %v2112
    %3144 = vmatprep.subr.bf16.mxu0 %v2122
    %3145 = vmatpush1.bf16.msra.mxu0 %v2121
    %3146 = vmatprep.subr.bf16.mxu0 %v2131
    %3147 = vmatpush1.bf16.msra.mxu0 %v2130
    %3148 = vmatprep.subr.bf16.mxu0 %v2140
    %3149 = vmatpush1.bf16.msra.mxu0 %v2139
    %3150 = vmatprep.subr.bf16.mxu0 0
    %3151 = vmatpush1.bf16.msra.mxu0 0
    %3152 = vmatprep.subr.bf16.mxu0 0
    %3153 = vmatpush1.bf16.msra.mxu0 0
    %3154 = vmatprep.subr.bf16.mxu0 0
    %3155 = vmatpush1.bf16.msra.mxu0 0
    %3156 = vmatprep.subr.bf16.mxu0 0
    %3157 = vmatpush1.bf16.msra.mxu0 0
    %3158 = vmatprep.subr.bf16.mxu0 0
    %3159 = vmatpush1.bf16.msra.mxu0 0
    %3160 = vmatprep.subr.bf16.mxu0 0
    %3161 = vmatpush1.bf16.msra.mxu0 0
    %3162 = vmatprep.subr.bf16.mxu0 0
    %3163 = vmatpush1.bf16.msra.mxu0 0
    %3164 = vmatprep.subr.bf16.mxu0 0
    %3165 = vmatpush1.bf16.msra.mxu0 0
    %3166 = vmatprep.mubr.bf16.mxu0 0
    %3167 = vmatmul.mubr.bf16.gmra.mrb[0].mxu0 %v2846
    %v3168 = vpop.f32.mrb[0].mxu0
    %v3169 = vadd.f32 %v3128, %v3168
    %v3170 = vpop.f32.mrb[0].mxu0
    %v3171 = vadd.f32 %v3130, %v3170
    %v3172 = vpop.f32.mrb[0].mxu0
    %v3173 = vpop.f32.mrb[0].mxu0
    %3174 = vdwg.mxu0
    %3175 = vmatprep.subr.bf16.mxu0 0
    %3176 = vmatpush1.bf16.msra.mxu0 %v1934
    %3177 = vmatprep.subr.bf16.mxu0 0
    %3178 = vmatpush1.bf16.msra.mxu0 %v1943
    %3179 = vmatprep.subr.bf16.mxu0 0
    %3180 = vmatpush1.bf16.msra.mxu0 %v1952
    %3181 = vmatprep.subr.bf16.mxu0 0
    %3182 = vmatpush1.bf16.msra.mxu0 %v1961
    %3183 = vmatprep.subr.bf16.mxu0 0
    %3184 = vmatpush1.bf16.msra.mxu0 %v1970
    %3185 = vmatprep.subr.bf16.mxu0 0
    %3186 = vmatpush1.bf16.msra.mxu0 %v1979
    %3187 = vmatprep.subr.bf16.mxu0 0
    %3188 = vmatpush1.bf16.msra.mxu0 %v1988
    %3189 = vmatprep.subr.bf16.mxu0 0
    %3190 = vmatpush1.bf16.msra.mxu0 %v1997
    %3191 = vmatprep.subr.bf16.mxu0 0
    %3192 = vmatpush1.bf16.msra.mxu0 %v2006
    %3193 = vmatprep.subr.bf16.mxu0 0
    %3194 = vmatpush1.bf16.msra.mxu0 %v2015
    %3195 = vmatprep.subr.bf16.mxu0 0
    %3196 = vmatpush1.bf16.msra.mxu0 %v2024
    %3197 = vmatprep.subr.bf16.mxu0 0
    %3198 = vmatpush1.bf16.msra.mxu0 %v2033
    %3199 = vmatprep.subr.bf16.mxu0 0
    %3200 = vmatpush1.bf16.msra.mxu0 %v2042
    %3201 = vmatprep.subr.bf16.mxu0 0
    %3202 = vmatpush1.bf16.msra.mxu0 %v2051
    %3203 = vmatprep.subr.bf16.mxu0 0
    %3204 = vmatpush1.bf16.msra.mxu0 %v2060
    %3205 = vmatprep.subr.bf16.mxu0 0
    %3206 = vmatpush1.bf16.msra.mxu0 %v2069
    %3207 = vmatprep.mubr.bf16.mxu0 %v2845
    %3208 = vmatmul.mubr.bf16.gmra.mrb[0].mxu0 %v2844
    %v3209 = vpop.f32.mrb[0].mxu0
    %v3210 = vadd.f32 %v1244, %v3209
    %v3211 = vpop.f32.mrb[0].mxu0
    %v3212 = vpop.f32.mrb[0].mxu0
    %v3213 = vpop.f32.mrb[0].mxu0
    %3214 = vdwg.mxu0
    %3215 = vmatprep.subr.bf16.mxu0 0
    %3216 = vmatpush1.bf16.msra.mxu0 %v2078
    %3217 = vmatprep.subr.bf16.mxu0 0
    %3218 = vmatpush1.bf16.msra.mxu0 %v2087
    %3219 = vmatprep.subr.bf16.mxu0 0
    %3220 = vmatpush1.bf16.msra.mxu0 %v2096
    %3221 = vmatprep.subr.bf16.mxu0 0
    %3222 = vmatpush1.bf16.msra.mxu0 %v2105
    %3223 = vmatprep.subr.bf16.mxu0 0
    %3224 = vmatpush1.bf16.msra.mxu0 %v2114
    %3225 = vmatprep.subr.bf16.mxu0 0
    %3226 = vmatpush1.bf16.msra.mxu0 %v2123
    %3227 = vmatprep.subr.bf16.mxu0 0
    %3228 = vmatpush1.bf16.msra.mxu0 %v2132
    %3229 = vmatprep.subr.bf16.mxu0 0
    %3230 = vmatpush1.bf16.msra.mxu0 %v2141
    %3231 = vmatprep.subr.bf16.mxu0 0
    %3232 = vmatpush1.bf16.msra.mxu0 0
    %3233 = vmatprep.subr.bf16.mxu0 0
    %3234 = vmatpush1.bf16.msra.mxu0 0
    %3235 = vmatprep.subr.bf16.mxu0 0
    %3236 = vmatpush1.bf16.msra.mxu0 0
    %3237 = vmatprep.subr.bf16.mxu0 0
    %3238 = vmatpush1.bf16.msra.mxu0 0
    %3239 = vmatprep.subr.bf16.mxu0 0
    %3240 = vmatpush1.bf16.msra.mxu0 0
    %3241 = vmatprep.subr.bf16.mxu0 0
    %3242 = vmatpush1.bf16.msra.mxu0 0
    %3243 = vmatprep.subr.bf16.mxu0 0
    %3244 = vmatpush1.bf16.msra.mxu0 0
    %3245 = vmatprep.subr.bf16.mxu0 0
    %3246 = vmatpush1.bf16.msra.mxu0 0
    %3247 = vmatprep.mubr.bf16.mxu0 0
    %3248 = vmatmul.mubr.bf16.gmra.mrb[0].mxu0 %v2846
    %v3249 = vpop.f32.mrb[0].mxu0
    %v3250 = vadd.f32 %v3210, %v3249
    %v3251 = vpop.f32.mrb[0].mxu0
    %v3252 = vpop.f32.mrb[0].mxu0
    %v3253 = vpop.f32.mrb[0].mxu0
    %3254 = vdwg.mxu0
    %v3255 = vadd.f32 %v2835, %v2923
    %v3256 = vadd.f32 %v2836, %v2925
    %v3257 = vadd.f32 %v2837, %v3005
    %v3258 = vxor.u32 %v3255, 2147483648
    %v3259 = vxor.u32 %v3256, 2147483648
    %v3260 = vxor.u32 %v3257, 2147483648
    %v3261 = vmul.f32 %v3258, 1.442695
    %v3262 = vpow.pop %v3261
    %v3263 = vmul.f32 %v3259, 1.442695
    %v3264 = vpow.pop %v3263
    %v3265 = vmul.f32 %v3260, 1.442695
    %v3266 = vpow.pop %v3265
    %v3267 = vadd.f32 %v3262, 1.0
    %v3268 = vadd.f32 %v3264, 1.0
    %v3269 = vadd.f32 %v3266, 1.0
    %v3270 = vrcp.pop %v3267
    %v3271 = vmul.f32 1.0, %v3270
    %v3272 = vrcp.pop %v3268
    %v3273 = vmul.f32 1.0, %v3272
    %v3274 = vrcp.pop %v3269
    %v3275 = vmul.f32 1.0, %v3274
    %v3276 = vadd.f32 %v2838, %v3007
    %v3277 = vadd.f32 %v2839, %v3087
    %v3278 = vadd.f32 %v2840, %v3089
    %v3279 = vxor.u32 %v3276, 2147483648
    %v3280 = vxor.u32 %v3277, 2147483648
    %v3281 = vxor.u32 %v3278, 2147483648
    %v3282 = vmul.f32 %v3279, 1.442695
    %v3283 = vpow.pop %v3282
    %v3284 = vmul.f32 %v3280, 1.442695
    %v3285 = vpow.pop %v3284
    %v3286 = vmul.f32 %v3281, 1.442695
    %v3287 = vpow.pop %v3286
    %v3288 = vadd.f32 %v3283, 1.0
    %v3289 = vadd.f32 %v3285, 1.0
    %v3290 = vadd.f32 %v3287, 1.0
    %v3291 = vrcp.pop %v3288
    %v3292 = vmul.f32 1.0, %v3291
    %v3293 = vrcp.pop %v3289
    %v3294 = vmul.f32 1.0, %v3293
    %v3295 = vrcp.pop %v3290
    %v3296 = vmul.f32 1.0, %v3295
    %v3297 = vmul.f32 %v3271, %v3169
    %v3298 = vmul.f32 %v3273, %v3171
    %v3299 = vmul.f32 %v3275, %v3250
    %v3300 = vadd.f32 %v2841, %v3297
    %v3301 = vadd.f32 %v2842, %v3298
    %v3302 = vadd.f32 %v2843, %v3299
    %v3303 = vtanh.pop %v3300
    %v3304 = vtanh.pop %v3301
    %v3305 = vtanh.pop %v3302
    %v3306 = vsub.f32 1.0, %v3292
    %v3307 = vsub.f32 1.0, %v3294
    %v3308 = vsub.f32 1.0, %v3296
    %v3309 = vmul.f32 %v3306, %v3303
    %v3310 = vmul.f32 %v3307, %v3304
    %v3311 = vmul.f32 %v3308, %v3305
    %v3312 = vmul.f32 %v3292, %v2826
    %v3313 = vmul.f32 %v3294, %v2827
    %v3314 = vmul.f32 %v3296, %v2828
    %v3315 = vadd.f32 %v3309, %v3312
    %v3316 = vadd.f32 %v3310, %v3313
    %v3317 = vadd.f32 %v3311, %v3314
    %v3318 = vmul.f32 %v3315, %v57
    %v3319 = vmul.f32 %v3316, %v58
    %v3320 = vmul.f32 %v3317, %v59
    %3321 = vst [vmem:[#allocation3 + $0x18] sm:$0xff] %v3318
    %3322 = vst [vmem:[#allocation3 + $0x20] sm:$0xff] %v3319
    %3323 = vst [vmem:[#allocation3 + $0x28] sm:$0xff] %v3320
    %v3324 = vld [vmem:[#allocation2 + $0x90] sm:$0xff]
    %v3325 = vld [vmem:[#allocation2 + $0x98] sm:$0xff]
    %v3326 = vld [vmem:[#allocation2 + $0xa0] sm:$0xff]
    %v3327 = vld [vmem:[#allocation2 + $0xa8] sm:$0xff]
    %v3328 = vld [vmem:[#allocation2 + $0xb0] sm:$0xff]
    %v3329 = vld [vmem:[#allocation2 + $0xb8] sm:$0xff]
    %v3330 = vld [vmem:[#allocation2 + $0xc0] sm:$0xff]
    %v3331 = vld [vmem:[#allocation2 + $0xc8] sm:$0xff]
    %v3332 = vld [vmem:[#allocation2 + $0xd0] sm:$0xff]
    %v3333 = vpack.c.bf16 %v3315, %v3315
    %v3334 = vpack.c.bf16 %v3316, %v3316
    %v3335 = vpack.c.bf16 %v3317, %v3317
    %3336 = vmatprep.subr.bf16.mxu0 %v1927
    %3337 = vmatpush1.bf16.msra.mxu0 %v1926
    %3338 = vmatprep.subr.bf16.mxu0 %v1936
    %3339 = vmatpush1.bf16.msra.mxu0 %v1935
    %3340 = vmatprep.subr.bf16.mxu0 %v1945
    %3341 = vmatpush1.bf16.msra.mxu0 %v1944
    %3342 = vmatprep.subr.bf16.mxu0 %v1954
    %3343 = vmatpush1.bf16.msra.mxu0 %v1953
    %3344 = vmatprep.subr.bf16.mxu0 %v1963
    %3345 = vmatpush1.bf16.msra.mxu0 %v1962
    %3346 = vmatprep.subr.bf16.mxu0 %v1972
    %3347 = vmatpush1.bf16.msra.mxu0 %v1971
    %3348 = vmatprep.subr.bf16.mxu0 %v1981
    %3349 = vmatpush1.bf16.msra.mxu0 %v1980
    %3350 = vmatprep.subr.bf16.mxu0 %v1990
    %3351 = vmatpush1.bf16.msra.mxu0 %v1989
    %3352 = vmatprep.subr.bf16.mxu0 %v1999
    %3353 = vmatpush1.bf16.msra.mxu0 %v1998
    %3354 = vmatprep.subr.bf16.mxu0 %v2008
    %3355 = vmatpush1.bf16.msra.mxu0 %v2007
    %3356 = vmatprep.subr.bf16.mxu0 %v2017
    %3357 = vmatpush1.bf16.msra.mxu0 %v2016
    %3358 = vmatprep.subr.bf16.mxu0 %v2026
    %3359 = vmatpush1.bf16.msra.mxu0 %v2025
    %3360 = vmatprep.subr.bf16.mxu0 %v2035
    %3361 = vmatpush1.bf16.msra.mxu0 %v2034
    %3362 = vmatprep.subr.bf16.mxu0 %v2044
    %3363 = vmatpush1.bf16.msra.mxu0 %v2043
    %3364 = vmatprep.subr.bf16.mxu0 %v2053
    %3365 = vmatpush1.bf16.msra.mxu0 %v2052
    %3366 = vmatprep.subr.bf16.mxu0 %v2062
    %3367 = vmatpush1.bf16.msra.mxu0 %v2061
    %3368 = vmatprep.mubr.bf16.mxu0 %v3334
    %3369 = vmatmul.mubr.bf16.gmra.mrb[0].mxu0 %v3333
    %v3370 = vpop.f32.mrb[0].mxu0
    %v3371 = vadd.f32 %v1212, %v3370
    %v3372 = vpop.f32.mrb[0].mxu0
    %v3373 = vadd.f32 %v1216, %v3372
    %v3374 = vpop.f32.mrb[0].mxu0
    %v3375 = vpop.f32.mrb[0].mxu0
    %3376 = vdwg.mxu0
    %3377 = vmatprep.subr.bf16.mxu0 %v2071
    %3378 = vmatpush1.bf16.msra.mxu0 %v2070
    %3379 = vmatprep.subr.bf16.mxu0 %v2080
    %3380 = vmatpush1.bf16.msra.mxu0 %v2079
    %3381 = vmatprep.subr.bf16.mxu0 %v2089
    %3382 = vmatpush1.bf16.msra.mxu0 %v2088
    %3383 = vmatprep.subr.bf16.mxu0 %v2098
    %3384 = vmatpush1.bf16.msra.mxu0 %v2097
    %3385 = vmatprep.subr.bf16.mxu0 %v2107
    %3386 = vmatpush1.bf16.msra.mxu0 %v2106
    %3387 = vmatprep.subr.bf16.mxu0 %v2116
    %3388 = vmatpush1.bf16.msra.mxu0 %v2115
    %3389 = vmatprep.subr.bf16.mxu0 %v2125
    %3390 = vmatpush1.bf16.msra.mxu0 %v2124
    %3391 = vmatprep.subr.bf16.mxu0 %v2134
    %3392 = vmatpush1.bf16.msra.mxu0 %v2133
    %3393 = vmatprep.subr.bf16.mxu0 0
    %3394 = vmatpush1.bf16.msra.mxu0 0
    %3395 = vmatprep.subr.bf16.mxu0 0
    %3396 = vmatpush1.bf16.msra.mxu0 0
    %3397 = vmatprep.subr.bf16.mxu0 0
    %3398 = vmatpush1.bf16.msra.mxu0 0
    %3399 = vmatprep.subr.bf16.mxu0 0
    %3400 = vmatpush1.bf16.msra.mxu0 0
    %3401 = vmatprep.subr.bf16.mxu0 0
    %3402 = vmatpush1.bf16.msra.mxu0 0
    %3403 = vmatprep.subr.bf16.mxu0 0
    %3404 = vmatpush1.bf16.msra.mxu0 0
    %3405 = vmatprep.subr.bf16.mxu0 0
    %3406 = vmatpush1.bf16.msra.mxu0 0
    %3407 = vmatprep.subr.bf16.mxu0 0
    %3408 = vmatpush1.bf16.msra.mxu0 0
    %3409 = vmatprep.mubr.bf16.mxu0 0
    %3410 = vmatmul.mubr.bf16.gmra.mrb[0].mxu0 %v3335
    %v3411 = vpop.f32.mrb[0].mxu0
    %v3412 = vadd.f32 %v3371, %v3411
    %v3413 = vpop.f32.mrb[0].mxu0
    %v3414 = vadd.f32 %v3373, %v3413
    %v3415 = vpop.f32.mrb[0].mxu0
    %v3416 = vpop.f32.mrb[0].mxu0
    %3417 = vdwg.mxu0
    %3418 = vmatprep.subr.bf16.mxu0 %v1929
    %3419 = vmatpush1.bf16.msra.mxu0 %v1928
    %3420 = vmatprep.subr.bf16.mxu0 %v1938
    %3421 = vmatpush1.bf16.msra.mxu0 %v1937
    %3422 = vmatprep.subr.bf16.mxu0 %v1947
    %3423 = vmatpush1.bf16.msra.mxu0 %v1946
    %3424 = vmatprep.subr.bf16.mxu0 %v1956
    %3425 = vmatpush1.bf16.msra.mxu0 %v1955
    %3426 = vmatprep.subr.bf16.mxu0 %v1965
    %3427 = vmatpush1.bf16.msra.mxu0 %v1964
    %3428 = vmatprep.subr.bf16.mxu0 %v1974
    %3429 = vmatpush1.bf16.msra.mxu0 %v1973
    %3430 = vmatprep.subr.bf16.mxu0 %v1983
    %3431 = vmatpush1.bf16.msra.mxu0 %v1982
    %3432 = vmatprep.subr.bf16.mxu0 %v1992
    %3433 = vmatpush1.bf16.msra.mxu0 %v1991
    %3434 = vmatprep.subr.bf16.mxu0 %v2001
    %3435 = vmatpush1.bf16.msra.mxu0 %v2000
    %3436 = vmatprep.subr.bf16.mxu0 %v2010
    %3437 = vmatpush1.bf16.msra.mxu0 %v2009
    %3438 = vmatprep.subr.bf16.mxu0 %v2019
    %3439 = vmatpush1.bf16.msra.mxu0 %v2018
    %3440 = vmatprep.subr.bf16.mxu0 %v2028
    %3441 = vmatpush1.bf16.msra.mxu0 %v2027
    %3442 = vmatprep.subr.bf16.mxu0 %v2037
    %3443 = vmatpush1.bf16.msra.mxu0 %v2036
    %3444 = vmatprep.subr.bf16.mxu0 %v2046
    %3445 = vmatpush1.bf16.msra.mxu0 %v2045
    %3446 = vmatprep.subr.bf16.mxu0 %v2055
    %3447 = vmatpush1.bf16.msra.mxu0 %v2054
    %3448 = vmatprep.subr.bf16.mxu0 %v2064
    %3449 = vmatpush1.bf16.msra.mxu0 %v2063
    %3450 = vmatprep.mubr.bf16.mxu0 %v3334
    %3451 = vmatmul.mubr.bf16.gmra.mrb[0].mxu0 %v3333
    %v3452 = vpop.f32.mrb[0].mxu0
    %v3453 = vadd.f32 %v1220, %v3452
    %v3454 = vpop.f32.mrb[0].mxu0
    %v3455 = vadd.f32 %v1224, %v3454
    %v3456 = vpop.f32.mrb[0].mxu0
    %v3457 = vpop.f32.mrb[0].mxu0
    %3458 = vdwg.mxu0
    %3459 = vmatprep.subr.bf16.mxu0 %v2073
    %3460 = vmatpush1.bf16.msra.mxu0 %v2072
    %3461 = vmatprep.subr.bf16.mxu0 %v2082
    %3462 = vmatpush1.bf16.msra.mxu0 %v2081
    %3463 = vmatprep.subr.bf16.mxu0 %v2091
    %3464 = vmatpush1.bf16.msra.mxu0 %v2090
    %3465 = vmatprep.subr.bf16.mxu0 %v2100
    %3466 = vmatpush1.bf16.msra.mxu0 %v2099
    %3467 = vmatprep.subr.bf16.mxu0 %v2109
    %3468 = vmatpush1.bf16.msra.mxu0 %v2108
    %3469 = vmatprep.subr.bf16.mxu0 %v2118
    %3470 = vmatpush1.bf16.msra.mxu0 %v2117
    %3471 = vmatprep.subr.bf16.mxu0 %v2127
    %3472 = vmatpush1.bf16.msra.mxu0 %v2126
    %3473 = vmatprep.subr.bf16.mxu0 %v2136
    %3474 = vmatpush1.bf16.msra.mxu0 %v2135
    %3475 = vmatprep.subr.bf16.mxu0 0
    %3476 = vmatpush1.bf16.msra.mxu0 0
    %3477 = vmatprep.subr.bf16.mxu0 0
    %3478 = vmatpush1.bf16.msra.mxu0 0
    %3479 = vmatprep.subr.bf16.mxu0 0
    %3480 = vmatpush1.bf16.msra.mxu0 0
    %3481 = vmatprep.subr.bf16.mxu0 0
    %3482 = vmatpush1.bf16.msra.mxu0 0
    %3483 = vmatprep.subr.bf16.mxu0 0
    %3484 = vmatpush1.bf16.msra.mxu0 0
    %3485 = vmatprep.subr.bf16.mxu0 0
    %3486 = vmatpush1.bf16.msra.mxu0 0
    %3487 = vmatprep.subr.bf16.mxu0 0
    %3488 = vmatpush1.bf16.msra.mxu0 0
    %3489 = vmatprep.subr.bf16.mxu0 0
    %3490 = vmatpush1.bf16.msra.mxu0 0
    %3491 = vmatprep.mubr.bf16.mxu0 0
    %3492 = vmatmul.mubr.bf16.gmra.mrb[0].mxu0 %v3335
    %v3493 = vpop.f32.mrb[0].mxu0
    %v3494 = vadd.f32 %v3453, %v3493
    %v3495 = vpop.f32.mrb[0].mxu0
    %v3496 = vadd.f32 %v3455, %v3495
    %v3497 = vpop.f32.mrb[0].mxu0
    %v3498 = vpop.f32.mrb[0].mxu0
    %3499 = vdwg.mxu0
    %3500 = vmatprep.subr.bf16.mxu0 %v1931
    %3501 = vmatpush1.bf16.msra.mxu0 %v1930
    %3502 = vmatprep.subr.bf16.mxu0 %v1940
    %3503 = vmatpush1.bf16.msra.mxu0 %v1939
    %3504 = vmatprep.subr.bf16.mxu0 %v1949
    %3505 = vmatpush1.bf16.msra.mxu0 %v1948
    %3506 = vmatprep.subr.bf16.mxu0 %v1958
    %3507 = vmatpush1.bf16.msra.mxu0 %v1957
    %3508 = vmatprep.subr.bf16.mxu0 %v1967
    %3509 = vmatpush1.bf16.msra.mxu0 %v1966
    %3510 = vmatprep.subr.bf16.mxu0 %v1976
    %3511 = vmatpush1.bf16.msra.mxu0 %v1975
    %3512 = vmatprep.subr.bf16.mxu0 %v1985
    %3513 = vmatpush1.bf16.msra.mxu0 %v1984
    %3514 = vmatprep.subr.bf16.mxu0 %v1994
    %3515 = vmatpush1.bf16.msra.mxu0 %v1993
    %3516 = vmatprep.subr.bf16.mxu0 %v2003
    %3517 = vmatpush1.bf16.msra.mxu0 %v2002
    %3518 = vmatprep.subr.bf16.mxu0 %v2012
    %3519 = vmatpush1.bf16.msra.mxu0 %v2011
    %3520 = vmatprep.subr.bf16.mxu0 %v2021
    %3521 = vmatpush1.bf16.msra.mxu0 %v2020
    %3522 = vmatprep.subr.bf16.mxu0 %v2030
    %3523 = vmatpush1.bf16.msra.mxu0 %v2029
    %3524 = vmatprep.subr.bf16.mxu0 %v2039
    %3525 = vmatpush1.bf16.msra.mxu0 %v2038
    %3526 = vmatprep.subr.bf16.mxu0 %v2048
    %3527 = vmatpush1.bf16.msra.mxu0 %v2047
    %3528 = vmatprep.subr.bf16.mxu0 %v2057
    %3529 = vmatpush1.bf16.msra.mxu0 %v2056
    %3530 = vmatprep.subr.bf16.mxu0 %v2066
    %3531 = vmatpush1.bf16.msra.mxu0 %v2065
    %3532 = vmatprep.mubr.bf16.mxu0 %v3334
    %3533 = vmatmul.mubr.bf16.gmra.mrb[0].mxu0 %v3333
    %v3534 = vpop.f32.mrb[0].mxu0
    %v3535 = vadd.f32 %v1228, %v3534
    %v3536 = vpop.f32.mrb[0].mxu0
    %v3537 = vadd.f32 %v1232, %v3536
    %v3538 = vpop.f32.mrb[0].mxu0
    %v3539 = vpop.f32.mrb[0].mxu0
    %3540 = vdwg.mxu0
    %3541 = vmatprep.subr.bf16.mxu0 %v2075
    %3542 = vmatpush1.bf16.msra.mxu0 %v2074
    %3543 = vmatprep.subr.bf16.mxu0 %v2084
    %3544 = vmatpush1.bf16.msra.mxu0 %v2083
    %3545 = vmatprep.subr.bf16.mxu0 %v2093
    %3546 = vmatpush1.bf16.msra.mxu0 %v2092
    %3547 = vmatprep.subr.bf16.mxu0 %v2102
    %3548 = vmatpush1.bf16.msra.mxu0 %v2101
    %3549 = vmatprep.subr.bf16.mxu0 %v2111
    %3550 = vmatpush1.bf16.msra.mxu0 %v2110
    %3551 = vmatprep.subr.bf16.mxu0 %v2120
    %3552 = vmatpush1.bf16.msra.mxu0 %v2119
    %3553 = vmatprep.subr.bf16.mxu0 %v2129
    %3554 = vmatpush1.bf16.msra.mxu0 %v2128
    %3555 = vmatprep.subr.bf16.mxu0 %v2138
    %3556 = vmatpush1.bf16.msra.mxu0 %v2137
    %3557 = vmatprep.subr.bf16.mxu0 0
    %3558 = vmatpush1.bf16.msra.mxu0 0
    %3559 = vmatprep.subr.bf16.mxu0 0
    %3560 = vmatpush1.bf16.msra.mxu0 0
    %3561 = vmatprep.subr.bf16.mxu0 0
    %3562 = vmatpush1.bf16.msra.mxu0 0
    %3563 = vmatprep.subr.bf16.mxu0 0
    %3564 = vmatpush1.bf16.msra.mxu0 0
    %3565 = vmatprep.subr.bf16.mxu0 0
    %3566 = vmatpush1.bf16.msra.mxu0 0
    %3567 = vmatprep.subr.bf16.mxu0 0
    %3568 = vmatpush1.bf16.msra.mxu0 0
    %3569 = vmatprep.subr.bf16.mxu0 0
    %3570 = vmatpush1.bf16.msra.mxu0 0
    %3571 = vmatprep.subr.bf16.mxu0 0
    %3572 = vmatpush1.bf16.msra.mxu0 0
    %3573 = vmatprep.mubr.bf16.mxu0 0
    %3574 = vmatmul.mubr.bf16.gmra.mrb[0].mxu0 %v3335
    %v3575 = vpop.f32.mrb[0].mxu0
    %v3576 = vadd.f32 %v3535, %v3575
    %v3577 = vpop.f32.mrb[0].mxu0
    %v3578 = vadd.f32 %v3537, %v3577
    %v3579 = vpop.f32.mrb[0].mxu0
    %v3580 = vpop.f32.mrb[0].mxu0
    %3581 = vdwg.mxu0
    %3582 = vmatprep.subr.bf16.mxu0 %v1933
    %3583 = vmatpush1.bf16.msra.mxu0 %v1932
    %3584 = vmatprep.subr.bf16.mxu0 %v1942
    %3585 = vmatpush1.bf16.msra.mxu0 %v1941
    %3586 = vmatprep.subr.bf16.mxu0 %v1951
    %3587 = vmatpush1.bf16.msra.mxu0 %v1950
    %3588 = vmatprep.subr.bf16.mxu0 %v1960
    %3589 = vmatpush1.bf16.msra.mxu0 %v1959
    %3590 = vmatprep.subr.bf16.mxu0 %v1969
    %3591 = vmatpush1.bf16.msra.mxu0 %v1968
    %3592 = vmatprep.subr.bf16.mxu0 %v1978
    %3593 = vmatpush1.bf16.msra.mxu0 %v1977
    %3594 = vmatprep.subr.bf16.mxu0 %v1987
    %3595 = vmatpush1.bf16.msra.mxu0 %v1986
    %3596 = vmatprep.subr.bf16.mxu0 %v1996
    %3597 = vmatpush1.bf16.msra.mxu0 %v1995
    %3598 = vmatprep.subr.bf16.mxu0 %v2005
    %3599 = vmatpush1.bf16.msra.mxu0 %v2004
    %3600 = vmatprep.subr.bf16.mxu0 %v2014
    %3601 = vmatpush1.bf16.msra.mxu0 %v2013
    %3602 = vmatprep.subr.bf16.mxu0 %v2023
    %3603 = vmatpush1.bf16.msra.mxu0 %v2022
    %3604 = vmatprep.subr.bf16.mxu0 %v2032
    %3605 = vmatpush1.bf16.msra.mxu0 %v2031
    %3606 = vmatprep.subr.bf16.mxu0 %v2041
    %3607 = vmatpush1.bf16.msra.mxu0 %v2040
    %3608 = vmatprep.subr.bf16.mxu0 %v2050
    %3609 = vmatpush1.bf16.msra.mxu0 %v2049
    %3610 = vmatprep.subr.bf16.mxu0 %v2059
    %3611 = vmatpush1.bf16.msra.mxu0 %v2058
    %3612 = vmatprep.subr.bf16.mxu0 %v2068
    %3613 = vmatpush1.bf16.msra.mxu0 %v2067
    %3614 = vmatprep.mubr.bf16.mxu0 %v3334
    %3615 = vmatmul.mubr.bf16.gmra.mrb[0].mxu0 %v3333
    %v3616 = vpop.f32.mrb[0].mxu0
    %v3617 = vadd.f32 %v1236, %v3616
    %v3618 = vpop.f32.mrb[0].mxu0
    %v3619 = vadd.f32 %v1240, %v3618
    %v3620 = vpop.f32.mrb[0].mxu0
    %v3621 = vpop.f32.mrb[0].mxu0
    %3622 = vdwg.mxu0
    %3623 = vmatprep.subr.bf16.mxu0 %v2077
    %3624 = vmatpush1.bf16.msra.mxu0 %v2076
    %3625 = vmatprep.subr.bf16.mxu0 %v2086
    %3626 = vmatpush1.bf16.msra.mxu0 %v2085
    %3627 = vmatprep.subr.bf16.mxu0 %v2095
    %3628 = vmatpush1.bf16.msra.mxu0 %v2094
    %3629 = vmatprep.subr.bf16.mxu0 %v2104
    %3630 = vmatpush1.bf16.msra.mxu0 %v2103
    %3631 = vmatprep.subr.bf16.mxu0 %v2113
    %3632 = vmatpush1.bf16.msra.mxu0 %v2112
    %3633 = vmatprep.subr.bf16.mxu0 %v2122
    %3634 = vmatpush1.bf16.msra.mxu0 %v2121
    %3635 = vmatprep.subr.bf16.mxu0 %v2131
    %3636 = vmatpush1.bf16.msra.mxu0 %v2130
    %3637 = vmatprep.subr.bf16.mxu0 %v2140
    %3638 = vmatpush1.bf16.msra.mxu0 %v2139
    %3639 = vmatprep.subr.bf16.mxu0 0
    %3640 = vmatpush1.bf16.msra.mxu0 0
    %3641 = vmatprep.subr.bf16.mxu0 0
    %3642 = vmatpush1.bf16.msra.mxu0 0
    %3643 = vmatprep.subr.bf16.mxu0 0
    %3644 = vmatpush1.bf16.msra.mxu0 0
    %3645 = vmatprep.subr.bf16.mxu0 0
    %3646 = vmatpush1.bf16.msra.mxu0 0
    %3647 = vmatprep.subr.bf16.mxu0 0
    %3648 = vmatpush1.bf16.msra.mxu0 0
    %3649 = vmatprep.subr.bf16.mxu0 0
    %3650 = vmatpush1.bf16.msra.mxu0 0
    %3651 = vmatprep.subr.bf16.mxu0 0
    %3652 = vmatpush1.bf16.msra.mxu0 0
    %3653 = vmatprep.subr.bf16.mxu0 0
    %3654 = vmatpush1.bf16.msra.mxu0 0
    %3655 = vmatprep.mubr.bf16.mxu0 0
    %3656 = vmatmul.mubr.bf16.gmra.mrb[0].mxu0 %v3335
    %v3657 = vpop.f32.mrb[0].mxu0
    %v3658 = vadd.f32 %v3617, %v3657
    %v3659 = vpop.f32.mrb[0].mxu0
    %v3660 = vadd.f32 %v3619, %v3659
    %v3661 = vpop.f32.mrb[0].mxu0
    %v3662 = vpop.f32.mrb[0].mxu0
    %3663 = vdwg.mxu0
    %3664 = vmatprep.subr.bf16.mxu0 0
    %3665 = vmatpush1.bf16.msra.mxu0 %v1934
    %3666 = vmatprep.subr.bf16.mxu0 0
    %3667 = vmatpush1.bf16.msra.mxu0 %v1943
    %3668 = vmatprep.subr.bf16.mxu0 0
    %3669 = vmatpush1.bf16.msra.mxu0 %v1952
    %3670 = vmatprep.subr.bf16.mxu0 0
    %3671 = vmatpush1.bf16.msra.mxu0 %v1961
    %3672 = vmatprep.subr.bf16.mxu0 0
    %3673 = vmatpush1.bf16.msra.mxu0 %v1970
    %3674 = vmatprep.subr.bf16.mxu0 0
    %3675 = vmatpush1.bf16.msra.mxu0 %v1979
    %3676 = vmatprep.subr.bf16.mxu0 0
    %3677 = vmatpush1.bf16.msra.mxu0 %v1988
    %3678 = vmatprep.subr.bf16.mxu0 0
    %3679 = vmatpush1.bf16.msra.mxu0 %v1997
    %3680 = vmatprep.subr.bf16.mxu0 0
    %3681 = vmatpush1.bf16.msra.mxu0 %v2006
    %3682 = vmatprep.subr.bf16.mxu0 0
    %3683 = vmatpush1.bf16.msra.mxu0 %v2015
    %3684 = vmatprep.subr.bf16.mxu0 0
    %3685 = vmatpush1.bf16.msra.mxu0 %v2024
    %3686 = vmatprep.subr.bf16.mxu0 0
    %3687 = vmatpush1.bf16.msra.mxu0 %v2033
    %3688 = vmatprep.subr.bf16.mxu0 0
    %3689 = vmatpush1.bf16.msra.mxu0 %v2042
    %3690 = vmatprep.subr.bf16.mxu0 0
    %3691 = vmatpush1.bf16.msra.mxu0 %v2051
    %3692 = vmatprep.subr.bf16.mxu0 0
    %3693 = vmatpush1.bf16.msra.mxu0 %v2060
    %3694 = vmatprep.subr.bf16.mxu0 0
    %3695 = vmatpush1.bf16.msra.mxu0 %v2069
    %3696 = vmatprep.mubr.bf16.mxu0 %v3334
    %3697 = vmatmul.mubr.bf16.gmra.mrb[0].mxu0 %v3333
    %v3698 = vpop.f32.mrb[0].mxu0
    %v3699 = vadd.f32 %v1244, %v3698
    %v3700 = vpop.f32.mrb[0].mxu0
    %v3701 = vpop.f32.mrb[0].mxu0
    %v3702 = vpop.f32.mrb[0].mxu0
    %3703 = vdwg.mxu0
    %3704 = vmatprep.subr.bf16.mxu0 0
    %3705 = vmatpush1.bf16.msra.mxu0 %v2078
    %3706 = vmatprep.subr.bf16.mxu0 0
    %3707 = vmatpush1.bf16.msra.mxu0 %v2087
    %3708 = vmatprep.subr.bf16.mxu0 0
    %3709 = vmatpush1.bf16.msra.mxu0 %v2096
    %3710 = vmatprep.subr.bf16.mxu0 0
    %3711 = vmatpush1.bf16.msra.mxu0 %v2105
    %3712 = vmatprep.subr.bf16.mxu0 0
    %3713 = vmatpush1.bf16.msra.mxu0 %v2114
    %3714 = vmatprep.subr.bf16.mxu0 0
    %3715 = vmatpush1.bf16.msra.mxu0 %v2123
    %3716 = vmatprep.subr.bf16.mxu0 0
    %3717 = vmatpush1.bf16.msra.mxu0 %v2132
    %3718 = vmatprep.subr.bf16.mxu0 0
    %3719 = vmatpush1.bf16.msra.mxu0 %v2141
    %3720 = vmatprep.subr.bf16.mxu0 0
    %3721 = vmatpush1.bf16.msra.mxu0 0
    %3722 = vmatprep.subr.bf16.mxu0 0
    %3723 = vmatpush1.bf16.msra.mxu0 0
    %3724 = vmatprep.subr.bf16.mxu0 0
    %3725 = vmatpush1.bf16.msra.mxu0 0
    %3726 = vmatprep.subr.bf16.mxu0 0
    %3727 = vmatpush1.bf16.msra.mxu0 0
    %3728 = vmatprep.subr.bf16.mxu0 0
    %3729 = vmatpush1.bf16.msra.mxu0 0
    %3730 = vmatprep.subr.bf16.mxu0 0
    %3731 = vmatpush1.bf16.msra.mxu0 0
    %3732 = vmatprep.subr.bf16.mxu0 0
    %3733 = vmatpush1.bf16.msra.mxu0 0
    %3734 = vmatprep.subr.bf16.mxu0 0
    %3735 = vmatpush1.bf16.msra.mxu0 0
    %3736 = vmatprep.mubr.bf16.mxu0 0
    %3737 = vmatmul.mubr.bf16.gmra.mrb[0].mxu0 %v3335
    %v3738 = vpop.f32.mrb[0].mxu0
    %v3739 = vadd.f32 %v3699, %v3738
    %v3740 = vpop.f32.mrb[0].mxu0
    %v3741 = vpop.f32.mrb[0].mxu0
    %v3742 = vpop.f32.mrb[0].mxu0
    %3743 = vdwg.mxu0
    %v3744 = vadd.f32 %v3324, %v3412
    %v3745 = vadd.f32 %v3325, %v3414
    %v3746 = vadd.f32 %v3326, %v3494
    %v3747 = vxor.u32 %v3744, 2147483648
    %v3748 = vxor.u32 %v3745, 2147483648
    %v3749 = vxor.u32 %v3746, 2147483648
    %v3750 = vmul.f32 %v3747, 1.442695
    %v3751 = vpow.pop %v3750
    %v3752 = vmul.f32 %v3748, 1.442695
    %v3753 = vpow.pop %v3752
    %v3754 = vmul.f32 %v3749, 1.442695
    %v3755 = vpow.pop %v3754
    %v3756 = vadd.f32 %v3751, 1.0
    %v3757 = vadd.f32 %v3753, 1.0
    %v3758 = vadd.f32 %v3755, 1.0
    %v3759 = vrcp.pop %v3756
    %v3760 = vmul.f32 1.0, %v3759
    %v3761 = vrcp.pop %v3757
    %v3762 = vmul.f32 1.0, %v3761
    %v3763 = vrcp.pop %v3758
    %v3764 = vmul.f32 1.0, %v3763
    %v3765 = vadd.f32 %v3327, %v3496
    %v3766 = vadd.f32 %v3328, %v3576
    %v3767 = vadd.f32 %v3329, %v3578
    %v3768 = vxor.u32 %v3765, 2147483648
    %v3769 = vxor.u32 %v3766, 2147483648
    %v3770 = vxor.u32 %v3767, 2147483648
    %v3771 = vmul.f32 %v3768, 1.442695
    %v3772 = vpow.pop %v3771
    %v3773 = vmul.f32 %v3769, 1.442695
    %v3774 = vpow.pop %v3773
    %v3775 = vmul.f32 %v3770, 1.442695
    %v3776 = vpow.pop %v3775
    %v3777 = vadd.f32 %v3772, 1.0
    %v3778 = vadd.f32 %v3774, 1.0
    %v3779 = vadd.f32 %v3776, 1.0
    %v3780 = vrcp.pop %v3777
    %v3781 = vmul.f32 1.0, %v3780
    %v3782 = vrcp.pop %v3778
    %v3783 = vmul.f32 1.0, %v3782
    %v3784 = vrcp.pop %v3779
    %v3785 = vmul.f32 1.0, %v3784
    %v3786 = vmul.f32 %v3760, %v3658
    %v3787 = vmul.f32 %v3762, %v3660
    %v3788 = vmul.f32 %v3764, %v3739
    %v3789 = vadd.f32 %v3330, %v3786
    %v3790 = vadd.f32 %v3331, %v3787
    %v3791 = vadd.f32 %v3332, %v3788
    %v3792 = vtanh.pop %v3789
    %v3793 = vtanh.pop %v3790
    %v3794 = vtanh.pop %v3791
    %v3795 = vsub.f32 1.0, %v3781
    %v3796 = vsub.f32 1.0, %v3783
    %v3797 = vsub.f32 1.0, %v3785
    %v3798 = vmul.f32 %v3795, %v3792
    %v3799 = vmul.f32 %v3796, %v3793
    %v3800 = vmul.f32 %v3797, %v3794
    %v3801 = vmul.f32 %v3781, %v3315
    %v3802 = vmul.f32 %v3783, %v3316
    %v3803 = vmul.f32 %v3785, %v3317
    %v3804 = vadd.f32 %v3798, %v3801
    %v3805 = vadd.f32 %v3799, %v3802
    %v3806 = vadd.f32 %v3800, %v3803
    %v3807 = vmul.f32 %v3804, %v57
    %v3808 = vmul.f32 %v3805, %v58
    %v3809 = vmul.f32 %v3806, %v59
    %3810 = vst [vmem:[#allocation3 + $0x30] sm:$0xff] %v3807
    %3811 = vst [vmem:[#allocation3 + $0x38] sm:$0xff] %v3808
    %3812 = vst [vmem:[#allocation3 + $0x40] sm:$0xff] %v3809
    %v3813 = vld [vmem:[#allocation2 + $0xd8] sm:$0xff]
    %v3814 = vld [vmem:[#allocation2 + $0xe0] sm:$0xff]
    %v3815 = vld [vmem:[#allocation2 + $0xe8] sm:$0xff]
    %v3816 = vld [vmem:[#allocation2 + $0xf0] sm:$0xff]
    %v3817 = vld [vmem:[#allocation2 + $0xf8] sm:$0xff]
    %v3818 = vld [vmem:[#allocation2 + $0x100] sm:$0xff]
    %v3819 = vld [vmem:[#allocation2 + $0x108] sm:$0xff]
    %v3820 = vld [vmem:[#allocation2 + $0x110] sm:$0xff]
    %v3821 = vld [vmem:[#allocation2 + $0x118] sm:$0xff]
    %v3822 = vpack.c.bf16 %v3804, %v3804
    %v3823 = vpack.c.bf16 %v3805, %v3805
    %v3824 = vpack.c.bf16 %v3806, %v3806
    %3825 = vmatprep.subr.bf16.mxu0 %v1927
    %3826 = vmatpush1.bf16.msra.mxu0 %v1926
    %3827 = vmatprep.subr.bf16.mxu0 %v1936
    %3828 = vmatpush1.bf16.msra.mxu0 %v1935
    %3829 = vmatprep.subr.bf16.mxu0 %v1945
    %3830 = vmatpush1.bf16.msra.mxu0 %v1944
    %3831 = vmatprep.subr.bf16.mxu0 %v1954
    %3832 = vmatpush1.bf16.msra.mxu0 %v1953
    %3833 = vmatprep.subr.bf16.mxu0 %v1963
    %3834 = vmatpush1.bf16.msra.mxu0 %v1962
    %3835 = vmatprep.subr.bf16.mxu0 %v1972
    %3836 = vmatpush1.bf16.msra.mxu0 %v1971
    %3837 = vmatprep.subr.bf16.mxu0 %v1981
    %3838 = vmatpush1.bf16.msra.mxu0 %v1980
    %3839 = vmatprep.subr.bf16.mxu0 %v1990
    %3840 = vmatpush1.bf16.msra.mxu0 %v1989
    %3841 = vmatprep.subr.bf16.mxu0 %v1999
    %3842 = vmatpush1.bf16.msra.mxu0 %v1998
    %3843 = vmatprep.subr.bf16.mxu0 %v2008
    %3844 = vmatpush1.bf16.msra.mxu0 %v2007
    %3845 = vmatprep.subr.bf16.mxu0 %v2017
    %3846 = vmatpush1.bf16.msra.mxu0 %v2016
    %3847 = vmatprep.subr.bf16.mxu0 %v2026
    %3848 = vmatpush1.bf16.msra.mxu0 %v2025
    %3849 = vmatprep.subr.bf16.mxu0 %v2035
    %3850 = vmatpush1.bf16.msra.mxu0 %v2034
    %3851 = vmatprep.subr.bf16.mxu0 %v2044
    %3852 = vmatpush1.bf16.msra.mxu0 %v2043
    %3853 = vmatprep.subr.bf16.mxu0 %v2053
    %3854 = vmatpush1.bf16.msra.mxu0 %v2052
    %3855 = vmatprep.subr.bf16.mxu0 %v2062
    %3856 = vmatpush1.bf16.msra.mxu0 %v2061
    %3857 = vmatprep.mubr.bf16.mxu0 %v3823
    %3858 = vmatmul.mubr.bf16.gmra.mrb[0].mxu0 %v3822
    %v3859 = vpop.f32.mrb[0].mxu0
    %v3860 = vadd.f32 %v1212, %v3859
    %v3861 = vpop.f32.mrb[0].mxu0
    %v3862 = vadd.f32 %v1216, %v3861
    %v3863 = vpop.f32.mrb[0].mxu0
    %v3864 = vpop.f32.mrb[0].mxu0
    %3865 = vdwg.mxu0
    %3866 = vmatprep.subr.bf16.mxu0 %v2071
    %3867 = vmatpush1.bf16.msra.mxu0 %v2070
    %3868 = vmatprep.subr.bf16.mxu0 %v2080
    %3869 = vmatpush1.bf16.msra.mxu0 %v2079
    %3870 = vmatprep.subr.bf16.mxu0 %v2089
    %3871 = vmatpush1.bf16.msra.mxu0 %v2088
    %3872 = vmatprep.subr.bf16.mxu0 %v2098
    %3873 = vmatpush1.bf16.msra.mxu0 %v2097
    %3874 = vmatprep.subr.bf16.mxu0 %v2107
    %3875 = vmatpush1.bf16.msra.mxu0 %v2106
    %3876 = vmatprep.subr.bf16.mxu0 %v2116
    %3877 = vmatpush1.bf16.msra.mxu0 %v2115
    %3878 = vmatprep.subr.bf16.mxu0 %v2125
    %3879 = vmatpush1.bf16.msra.mxu0 %v2124
    %3880 = vmatprep.subr.bf16.mxu0 %v2134
    %3881 = vmatpush1.bf16.msra.mxu0 %v2133
    %3882 = vmatprep.subr.bf16.mxu0 0
    %3883 = vmatpush1.bf16.msra.mxu0 0
    %3884 = vmatprep.subr.bf16.mxu0 0
    %3885 = vmatpush1.bf16.msra.mxu0 0
    %3886 = vmatprep.subr.bf16.mxu0 0
    %3887 = vmatpush1.bf16.msra.mxu0 0
    %3888 = vmatprep.subr.bf16.mxu0 0
    %3889 = vmatpush1.bf16.msra.mxu0 0
    %3890 = vmatprep.subr.bf16.mxu0 0
    %3891 = vmatpush1.bf16.msra.mxu0 0
    %3892 = vmatprep.subr.bf16.mxu0 0
    %3893 = vmatpush1.bf16.msra.mxu0 0
    %3894 = vmatprep.subr.bf16.mxu0 0
    %3895 = vmatpush1.bf16.msra.mxu0 0
    %3896 = vmatprep.subr.bf16.mxu0 0
    %3897 = vmatpush1.bf16.msra.mxu0 0
    %3898 = vmatprep.mubr.bf16.mxu0 0
    %3899 = vmatmul.mubr.bf16.gmra.mrb[0].mxu0 %v3824
    %v3900 = vpop.f32.mrb[0].mxu0
    %v3901 = vadd.f32 %v3860, %v3900
    %v3902 = vpop.f32.mrb[0].mxu0
    %v3903 = vadd.f32 %v3862, %v3902
    %v3904 = vpop.f32.mrb[0].mxu0
    %v3905 = vpop.f32.mrb[0].mxu0
    %3906 = vdwg.mxu0
    %3907 = vmatprep.subr.bf16.mxu0 %v1929
    %3908 = vmatpush1.bf16.msra.mxu0 %v1928
    %3909 = vmatprep.subr.bf16.mxu0 %v1938
    %3910 = vmatpush1.bf16.msra.mxu0 %v1937
    %3911 = vmatprep.subr.bf16.mxu0 %v1947
    %3912 = vmatpush1.bf16.msra.mxu0 %v1946
    %3913 = vmatprep.subr.bf16.mxu0 %v1956
    %3914 = vmatpush1.bf16.msra.mxu0 %v1955
    %3915 = vmatprep.subr.bf16.mxu0 %v1965
    %3916 = vmatpush1.bf16.msra.mxu0 %v1964
    %3917 = vmatprep.subr.bf16.mxu0 %v1974
    %3918 = vmatpush1.bf16.msra.mxu0 %v1973
    %3919 = vmatprep.subr.bf16.mxu0 %v1983
    %3920 = vmatpush1.bf16.msra.mxu0 %v1982
    %3921 = vmatprep.subr.bf16.mxu0 %v1992
    %3922 = vmatpush1.bf16.msra.mxu0 %v1991
    %3923 = vmatprep.subr.bf16.mxu0 %v2001
    %3924 = vmatpush1.bf16.msra.mxu0 %v2000
    %3925 = vmatprep.subr.bf16.mxu0 %v2010
    %3926 = vmatpush1.bf16.msra.mxu0 %v2009
    %3927 = vmatprep.subr.bf16.mxu0 %v2019
    %3928 = vmatpush1.bf16.msra.mxu0 %v2018
    %3929 = vmatprep.subr.bf16.mxu0 %v2028
    %3930 = vmatpush1.bf16.msra.mxu0 %v2027
    %3931 = vmatprep.subr.bf16.mxu0 %v2037
    %3932 = vmatpush1.bf16.msra.mxu0 %v2036
    %3933 = vmatprep.subr.bf16.mxu0 %v2046
    %3934 = vmatpush1.bf16.msra.mxu0 %v2045
    %3935 = vmatprep.subr.bf16.mxu0 %v2055
    %3936 = vmatpush1.bf16.msra.mxu0 %v2054
    %3937 = vmatprep.subr.bf16.mxu0 %v2064
    %3938 = vmatpush1.bf16.msra.mxu0 %v2063
    %3939 = vmatprep.mubr.bf16.mxu0 %v3823
    %3940 = vmatmul.mubr.bf16.gmra.mrb[0].mxu0 %v3822
    %v3941 = vpop.f32.mrb[0].mxu0
    %v3942 = vadd.f32 %v1220, %v3941
    %v3943 = vpop.f32.mrb[0].mxu0
    %v3944 = vadd.f32 %v1224, %v3943
    %v3945 = vpop.f32.mrb[0].mxu0
    %v3946 = vpop.f32.mrb[0].mxu0
    %3947 = vdwg.mxu0
    %3948 = vmatprep.subr.bf16.mxu0 %v2073
    %3949 = vmatpush1.bf16.msra.mxu0 %v2072
    %3950 = vmatprep.subr.bf16.mxu0 %v2082
    %3951 = vmatpush1.bf16.msra.mxu0 %v2081
    %3952 = vmatprep.subr.bf16.mxu0 %v2091
    %3953 = vmatpush1.bf16.msra.mxu0 %v2090
    %3954 = vmatprep.subr.bf16.mxu0 %v2100
    %3955 = vmatpush1.bf16.msra.mxu0 %v2099
    %3956 = vmatprep.subr.bf16.mxu0 %v2109
    %3957 = vmatpush1.bf16.msra.mxu0 %v2108
    %3958 = vmatprep.subr.bf16.mxu0 %v2118
    %3959 = vmatpush1.bf16.msra.mxu0 %v2117
    %3960 = vmatprep.subr.bf16.mxu0 %v2127
    %3961 = vmatpush1.bf16.msra.mxu0 %v2126
    %3962 = vmatprep.subr.bf16.mxu0 %v2136
    %3963 = vmatpush1.bf16.msra.mxu0 %v2135
    %3964 = vmatprep.subr.bf16.mxu0 0
    %3965 = vmatpush1.bf16.msra.mxu0 0
    %3966 = vmatprep.subr.bf16.mxu0 0
    %3967 = vmatpush1.bf16.msra.mxu0 0
    %3968 = vmatprep.subr.bf16.mxu0 0
    %3969 = vmatpush1.bf16.msra.mxu0 0
    %3970 = vmatprep.subr.bf16.mxu0 0
    %3971 = vmatpush1.bf16.msra.mxu0 0
    %3972 = vmatprep.subr.bf16.mxu0 0
    %3973 = vmatpush1.bf16.msra.mxu0 0
    %3974 = vmatprep.subr.bf16.mxu0 0
    %3975 = vmatpush1.bf16.msra.mxu0 0
    %3976 = vmatprep.subr.bf16.mxu0 0
    %3977 = vmatpush1.bf16.msra.mxu0 0
    %3978 = vmatprep.subr.bf16.mxu0 0
    %3979 = vmatpush1.bf16.msra.mxu0 0
    %3980 = vmatprep.mubr.bf16.mxu0 0
    %3981 = vmatmul.mubr.bf16.gmra.mrb[0].mxu0 %v3824
    %v3982 = vpop.f32.mrb[0].mxu0
    %v3983 = vadd.f32 %v3942, %v3982
    %v3984 = vpop.f32.mrb[0].mxu0
    %v3985 = vadd.f32 %v3944, %v3984
    %v3986 = vpop.f32.mrb[0].mxu0
    %v3987 = vpop.f32.mrb[0].mxu0
    %3988 = vdwg.mxu0
    %3989 = vmatprep.subr.bf16.mxu0 %v1931
    %3990 = vmatpush1.bf16.msra.mxu0 %v1930
    %3991 = vmatprep.subr.bf16.mxu0 %v1940
    %3992 = vmatpush1.bf16.msra.mxu0 %v1939
    %3993 = vmatprep.subr.bf16.mxu0 %v1949
    %3994 = vmatpush1.bf16.msra.mxu0 %v1948
    %3995 = vmatprep.subr.bf16.mxu0 %v1958
    %3996 = vmatpush1.bf16.msra.mxu0 %v1957
    %3997 = vmatprep.subr.bf16.mxu0 %v1967
    %3998 = vmatpush1.bf16.msra.mxu0 %v1966
    %3999 = vmatprep.subr.bf16.mxu0 %v1976
    %4000 = vmatpush1.bf16.msra.mxu0 %v1975
    %4001 = vmatprep.subr.bf16.mxu0 %v1985
    %4002 = vmatpush1.bf16.msra.mxu0 %v1984
    %4003 = vmatprep.subr.bf16.mxu0 %v1994
    %4004 = vmatpush1.bf16.msra.mxu0 %v1993
    %4005 = vmatprep.subr.bf16.mxu0 %v2003
    %4006 = vmatpush1.bf16.msra.mxu0 %v2002
    %4007 = vmatprep.subr.bf16.mxu0 %v2012
    %4008 = vmatpush1.bf16.msra.mxu0 %v2011
    %4009 = vmatprep.subr.bf16.mxu0 %v2021
    %4010 = vmatpush1.bf16.msra.mxu0 %v2020
    %4011 = vmatprep.subr.bf16.mxu0 %v2030
    %4012 = vmatpush1.bf16.msra.mxu0 %v2029
    %4013 = vmatprep.subr.bf16.mxu0 %v2039
    %4014 = vmatpush1.bf16.msra.mxu0 %v2038
    %4015 = vmatprep.subr.bf16.mxu0 %v2048
    %4016 = vmatpush1.bf16.msra.mxu0 %v2047
    %4017 = vmatprep.subr.bf16.mxu0 %v2057
    %4018 = vmatpush1.bf16.msra.mxu0 %v2056
    %4019 = vmatprep.subr.bf16.mxu0 %v2066
    %4020 = vmatpush1.bf16.msra.mxu0 %v2065
    %4021 = vmatprep.mubr.bf16.mxu0 %v3823
    %4022 = vmatmul.mubr.bf16.gmra.mrb[0].mxu0 %v3822
    %v4023 = vpop.f32.mrb[0].mxu0
    %v4024 = vadd.f32 %v1228, %v4023
    %v4025 = vpop.f32.mrb[0].mxu0
    %v4026 = vadd.f32 %v1232, %v4025
    %v4027 = vpop.f32.mrb[0].mxu0
    %v4028 = vpop.f32.mrb[0].mxu0
    %4029 = vdwg.mxu0
    %4030 = vmatprep.subr.bf16.mxu0 %v2075
    %4031 = vmatpush1.bf16.msra.mxu0 %v2074
    %4032 = vmatprep.subr.bf16.mxu0 %v2084
    %4033 = vmatpush1.bf16.msra.mxu0 %v2083
    %4034 = vmatprep.subr.bf16.mxu0 %v2093
    %4035 = vmatpush1.bf16.msra.mxu0 %v2092
    %4036 = vmatprep.subr.bf16.mxu0 %v2102
    %4037 = vmatpush1.bf16.msra.mxu0 %v2101
    %4038 = vmatprep.subr.bf16.mxu0 %v2111
    %4039 = vmatpush1.bf16.msra.mxu0 %v2110
    %4040 = vmatprep.subr.bf16.mxu0 %v2120
    %4041 = vmatpush1.bf16.msra.mxu0 %v2119
    %4042 = vmatprep.subr.bf16.mxu0 %v2129
    %4043 = vmatpush1.bf16.msra.mxu0 %v2128
    %4044 = vmatprep.subr.bf16.mxu0 %v2138
    %4045 = vmatpush1.bf16.msra.mxu0 %v2137
    %4046 = vmatprep.subr.bf16.mxu0 0
    %4047 = vmatpush1.bf16.msra.mxu0 0
    %4048 = vmatprep.subr.bf16.mxu0 0
    %4049 = vmatpush1.bf16.msra.mxu0 0
    %4050 = vmatprep.subr.bf16.mxu0 0
    %4051 = vmatpush1.bf16.msra.mxu0 0
    %4052 = vmatprep.subr.bf16.mxu0 0
    %4053 = vmatpush1.bf16.msra.mxu0 0
    %4054 = vmatprep.subr.bf16.mxu0 0
    %4055 = vmatpush1.bf16.msra.mxu0 0
    %4056 = vmatprep.subr.bf16.mxu0 0
    %4057 = vmatpush1.bf16.msra.mxu0 0
    %4058 = vmatprep.subr.bf16.mxu0 0
    %4059 = vmatpush1.bf16.msra.mxu0 0
    %4060 = vmatprep.subr.bf16.mxu0 0
    %4061 = vmatpush1.bf16.msra.mxu0 0
    %4062 = vmatprep.mubr.bf16.mxu0 0
    %4063 = vmatmul.mubr.bf16.gmra.mrb[0].mxu0 %v3824
    %v4064 = vpop.f32.mrb[0].mxu0
    %v4065 = vadd.f32 %v4024, %v4064
    %v4066 = vpop.f32.mrb[0].mxu0
    %v4067 = vadd.f32 %v4026, %v4066
    %v4068 = vpop.f32.mrb[0].mxu0
    %v4069 = vpop.f32.mrb[0].mxu0
    %4070 = vdwg.mxu0
    %4071 = vmatprep.subr.bf16.mxu0 %v1933
    %4072 = vmatpush1.bf16.msra.mxu0 %v1932
    %4073 = vmatprep.subr.bf16.mxu0 %v1942
    %4074 = vmatpush1.bf16.msra.mxu0 %v1941
    %4075 = vmatprep.subr.bf16.mxu0 %v1951
    %4076 = vmatpush1.bf16.msra.mxu0 %v1950
    %4077 = vmatprep.subr.bf16.mxu0 %v1960
    %4078 = vmatpush1.bf16.msra.mxu0 %v1959
    %4079 = vmatprep.subr.bf16.mxu0 %v1969
    %4080 = vmatpush1.bf16.msra.mxu0 %v1968
    %4081 = vmatprep.subr.bf16.mxu0 %v1978
    %4082 = vmatpush1.bf16.msra.mxu0 %v1977
    %4083 = vmatprep.subr.bf16.mxu0 %v1987
    %4084 = vmatpush1.bf16.msra.mxu0 %v1986
    %4085 = vmatprep.subr.bf16.mxu0 %v1996
    %4086 = vmatpush1.bf16.msra.mxu0 %v1995
    %4087 = vmatprep.subr.bf16.mxu0 %v2005
    %4088 = vmatpush1.bf16.msra.mxu0 %v2004
    %4089 = vmatprep.subr.bf16.mxu0 %v2014
    %4090 = vmatpush1.bf16.msra.mxu0 %v2013
    %4091 = vmatprep.subr.bf16.mxu0 %v2023
    %4092 = vmatpush1.bf16.msra.mxu0 %v2022
    %4093 = vmatprep.subr.bf16.mxu0 %v2032
    %4094 = vmatpush1.bf16.msra.mxu0 %v2031
    %4095 = vmatprep.subr.bf16.mxu0 %v2041
    %4096 = vmatpush1.bf16.msra.mxu0 %v2040
    %4097 = vmatprep.subr.bf16.mxu0 %v2050
    %4098 = vmatpush1.bf16.msra.mxu0 %v2049
    %4099 = vmatprep.subr.bf16.mxu0 %v2059
    %4100 = vmatpush1.bf16.msra.mxu0 %v2058
    %4101 = vmatprep.subr.bf16.mxu0 %v2068
    %4102 = vmatpush1.bf16.msra.mxu0 %v2067
    %4103 = vmatprep.mubr.bf16.mxu0 %v3823
    %4104 = vmatmul.mubr.bf16.gmra.mrb[0].mxu0 %v3822
    %v4105 = vpop.f32.mrb[0].mxu0
    %v4106 = vadd.f32 %v1236, %v4105
    %v4107 = vpop.f32.mrb[0].mxu0
    %v4108 = vadd.f32 %v1240, %v4107
    %v4109 = vpop.f32.mrb[0].mxu0
    %v4110 = vpop.f32.mrb[0].mxu0
    %4111 = vdwg.mxu0
    %4112 = vmatprep.subr.bf16.mxu0 %v2077
    %4113 = vmatpush1.bf16.msra.mxu0 %v2076
    %4114 = vmatprep.subr.bf16.mxu0 %v2086
    %4115 = vmatpush1.bf16.msra.mxu0 %v2085
    %4116 = vmatprep.subr.bf16.mxu0 %v2095
    %4117 = vmatpush1.bf16.msra.mxu0 %v2094
    %4118 = vmatprep.subr.bf16.mxu0 %v2104
    %4119 = vmatpush1.bf16.msra.mxu0 %v2103
    %4120 = vmatprep.subr.bf16.mxu0 %v2113
    %4121 = vmatpush1.bf16.msra.mxu0 %v2112
    %4122 = vmatprep.subr.bf16.mxu0 %v2122
    %4123 = vmatpush1.bf16.msra.mxu0 %v2121
    %4124 = vmatprep.subr.bf16.mxu0 %v2131
    %4125 = vmatpush1.bf16.msra.mxu0 %v2130
    %4126 = vmatprep.subr.bf16.mxu0 %v2140
    %4127 = vmatpush1.bf16.msra.mxu0 %v2139
    %4128 = vmatprep.subr.bf16.mxu0 0
    %4129 = vmatpush1.bf16.msra.mxu0 0
    %4130 = vmatprep.subr.bf16.mxu0 0
    %4131 = vmatpush1.bf16.msra.mxu0 0
    %4132 = vmatprep.subr.bf16.mxu0 0
    %4133 = vmatpush1.bf16.msra.mxu0 0
    %4134 = vmatprep.subr.bf16.mxu0 0
    %4135 = vmatpush1.bf16.msra.mxu0 0
    %4136 = vmatprep.subr.bf16.mxu0 0
    %4137 = vmatpush1.bf16.msra.mxu0 0
    %4138 = vmatprep.subr.bf16.mxu0 0
    %4139 = vmatpush1.bf16.msra.mxu0 0
    %4140 = vmatprep.subr.bf16.mxu0 0
    %4141 = vmatpush1.bf16.msra.mxu0 0
    %4142 = vmatprep.subr.bf16.mxu0 0
    %4143 = vmatpush1.bf16.msra.mxu0 0
    %4144 = vmatprep.mubr.bf16.mxu0 0
    %4145 = vmatmul.mubr.bf16.gmra.mrb[0].mxu0 %v3824
    %v4146 = vpop.f32.mrb[0].mxu0
    %v4147 = vadd.f32 %v4106, %v4146
    %v4148 = vpop.f32.mrb[0].mxu0
    %v4149 = vadd.f32 %v4108, %v4148
    %v4150 = vpop.f32.mrb[0].mxu0
    %v4151 = vpop.f32.mrb[0].mxu0
    %4152 = vdwg.mxu0
    %4153 = vmatprep.subr.bf16.mxu0 0
    %4154 = vmatpush1.bf16.msra.mxu0 %v1934
    %4155 = vmatprep.subr.bf16.mxu0 0
    %4156 = vmatpush1.bf16.msra.mxu0 %v1943
    %4157 = vmatprep.subr.bf16.mxu0 0
    %4158 = vmatpush1.bf16.msra.mxu0 %v1952
    %4159 = vmatprep.subr.bf16.mxu0 0
    %4160 = vmatpush1.bf16.msra.mxu0 %v1961
    %4161 = vmatprep.subr.bf16.mxu0 0
    %4162 = vmatpush1.bf16.msra.mxu0 %v1970
    %4163 = vmatprep.subr.bf16.mxu0 0
    %4164 = vmatpush1.bf16.msra.mxu0 %v1979
    %4165 = vmatprep.subr.bf16.mxu0 0
    %4166 = vmatpush1.bf16.msra.mxu0 %v1988
    %4167 = vmatprep.subr.bf16.mxu0 0
    %4168 = vmatpush1.bf16.msra.mxu0 %v1997
    %4169 = vmatprep.subr.bf16.mxu0 0
    %4170 = vmatpush1.bf16.msra.mxu0 %v2006
    %4171 = vmatprep.subr.bf16.mxu0 0
    %4172 = vmatpush1.bf16.msra.mxu0 %v2015
    %4173 = vmatprep.subr.bf16.mxu0 0
    %4174 = vmatpush1.bf16.msra.mxu0 %v2024
    %4175 = vmatprep.subr.bf16.mxu0 0
    %4176 = vmatpush1.bf16.msra.mxu0 %v2033
    %4177 = vmatprep.subr.bf16.mxu0 0
    %4178 = vmatpush1.bf16.msra.mxu0 %v2042
    %4179 = vmatprep.subr.bf16.mxu0 0
    %4180 = vmatpush1.bf16.msra.mxu0 %v2051
    %4181 = vmatprep.subr.bf16.mxu0 0
    %4182 = vmatpush1.bf16.msra.mxu0 %v2060
    %4183 = vmatprep.subr.bf16.mxu0 0
    %4184 = vmatpush1.bf16.msra.mxu0 %v2069
    %4185 = vmatprep.mubr.bf16.mxu0 %v3823
    %4186 = vmatmul.mubr.bf16.gmra.mrb[0].mxu0 %v3822
    %v4187 = vpop.f32.mrb[0].mxu0
    %v4188 = vadd.f32 %v1244, %v4187
    %v4189 = vpop.f32.mrb[0].mxu0
    %v4190 = vpop.f32.mrb[0].mxu0
    %v4191 = vpop.f32.mrb[0].mxu0
    %4192 = vdwg.mxu0
    %4193 = vmatprep.subr.bf16.mxu0 0
    %4194 = vmatpush1.bf16.msra.mxu0 %v2078
    %4195 = vmatprep.subr.bf16.mxu0 0
    %4196 = vmatpush1.bf16.msra.mxu0 %v2087
    %4197 = vmatprep.subr.bf16.mxu0 0
    %4198 = vmatpush1.bf16.msra.mxu0 %v2096
    %4199 = vmatprep.subr.bf16.mxu0 0
    %4200 = vmatpush1.bf16.msra.mxu0 %v2105
    %4201 = vmatprep.subr.bf16.mxu0 0
    %4202 = vmatpush1.bf16.msra.mxu0 %v2114
    %4203 = vmatprep.subr.bf16.mxu0 0
    %4204 = vmatpush1.bf16.msra.mxu0 %v2123
    %4205 = vmatprep.subr.bf16.mxu0 0
    %4206 = vmatpush1.bf16.msra.mxu0 %v2132
    %4207 = vmatprep.subr.bf16.mxu0 0
    %4208 = vmatpush1.bf16.msra.mxu0 %v2141
    %4209 = vmatprep.subr.bf16.mxu0 0
    %4210 = vmatpush1.bf16.msra.mxu0 0
    %4211 = vmatprep.subr.bf16.mxu0 0
    %4212 = vmatpush1.bf16.msra.mxu0 0
    %4213 = vmatprep.subr.bf16.mxu0 0
    %4214 = vmatpush1.bf16.msra.mxu0 0
    %4215 = vmatprep.subr.bf16.mxu0 0
    %4216 = vmatpush1.bf16.msra.mxu0 0
    %4217 = vmatprep.subr.bf16.mxu0 0
    %4218 = vmatpush1.bf16.msra.mxu0 0
    %4219 = vmatprep.subr.bf16.mxu0 0
    %4220 = vmatpush1.bf16.msra.mxu0 0
    %4221 = vmatprep.subr.bf16.mxu0 0
    %4222 = vmatpush1.bf16.msra.mxu0 0
    %4223 = vmatprep.subr.bf16.mxu0 0
    %4224 = vmatpush1.bf16.msra.mxu0 0
    %4225 = vmatprep.mubr.bf16.mxu0 0
    %4226 = vmatmul.mubr.bf16.gmra.mrb[0].mxu0 %v3824
    %v4227 = vpop.f32.mrb[0].mxu0
    %v4228 = vadd.f32 %v4188, %v4227
    %v4229 = vpop.f32.mrb[0].mxu0
    %v4230 = vpop.f32.mrb[0].mxu0
    %v4231 = vpop.f32.mrb[0].mxu0
    %4232 = vdwg.mxu0
    %v4233 = vadd.f32 %v3813, %v3901
    %v4234 = vadd.f32 %v3814, %v3903
    %v4235 = vadd.f32 %v3815, %v3983
    %v4236 = vxor.u32 %v4233, 2147483648
    %v4237 = vxor.u32 %v4234, 2147483648
    %v4238 = vxor.u32 %v4235, 2147483648
    %v4239 = vmul.f32 %v4236, 1.442695
    %v4240 = vpow.pop %v4239
    %v4241 = vmul.f32 %v4237, 1.442695
    %v4242 = vpow.pop %v4241
    %v4243 = vmul.f32 %v4238, 1.442695
    %v4244 = vpow.pop %v4243
    %v4245 = vadd.f32 %v4240, 1.0
    %v4246 = vadd.f32 %v4242, 1.0
    %v4247 = vadd.f32 %v4244, 1.0
    %v4248 = vrcp.pop %v4245
    %v4249 = vmul.f32 1.0, %v4248
    %v4250 = vrcp.pop %v4246
    %v4251 = vmul.f32 1.0, %v4250
    %v4252 = vrcp.pop %v4247
    %v4253 = vmul.f32 1.0, %v4252
    %v4254 = vadd.f32 %v3816, %v3985
    %v4255 = vadd.f32 %v3817, %v4065
    %v4256 = vadd.f32 %v3818, %v4067
    %v4257 = vxor.u32 %v4254, 2147483648
    %v4258 = vxor.u32 %v4255, 2147483648
    %v4259 = vxor.u32 %v4256, 2147483648
    %v4260 = vmul.f32 %v4257, 1.442695
    %v4261 = vpow.pop %v4260
    %v4262 = vmul.f32 %v4258, 1.442695
    %v4263 = vpow.pop %v4262
    %v4264 = vmul.f32 %v4259, 1.442695
    %v4265 = vpow.pop %v4264
    %v4266 = vadd.f32 %v4261, 1.0
    %v4267 = vadd.f32 %v4263, 1.0
    %v4268 = vadd.f32 %v4265, 1.0
    %v4269 = vrcp.pop %v4266
    %v4270 = vmul.f32 1.0, %v4269
    %v4271 = vrcp.pop %v4267
    %v4272 = vmul.f32 1.0, %v4271
    %v4273 = vrcp.pop %v4268
    %v4274 = vmul.f32 1.0, %v4273
    %v4275 = vmul.f32 %v4249, %v4147
    %v4276 = vmul.f32 %v4251, %v4149
    %v4277 = vmul.f32 %v4253, %v4228
    %v4278 = vadd.f32 %v3819, %v4275
    %v4279 = vadd.f32 %v3820, %v4276
    %v4280 = vadd.f32 %v3821, %v4277
    %v4281 = vtanh.pop %v4278
    %v4282 = vtanh.pop %v4279
    %v4283 = vtanh.pop %v4280
    %v4284 = vsub.f32 1.0, %v4270
    %v4285 = vsub.f32 1.0, %v4272
    %v4286 = vsub.f32 1.0, %v4274
    %v4287 = vmul.f32 %v4284, %v4281
    %v4288 = vmul.f32 %v4285, %v4282
    %v4289 = vmul.f32 %v4286, %v4283
    %v4290 = vmul.f32 %v4270, %v3804
    %v4291 = vmul.f32 %v4272, %v3805
    %v4292 = vmul.f32 %v4274, %v3806
    %v4293 = vadd.f32 %v4287, %v4290
    %v4294 = vadd.f32 %v4288, %v4291
    %v4295 = vadd.f32 %v4289, %v4292
    %v4296 = vmul.f32 %v4293, %v57
    %v4297 = vmul.f32 %v4294, %v58
    %v4298 = vmul.f32 %v4295, %v59
    %4299 = vst [vmem:[#allocation3 + $0x48] sm:$0xff] %v4296
    %4300 = vst [vmem:[#allocation3 + $0x50] sm:$0xff] %v4297
    %4301 = vst [vmem:[#allocation3 + $0x58] sm:$0xff] %v4298
    %v4302 = vld [vmem:[#allocation2 + $0x120] sm:$0xff]
    %v4303 = vld [vmem:[#allocation2 + $0x128] sm:$0xff]
    %v4304 = vld [vmem:[#allocation2 + $0x130] sm:$0xff]
    %v4305 = vld [vmem:[#allocation2 + $0x138] sm:$0xff]
    %v4306 = vld [vmem:[#allocation2 + $0x140] sm:$0xff]
    %v4307 = vld [vmem:[#allocation2 + $0x148] sm:$0xff]
    %v4308 = vld [vmem:[#allocation2 + $0x150] sm:$0xff]
    %v4309 = vld [vmem:[#allocation2 + $0x158] sm:$0xff]
    %v4310 = vld [vmem:[#allocation2 + $0x160] sm:$0xff]
    %v4311 = vpack.c.bf16 %v4293, %v4293
    %v4312 = vpack.c.bf16 %v4294, %v4294
    %v4313 = vpack.c.bf16 %v4295, %v4295
    %4314 = vmatprep.subr.bf16.mxu0 %v1927
    %4315 = vmatpush1.bf16.msra.mxu0 %v1926
    %4316 = vmatprep.subr.bf16.mxu0 %v1936
    %4317 = vmatpush1.bf16.msra.mxu0 %v1935
    %4318 = vmatprep.subr.bf16.mxu0 %v1945
    %4319 = vmatpush1.bf16.msra.mxu0 %v1944
    %4320 = vmatprep.subr.bf16.mxu0 %v1954
    %4321 = vmatpush1.bf16.msra.mxu0 %v1953
    %4322 = vmatprep.subr.bf16.mxu0 %v1963
    %4323 = vmatpush1.bf16.msra.mxu0 %v1962
    %4324 = vmatprep.subr.bf16.mxu0 %v1972
    %4325 = vmatpush1.bf16.msra.mxu0 %v1971
    %4326 = vmatprep.subr.bf16.mxu0 %v1981
    %4327 = vmatpush1.bf16.msra.mxu0 %v1980
    %4328 = vmatprep.subr.bf16.mxu0 %v1990
    %4329 = vmatpush1.bf16.msra.mxu0 %v1989
    %4330 = vmatprep.subr.bf16.mxu0 %v1999
    %4331 = vmatpush1.bf16.msra.mxu0 %v1998
    %4332 = vmatprep.subr.bf16.mxu0 %v2008
    %4333 = vmatpush1.bf16.msra.mxu0 %v2007
    %4334 = vmatprep.subr.bf16.mxu0 %v2017
    %4335 = vmatpush1.bf16.msra.mxu0 %v2016
    %4336 = vmatprep.subr.bf16.mxu0 %v2026
    %4337 = vmatpush1.bf16.msra.mxu0 %v2025
    %4338 = vmatprep.subr.bf16.mxu0 %v2035
    %4339 = vmatpush1.bf16.msra.mxu0 %v2034
    %4340 = vmatprep.subr.bf16.mxu0 %v2044
    %4341 = vmatpush1.bf16.msra.mxu0 %v2043
    %4342 = vmatprep.subr.bf16.mxu0 %v2053
    %4343 = vmatpush1.bf16.msra.mxu0 %v2052
    %4344 = vmatprep.subr.bf16.mxu0 %v2062
    %4345 = vmatpush1.bf16.msra.mxu0 %v2061
    %4346 = vmatprep.mubr.bf16.mxu0 %v4312
    %4347 = vmatmul.mubr.bf16.gmra.mrb[0].mxu0 %v4311
    %v4348 = vpop.f32.mrb[0].mxu0
    %v4349 = vadd.f32 %v1212, %v4348
    %v4350 = vpop.f32.mrb[0].mxu0
    %v4351 = vadd.f32 %v1216, %v4350
    %v4352 = vpop.f32.mrb[0].mxu0
    %v4353 = vpop.f32.mrb[0].mxu0
    %4354 = vdwg.mxu0
    %4355 = vmatprep.subr.bf16.mxu0 %v2071
    %4356 = vmatpush1.bf16.msra.mxu0 %v2070
    %4357 = vmatprep.subr.bf16.mxu0 %v2080
    %4358 = vmatpush1.bf16.msra.mxu0 %v2079
    %4359 = vmatprep.subr.bf16.mxu0 %v2089
    %4360 = vmatpush1.bf16.msra.mxu0 %v2088
    %4361 = vmatprep.subr.bf16.mxu0 %v2098
    %4362 = vmatpush1.bf16.msra.mxu0 %v2097
    %4363 = vmatprep.subr.bf16.mxu0 %v2107
    %4364 = vmatpush1.bf16.msra.mxu0 %v2106
    %4365 = vmatprep.subr.bf16.mxu0 %v2116
    %4366 = vmatpush1.bf16.msra.mxu0 %v2115
    %4367 = vmatprep.subr.bf16.mxu0 %v2125
    %4368 = vmatpush1.bf16.msra.mxu0 %v2124
    %4369 = vmatprep.subr.bf16.mxu0 %v2134
    %4370 = vmatpush1.bf16.msra.mxu0 %v2133
    %4371 = vmatprep.subr.bf16.mxu0 0
    %4372 = vmatpush1.bf16.msra.mxu0 0
    %4373 = vmatprep.subr.bf16.mxu0 0
    %4374 = vmatpush1.bf16.msra.mxu0 0
    %4375 = vmatprep.subr.bf16.mxu0 0
    %4376 = vmatpush1.bf16.msra.mxu0 0
    %4377 = vmatprep.subr.bf16.mxu0 0
    %4378 = vmatpush1.bf16.msra.mxu0 0
    %4379 = vmatprep.subr.bf16.mxu0 0
    %4380 = vmatpush1.bf16.msra.mxu0 0
    %4381 = vmatprep.subr.bf16.mxu0 0
    %4382 = vmatpush1.bf16.msra.mxu0 0
    %4383 = vmatprep.subr.bf16.mxu0 0
    %4384 = vmatpush1.bf16.msra.mxu0 0
    %4385 = vmatprep.subr.bf16.mxu0 0
    %4386 = vmatpush1.bf16.msra.mxu0 0
    %4387 = vmatprep.mubr.bf16.mxu0 0
    %4388 = vmatmul.mubr.bf16.gmra.mrb[0].mxu0 %v4313
    %v4389 = vpop.f32.mrb[0].mxu0
    %v4390 = vadd.f32 %v4349, %v4389
    %v4391 = vpop.f32.mrb[0].mxu0
    %v4392 = vadd.f32 %v4351, %v4391
    %v4393 = vpop.f32.mrb[0].mxu0
    %v4394 = vpop.f32.mrb[0].mxu0
    %4395 = vdwg.mxu0
    %4396 = vmatprep.subr.bf16.mxu0 %v1929
    %4397 = vmatpush1.bf16.msra.mxu0 %v1928
    %4398 = vmatprep.subr.bf16.mxu0 %v1938
    %4399 = vmatpush1.bf16.msra.mxu0 %v1937
    %4400 = vmatprep.subr.bf16.mxu0 %v1947
    %4401 = vmatpush1.bf16.msra.mxu0 %v1946
    %4402 = vmatprep.subr.bf16.mxu0 %v1956
    %4403 = vmatpush1.bf16.msra.mxu0 %v1955
    %4404 = vmatprep.subr.bf16.mxu0 %v1965
    %4405 = vmatpush1.bf16.msra.mxu0 %v1964
    %4406 = vmatprep.subr.bf16.mxu0 %v1974
    %4407 = vmatpush1.bf16.msra.mxu0 %v1973
    %4408 = vmatprep.subr.bf16.mxu0 %v1983
    %4409 = vmatpush1.bf16.msra.mxu0 %v1982
    %4410 = vmatprep.subr.bf16.mxu0 %v1992
    %4411 = vmatpush1.bf16.msra.mxu0 %v1991
    %4412 = vmatprep.subr.bf16.mxu0 %v2001
    %4413 = vmatpush1.bf16.msra.mxu0 %v2000
    %4414 = vmatprep.subr.bf16.mxu0 %v2010
    %4415 = vmatpush1.bf16.msra.mxu0 %v2009
    %4416 = vmatprep.subr.bf16.mxu0 %v2019
    %4417 = vmatpush1.bf16.msra.mxu0 %v2018
    %4418 = vmatprep.subr.bf16.mxu0 %v2028
    %4419 = vmatpush1.bf16.msra.mxu0 %v2027
    %4420 = vmatprep.subr.bf16.mxu0 %v2037
    %4421 = vmatpush1.bf16.msra.mxu0 %v2036
    %4422 = vmatprep.subr.bf16.mxu0 %v2046
    %4423 = vmatpush1.bf16.msra.mxu0 %v2045
    %4424 = vmatprep.subr.bf16.mxu0 %v2055
    %4425 = vmatpush1.bf16.msra.mxu0 %v2054
    %4426 = vmatprep.subr.bf16.mxu0 %v2064
    %4427 = vmatpush1.bf16.msra.mxu0 %v2063
    %4428 = vmatprep.mubr.bf16.mxu0 %v4312
    %4429 = vmatmul.mubr.bf16.gmra.mrb[0].mxu0 %v4311
    %v4430 = vpop.f32.mrb[0].mxu0
    %v4431 = vadd.f32 %v1220, %v4430
    %v4432 = vpop.f32.mrb[0].mxu0
    %v4433 = vadd.f32 %v1224, %v4432
    %v4434 = vpop.f32.mrb[0].mxu0
    %v4435 = vpop.f32.mrb[0].mxu0
    %4436 = vdwg.mxu0
    %4437 = vmatprep.subr.bf16.mxu0 %v2073
    %4438 = vmatpush1.bf16.msra.mxu0 %v2072
    %4439 = vmatprep.subr.bf16.mxu0 %v2082
    %4440 = vmatpush1.bf16.msra.mxu0 %v2081
    %4441 = vmatprep.subr.bf16.mxu0 %v2091
    %4442 = vmatpush1.bf16.msra.mxu0 %v2090
    %4443 = vmatprep.subr.bf16.mxu0 %v2100
    %4444 = vmatpush1.bf16.msra.mxu0 %v2099
    %4445 = vmatprep.subr.bf16.mxu0 %v2109
    %4446 = vmatpush1.bf16.msra.mxu0 %v2108
    %4447 = vmatprep.subr.bf16.mxu0 %v2118
    %4448 = vmatpush1.bf16.msra.mxu0 %v2117
    %4449 = vmatprep.subr.bf16.mxu0 %v2127
    %4450 = vmatpush1.bf16.msra.mxu0 %v2126
    %4451 = vmatprep.subr.bf16.mxu0 %v2136
    %4452 = vmatpush1.bf16.msra.mxu0 %v2135
    %4453 = vmatprep.subr.bf16.mxu0 0
    %4454 = vmatpush1.bf16.msra.mxu0 0
    %4455 = vmatprep.subr.bf16.mxu0 0
    %4456 = vmatpush1.bf16.msra.mxu0 0
    %4457 = vmatprep.subr.bf16.mxu0 0
    %4458 = vmatpush1.bf16.msra.mxu0 0
    %4459 = vmatprep.subr.bf16.mxu0 0
    %4460 = vmatpush1.bf16.msra.mxu0 0
    %4461 = vmatprep.subr.bf16.mxu0 0
    %4462 = vmatpush1.bf16.msra.mxu0 0
    %4463 = vmatprep.subr.bf16.mxu0 0
    %4464 = vmatpush1.bf16.msra.mxu0 0
    %4465 = vmatprep.subr.bf16.mxu0 0
    %4466 = vmatpush1.bf16.msra.mxu0 0
    %4467 = vmatprep.subr.bf16.mxu0 0
    %4468 = vmatpush1.bf16.msra.mxu0 0
    %4469 = vmatprep.mubr.bf16.mxu0 0
    %4470 = vmatmul.mubr.bf16.gmra.mrb[0].mxu0 %v4313
    %v4471 = vpop.f32.mrb[0].mxu0
    %v4472 = vadd.f32 %v4431, %v4471
    %v4473 = vpop.f32.mrb[0].mxu0
    %v4474 = vadd.f32 %v4433, %v4473
    %v4475 = vpop.f32.mrb[0].mxu0
    %v4476 = vpop.f32.mrb[0].mxu0
    %4477 = vdwg.mxu0
    %4478 = vmatprep.subr.bf16.mxu0 %v1931
    %4479 = vmatpush1.bf16.msra.mxu0 %v1930
    %4480 = vmatprep.subr.bf16.mxu0 %v1940
    %4481 = vmatpush1.bf16.msra.mxu0 %v1939
    %4482 = vmatprep.subr.bf16.mxu0 %v1949
    %4483 = vmatpush1.bf16.msra.mxu0 %v1948
    %4484 = vmatprep.subr.bf16.mxu0 %v1958
    %4485 = vmatpush1.bf16.msra.mxu0 %v1957
    %4486 = vmatprep.subr.bf16.mxu0 %v1967
    %4487 = vmatpush1.bf16.msra.mxu0 %v1966
    %4488 = vmatprep.subr.bf16.mxu0 %v1976
    %4489 = vmatpush1.bf16.msra.mxu0 %v1975
    %4490 = vmatprep.subr.bf16.mxu0 %v1985
    %4491 = vmatpush1.bf16.msra.mxu0 %v1984
    %4492 = vmatprep.subr.bf16.mxu0 %v1994
    %4493 = vmatpush1.bf16.msra.mxu0 %v1993
    %4494 = vmatprep.subr.bf16.mxu0 %v2003
    %4495 = vmatpush1.bf16.msra.mxu0 %v2002
    %4496 = vmatprep.subr.bf16.mxu0 %v2012
    %4497 = vmatpush1.bf16.msra.mxu0 %v2011
    %4498 = vmatprep.subr.bf16.mxu0 %v2021
    %4499 = vmatpush1.bf16.msra.mxu0 %v2020
    %4500 = vmatprep.subr.bf16.mxu0 %v2030
    %4501 = vmatpush1.bf16.msra.mxu0 %v2029
    %4502 = vmatprep.subr.bf16.mxu0 %v2039
    %4503 = vmatpush1.bf16.msra.mxu0 %v2038
    %4504 = vmatprep.subr.bf16.mxu0 %v2048
    %4505 = vmatpush1.bf16.msra.mxu0 %v2047
    %4506 = vmatprep.subr.bf16.mxu0 %v2057
    %4507 = vmatpush1.bf16.msra.mxu0 %v2056
    %4508 = vmatprep.subr.bf16.mxu0 %v2066
    %4509 = vmatpush1.bf16.msra.mxu0 %v2065
    %4510 = vmatprep.mubr.bf16.mxu0 %v4312
    %4511 = vmatmul.mubr.bf16.gmra.mrb[0].mxu0 %v4311
    %v4512 = vpop.f32.mrb[0].mxu0
    %v4513 = vadd.f32 %v1228, %v4512
    %v4514 = vpop.f32.mrb[0].mxu0
    %v4515 = vadd.f32 %v1232, %v4514
    %v4516 = vpop.f32.mrb[0].mxu0
    %v4517 = vpop.f32.mrb[0].mxu0
    %4518 = vdwg.mxu0
    %4519 = vmatprep.subr.bf16.mxu0 %v2075
    %4520 = vmatpush1.bf16.msra.mxu0 %v2074
    %4521 = vmatprep.subr.bf16.mxu0 %v2084
    %4522 = vmatpush1.bf16.msra.mxu0 %v2083
    %4523 = vmatprep.subr.bf16.mxu0 %v2093
    %4524 = vmatpush1.bf16.msra.mxu0 %v2092
    %4525 = vmatprep.subr.bf16.mxu0 %v2102
    %4526 = vmatpush1.bf16.msra.mxu0 %v2101
    %4527 = vmatprep.subr.bf16.mxu0 %v2111
    %4528 = vmatpush1.bf16.msra.mxu0 %v2110
    %4529 = vmatprep.subr.bf16.mxu0 %v2120
    %4530 = vmatpush1.bf16.msra.mxu0 %v2119
    %4531 = vmatprep.subr.bf16.mxu0 %v2129
    %4532 = vmatpush1.bf16.msra.mxu0 %v2128
    %4533 = vmatprep.subr.bf16.mxu0 %v2138
    %4534 = vmatpush1.bf16.msra.mxu0 %v2137
    %4535 = vmatprep.subr.bf16.mxu0 0
    %4536 = vmatpush1.bf16.msra.mxu0 0
    %4537 = vmatprep.subr.bf16.mxu0 0
    %4538 = vmatpush1.bf16.msra.mxu0 0
    %4539 = vmatprep.subr.bf16.mxu0 0
    %4540 = vmatpush1.bf16.msra.mxu0 0
    %4541 = vmatprep.subr.bf16.mxu0 0
    %4542 = vmatpush1.bf16.msra.mxu0 0
    %4543 = vmatprep.subr.bf16.mxu0 0
    %4544 = vmatpush1.bf16.msra.mxu0 0
    %4545 = vmatprep.subr.bf16.mxu0 0
    %4546 = vmatpush1.bf16.msra.mxu0 0
    %4547 = vmatprep.subr.bf16.mxu0 0
    %4548 = vmatpush1.bf16.msra.mxu0 0
    %4549 = vmatprep.subr.bf16.mxu0 0
    %4550 = vmatpush1.bf16.msra.mxu0 0
    %4551 = vmatprep.mubr.bf16.mxu0 0
    %4552 = vmatmul.mubr.bf16.gmra.mrb[0].mxu0 %v4313
    %v4553 = vpop.f32.mrb[0].mxu0
    %v4554 = vadd.f32 %v4513, %v4553
    %v4555 = vpop.f32.mrb[0].mxu0
    %v4556 = vadd.f32 %v4515, %v4555
    %v4557 = vpop.f32.mrb[0].mxu0
    %v4558 = vpop.f32.mrb[0].mxu0
    %4559 = vdwg.mxu0
    %4560 = vmatprep.subr.bf16.mxu0 %v1933
    %4561 = vmatpush1.bf16.msra.mxu0 %v1932
    %4562 = vmatprep.subr.bf16.mxu0 %v1942
    %4563 = vmatpush1.bf16.msra.mxu0 %v1941
    %4564 = vmatprep.subr.bf16.mxu0 %v1951
    %4565 = vmatpush1.bf16.msra.mxu0 %v1950
    %4566 = vmatprep.subr.bf16.mxu0 %v1960
    %4567 = vmatpush1.bf16.msra.mxu0 %v1959
    %4568 = vmatprep.subr.bf16.mxu0 %v1969
    %4569 = vmatpush1.bf16.msra.mxu0 %v1968
    %4570 = vmatprep.subr.bf16.mxu0 %v1978
    %4571 = vmatpush1.bf16.msra.mxu0 %v1977
    %4572 = vmatprep.subr.bf16.mxu0 %v1987
    %4573 = vmatpush1.bf16.msra.mxu0 %v1986
    %4574 = vmatprep.subr.bf16.mxu0 %v1996
    %4575 = vmatpush1.bf16.msra.mxu0 %v1995
    %4576 = vmatprep.subr.bf16.mxu0 %v2005
    %4577 = vmatpush1.bf16.msra.mxu0 %v2004
    %4578 = vmatprep.subr.bf16.mxu0 %v2014
    %4579 = vmatpush1.bf16.msra.mxu0 %v2013
    %4580 = vmatprep.subr.bf16.mxu0 %v2023
    %4581 = vmatpush1.bf16.msra.mxu0 %v2022
    %4582 = vmatprep.subr.bf16.mxu0 %v2032
    %4583 = vmatpush1.bf16.msra.mxu0 %v2031
    %4584 = vmatprep.subr.bf16.mxu0 %v2041
    %4585 = vmatpush1.bf16.msra.mxu0 %v2040
    %4586 = vmatprep.subr.bf16.mxu0 %v2050
    %4587 = vmatpush1.bf16.msra.mxu0 %v2049
    %4588 = vmatprep.subr.bf16.mxu0 %v2059
    %4589 = vmatpush1.bf16.msra.mxu0 %v2058
    %4590 = vmatprep.subr.bf16.mxu0 %v2068
    %4591 = vmatpush1.bf16.msra.mxu0 %v2067
    %4592 = vmatprep.mubr.bf16.mxu0 %v4312
    %4593 = vmatmul.mubr.bf16.gmra.mrb[0].mxu0 %v4311
    %v4594 = vpop.f32.mrb[0].mxu0
    %v4595 = vadd.f32 %v1236, %v4594
    %v4596 = vpop.f32.mrb[0].mxu0
    %v4597 = vadd.f32 %v1240, %v4596
    %v4598 = vpop.f32.mrb[0].mxu0
    %v4599 = vpop.f32.mrb[0].mxu0
    %4600 = vdwg.mxu0
    %4601 = vmatprep.subr.bf16.mxu0 %v2077
    %4602 = vmatpush1.bf16.msra.mxu0 %v2076
    %4603 = vmatprep.subr.bf16.mxu0 %v2086
    %4604 = vmatpush1.bf16.msra.mxu0 %v2085
    %4605 = vmatprep.subr.bf16.mxu0 %v2095
    %4606 = vmatpush1.bf16.msra.mxu0 %v2094
    %4607 = vmatprep.subr.bf16.mxu0 %v2104
    %4608 = vmatpush1.bf16.msra.mxu0 %v2103
    %4609 = vmatprep.subr.bf16.mxu0 %v2113
    %4610 = vmatpush1.bf16.msra.mxu0 %v2112
    %4611 = vmatprep.subr.bf16.mxu0 %v2122
    %4612 = vmatpush1.bf16.msra.mxu0 %v2121
    %4613 = vmatprep.subr.bf16.mxu0 %v2131
    %4614 = vmatpush1.bf16.msra.mxu0 %v2130
    %4615 = vmatprep.subr.bf16.mxu0 %v2140
    %4616 = vmatpush1.bf16.msra.mxu0 %v2139
    %4617 = vmatprep.subr.bf16.mxu0 0
    %4618 = vmatpush1.bf16.msra.mxu0 0
    %4619 = vmatprep.subr.bf16.mxu0 0
    %4620 = vmatpush1.bf16.msra.mxu0 0
    %4621 = vmatprep.subr.bf16.mxu0 0
    %4622 = vmatpush1.bf16.msra.mxu0 0
    %4623 = vmatprep.subr.bf16.mxu0 0
    %4624 = vmatpush1.bf16.msra.mxu0 0
    %4625 = vmatprep.subr.bf16.mxu0 0
    %4626 = vmatpush1.bf16.msra.mxu0 0
    %4627 = vmatprep.subr.bf16.mxu0 0
    %4628 = vmatpush1.bf16.msra.mxu0 0
    %4629 = vmatprep.subr.bf16.mxu0 0
    %4630 = vmatpush1.bf16.msra.mxu0 0
    %4631 = vmatprep.subr.bf16.mxu0 0
    %4632 = vmatpush1.bf16.msra.mxu0 0
    %4633 = vmatprep.mubr.bf16.mxu0 0
    %4634 = vmatmul.mubr.bf16.gmra.mrb[0].mxu0 %v4313
    %v4635 = vpop.f32.mrb[0].mxu0
    %v4636 = vadd.f32 %v4595, %v4635
    %v4637 = vpop.f32.mrb[0].mxu0
    %v4638 = vadd.f32 %v4597, %v4637
    %v4639 = vpop.f32.mrb[0].mxu0
    %v4640 = vpop.f32.mrb[0].mxu0
    %4641 = vdwg.mxu0
    %4642 = vmatprep.subr.bf16.mxu0 0
    %4643 = vmatpush1.bf16.msra.mxu0 %v1934
    %4644 = vmatprep.subr.bf16.mxu0 0
    %4645 = vmatpush1.bf16.msra.mxu0 %v1943
    %4646 = vmatprep.subr.bf16.mxu0 0
    %4647 = vmatpush1.bf16.msra.mxu0 %v1952
    %4648 = vmatprep.subr.bf16.mxu0 0
    %4649 = vmatpush1.bf16.msra.mxu0 %v1961
    %4650 = vmatprep.subr.bf16.mxu0 0
    %4651 = vmatpush1.bf16.msra.mxu0 %v1970
    %4652 = vmatprep.subr.bf16.mxu0 0
    %4653 = vmatpush1.bf16.msra.mxu0 %v1979
    %4654 = vmatprep.subr.bf16.mxu0 0
    %4655 = vmatpush1.bf16.msra.mxu0 %v1988
    %4656 = vmatprep.subr.bf16.mxu0 0
    %4657 = vmatpush1.bf16.msra.mxu0 %v1997
    %4658 = vmatprep.subr.bf16.mxu0 0
    %4659 = vmatpush1.bf16.msra.mxu0 %v2006
    %4660 = vmatprep.subr.bf16.mxu0 0
    %4661 = vmatpush1.bf16.msra.mxu0 %v2015
    %4662 = vmatprep.subr.bf16.mxu0 0
    %4663 = vmatpush1.bf16.msra.mxu0 %v2024
    %4664 = vmatprep.subr.bf16.mxu0 0
    %4665 = vmatpush1.bf16.msra.mxu0 %v2033
    %4666 = vmatprep.subr.bf16.mxu0 0
    %4667 = vmatpush1.bf16.msra.mxu0 %v2042
    %4668 = vmatprep.subr.bf16.mxu0 0
    %4669 = vmatpush1.bf16.msra.mxu0 %v2051
    %4670 = vmatprep.subr.bf16.mxu0 0
    %4671 = vmatpush1.bf16.msra.mxu0 %v2060
    %4672 = vmatprep.subr.bf16.mxu0 0
    %4673 = vmatpush1.bf16.msra.mxu0 %v2069
    %4674 = vmatprep.mubr.bf16.mxu0 %v4312
    %4675 = vmatmul.mubr.bf16.gmra.mrb[0].mxu0 %v4311
    %v4676 = vpop.f32.mrb[0].mxu0
    %v4677 = vadd.f32 %v1244, %v4676
    %v4678 = vpop.f32.mrb[0].mxu0
    %v4679 = vpop.f32.mrb[0].mxu0
    %v4680 = vpop.f32.mrb[0].mxu0
    %4681 = vdwg.mxu0
    %4682 = vmatprep.subr.bf16.mxu0 0
    %4683 = vmatpush1.bf16.msra.mxu0 %v2078
    %4684 = vmatprep.subr.bf16.mxu0 0
    %4685 = vmatpush1.bf16.msra.mxu0 %v2087
    %4686 = vmatprep.subr.bf16.mxu0 0
    %4687 = vmatpush1.bf16.msra.mxu0 %v2096
    %4688 = vmatprep.subr.bf16.mxu0 0
    %4689 = vmatpush1.bf16.msra.mxu0 %v2105
    %4690 = vmatprep.subr.bf16.mxu0 0
    %4691 = vmatpush1.bf16.msra.mxu0 %v2114
    %4692 = vmatprep.subr.bf16.mxu0 0
    %4693 = vmatpush1.bf16.msra.mxu0 %v2123
    %4694 = vmatprep.subr.bf16.mxu0 0
    %4695 = vmatpush1.bf16.msra.mxu0 %v2132
    %4696 = vmatprep.subr.bf16.mxu0 0
    %4697 = vmatpush1.bf16.msra.mxu0 %v2141
    %4698 = vmatprep.subr.bf16.mxu0 0
    %4699 = vmatpush1.bf16.msra.mxu0 0
    %4700 = vmatprep.subr.bf16.mxu0 0
    %4701 = vmatpush1.bf16.msra.mxu0 0
    %4702 = vmatprep.subr.bf16.mxu0 0
    %4703 = vmatpush1.bf16.msra.mxu0 0
    %4704 = vmatprep.subr.bf16.mxu0 0
    %4705 = vmatpush1.bf16.msra.mxu0 0
    %4706 = vmatprep.subr.bf16.mxu0 0
    %4707 = vmatpush1.bf16.msra.mxu0 0
    %4708 = vmatprep.subr.bf16.mxu0 0
    %4709 = vmatpush1.bf16.msra.mxu0 0
    %4710 = vmatprep.subr.bf16.mxu0 0
    %4711 = vmatpush1.bf16.msra.mxu0 0
    %4712 = vmatprep.subr.bf16.mxu0 0
    %4713 = vmatpush1.bf16.msra.mxu0 0
    %4714 = vmatprep.mubr.bf16.mxu0 0
    %4715 = vmatmul.mubr.bf16.gmra.mrb[0].mxu0 %v4313
    %v4716 = vpop.f32.mrb[0].mxu0
    %v4717 = vadd.f32 %v4677, %v4716
    %v4718 = vpop.f32.mrb[0].mxu0
    %v4719 = vpop.f32.mrb[0].mxu0
    %v4720 = vpop.f32.mrb[0].mxu0
    %4721 = vdwg.mxu0
    %v4722 = vadd.f32 %v4302, %v4390
    %v4723 = vadd.f32 %v4303, %v4392
    %v4724 = vadd.f32 %v4304, %v4472
    %v4725 = vxor.u32 %v4722, 2147483648
    %v4726 = vxor.u32 %v4723, 2147483648
    %v4727 = vxor.u32 %v4724, 2147483648
    %v4728 = vmul.f32 %v4725, 1.442695
    %v4729 = vpow.pop %v4728
    %v4730 = vmul.f32 %v4726, 1.442695
    %v4731 = vpow.pop %v4730
    %v4732 = vmul.f32 %v4727, 1.442695
    %v4733 = vpow.pop %v4732
    %v4734 = vadd.f32 %v4729, 1.0
    %v4735 = vadd.f32 %v4731, 1.0
    %v4736 = vadd.f32 %v4733, 1.0
    %v4737 = vrcp.pop %v4734
    %v4738 = vmul.f32 1.0, %v4737
    %v4739 = vrcp.pop %v4735
    %v4740 = vmul.f32 1.0, %v4739
    %v4741 = vrcp.pop %v4736
    %v4742 = vmul.f32 1.0, %v4741
    %v4743 = vadd.f32 %v4305, %v4474
    %v4744 = vadd.f32 %v4306, %v4554
    %v4745 = vadd.f32 %v4307, %v4556
    %v4746 = vxor.u32 %v4743, 2147483648
    %v4747 = vxor.u32 %v4744, 2147483648
    %v4748 = vxor.u32 %v4745, 2147483648
    %v4749 = vmul.f32 %v4746, 1.442695
    %v4750 = vpow.pop %v4749
    %v4751 = vmul.f32 %v4747, 1.442695
    %v4752 = vpow.pop %v4751
    %v4753 = vmul.f32 %v4748, 1.442695
    %v4754 = vpow.pop %v4753
    %v4755 = vadd.f32 %v4750, 1.0
    %v4756 = vadd.f32 %v4752, 1.0
    %v4757 = vadd.f32 %v4754, 1.0
    %v4758 = vrcp.pop %v4755
    %v4759 = vmul.f32 1.0, %v4758
    %v4760 = vrcp.pop %v4756
    %v4761 = vmul.f32 1.0, %v4760
    %v4762 = vrcp.pop %v4757
    %v4763 = vmul.f32 1.0, %v4762
    %v4764 = vmul.f32 %v4738, %v4636
    %v4765 = vmul.f32 %v4740, %v4638
    %v4766 = vmul.f32 %v4742, %v4717
    %v4767 = vadd.f32 %v4308, %v4764
    %v4768 = vadd.f32 %v4309, %v4765
    %v4769 = vadd.f32 %v4310, %v4766
    %v4770 = vtanh.pop %v4767
    %v4771 = vtanh.pop %v4768
    %v4772 = vtanh.pop %v4769
    %v4773 = vsub.f32 1.0, %v4759
    %v4774 = vsub.f32 1.0, %v4761
    %v4775 = vsub.f32 1.0, %v4763
    %v4776 = vmul.f32 %v4773, %v4770
    %v4777 = vmul.f32 %v4774, %v4771
    %v4778 = vmul.f32 %v4775, %v4772
    %v4779 = vmul.f32 %v4759, %v4293
    %v4780 = vmul.f32 %v4761, %v4294
    %v4781 = vmul.f32 %v4763, %v4295
    %v4782 = vadd.f32 %v4776, %v4779
    %v4783 = vadd.f32 %v4777, %v4780
    %v4784 = vadd.f32 %v4778, %v4781
    %v4785 = vmul.f32 %v4782, %v57
    %v4786 = vmul.f32 %v4783, %v58
    %v4787 = vmul.f32 %v4784, %v59
    %4788 = vst [vmem:[#allocation3 + $0x60] sm:$0xff] %v4785
    %4789 = vst [vmem:[#allocation3 + $0x68] sm:$0xff] %v4786
    %4790 = vst [vmem:[#allocation3 + $0x70] sm:$0xff] %v4787
    %v4791 = vld [vmem:[#allocation2 + $0x168] sm:$0xff]
    %v4792 = vld [vmem:[#allocation2 + $0x170] sm:$0xff]
    %v4793 = vld [vmem:[#allocation2 + $0x178] sm:$0xff]
    %v4794 = vld [vmem:[#allocation2 + $0x180] sm:$0xff]
    %v4795 = vld [vmem:[#allocation2 + $0x188] sm:$0xff]
    %v4796 = vld [vmem:[#allocation2 + $0x190] sm:$0xff]
    %v4797 = vld [vmem:[#allocation2 + $0x198] sm:$0xff]
    %v4798 = vld [vmem:[#allocation2 + $0x1a0] sm:$0xff]
    %v4799 = vld [vmem:[#allocation2 + $0x1a8] sm:$0xff]
    %v4800 = vpack.c.bf16 %v4782, %v4782
    %v4801 = vpack.c.bf16 %v4783, %v4783
    %v4802 = vpack.c.bf16 %v4784, %v4784
    %4803 = vmatprep.subr.bf16.mxu0 %v1927
    %4804 = vmatpush1.bf16.msra.mxu0 %v1926
    %4805 = vmatprep.subr.bf16.mxu0 %v1936
    %4806 = vmatpush1.bf16.msra.mxu0 %v1935
    %4807 = vmatprep.subr.bf16.mxu0 %v1945
    %4808 = vmatpush1.bf16.msra.mxu0 %v1944
    %4809 = vmatprep.subr.bf16.mxu0 %v1954
    %4810 = vmatpush1.bf16.msra.mxu0 %v1953
    %4811 = vmatprep.subr.bf16.mxu0 %v1963
    %4812 = vmatpush1.bf16.msra.mxu0 %v1962
    %4813 = vmatprep.subr.bf16.mxu0 %v1972
    %4814 = vmatpush1.bf16.msra.mxu0 %v1971
    %4815 = vmatprep.subr.bf16.mxu0 %v1981
    %4816 = vmatpush1.bf16.msra.mxu0 %v1980
    %4817 = vmatprep.subr.bf16.mxu0 %v1990
    %4818 = vmatpush1.bf16.msra.mxu0 %v1989
    %4819 = vmatprep.subr.bf16.mxu0 %v1999
    %4820 = vmatpush1.bf16.msra.mxu0 %v1998
    %4821 = vmatprep.subr.bf16.mxu0 %v2008
    %4822 = vmatpush1.bf16.msra.mxu0 %v2007
    %4823 = vmatprep.subr.bf16.mxu0 %v2017
    %4824 = vmatpush1.bf16.msra.mxu0 %v2016
    %4825 = vmatprep.subr.bf16.mxu0 %v2026
    %4826 = vmatpush1.bf16.msra.mxu0 %v2025
    %4827 = vmatprep.subr.bf16.mxu0 %v2035
    %4828 = vmatpush1.bf16.msra.mxu0 %v2034
    %4829 = vmatprep.subr.bf16.mxu0 %v2044
    %4830 = vmatpush1.bf16.msra.mxu0 %v2043
    %4831 = vmatprep.subr.bf16.mxu0 %v2053
    %4832 = vmatpush1.bf16.msra.mxu0 %v2052
    %4833 = vmatprep.subr.bf16.mxu0 %v2062
    %4834 = vmatpush1.bf16.msra.mxu0 %v2061
    %4835 = vmatprep.mubr.bf16.mxu0 %v4801
    %4836 = vmatmul.mubr.bf16.gmra.mrb[0].mxu0 %v4800
    %v4837 = vpop.f32.mrb[0].mxu0
    %v4838 = vadd.f32 %v1212, %v4837
    %v4839 = vpop.f32.mrb[0].mxu0
    %v4840 = vadd.f32 %v1216, %v4839
    %v4841 = vpop.f32.mrb[0].mxu0
    %v4842 = vpop.f32.mrb[0].mxu0
    %4843 = vdwg.mxu0
    %4844 = vmatprep.subr.bf16.mxu0 %v2071
    %4845 = vmatpush1.bf16.msra.mxu0 %v2070
    %4846 = vmatprep.subr.bf16.mxu0 %v2080
    %4847 = vmatpush1.bf16.msra.mxu0 %v2079
    %4848 = vmatprep.subr.bf16.mxu0 %v2089
    %4849 = vmatpush1.bf16.msra.mxu0 %v2088
    %4850 = vmatprep.subr.bf16.mxu0 %v2098
    %4851 = vmatpush1.bf16.msra.mxu0 %v2097
    %4852 = vmatprep.subr.bf16.mxu0 %v2107
    %4853 = vmatpush1.bf16.msra.mxu0 %v2106
    %4854 = vmatprep.subr.bf16.mxu0 %v2116
    %4855 = vmatpush1.bf16.msra.mxu0 %v2115
    %4856 = vmatprep.subr.bf16.mxu0 %v2125
    %4857 = vmatpush1.bf16.msra.mxu0 %v2124
    %4858 = vmatprep.subr.bf16.mxu0 %v2134
    %4859 = vmatpush1.bf16.msra.mxu0 %v2133
    %4860 = vmatprep.subr.bf16.mxu0 0
    %4861 = vmatpush1.bf16.msra.mxu0 0
    %4862 = vmatprep.subr.bf16.mxu0 0
    %4863 = vmatpush1.bf16.msra.mxu0 0
    %4864 = vmatprep.subr.bf16.mxu0 0
    %4865 = vmatpush1.bf16.msra.mxu0 0
    %4866 = vmatprep.subr.bf16.mxu0 0
    %4867 = vmatpush1.bf16.msra.mxu0 0
    %4868 = vmatprep.subr.bf16.mxu0 0
    %4869 = vmatpush1.bf16.msra.mxu0 0
    %4870 = vmatprep.subr.bf16.mxu0 0
    %4871 = vmatpush1.bf16.msra.mxu0 0
    %4872 = vmatprep.subr.bf16.mxu0 0
    %4873 = vmatpush1.bf16.msra.mxu0 0
    %4874 = vmatprep.subr.bf16.mxu0 0
    %4875 = vmatpush1.bf16.msra.mxu0 0
    %4876 = vmatprep.mubr.bf16.mxu0 0
    %4877 = vmatmul.mubr.bf16.gmra.mrb[0].mxu0 %v4802
    %v4878 = vpop.f32.mrb[0].mxu0
    %v4879 = vadd.f32 %v4838, %v4878
    %v4880 = vpop.f32.mrb[0].mxu0
    %v4881 = vadd.f32 %v4840, %v4880
    %v4882 = vpop.f32.mrb[0].mxu0
    %v4883 = vpop.f32.mrb[0].mxu0
    %4884 = vdwg.mxu0
    %4885 = vmatprep.subr.bf16.mxu0 %v1929
    %4886 = vmatpush1.bf16.msra.mxu0 %v1928
    %4887 = vmatprep.subr.bf16.mxu0 %v1938
    %4888 = vmatpush1.bf16.msra.mxu0 %v1937
    %4889 = vmatprep.subr.bf16.mxu0 %v1947
    %4890 = vmatpush1.bf16.msra.mxu0 %v1946
    %4891 = vmatprep.subr.bf16.mxu0 %v1956
    %4892 = vmatpush1.bf16.msra.mxu0 %v1955
    %4893 = vmatprep.subr.bf16.mxu0 %v1965
    %4894 = vmatpush1.bf16.msra.mxu0 %v1964
    %4895 = vmatprep.subr.bf16.mxu0 %v1974
    %4896 = vmatpush1.bf16.msra.mxu0 %v1973
    %4897 = vmatprep.subr.bf16.mxu0 %v1983
    %4898 = vmatpush1.bf16.msra.mxu0 %v1982
    %4899 = vmatprep.subr.bf16.mxu0 %v1992
    %4900 = vmatpush1.bf16.msra.mxu0 %v1991
    %4901 = vmatprep.subr.bf16.mxu0 %v2001
    %4902 = vmatpush1.bf16.msra.mxu0 %v2000
    %4903 = vmatprep.subr.bf16.mxu0 %v2010
    %4904 = vmatpush1.bf16.msra.mxu0 %v2009
    %4905 = vmatprep.subr.bf16.mxu0 %v2019
    %4906 = vmatpush1.bf16.msra.mxu0 %v2018
    %4907 = vmatprep.subr.bf16.mxu0 %v2028
    %4908 = vmatpush1.bf16.msra.mxu0 %v2027
    %4909 = vmatprep.subr.bf16.mxu0 %v2037
    %4910 = vmatpush1.bf16.msra.mxu0 %v2036
    %4911 = vmatprep.subr.bf16.mxu0 %v2046
    %4912 = vmatpush1.bf16.msra.mxu0 %v2045
    %4913 = vmatprep.subr.bf16.mxu0 %v2055
    %4914 = vmatpush1.bf16.msra.mxu0 %v2054
    %4915 = vmatprep.subr.bf16.mxu0 %v2064
    %4916 = vmatpush1.bf16.msra.mxu0 %v2063
    %4917 = vmatprep.mubr.bf16.mxu0 %v4801
    %4918 = vmatmul.mubr.bf16.gmra.mrb[0].mxu0 %v4800
    %v4919 = vpop.f32.mrb[0].mxu0
    %v4920 = vadd.f32 %v1220, %v4919
    %v4921 = vpop.f32.mrb[0].mxu0
    %v4922 = vadd.f32 %v1224, %v4921
    %v4923 = vpop.f32.mrb[0].mxu0
    %v4924 = vpop.f32.mrb[0].mxu0
    %4925 = vdwg.mxu0
    %4926 = vmatprep.subr.bf16.mxu0 %v2073
    %4927 = vmatpush1.bf16.msra.mxu0 %v2072
    %4928 = vmatprep.subr.bf16.mxu0 %v2082
    %4929 = vmatpush1.bf16.msra.mxu0 %v2081
    %4930 = vmatprep.subr.bf16.mxu0 %v2091
    %4931 = vmatpush1.bf16.msra.mxu0 %v2090
    %4932 = vmatprep.subr.bf16.mxu0 %v2100
    %4933 = vmatpush1.bf16.msra.mxu0 %v2099
    %4934 = vmatprep.subr.bf16.mxu0 %v2109
    %4935 = vmatpush1.bf16.msra.mxu0 %v2108
    %4936 = vmatprep.subr.bf16.mxu0 %v2118
    %4937 = vmatpush1.bf16.msra.mxu0 %v2117
    %4938 = vmatprep.subr.bf16.mxu0 %v2127
    %4939 = vmatpush1.bf16.msra.mxu0 %v2126
    %4940 = vmatprep.subr.bf16.mxu0 %v2136
    %4941 = vmatpush1.bf16.msra.mxu0 %v2135
    %4942 = vmatprep.subr.bf16.mxu0 0
    %4943 = vmatpush1.bf16.msra.mxu0 0
    %4944 = vmatprep.subr.bf16.mxu0 0
    %4945 = vmatpush1.bf16.msra.mxu0 0
    %4946 = vmatprep.subr.bf16.mxu0 0
    %4947 = vmatpush1.bf16.msra.mxu0 0
    %4948 = vmatprep.subr.bf16.mxu0 0
    %4949 = vmatpush1.bf16.msra.mxu0 0
    %4950 = vmatprep.subr.bf16.mxu0 0
    %4951 = vmatpush1.bf16.msra.mxu0 0
    %4952 = vmatprep.subr.bf16.mxu0 0
    %4953 = vmatpush1.bf16.msra.mxu0 0
    %4954 = vmatprep.subr.bf16.mxu0 0
    %4955 = vmatpush1.bf16.msra.mxu0 0
    %4956 = vmatprep.subr.bf16.mxu0 0
    %4957 = vmatpush1.bf16.msra.mxu0 0
    %4958 = vmatprep.mubr.bf16.mxu0 0
    %4959 = vmatmul.mubr.bf16.gmra.mrb[0].mxu0 %v4802
    %v4960 = vpop.f32.mrb[0].mxu0
    %v4961 = vadd.f32 %v4920, %v4960
    %v4962 = vpop.f32.mrb[0].mxu0
    %v4963 = vadd.f32 %v4922, %v4962
    %v4964 = vpop.f32.mrb[0].mxu0
    %v4965 = vpop.f32.mrb[0].mxu0
    %4966 = vdwg.mxu0
    %4967 = vmatprep.subr.bf16.mxu0 %v1931
    %4968 = vmatpush1.bf16.msra.mxu0 %v1930
    %4969 = vmatprep.subr.bf16.mxu0 %v1940
    %4970 = vmatpush1.bf16.msra.mxu0 %v1939
    %4971 = vmatprep.subr.bf16.mxu0 %v1949
    %4972 = vmatpush1.bf16.msra.mxu0 %v1948
    %4973 = vmatprep.subr.bf16.mxu0 %v1958
    %4974 = vmatpush1.bf16.msra.mxu0 %v1957
    %4975 = vmatprep.subr.bf16.mxu0 %v1967
    %4976 = vmatpush1.bf16.msra.mxu0 %v1966
    %4977 = vmatprep.subr.bf16.mxu0 %v1976
    %4978 = vmatpush1.bf16.msra.mxu0 %v1975
    %4979 = vmatprep.subr.bf16.mxu0 %v1985
    %4980 = vmatpush1.bf16.msra.mxu0 %v1984
    %4981 = vmatprep.subr.bf16.mxu0 %v1994
    %4982 = vmatpush1.bf16.msra.mxu0 %v1993
    %4983 = vmatprep.subr.bf16.mxu0 %v2003
    %4984 = vmatpush1.bf16.msra.mxu0 %v2002
    %4985 = vmatprep.subr.bf16.mxu0 %v2012
    %4986 = vmatpush1.bf16.msra.mxu0 %v2011
    %4987 = vmatprep.subr.bf16.mxu0 %v2021
    %4988 = vmatpush1.bf16.msra.mxu0 %v2020
    %4989 = vmatprep.subr.bf16.mxu0 %v2030
    %4990 = vmatpush1.bf16.msra.mxu0 %v2029
    %4991 = vmatprep.subr.bf16.mxu0 %v2039
    %4992 = vmatpush1.bf16.msra.mxu0 %v2038
    %4993 = vmatprep.subr.bf16.mxu0 %v2048
    %4994 = vmatpush1.bf16.msra.mxu0 %v2047
    %4995 = vmatprep.subr.bf16.mxu0 %v2057
    %4996 = vmatpush1.bf16.msra.mxu0 %v2056
    %4997 = vmatprep.subr.bf16.mxu0 %v2066
    %4998 = vmatpush1.bf16.msra.mxu0 %v2065
    %4999 = vmatprep.mubr.bf16.mxu0 %v4801
    %5000 = vmatmul.mubr.bf16.gmra.mrb[0].mxu0 %v4800
    %v5001 = vpop.f32.mrb[0].mxu0
    %v5002 = vadd.f32 %v1228, %v5001
    %v5003 = vpop.f32.mrb[0].mxu0
    %v5004 = vadd.f32 %v1232, %v5003
    %v5005 = vpop.f32.mrb[0].mxu0
    %v5006 = vpop.f32.mrb[0].mxu0
    %5007 = vdwg.mxu0
    %5008 = vmatprep.subr.bf16.mxu0 %v2075
    %5009 = vmatpush1.bf16.msra.mxu0 %v2074
    %5010 = vmatprep.subr.bf16.mxu0 %v2084
    %5011 = vmatpush1.bf16.msra.mxu0 %v2083
    %5012 = vmatprep.subr.bf16.mxu0 %v2093
    %5013 = vmatpush1.bf16.msra.mxu0 %v2092
    %5014 = vmatprep.subr.bf16.mxu0 %v2102
    %5015 = vmatpush1.bf16.msra.mxu0 %v2101
    %5016 = vmatprep.subr.bf16.mxu0 %v2111
    %5017 = vmatpush1.bf16.msra.mxu0 %v2110
    %5018 = vmatprep.subr.bf16.mxu0 %v2120
    %5019 = vmatpush1.bf16.msra.mxu0 %v2119
    %5020 = vmatprep.subr.bf16.mxu0 %v2129
    %5021 = vmatpush1.bf16.msra.mxu0 %v2128
    %5022 = vmatprep.subr.bf16.mxu0 %v2138
    %5023 = vmatpush1.bf16.msra.mxu0 %v2137
    %5024 = vmatprep.subr.bf16.mxu0 0
    %5025 = vmatpush1.bf16.msra.mxu0 0
    %5026 = vmatprep.subr.bf16.mxu0 0
    %5027 = vmatpush1.bf16.msra.mxu0 0
    %5028 = vmatprep.subr.bf16.mxu0 0
    %5029 = vmatpush1.bf16.msra.mxu0 0
    %5030 = vmatprep.subr.bf16.mxu0 0
    %5031 = vmatpush1.bf16.msra.mxu0 0
    %5032 = vmatprep.subr.bf16.mxu0 0
    %5033 = vmatpush1.bf16.msra.mxu0 0
    %5034 = vmatprep.subr.bf16.mxu0 0
    %5035 = vmatpush1.bf16.msra.mxu0 0
    %5036 = vmatprep.subr.bf16.mxu0 0
    %5037 = vmatpush1.bf16.msra.mxu0 0
    %5038 = vmatprep.subr.bf16.mxu0 0
    %5039 = vmatpush1.bf16.msra.mxu0 0
    %5040 = vmatprep.mubr.bf16.mxu0 0
    %5041 = vmatmul.mubr.bf16.gmra.mrb[0].mxu0 %v4802
    %v5042 = vpop.f32.mrb[0].mxu0
    %v5043 = vadd.f32 %v5002, %v5042
    %v5044 = vpop.f32.mrb[0].mxu0
    %v5045 = vadd.f32 %v5004, %v5044
    %v5046 = vpop.f32.mrb[0].mxu0
    %v5047 = vpop.f32.mrb[0].mxu0
    %5048 = vdwg.mxu0
    %5049 = vmatprep.subr.bf16.mxu0 %v1933
    %5050 = vmatpush1.bf16.msra.mxu0 %v1932
    %5051 = vmatprep.subr.bf16.mxu0 %v1942
    %5052 = vmatpush1.bf16.msra.mxu0 %v1941
    %5053 = vmatprep.subr.bf16.mxu0 %v1951
    %5054 = vmatpush1.bf16.msra.mxu0 %v1950
    %5055 = vmatprep.subr.bf16.mxu0 %v1960
    %5056 = vmatpush1.bf16.msra.mxu0 %v1959
    %5057 = vmatprep.subr.bf16.mxu0 %v1969
    %5058 = vmatpush1.bf16.msra.mxu0 %v1968
    %5059 = vmatprep.subr.bf16.mxu0 %v1978
    %5060 = vmatpush1.bf16.msra.mxu0 %v1977
    %5061 = vmatprep.subr.bf16.mxu0 %v1987
    %5062 = vmatpush1.bf16.msra.mxu0 %v1986
    %5063 = vmatprep.subr.bf16.mxu0 %v1996
    %5064 = vmatpush1.bf16.msra.mxu0 %v1995
    %5065 = vmatprep.subr.bf16.mxu0 %v2005
    %5066 = vmatpush1.bf16.msra.mxu0 %v2004
    %5067 = vmatprep.subr.bf16.mxu0 %v2014
    %5068 = vmatpush1.bf16.msra.mxu0 %v2013
    %5069 = vmatprep.subr.bf16.mxu0 %v2023
    %5070 = vmatpush1.bf16.msra.mxu0 %v2022
    %5071 = vmatprep.subr.bf16.mxu0 %v2032
    %5072 = vmatpush1.bf16.msra.mxu0 %v2031
    %5073 = vmatprep.subr.bf16.mxu0 %v2041
    %5074 = vmatpush1.bf16.msra.mxu0 %v2040
    %5075 = vmatprep.subr.bf16.mxu0 %v2050
    %5076 = vmatpush1.bf16.msra.mxu0 %v2049
    %5077 = vmatprep.subr.bf16.mxu0 %v2059
    %5078 = vmatpush1.bf16.msra.mxu0 %v2058
    %5079 = vmatprep.subr.bf16.mxu0 %v2068
    %5080 = vmatpush1.bf16.msra.mxu0 %v2067
    %5081 = vmatprep.mubr.bf16.mxu0 %v4801
    %5082 = vmatmul.mubr.bf16.gmra.mrb[0].mxu0 %v4800
    %v5083 = vpop.f32.mrb[0].mxu0
    %v5084 = vadd.f32 %v1236, %v5083
    %v5085 = vpop.f32.mrb[0].mxu0
    %v5086 = vadd.f32 %v1240, %v5085
    %v5087 = vpop.f32.mrb[0].mxu0
    %v5088 = vpop.f32.mrb[0].mxu0
    %5089 = vdwg.mxu0
    %5090 = vmatprep.subr.bf16.mxu0 %v2077
    %5091 = vmatpush1.bf16.msra.mxu0 %v2076
    %5092 = vmatprep.subr.bf16.mxu0 %v2086
    %5093 = vmatpush1.bf16.msra.mxu0 %v2085
    %5094 = vmatprep.subr.bf16.mxu0 %v2095
    %5095 = vmatpush1.bf16.msra.mxu0 %v2094
    %5096 = vmatprep.subr.bf16.mxu0 %v2104
    %5097 = vmatpush1.bf16.msra.mxu0 %v2103
    %5098 = vmatprep.subr.bf16.mxu0 %v2113
    %5099 = vmatpush1.bf16.msra.mxu0 %v2112
    %5100 = vmatprep.subr.bf16.mxu0 %v2122
    %5101 = vmatpush1.bf16.msra.mxu0 %v2121
    %5102 = vmatprep.subr.bf16.mxu0 %v2131
    %5103 = vmatpush1.bf16.msra.mxu0 %v2130
    %5104 = vmatprep.subr.bf16.mxu0 %v2140
    %5105 = vmatpush1.bf16.msra.mxu0 %v2139
    %5106 = vmatprep.subr.bf16.mxu0 0
    %5107 = vmatpush1.bf16.msra.mxu0 0
    %5108 = vmatprep.subr.bf16.mxu0 0
    %5109 = vmatpush1.bf16.msra.mxu0 0
    %5110 = vmatprep.subr.bf16.mxu0 0
    %5111 = vmatpush1.bf16.msra.mxu0 0
    %5112 = vmatprep.subr.bf16.mxu0 0
    %5113 = vmatpush1.bf16.msra.mxu0 0
    %5114 = vmatprep.subr.bf16.mxu0 0
    %5115 = vmatpush1.bf16.msra.mxu0 0
    %5116 = vmatprep.subr.bf16.mxu0 0
    %5117 = vmatpush1.bf16.msra.mxu0 0
    %5118 = vmatprep.subr.bf16.mxu0 0
    %5119 = vmatpush1.bf16.msra.mxu0 0
    %5120 = vmatprep.subr.bf16.mxu0 0
    %5121 = vmatpush1.bf16.msra.mxu0 0
    %5122 = vmatprep.mubr.bf16.mxu0 0
    %5123 = vmatmul.mubr.bf16.gmra.mrb[0].mxu0 %v4802
    %v5124 = vpop.f32.mrb[0].mxu0
    %v5125 = vadd.f32 %v5084, %v5124
    %v5126 = vpop.f32.mrb[0].mxu0
    %v5127 = vadd.f32 %v5086, %v5126
    %v5128 = vpop.f32.mrb[0].mxu0
    %v5129 = vpop.f32.mrb[0].mxu0
    %5130 = vdwg.mxu0
    %5131 = vmatprep.subr.bf16.mxu0 0
    %5132 = vmatpush1.bf16.msra.mxu0 %v1934
    %5133 = vmatprep.subr.bf16.mxu0 0
    %5134 = vmatpush1.bf16.msra.mxu0 %v1943
    %5135 = vmatprep.subr.bf16.mxu0 0
    %5136 = vmatpush1.bf16.msra.mxu0 %v1952
    %5137 = vmatprep.subr.bf16.mxu0 0
    %5138 = vmatpush1.bf16.msra.mxu0 %v1961
    %5139 = vmatprep.subr.bf16.mxu0 0
    %5140 = vmatpush1.bf16.msra.mxu0 %v1970
    %5141 = vmatprep.subr.bf16.mxu0 0
    %5142 = vmatpush1.bf16.msra.mxu0 %v1979
    %5143 = vmatprep.subr.bf16.mxu0 0
    %5144 = vmatpush1.bf16.msra.mxu0 %v1988
    %5145 = vmatprep.subr.bf16.mxu0 0
    %5146 = vmatpush1.bf16.msra.mxu0 %v1997
    %5147 = vmatprep.subr.bf16.mxu0 0
    %5148 = vmatpush1.bf16.msra.mxu0 %v2006
    %5149 = vmatprep.subr.bf16.mxu0 0
    %5150 = vmatpush1.bf16.msra.mxu0 %v2015
    %5151 = vmatprep.subr.bf16.mxu0 0
    %5152 = vmatpush1.bf16.msra.mxu0 %v2024
    %5153 = vmatprep.subr.bf16.mxu0 0
    %5154 = vmatpush1.bf16.msra.mxu0 %v2033
    %5155 = vmatprep.subr.bf16.mxu0 0
    %5156 = vmatpush1.bf16.msra.mxu0 %v2042
    %5157 = vmatprep.subr.bf16.mxu0 0
    %5158 = vmatpush1.bf16.msra.mxu0 %v2051
    %5159 = vmatprep.subr.bf16.mxu0 0
    %5160 = vmatpush1.bf16.msra.mxu0 %v2060
    %5161 = vmatprep.subr.bf16.mxu0 0
    %5162 = vmatpush1.bf16.msra.mxu0 %v2069
    %5163 = vmatprep.mubr.bf16.mxu0 %v4801
    %5164 = vmatmul.mubr.bf16.gmra.mrb[0].mxu0 %v4800
    %v5165 = vpop.f32.mrb[0].mxu0
    %v5166 = vadd.f32 %v1244, %v5165
    %v5167 = vpop.f32.mrb[0].mxu0
    %v5168 = vpop.f32.mrb[0].mxu0
    %v5169 = vpop.f32.mrb[0].mxu0
    %5170 = vdwg.mxu0
    %5171 = vmatprep.subr.bf16.mxu0 0
    %5172 = vmatpush1.bf16.msra.mxu0 %v2078
    %5173 = vmatprep.subr.bf16.mxu0 0
    %5174 = vmatpush1.bf16.msra.mxu0 %v2087
    %5175 = vmatprep.subr.bf16.mxu0 0
    %5176 = vmatpush1.bf16.msra.mxu0 %v2096
    %5177 = vmatprep.subr.bf16.mxu0 0
    %5178 = vmatpush1.bf16.msra.mxu0 %v2105
    %5179 = vmatprep.subr.bf16.mxu0 0
    %5180 = vmatpush1.bf16.msra.mxu0 %v2114
    %5181 = vmatprep.subr.bf16.mxu0 0
    %5182 = vmatpush1.bf16.msra.mxu0 %v2123
    %5183 = vmatprep.subr.bf16.mxu0 0
    %5184 = vmatpush1.bf16.msra.mxu0 %v2132
    %5185 = vmatprep.subr.bf16.mxu0 0
    %5186 = vmatpush1.bf16.msra.mxu0 %v2141
    %5187 = vmatprep.subr.bf16.mxu0 0
    %5188 = vmatpush1.bf16.msra.mxu0 0
    %5189 = vmatprep.subr.bf16.mxu0 0
    %5190 = vmatpush1.bf16.msra.mxu0 0
    %5191 = vmatprep.subr.bf16.mxu0 0
    %5192 = vmatpush1.bf16.msra.mxu0 0
    %5193 = vmatprep.subr.bf16.mxu0 0
    %5194 = vmatpush1.bf16.msra.mxu0 0
    %5195 = vmatprep.subr.bf16.mxu0 0
    %5196 = vmatpush1.bf16.msra.mxu0 0
    %5197 = vmatprep.subr.bf16.mxu0 0
    %5198 = vmatpush1.bf16.msra.mxu0 0
    %5199 = vmatprep.subr.bf16.mxu0 0
    %5200 = vmatpush1.bf16.msra.mxu0 0
    %5201 = vmatprep.subr.bf16.mxu0 0
    %5202 = vmatpush1.bf16.msra.mxu0 0
    %5203 = vmatprep.mubr.bf16.mxu0 0
    %5204 = vmatmul.mubr.bf16.gmra.mrb[0].mxu0 %v4802
    %v5205 = vpop.f32.mrb[0].mxu0
    %v5206 = vadd.f32 %v5166, %v5205
    %v5207 = vpop.f32.mrb[0].mxu0
    %v5208 = vpop.f32.mrb[0].mxu0
    %v5209 = vpop.f32.mrb[0].mxu0
    %5210 = vdwg.mxu0
    %v5211 = vadd.f32 %v4791, %v4879
    %v5212 = vadd.f32 %v4792, %v4881
    %v5213 = vadd.f32 %v4793, %v4961
    %v5214 = vxor.u32 %v5211, 2147483648
    %v5215 = vxor.u32 %v5212, 2147483648
    %v5216 = vxor.u32 %v5213, 2147483648
    %v5217 = vmul.f32 %v5214, 1.442695
    %v5218 = vpow.pop %v5217
    %v5219 = vmul.f32 %v5215, 1.442695
    %v5220 = vpow.pop %v5219
    %v5221 = vmul.f32 %v5216, 1.442695
    %v5222 = vpow.pop %v5221
    %v5223 = vadd.f32 %v5218, 1.0
    %v5224 = vadd.f32 %v5220, 1.0
    %v5225 = vadd.f32 %v5222, 1.0
    %v5226 = vrcp.pop %v5223
    %v5227 = vmul.f32 1.0, %v5226
    %v5228 = vrcp.pop %v5224
    %v5229 = vmul.f32 1.0, %v5228
    %v5230 = vrcp.pop %v5225
    %v5231 = vmul.f32 1.0, %v5230
    %v5232 = vadd.f32 %v4794, %v4963
    %v5233 = vadd.f32 %v4795, %v5043
    %v5234 = vadd.f32 %v4796, %v5045
    %v5235 = vxor.u32 %v5232, 2147483648
    %v5236 = vxor.u32 %v5233, 2147483648
    %v5237 = vxor.u32 %v5234, 2147483648
    %v5238 = vmul.f32 %v5235, 1.442695
    %v5239 = vpow.pop %v5238
    %v5240 = vmul.f32 %v5236, 1.442695
    %v5241 = vpow.pop %v5240
    %v5242 = vmul.f32 %v5237, 1.442695
    %v5243 = vpow.pop %v5242
    %v5244 = vadd.f32 %v5239, 1.0
    %v5245 = vadd.f32 %v5241, 1.0
    %v5246 = vadd.f32 %v5243, 1.0
    %v5247 = vrcp.pop %v5244
    %v5248 = vmul.f32 1.0, %v5247
    %v5249 = vrcp.pop %v5245
    %v5250 = vmul.f32 1.0, %v5249
    %v5251 = vrcp.pop %v5246
    %v5252 = vmul.f32 1.0, %v5251
    %v5253 = vmul.f32 %v5227, %v5125
    %v5254 = vmul.f32 %v5229, %v5127
    %v5255 = vmul.f32 %v5231, %v5206
    %v5256 = vadd.f32 %v4797, %v5253
    %v5257 = vadd.f32 %v4798, %v5254
    %v5258 = vadd.f32 %v4799, %v5255
    %v5259 = vtanh.pop %v5256
    %v5260 = vtanh.pop %v5257
    %v5261 = vtanh.pop %v5258
    %v5262 = vsub.f32 1.0, %v5248
    %v5263 = vsub.f32 1.0, %v5250
    %v5264 = vsub.f32 1.0, %v5252
    %v5265 = vmul.f32 %v5262, %v5259
    %v5266 = vmul.f32 %v5263, %v5260
    %v5267 = vmul.f32 %v5264, %v5261
    %v5268 = vmul.f32 %v5248, %v4782
    %v5269 = vmul.f32 %v5250, %v4783
    %v5270 = vmul.f32 %v5252, %v4784
    %v5271 = vadd.f32 %v5265, %v5268
    %v5272 = vadd.f32 %v5266, %v5269
    %v5273 = vadd.f32 %v5267, %v5270
    %v5274 = vmul.f32 %v5271, %v57
    %v5275 = vmul.f32 %v5272, %v58
    %v5276 = vmul.f32 %v5273, %v59
    %5277 = vst [vmem:[#allocation3 + $0x78] sm:$0xff] %v5274
    %5278 = vst [vmem:[#allocation3 + $0x80] sm:$0xff] %v5275
    %5279 = vst [vmem:[#allocation3 + $0x88] sm:$0xff] %v5276
    %v5280 = vld [vmem:[#allocation2 + $0x1b0] sm:$0xff]
    %v5281 = vld [vmem:[#allocation2 + $0x1b8] sm:$0xff]
    %v5282 = vld [vmem:[#allocation2 + $0x1c0] sm:$0xff]
    %v5283 = vld [vmem:[#allocation2 + $0x1c8] sm:$0xff]
    %v5284 = vld [vmem:[#allocation2 + $0x1d0] sm:$0xff]
    %v5285 = vld [vmem:[#allocation2 + $0x1d8] sm:$0xff]
    %v5286 = vld [vmem:[#allocation2 + $0x1e0] sm:$0xff]
    %v5287 = vld [vmem:[#allocation2 + $0x1e8] sm:$0xff]
    %v5288 = vld [vmem:[#allocation2 + $0x1f0] sm:$0xff]
    %v5289 = vpack.c.bf16 %v5271, %v5271
    %v5290 = vpack.c.bf16 %v5272, %v5272
    %v5291 = vpack.c.bf16 %v5273, %v5273
    %5292 = vmatprep.subr.bf16.mxu0 %v1927
    %5293 = vmatpush1.bf16.msra.mxu0 %v1926
    %5294 = vmatprep.subr.bf16.mxu0 %v1936
    %5295 = vmatpush1.bf16.msra.mxu0 %v1935
    %5296 = vmatprep.subr.bf16.mxu0 %v1945
    %5297 = vmatpush1.bf16.msra.mxu0 %v1944
    %5298 = vmatprep.subr.bf16.mxu0 %v1954
    %5299 = vmatpush1.bf16.msra.mxu0 %v1953
    %5300 = vmatprep.subr.bf16.mxu0 %v1963
    %5301 = vmatpush1.bf16.msra.mxu0 %v1962
    %5302 = vmatprep.subr.bf16.mxu0 %v1972
    %5303 = vmatpush1.bf16.msra.mxu0 %v1971
    %5304 = vmatprep.subr.bf16.mxu0 %v1981
    %5305 = vmatpush1.bf16.msra.mxu0 %v1980
    %5306 = vmatprep.subr.bf16.mxu0 %v1990
    %5307 = vmatpush1.bf16.msra.mxu0 %v1989
    %5308 = vmatprep.subr.bf16.mxu0 %v1999
    %5309 = vmatpush1.bf16.msra.mxu0 %v1998
    %5310 = vmatprep.subr.bf16.mxu0 %v2008
    %5311 = vmatpush1.bf16.msra.mxu0 %v2007
    %5312 = vmatprep.subr.bf16.mxu0 %v2017
    %5313 = vmatpush1.bf16.msra.mxu0 %v2016
    %5314 = vmatprep.subr.bf16.mxu0 %v2026
    %5315 = vmatpush1.bf16.msra.mxu0 %v2025
    %5316 = vmatprep.subr.bf16.mxu0 %v2035
    %5317 = vmatpush1.bf16.msra.mxu0 %v2034
    %5318 = vmatprep.subr.bf16.mxu0 %v2044
    %5319 = vmatpush1.bf16.msra.mxu0 %v2043
    %5320 = vmatprep.subr.bf16.mxu0 %v2053
    %5321 = vmatpush1.bf16.msra.mxu0 %v2052
    %5322 = vmatprep.subr.bf16.mxu0 %v2062
    %5323 = vmatpush1.bf16.msra.mxu0 %v2061
    %5324 = vmatprep.mubr.bf16.mxu0 %v5290
    %5325 = vmatmul.mubr.bf16.gmra.mrb[0].mxu0 %v5289
    %v5326 = vpop.f32.mrb[0].mxu0
    %v5327 = vadd.f32 %v1212, %v5326
    %v5328 = vpop.f32.mrb[0].mxu0
    %v5329 = vadd.f32 %v1216, %v5328
    %v5330 = vpop.f32.mrb[0].mxu0
    %v5331 = vpop.f32.mrb[0].mxu0
    %5332 = vdwg.mxu0
    %5333 = vmatprep.subr.bf16.mxu0 %v2071
    %5334 = vmatpush1.bf16.msra.mxu0 %v2070
    %5335 = vmatprep.subr.bf16.mxu0 %v2080
    %5336 = vmatpush1.bf16.msra.mxu0 %v2079
    %5337 = vmatprep.subr.bf16.mxu0 %v2089
    %5338 = vmatpush1.bf16.msra.mxu0 %v2088
    %5339 = vmatprep.subr.bf16.mxu0 %v2098
    %5340 = vmatpush1.bf16.msra.mxu0 %v2097
    %5341 = vmatprep.subr.bf16.mxu0 %v2107
    %5342 = vmatpush1.bf16.msra.mxu0 %v2106
    %5343 = vmatprep.subr.bf16.mxu0 %v2116
    %5344 = vmatpush1.bf16.msra.mxu0 %v2115
    %5345 = vmatprep.subr.bf16.mxu0 %v2125
    %5346 = vmatpush1.bf16.msra.mxu0 %v2124
    %5347 = vmatprep.subr.bf16.mxu0 %v2134
    %5348 = vmatpush1.bf16.msra.mxu0 %v2133
    %5349 = vmatprep.subr.bf16.mxu0 0
    %5350 = vmatpush1.bf16.msra.mxu0 0
    %5351 = vmatprep.subr.bf16.mxu0 0
    %5352 = vmatpush1.bf16.msra.mxu0 0
    %5353 = vmatprep.subr.bf16.mxu0 0
    %5354 = vmatpush1.bf16.msra.mxu0 0
    %5355 = vmatprep.subr.bf16.mxu0 0
    %5356 = vmatpush1.bf16.msra.mxu0 0
    %5357 = vmatprep.subr.bf16.mxu0 0
    %5358 = vmatpush1.bf16.msra.mxu0 0
    %5359 = vmatprep.subr.bf16.mxu0 0
    %5360 = vmatpush1.bf16.msra.mxu0 0
    %5361 = vmatprep.subr.bf16.mxu0 0
    %5362 = vmatpush1.bf16.msra.mxu0 0
    %5363 = vmatprep.subr.bf16.mxu0 0
    %5364 = vmatpush1.bf16.msra.mxu0 0
    %5365 = vmatprep.mubr.bf16.mxu0 0
    %5366 = vmatmul.mubr.bf16.gmra.mrb[0].mxu0 %v5291
    %v5367 = vpop.f32.mrb[0].mxu0
    %v5368 = vadd.f32 %v5327, %v5367
    %v5369 = vpop.f32.mrb[0].mxu0
    %v5370 = vadd.f32 %v5329, %v5369
    %v5371 = vpop.f32.mrb[0].mxu0
    %v5372 = vpop.f32.mrb[0].mxu0
    %5373 = vdwg.mxu0
    %5374 = vmatprep.subr.bf16.mxu0 %v1929
    %5375 = vmatpush1.bf16.msra.mxu0 %v1928
    %5376 = vmatprep.subr.bf16.mxu0 %v1938
    %5377 = vmatpush1.bf16.msra.mxu0 %v1937
    %5378 = vmatprep.subr.bf16.mxu0 %v1947
    %5379 = vmatpush1.bf16.msra.mxu0 %v1946
    %5380 = vmatprep.subr.bf16.mxu0 %v1956
    %5381 = vmatpush1.bf16.msra.mxu0 %v1955
    %5382 = vmatprep.subr.bf16.mxu0 %v1965
    %5383 = vmatpush1.bf16.msra.mxu0 %v1964
    %5384 = vmatprep.subr.bf16.mxu0 %v1974
    %5385 = vmatpush1.bf16.msra.mxu0 %v1973
    %5386 = vmatprep.subr.bf16.mxu0 %v1983
    %5387 = vmatpush1.bf16.msra.mxu0 %v1982
    %5388 = vmatprep.subr.bf16.mxu0 %v1992
    %5389 = vmatpush1.bf16.msra.mxu0 %v1991
    %5390 = vmatprep.subr.bf16.mxu0 %v2001
    %5391 = vmatpush1.bf16.msra.mxu0 %v2000
    %5392 = vmatprep.subr.bf16.mxu0 %v2010
    %5393 = vmatpush1.bf16.msra.mxu0 %v2009
    %5394 = vmatprep.subr.bf16.mxu0 %v2019
    %5395 = vmatpush1.bf16.msra.mxu0 %v2018
    %5396 = vmatprep.subr.bf16.mxu0 %v2028
    %5397 = vmatpush1.bf16.msra.mxu0 %v2027
    %5398 = vmatprep.subr.bf16.mxu0 %v2037
    %5399 = vmatpush1.bf16.msra.mxu0 %v2036
    %5400 = vmatprep.subr.bf16.mxu0 %v2046
    %5401 = vmatpush1.bf16.msra.mxu0 %v2045
    %5402 = vmatprep.subr.bf16.mxu0 %v2055
    %5403 = vmatpush1.bf16.msra.mxu0 %v2054
    %5404 = vmatprep.subr.bf16.mxu0 %v2064
    %5405 = vmatpush1.bf16.msra.mxu0 %v2063
    %5406 = vmatprep.mubr.bf16.mxu0 %v5290
    %5407 = vmatmul.mubr.bf16.gmra.mrb[0].mxu0 %v5289
    %v5408 = vpop.f32.mrb[0].mxu0
    %v5409 = vadd.f32 %v1220, %v5408
    %v5410 = vpop.f32.mrb[0].mxu0
    %v5411 = vadd.f32 %v1224, %v5410
    %v5412 = vpop.f32.mrb[0].mxu0
    %v5413 = vpop.f32.mrb[0].mxu0
    %5414 = vdwg.mxu0
    %5415 = vmatprep.subr.bf16.mxu0 %v2073
    %5416 = vmatpush1.bf16.msra.mxu0 %v2072
    %5417 = vmatprep.subr.bf16.mxu0 %v2082
    %5418 = vmatpush1.bf16.msra.mxu0 %v2081
    %5419 = vmatprep.subr.bf16.mxu0 %v2091
    %5420 = vmatpush1.bf16.msra.mxu0 %v2090
    %5421 = vmatprep.subr.bf16.mxu0 %v2100
    %5422 = vmatpush1.bf16.msra.mxu0 %v2099
    %5423 = vmatprep.subr.bf16.mxu0 %v2109
    %5424 = vmatpush1.bf16.msra.mxu0 %v2108
    %5425 = vmatprep.subr.bf16.mxu0 %v2118
    %5426 = vmatpush1.bf16.msra.mxu0 %v2117
    %5427 = vmatprep.subr.bf16.mxu0 %v2127
    %5428 = vmatpush1.bf16.msra.mxu0 %v2126
    %5429 = vmatprep.subr.bf16.mxu0 %v2136
    %5430 = vmatpush1.bf16.msra.mxu0 %v2135
    %5431 = vmatprep.subr.bf16.mxu0 0
    %5432 = vmatpush1.bf16.msra.mxu0 0
    %5433 = vmatprep.subr.bf16.mxu0 0
    %5434 = vmatpush1.bf16.msra.mxu0 0
    %5435 = vmatprep.subr.bf16.mxu0 0
    %5436 = vmatpush1.bf16.msra.mxu0 0
    %5437 = vmatprep.subr.bf16.mxu0 0
    %5438 = vmatpush1.bf16.msra.mxu0 0
    %5439 = vmatprep.subr.bf16.mxu0 0
    %5440 = vmatpush1.bf16.msra.mxu0 0
    %5441 = vmatprep.subr.bf16.mxu0 0
    %5442 = vmatpush1.bf16.msra.mxu0 0
    %5443 = vmatprep.subr.bf16.mxu0 0
    %5444 = vmatpush1.bf16.msra.mxu0 0
    %5445 = vmatprep.subr.bf16.mxu0 0
    %5446 = vmatpush1.bf16.msra.mxu0 0
    %5447 = vmatprep.mubr.bf16.mxu0 0
    %5448 = vmatmul.mubr.bf16.gmra.mrb[0].mxu0 %v5291
    %v5449 = vpop.f32.mrb[0].mxu0
    %v5450 = vadd.f32 %v5409, %v5449
    %v5451 = vpop.f32.mrb[0].mxu0
    %v5452 = vadd.f32 %v5411, %v5451
    %v5453 = vpop.f32.mrb[0].mxu0
    %v5454 = vpop.f32.mrb[0].mxu0
    %5455 = vdwg.mxu0
    %5456 = vmatprep.subr.bf16.mxu0 %v1931
    %5457 = vmatpush1.bf16.msra.mxu0 %v1930
    %5458 = vmatprep.subr.bf16.mxu0 %v1940
    %5459 = vmatpush1.bf16.msra.mxu0 %v1939
    %5460 = vmatprep.subr.bf16.mxu0 %v1949
    %5461 = vmatpush1.bf16.msra.mxu0 %v1948
    %5462 = vmatprep.subr.bf16.mxu0 %v1958
    %5463 = vmatpush1.bf16.msra.mxu0 %v1957
    %5464 = vmatprep.subr.bf16.mxu0 %v1967
    %5465 = vmatpush1.bf16.msra.mxu0 %v1966
    %5466 = vmatprep.subr.bf16.mxu0 %v1976
    %5467 = vmatpush1.bf16.msra.mxu0 %v1975
    %5468 = vmatprep.subr.bf16.mxu0 %v1985
    %5469 = vmatpush1.bf16.msra.mxu0 %v1984
    %5470 = vmatprep.subr.bf16.mxu0 %v1994
    %5471 = vmatpush1.bf16.msra.mxu0 %v1993
    %5472 = vmatprep.subr.bf16.mxu0 %v2003
    %5473 = vmatpush1.bf16.msra.mxu0 %v2002
    %5474 = vmatprep.subr.bf16.mxu0 %v2012
    %5475 = vmatpush1.bf16.msra.mxu0 %v2011
    %5476 = vmatprep.subr.bf16.mxu0 %v2021
    %5477 = vmatpush1.bf16.msra.mxu0 %v2020
    %5478 = vmatprep.subr.bf16.mxu0 %v2030
    %5479 = vmatpush1.bf16.msra.mxu0 %v2029
    %5480 = vmatprep.subr.bf16.mxu0 %v2039
    %5481 = vmatpush1.bf16.msra.mxu0 %v2038
    %5482 = vmatprep.subr.bf16.mxu0 %v2048
    %5483 = vmatpush1.bf16.msra.mxu0 %v2047
    %5484 = vmatprep.subr.bf16.mxu0 %v2057
    %5485 = vmatpush1.bf16.msra.mxu0 %v2056
    %5486 = vmatprep.subr.bf16.mxu0 %v2066
    %5487 = vmatpush1.bf16.msra.mxu0 %v2065
    %5488 = vmatprep.mubr.bf16.mxu0 %v5290
    %5489 = vmatmul.mubr.bf16.gmra.mrb[0].mxu0 %v5289
    %v5490 = vpop.f32.mrb[0].mxu0
    %v5491 = vadd.f32 %v1228, %v5490
    %v5492 = vpop.f32.mrb[0].mxu0
    %v5493 = vadd.f32 %v1232, %v5492
    %v5494 = vpop.f32.mrb[0].mxu0
    %v5495 = vpop.f32.mrb[0].mxu0
    %5496 = vdwg.mxu0
    %5497 = vmatprep.subr.bf16.mxu0 %v2075
    %5498 = vmatpush1.bf16.msra.mxu0 %v2074
    %5499 = vmatprep.subr.bf16.mxu0 %v2084
    %5500 = vmatpush1.bf16.msra.mxu0 %v2083
    %5501 = vmatprep.subr.bf16.mxu0 %v2093
    %5502 = vmatpush1.bf16.msra.mxu0 %v2092
    %5503 = vmatprep.subr.bf16.mxu0 %v2102
    %5504 = vmatpush1.bf16.msra.mxu0 %v2101
    %5505 = vmatprep.subr.bf16.mxu0 %v2111
    %5506 = vmatpush1.bf16.msra.mxu0 %v2110
    %5507 = vmatprep.subr.bf16.mxu0 %v2120
    %5508 = vmatpush1.bf16.msra.mxu0 %v2119
    %5509 = vmatprep.subr.bf16.mxu0 %v2129
    %5510 = vmatpush1.bf16.msra.mxu0 %v2128
    %5511 = vmatprep.subr.bf16.mxu0 %v2138
    %5512 = vmatpush1.bf16.msra.mxu0 %v2137
    %5513 = vmatprep.subr.bf16.mxu0 0
    %5514 = vmatpush1.bf16.msra.mxu0 0
    %5515 = vmatprep.subr.bf16.mxu0 0
    %5516 = vmatpush1.bf16.msra.mxu0 0
    %5517 = vmatprep.subr.bf16.mxu0 0
    %5518 = vmatpush1.bf16.msra.mxu0 0
    %5519 = vmatprep.subr.bf16.mxu0 0
    %5520 = vmatpush1.bf16.msra.mxu0 0
    %5521 = vmatprep.subr.bf16.mxu0 0
    %5522 = vmatpush1.bf16.msra.mxu0 0
    %5523 = vmatprep.subr.bf16.mxu0 0
    %5524 = vmatpush1.bf16.msra.mxu0 0
    %5525 = vmatprep.subr.bf16.mxu0 0
    %5526 = vmatpush1.bf16.msra.mxu0 0
    %5527 = vmatprep.subr.bf16.mxu0 0
    %5528 = vmatpush1.bf16.msra.mxu0 0
    %5529 = vmatprep.mubr.bf16.mxu0 0
    %5530 = vmatmul.mubr.bf16.gmra.mrb[0].mxu0 %v5291
    %v5531 = vpop.f32.mrb[0].mxu0
    %v5532 = vadd.f32 %v5491, %v5531
    %v5533 = vpop.f32.mrb[0].mxu0
    %v5534 = vadd.f32 %v5493, %v5533
    %v5535 = vpop.f32.mrb[0].mxu0
    %v5536 = vpop.f32.mrb[0].mxu0
    %5537 = vdwg.mxu0
    %5538 = vmatprep.subr.bf16.mxu0 %v1933
    %5539 = vmatpush1.bf16.msra.mxu0 %v1932
    %5540 = vmatprep.subr.bf16.mxu0 %v1942
    %5541 = vmatpush1.bf16.msra.mxu0 %v1941
    %5542 = vmatprep.subr.bf16.mxu0 %v1951
    %5543 = vmatpush1.bf16.msra.mxu0 %v1950
    %5544 = vmatprep.subr.bf16.mxu0 %v1960
    %5545 = vmatpush1.bf16.msra.mxu0 %v1959
    %5546 = vmatprep.subr.bf16.mxu0 %v1969
    %5547 = vmatpush1.bf16.msra.mxu0 %v1968
    %5548 = vmatprep.subr.bf16.mxu0 %v1978
    %5549 = vmatpush1.bf16.msra.mxu0 %v1977
    %5550 = vmatprep.subr.bf16.mxu0 %v1987
    %5551 = vmatpush1.bf16.msra.mxu0 %v1986
    %5552 = vmatprep.subr.bf16.mxu0 %v1996
    %5553 = vmatpush1.bf16.msra.mxu0 %v1995
    %5554 = vmatprep.subr.bf16.mxu0 %v2005
    %5555 = vmatpush1.bf16.msra.mxu0 %v2004
    %5556 = vmatprep.subr.bf16.mxu0 %v2014
    %5557 = vmatpush1.bf16.msra.mxu0 %v2013
    %5558 = vmatprep.subr.bf16.mxu0 %v2023
    %5559 = vmatpush1.bf16.msra.mxu0 %v2022
    %5560 = vmatprep.subr.bf16.mxu0 %v2032
    %5561 = vmatpush1.bf16.msra.mxu0 %v2031
    %5562 = vmatprep.subr.bf16.mxu0 %v2041
    %5563 = vmatpush1.bf16.msra.mxu0 %v2040
    %5564 = vmatprep.subr.bf16.mxu0 %v2050
    %5565 = vmatpush1.bf16.msra.mxu0 %v2049
    %5566 = vmatprep.subr.bf16.mxu0 %v2059
    %5567 = vmatpush1.bf16.msra.mxu0 %v2058
    %5568 = vmatprep.subr.bf16.mxu0 %v2068
    %5569 = vmatpush1.bf16.msra.mxu0 %v2067
    %5570 = vmatprep.mubr.bf16.mxu0 %v5290
    %5571 = vmatmul.mubr.bf16.gmra.mrb[0].mxu0 %v5289
    %v5572 = vpop.f32.mrb[0].mxu0
    %v5573 = vadd.f32 %v1236, %v5572
    %v5574 = vpop.f32.mrb[0].mxu0
    %v5575 = vadd.f32 %v1240, %v5574
    %v5576 = vpop.f32.mrb[0].mxu0
    %v5577 = vpop.f32.mrb[0].mxu0
    %5578 = vdwg.mxu0
    %5579 = vmatprep.subr.bf16.mxu0 %v2077
    %5580 = vmatpush1.bf16.msra.mxu0 %v2076
    %5581 = vmatprep.subr.bf16.mxu0 %v2086
    %5582 = vmatpush1.bf16.msra.mxu0 %v2085
    %5583 = vmatprep.subr.bf16.mxu0 %v2095
    %5584 = vmatpush1.bf16.msra.mxu0 %v2094
    %5585 = vmatprep.subr.bf16.mxu0 %v2104
    %5586 = vmatpush1.bf16.msra.mxu0 %v2103
    %5587 = vmatprep.subr.bf16.mxu0 %v2113
    %5588 = vmatpush1.bf16.msra.mxu0 %v2112
    %5589 = vmatprep.subr.bf16.mxu0 %v2122
    %5590 = vmatpush1.bf16.msra.mxu0 %v2121
    %5591 = vmatprep.subr.bf16.mxu0 %v2131
    %5592 = vmatpush1.bf16.msra.mxu0 %v2130
    %5593 = vmatprep.subr.bf16.mxu0 %v2140
    %5594 = vmatpush1.bf16.msra.mxu0 %v2139
    %5595 = vmatprep.subr.bf16.mxu0 0
    %5596 = vmatpush1.bf16.msra.mxu0 0
    %5597 = vmatprep.subr.bf16.mxu0 0
    %5598 = vmatpush1.bf16.msra.mxu0 0
    %5599 = vmatprep.subr.bf16.mxu0 0
    %5600 = vmatpush1.bf16.msra.mxu0 0
    %5601 = vmatprep.subr.bf16.mxu0 0
    %5602 = vmatpush1.bf16.msra.mxu0 0
    %5603 = vmatprep.subr.bf16.mxu0 0
    %5604 = vmatpush1.bf16.msra.mxu0 0
    %5605 = vmatprep.subr.bf16.mxu0 0
    %5606 = vmatpush1.bf16.msra.mxu0 0
    %5607 = vmatprep.subr.bf16.mxu0 0
    %5608 = vmatpush1.bf16.msra.mxu0 0
    %5609 = vmatprep.subr.bf16.mxu0 0
    %5610 = vmatpush1.bf16.msra.mxu0 0
    %5611 = vmatprep.mubr.bf16.mxu0 0
    %5612 = vmatmul.mubr.bf16.gmra.mrb[0].mxu0 %v5291
    %v5613 = vpop.f32.mrb[0].mxu0
    %v5614 = vadd.f32 %v5573, %v5613
    %v5615 = vpop.f32.mrb[0].mxu0
    %v5616 = vadd.f32 %v5575, %v5615
    %v5617 = vpop.f32.mrb[0].mxu0
    %v5618 = vpop.f32.mrb[0].mxu0
    %5619 = vdwg.mxu0
    %5620 = vmatprep.subr.bf16.mxu0 0
    %5621 = vmatpush1.bf16.msra.mxu0 %v1934
    %5622 = vmatprep.subr.bf16.mxu0 0
    %5623 = vmatpush1.bf16.msra.mxu0 %v1943
    %5624 = vmatprep.subr.bf16.mxu0 0
    %5625 = vmatpush1.bf16.msra.mxu0 %v1952
    %5626 = vmatprep.subr.bf16.mxu0 0
    %5627 = vmatpush1.bf16.msra.mxu0 %v1961
    %5628 = vmatprep.subr.bf16.mxu0 0
    %5629 = vmatpush1.bf16.msra.mxu0 %v1970
    %5630 = vmatprep.subr.bf16.mxu0 0
    %5631 = vmatpush1.bf16.msra.mxu0 %v1979
    %5632 = vmatprep.subr.bf16.mxu0 0
    %5633 = vmatpush1.bf16.msra.mxu0 %v1988
    %5634 = vmatprep.subr.bf16.mxu0 0
    %5635 = vmatpush1.bf16.msra.mxu0 %v1997
    %5636 = vmatprep.subr.bf16.mxu0 0
    %5637 = vmatpush1.bf16.msra.mxu0 %v2006
    %5638 = vmatprep.subr.bf16.mxu0 0
    %5639 = vmatpush1.bf16.msra.mxu0 %v2015
    %5640 = vmatprep.subr.bf16.mxu0 0
    %5641 = vmatpush1.bf16.msra.mxu0 %v2024
    %5642 = vmatprep.subr.bf16.mxu0 0
    %5643 = vmatpush1.bf16.msra.mxu0 %v2033
    %5644 = vmatprep.subr.bf16.mxu0 0
    %5645 = vmatpush1.bf16.msra.mxu0 %v2042
    %5646 = vmatprep.subr.bf16.mxu0 0
    %5647 = vmatpush1.bf16.msra.mxu0 %v2051
    %5648 = vmatprep.subr.bf16.mxu0 0
    %5649 = vmatpush1.bf16.msra.mxu0 %v2060
    %5650 = vmatprep.subr.bf16.mxu0 0
    %5651 = vmatpush1.bf16.msra.mxu0 %v2069
    %5652 = vmatprep.mubr.bf16.mxu0 %v5290
    %5653 = vmatmul.mubr.bf16.gmra.mrb[0].mxu0 %v5289
    %v5654 = vpop.f32.mrb[0].mxu0
    %v5655 = vadd.f32 %v1244, %v5654
    %v5656 = vpop.f32.mrb[0].mxu0
    %v5657 = vpop.f32.mrb[0].mxu0
    %v5658 = vpop.f32.mrb[0].mxu0
    %5659 = vdwg.mxu0
    %5660 = vmatprep.subr.bf16.mxu0 0
    %5661 = vmatpush1.bf16.msra.mxu0 %v2078
    %5662 = vmatprep.subr.bf16.mxu0 0
    %5663 = vmatpush1.bf16.msra.mxu0 %v2087
    %5664 = vmatprep.subr.bf16.mxu0 0
    %5665 = vmatpush1.bf16.msra.mxu0 %v2096
    %5666 = vmatprep.subr.bf16.mxu0 0
    %5667 = vmatpush1.bf16.msra.mxu0 %v2105
    %5668 = vmatprep.subr.bf16.mxu0 0
    %5669 = vmatpush1.bf16.msra.mxu0 %v2114
    %5670 = vmatprep.subr.bf16.mxu0 0
    %5671 = vmatpush1.bf16.msra.mxu0 %v2123
    %5672 = vmatprep.subr.bf16.mxu0 0
    %5673 = vmatpush1.bf16.msra.mxu0 %v2132
    %5674 = vmatprep.subr.bf16.mxu0 0
    %5675 = vmatpush1.bf16.msra.mxu0 %v2141
    %5676 = vmatprep.subr.bf16.mxu0 0
    %5677 = vmatpush1.bf16.msra.mxu0 0
    %5678 = vmatprep.subr.bf16.mxu0 0
    %5679 = vmatpush1.bf16.msra.mxu0 0
    %5680 = vmatprep.subr.bf16.mxu0 0
    %5681 = vmatpush1.bf16.msra.mxu0 0
    %5682 = vmatprep.subr.bf16.mxu0 0
    %5683 = vmatpush1.bf16.msra.mxu0 0
    %5684 = vmatprep.subr.bf16.mxu0 0
    %5685 = vmatpush1.bf16.msra.mxu0 0
    %5686 = vmatprep.subr.bf16.mxu0 0
    %5687 = vmatpush1.bf16.msra.mxu0 0
    %5688 = vmatprep.subr.bf16.mxu0 0
    %5689 = vmatpush1.bf16.msra.mxu0 0
    %5690 = vmatprep.subr.bf16.mxu0 0
    %5691 = vmatpush1.bf16.msra.mxu0 0
    %5692 = vmatprep.mubr.bf16.mxu0 0
    %5693 = vmatmul.mubr.bf16.gmra.mrb[0].mxu0 %v5291
    %v5694 = vpop.f32.mrb[0].mxu0
    %v5695 = vadd.f32 %v5655, %v5694
    %v5696 = vpop.f32.mrb[0].mxu0
    %v5697 = vpop.f32.mrb[0].mxu0
    %v5698 = vpop.f32.mrb[0].mxu0
    %5699 = vdwg.mxu0
    %v5700 = vadd.f32 %v5280, %v5368
    %v5701 = vadd.f32 %v5281, %v5370
    %v5702 = vadd.f32 %v5282, %v5450
    %v5703 = vxor.u32 %v5700, 2147483648
    %v5704 = vxor.u32 %v5701, 2147483648
    %v5705 = vxor.u32 %v5702, 2147483648
    %v5706 = vmul.f32 %v5703, 1.442695
    %v5707 = vpow.pop %v5706
    %v5708 = vmul.f32 %v5704, 1.442695
    %v5709 = vpow.pop %v5708
    %v5710 = vmul.f32 %v5705, 1.442695
    %v5711 = vpow.pop %v5710
    %v5712 = vadd.f32 %v5707, 1.0
    %v5713 = vadd.f32 %v5709, 1.0
    %v5714 = vadd.f32 %v5711, 1.0
    %v5715 = vrcp.pop %v5712
    %v5716 = vmul.f32 1.0, %v5715
    %v5717 = vrcp.pop %v5713
    %v5718 = vmul.f32 1.0, %v5717
    %v5719 = vrcp.pop %v5714
    %v5720 = vmul.f32 1.0, %v5719
    %v5721 = vadd.f32 %v5283, %v5452
    %v5722 = vadd.f32 %v5284, %v5532
    %v5723 = vadd.f32 %v5285, %v5534
    %v5724 = vxor.u32 %v5721, 2147483648
    %v5725 = vxor.u32 %v5722, 2147483648
    %v5726 = vxor.u32 %v5723, 2147483648
    %v5727 = vmul.f32 %v5724, 1.442695
    %v5728 = vpow.pop %v5727
    %v5729 = vmul.f32 %v5725, 1.442695
    %v5730 = vpow.pop %v5729
    %v5731 = vmul.f32 %v5726, 1.442695
    %v5732 = vpow.pop %v5731
    %v5733 = vadd.f32 %v5728, 1.0
    %v5734 = vadd.f32 %v5730, 1.0
    %v5735 = vadd.f32 %v5732, 1.0
    %v5736 = vrcp.pop %v5733
    %v5737 = vmul.f32 1.0, %v5736
    %v5738 = vrcp.pop %v5734
    %v5739 = vmul.f32 1.0, %v5738
    %v5740 = vrcp.pop %v5735
    %v5741 = vmul.f32 1.0, %v5740
    %v5742 = vmul.f32 %v5716, %v5614
    %v5743 = vmul.f32 %v5718, %v5616
    %v5744 = vmul.f32 %v5720, %v5695
    %v5745 = vadd.f32 %v5286, %v5742
    %v5746 = vadd.f32 %v5287, %v5743
    %v5747 = vadd.f32 %v5288, %v5744
    %v5748 = vtanh.pop %v5745
    %v5749 = vtanh.pop %v5746
    %v5750 = vtanh.pop %v5747
    %v5751 = vsub.f32 1.0, %v5737
    %v5752 = vsub.f32 1.0, %v5739
    %v5753 = vsub.f32 1.0, %v5741
    %v5754 = vmul.f32 %v5751, %v5748
    %v5755 = vmul.f32 %v5752, %v5749
    %v5756 = vmul.f32 %v5753, %v5750
    %v5757 = vmul.f32 %v5737, %v5271
    %v5758 = vmul.f32 %v5739, %v5272
    %v5759 = vmul.f32 %v5741, %v5273
    %v5760 = vadd.f32 %v5754, %v5757
    %v5761 = vadd.f32 %v5755, %v5758
    %v5762 = vadd.f32 %v5756, %v5759
    %v5763 = vmul.f32 %v5760, %v57
    %v5764 = vmul.f32 %v5761, %v58
    %v5765 = vmul.f32 %v5762, %v59
    %5766 = vst [vmem:[#allocation3 + $0x90] sm:$0xff] %v5763
    %5767 = vst [vmem:[#allocation3 + $0x98] sm:$0xff] %v5764
    %5768 = vst [vmem:[#allocation3 + $0xa0] sm:$0xff] %v5765
    %v5769 = vld [vmem:[#allocation2 + $0x1f8] sm:$0xff]
    %v5770 = vld [vmem:[#allocation2 + $0x200] sm:$0xff]
    %v5771 = vld [vmem:[#allocation2 + $0x208] sm:$0xff]
    %v5772 = vld [vmem:[#allocation2 + $0x210] sm:$0xff]
    %v5773 = vld [vmem:[#allocation2 + $0x218] sm:$0xff]
    %v5774 = vld [vmem:[#allocation2 + $0x220] sm:$0xff]
    %v5775 = vld [vmem:[#allocation2 + $0x228] sm:$0xff]
    %v5776 = vld [vmem:[#allocation2 + $0x230] sm:$0xff]
    %v5777 = vld [vmem:[#allocation2 + $0x238] sm:$0xff]
    %v5778 = vpack.c.bf16 %v5760, %v5760
    %v5779 = vpack.c.bf16 %v5761, %v5761
    %v5780 = vpack.c.bf16 %v5762, %v5762
    %5781 = vmatprep.subr.bf16.mxu0 %v1927
    %5782 = vmatpush1.bf16.msra.mxu0 %v1926
    %5783 = vmatprep.subr.bf16.mxu0 %v1936
    %5784 = vmatpush1.bf16.msra.mxu0 %v1935
    %5785 = vmatprep.subr.bf16.mxu0 %v1945
    %5786 = vmatpush1.bf16.msra.mxu0 %v1944
    %5787 = vmatprep.subr.bf16.mxu0 %v1954
    %5788 = vmatpush1.bf16.msra.mxu0 %v1953
    %5789 = vmatprep.subr.bf16.mxu0 %v1963
    %5790 = vmatpush1.bf16.msra.mxu0 %v1962
    %5791 = vmatprep.subr.bf16.mxu0 %v1972
    %5792 = vmatpush1.bf16.msra.mxu0 %v1971
    %5793 = vmatprep.subr.bf16.mxu0 %v1981
    %5794 = vmatpush1.bf16.msra.mxu0 %v1980
    %5795 = vmatprep.subr.bf16.mxu0 %v1990
    %5796 = vmatpush1.bf16.msra.mxu0 %v1989
    %5797 = vmatprep.subr.bf16.mxu0 %v1999
    %5798 = vmatpush1.bf16.msra.mxu0 %v1998
    %5799 = vmatprep.subr.bf16.mxu0 %v2008
    %5800 = vmatpush1.bf16.msra.mxu0 %v2007
    %5801 = vmatprep.subr.bf16.mxu0 %v2017
    %5802 = vmatpush1.bf16.msra.mxu0 %v2016
    %5803 = vmatprep.subr.bf16.mxu0 %v2026
    %5804 = vmatpush1.bf16.msra.mxu0 %v2025
    %5805 = vmatprep.subr.bf16.mxu0 %v2035
    %5806 = vmatpush1.bf16.msra.mxu0 %v2034
    %5807 = vmatprep.subr.bf16.mxu0 %v2044
    %5808 = vmatpush1.bf16.msra.mxu0 %v2043
    %5809 = vmatprep.subr.bf16.mxu0 %v2053
    %5810 = vmatpush1.bf16.msra.mxu0 %v2052
    %5811 = vmatprep.subr.bf16.mxu0 %v2062
    %5812 = vmatpush1.bf16.msra.mxu0 %v2061
    %5813 = vmatprep.mubr.bf16.mxu0 %v5779
    %5814 = vmatmul.mubr.bf16.gmra.mrb[0].mxu0 %v5778
    %v5815 = vpop.f32.mrb[0].mxu0
    %v5816 = vadd.f32 %v1212, %v5815
    %v5817 = vpop.f32.mrb[0].mxu0
    %v5818 = vadd.f32 %v1216, %v5817
    %v5819 = vpop.f32.mrb[0].mxu0
    %v5820 = vpop.f32.mrb[0].mxu0
    %5821 = vdwg.mxu0
    %5822 = vmatprep.subr.bf16.mxu0 %v2071
    %5823 = vmatpush1.bf16.msra.mxu0 %v2070
    %5824 = vmatprep.subr.bf16.mxu0 %v2080
    %5825 = vmatpush1.bf16.msra.mxu0 %v2079
    %5826 = vmatprep.subr.bf16.mxu0 %v2089
    %5827 = vmatpush1.bf16.msra.mxu0 %v2088
    %5828 = vmatprep.subr.bf16.mxu0 %v2098
    %5829 = vmatpush1.bf16.msra.mxu0 %v2097
    %5830 = vmatprep.subr.bf16.mxu0 %v2107
    %5831 = vmatpush1.bf16.msra.mxu0 %v2106
    %5832 = vmatprep.subr.bf16.mxu0 %v2116
    %5833 = vmatpush1.bf16.msra.mxu0 %v2115
    %5834 = vmatprep.subr.bf16.mxu0 %v2125
    %5835 = vmatpush1.bf16.msra.mxu0 %v2124
    %5836 = vmatprep.subr.bf16.mxu0 %v2134
    %5837 = vmatpush1.bf16.msra.mxu0 %v2133
    %5838 = vmatprep.subr.bf16.mxu0 0
    %5839 = vmatpush1.bf16.msra.mxu0 0
    %5840 = vmatprep.subr.bf16.mxu0 0
    %5841 = vmatpush1.bf16.msra.mxu0 0
    %5842 = vmatprep.subr.bf16.mxu0 0
    %5843 = vmatpush1.bf16.msra.mxu0 0
    %5844 = vmatprep.subr.bf16.mxu0 0
    %5845 = vmatpush1.bf16.msra.mxu0 0
    %5846 = vmatprep.subr.bf16.mxu0 0
    %5847 = vmatpush1.bf16.msra.mxu0 0
    %5848 = vmatprep.subr.bf16.mxu0 0
    %5849 = vmatpush1.bf16.msra.mxu0 0
    %5850 = vmatprep.subr.bf16.mxu0 0
    %5851 = vmatpush1.bf16.msra.mxu0 0
    %5852 = vmatprep.subr.bf16.mxu0 0
    %5853 = vmatpush1.bf16.msra.mxu0 0
    %5854 = vmatprep.mubr.bf16.mxu0 0
    %5855 = vmatmul.mubr.bf16.gmra.mrb[0].mxu0 %v5780
    %v5856 = vpop.f32.mrb[0].mxu0
    %v5857 = vadd.f32 %v5816, %v5856
    %v5858 = vpop.f32.mrb[0].mxu0
    %v5859 = vadd.f32 %v5818, %v5858
    %v5860 = vpop.f32.mrb[0].mxu0
    %v5861 = vpop.f32.mrb[0].mxu0
    %5862 = vdwg.mxu0
    %5863 = vmatprep.subr.bf16.mxu0 %v1929
    %5864 = vmatpush1.bf16.msra.mxu0 %v1928
    %5865 = vmatprep.subr.bf16.mxu0 %v1938
    %5866 = vmatpush1.bf16.msra.mxu0 %v1937
    %5867 = vmatprep.subr.bf16.mxu0 %v1947
    %5868 = vmatpush1.bf16.msra.mxu0 %v1946
    %5869 = vmatprep.subr.bf16.mxu0 %v1956
    %5870 = vmatpush1.bf16.msra.mxu0 %v1955
    %5871 = vmatprep.subr.bf16.mxu0 %v1965
    %5872 = vmatpush1.bf16.msra.mxu0 %v1964
    %5873 = vmatprep.subr.bf16.mxu0 %v1974
    %5874 = vmatpush1.bf16.msra.mxu0 %v1973
    %5875 = vmatprep.subr.bf16.mxu0 %v1983
    %5876 = vmatpush1.bf16.msra.mxu0 %v1982
    %5877 = vmatprep.subr.bf16.mxu0 %v1992
    %5878 = vmatpush1.bf16.msra.mxu0 %v1991
    %5879 = vmatprep.subr.bf16.mxu0 %v2001
    %5880 = vmatpush1.bf16.msra.mxu0 %v2000
    %5881 = vmatprep.subr.bf16.mxu0 %v2010
    %5882 = vmatpush1.bf16.msra.mxu0 %v2009
    %5883 = vmatprep.subr.bf16.mxu0 %v2019
    %5884 = vmatpush1.bf16.msra.mxu0 %v2018
    %5885 = vmatprep.subr.bf16.mxu0 %v2028
    %5886 = vmatpush1.bf16.msra.mxu0 %v2027
    %5887 = vmatprep.subr.bf16.mxu0 %v2037
    %5888 = vmatpush1.bf16.msra.mxu0 %v2036
    %5889 = vmatprep.subr.bf16.mxu0 %v2046
    %5890 = vmatpush1.bf16.msra.mxu0 %v2045
    %5891 = vmatprep.subr.bf16.mxu0 %v2055
    %5892 = vmatpush1.bf16.msra.mxu0 %v2054
    %5893 = vmatprep.subr.bf16.mxu0 %v2064
    %5894 = vmatpush1.bf16.msra.mxu0 %v2063
    %5895 = vmatprep.mubr.bf16.mxu0 %v5779
    %5896 = vmatmul.mubr.bf16.gmra.mrb[0].mxu0 %v5778
    %v5897 = vpop.f32.mrb[0].mxu0
    %v5898 = vadd.f32 %v1220, %v5897
    %v5899 = vpop.f32.mrb[0].mxu0
    %v5900 = vadd.f32 %v1224, %v5899
    %v5901 = vpop.f32.mrb[0].mxu0
    %v5902 = vpop.f32.mrb[0].mxu0
    %5903 = vdwg.mxu0
    %5904 = vmatprep.subr.bf16.mxu0 %v2073
    %5905 = vmatpush1.bf16.msra.mxu0 %v2072
    %5906 = vmatprep.subr.bf16.mxu0 %v2082
    %5907 = vmatpush1.bf16.msra.mxu0 %v2081
    %5908 = vmatprep.subr.bf16.mxu0 %v2091
    %5909 = vmatpush1.bf16.msra.mxu0 %v2090
    %5910 = vmatprep.subr.bf16.mxu0 %v2100
    %5911 = vmatpush1.bf16.msra.mxu0 %v2099
    %5912 = vmatprep.subr.bf16.mxu0 %v2109
    %5913 = vmatpush1.bf16.msra.mxu0 %v2108
    %5914 = vmatprep.subr.bf16.mxu0 %v2118
    %5915 = vmatpush1.bf16.msra.mxu0 %v2117
    %5916 = vmatprep.subr.bf16.mxu0 %v2127
    %5917 = vmatpush1.bf16.msra.mxu0 %v2126
    %5918 = vmatprep.subr.bf16.mxu0 %v2136
    %5919 = vmatpush1.bf16.msra.mxu0 %v2135
    %5920 = vmatprep.subr.bf16.mxu0 0
    %5921 = vmatpush1.bf16.msra.mxu0 0
    %5922 = vmatprep.subr.bf16.mxu0 0
    %5923 = vmatpush1.bf16.msra.mxu0 0
    %5924 = vmatprep.subr.bf16.mxu0 0
    %5925 = vmatpush1.bf16.msra.mxu0 0
    %5926 = vmatprep.subr.bf16.mxu0 0
    %5927 = vmatpush1.bf16.msra.mxu0 0
    %5928 = vmatprep.subr.bf16.mxu0 0
    %5929 = vmatpush1.bf16.msra.mxu0 0
    %5930 = vmatprep.subr.bf16.mxu0 0
    %5931 = vmatpush1.bf16.msra.mxu0 0
    %5932 = vmatprep.subr.bf16.mxu0 0
    %5933 = vmatpush1.bf16.msra.mxu0 0
    %5934 = vmatprep.subr.bf16.mxu0 0
    %5935 = vmatpush1.bf16.msra.mxu0 0
    %5936 = vmatprep.mubr.bf16.mxu0 0
    %5937 = vmatmul.mubr.bf16.gmra.mrb[0].mxu0 %v5780
    %v5938 = vpop.f32.mrb[0].mxu0
    %v5939 = vadd.f32 %v5898, %v5938
    %v5940 = vpop.f32.mrb[0].mxu0
    %v5941 = vadd.f32 %v5900, %v5940
    %v5942 = vpop.f32.mrb[0].mxu0
    %v5943 = vpop.f32.mrb[0].mxu0
    %5944 = vdwg.mxu0
    %5945 = vmatprep.subr.bf16.mxu0 %v1931
    %5946 = vmatpush1.bf16.msra.mxu0 %v1930
    %5947 = vmatprep.subr.bf16.mxu0 %v1940
    %5948 = vmatpush1.bf16.msra.mxu0 %v1939
    %5949 = vmatprep.subr.bf16.mxu0 %v1949
    %5950 = vmatpush1.bf16.msra.mxu0 %v1948
    %5951 = vmatprep.subr.bf16.mxu0 %v1958
    %5952 = vmatpush1.bf16.msra.mxu0 %v1957
    %5953 = vmatprep.subr.bf16.mxu0 %v1967
    %5954 = vmatpush1.bf16.msra.mxu0 %v1966
    %5955 = vmatprep.subr.bf16.mxu0 %v1976
    %5956 = vmatpush1.bf16.msra.mxu0 %v1975
    %5957 = vmatprep.subr.bf16.mxu0 %v1985
    %5958 = vmatpush1.bf16.msra.mxu0 %v1984
    %5959 = vmatprep.subr.bf16.mxu0 %v1994
    %5960 = vmatpush1.bf16.msra.mxu0 %v1993
    %5961 = vmatprep.subr.bf16.mxu0 %v2003
    %5962 = vmatpush1.bf16.msra.mxu0 %v2002
    %5963 = vmatprep.subr.bf16.mxu0 %v2012
    %5964 = vmatpush1.bf16.msra.mxu0 %v2011
    %5965 = vmatprep.subr.bf16.mxu0 %v2021
    %5966 = vmatpush1.bf16.msra.mxu0 %v2020
    %5967 = vmatprep.subr.bf16.mxu0 %v2030
    %5968 = vmatpush1.bf16.msra.mxu0 %v2029
    %5969 = vmatprep.subr.bf16.mxu0 %v2039
    %5970 = vmatpush1.bf16.msra.mxu0 %v2038
    %5971 = vmatprep.subr.bf16.mxu0 %v2048
    %5972 = vmatpush1.bf16.msra.mxu0 %v2047
    %5973 = vmatprep.subr.bf16.mxu0 %v2057
    %5974 = vmatpush1.bf16.msra.mxu0 %v2056
    %5975 = vmatprep.subr.bf16.mxu0 %v2066
    %5976 = vmatpush1.bf16.msra.mxu0 %v2065
    %5977 = vmatprep.mubr.bf16.mxu0 %v5779
    %5978 = vmatmul.mubr.bf16.gmra.mrb[0].mxu0 %v5778
    %v5979 = vpop.f32.mrb[0].mxu0
    %v5980 = vadd.f32 %v1228, %v5979
    %v5981 = vpop.f32.mrb[0].mxu0
    %v5982 = vadd.f32 %v1232, %v5981
    %v5983 = vpop.f32.mrb[0].mxu0
    %v5984 = vpop.f32.mrb[0].mxu0
    %5985 = vdwg.mxu0
    %5986 = vmatprep.subr.bf16.mxu0 %v2075
    %5987 = vmatpush1.bf16.msra.mxu0 %v2074
    %5988 = vmatprep.subr.bf16.mxu0 %v2084
    %5989 = vmatpush1.bf16.msra.mxu0 %v2083
    %5990 = vmatprep.subr.bf16.mxu0 %v2093
    %5991 = vmatpush1.bf16.msra.mxu0 %v2092
    %5992 = vmatprep.subr.bf16.mxu0 %v2102
    %5993 = vmatpush1.bf16.msra.mxu0 %v2101
    %5994 = vmatprep.subr.bf16.mxu0 %v2111
    %5995 = vmatpush1.bf16.msra.mxu0 %v2110
    %5996 = vmatprep.subr.bf16.mxu0 %v2120
    %5997 = vmatpush1.bf16.msra.mxu0 %v2119
    %5998 = vmatprep.subr.bf16.mxu0 %v2129
    %5999 = vmatpush1.bf16.msra.mxu0 %v2128
    %6000 = vmatprep.subr.bf16.mxu0 %v2138
    %6001 = vmatpush1.bf16.msra.mxu0 %v2137
    %6002 = vmatprep.subr.bf16.mxu0 0
    %6003 = vmatpush1.bf16.msra.mxu0 0
    %6004 = vmatprep.subr.bf16.mxu0 0
    %6005 = vmatpush1.bf16.msra.mxu0 0
    %6006 = vmatprep.subr.bf16.mxu0 0
    %6007 = vmatpush1.bf16.msra.mxu0 0
    %6008 = vmatprep.subr.bf16.mxu0 0
    %6009 = vmatpush1.bf16.msra.mxu0 0
    %6010 = vmatprep.subr.bf16.mxu0 0
    %6011 = vmatpush1.bf16.msra.mxu0 0
    %6012 = vmatprep.subr.bf16.mxu0 0
    %6013 = vmatpush1.bf16.msra.mxu0 0
    %6014 = vmatprep.subr.bf16.mxu0 0
    %6015 = vmatpush1.bf16.msra.mxu0 0
    %6016 = vmatprep.subr.bf16.mxu0 0
    %6017 = vmatpush1.bf16.msra.mxu0 0
    %6018 = vmatprep.mubr.bf16.mxu0 0
    %6019 = vmatmul.mubr.bf16.gmra.mrb[0].mxu0 %v5780
    %v6020 = vpop.f32.mrb[0].mxu0
    %v6021 = vadd.f32 %v5980, %v6020
    %v6022 = vpop.f32.mrb[0].mxu0
    %v6023 = vadd.f32 %v5982, %v6022
    %v6024 = vpop.f32.mrb[0].mxu0
    %v6025 = vpop.f32.mrb[0].mxu0
    %6026 = vdwg.mxu0
    %6027 = vmatprep.subr.bf16.mxu0 %v1933
    %6028 = vmatpush1.bf16.msra.mxu0 %v1932
    %6029 = vmatprep.subr.bf16.mxu0 %v1942
    %6030 = vmatpush1.bf16.msra.mxu0 %v1941
    %6031 = vmatprep.subr.bf16.mxu0 %v1951
    %6032 = vmatpush1.bf16.msra.mxu0 %v1950
    %6033 = vmatprep.subr.bf16.mxu0 %v1960
    %6034 = vmatpush1.bf16.msra.mxu0 %v1959
    %6035 = vmatprep.subr.bf16.mxu0 %v1969
    %6036 = vmatpush1.bf16.msra.mxu0 %v1968
    %6037 = vmatprep.subr.bf16.mxu0 %v1978
    %6038 = vmatpush1.bf16.msra.mxu0 %v1977
    %6039 = vmatprep.subr.bf16.mxu0 %v1987
    %6040 = vmatpush1.bf16.msra.mxu0 %v1986
    %6041 = vmatprep.subr.bf16.mxu0 %v1996
    %6042 = vmatpush1.bf16.msra.mxu0 %v1995
    %6043 = vmatprep.subr.bf16.mxu0 %v2005
    %6044 = vmatpush1.bf16.msra.mxu0 %v2004
    %6045 = vmatprep.subr.bf16.mxu0 %v2014
    %6046 = vmatpush1.bf16.msra.mxu0 %v2013
    %6047 = vmatprep.subr.bf16.mxu0 %v2023
    %6048 = vmatpush1.bf16.msra.mxu0 %v2022
    %6049 = vmatprep.subr.bf16.mxu0 %v2032
    %6050 = vmatpush1.bf16.msra.mxu0 %v2031
    %6051 = vmatprep.subr.bf16.mxu0 %v2041
    %6052 = vmatpush1.bf16.msra.mxu0 %v2040
    %6053 = vmatprep.subr.bf16.mxu0 %v2050
    %6054 = vmatpush1.bf16.msra.mxu0 %v2049
    %6055 = vmatprep.subr.bf16.mxu0 %v2059
    %6056 = vmatpush1.bf16.msra.mxu0 %v2058
    %6057 = vmatprep.subr.bf16.mxu0 %v2068
    %6058 = vmatpush1.bf16.msra.mxu0 %v2067
    %6059 = vmatprep.mubr.bf16.mxu0 %v5779
    %6060 = vmatmul.mubr.bf16.gmra.mrb[0].mxu0 %v5778
    %v6061 = vpop.f32.mrb[0].mxu0
    %v6062 = vadd.f32 %v1236, %v6061
    %v6063 = vpop.f32.mrb[0].mxu0
    %v6064 = vadd.f32 %v1240, %v6063
    %v6065 = vpop.f32.mrb[0].mxu0
    %v6066 = vpop.f32.mrb[0].mxu0
    %6067 = vdwg.mxu0
    %6068 = vmatprep.subr.bf16.mxu0 %v2077
    %6069 = vmatpush1.bf16.msra.mxu0 %v2076
    %6070 = vmatprep.subr.bf16.mxu0 %v2086
    %6071 = vmatpush1.bf16.msra.mxu0 %v2085
    %6072 = vmatprep.subr.bf16.mxu0 %v2095
    %6073 = vmatpush1.bf16.msra.mxu0 %v2094
    %6074 = vmatprep.subr.bf16.mxu0 %v2104
    %6075 = vmatpush1.bf16.msra.mxu0 %v2103
    %6076 = vmatprep.subr.bf16.mxu0 %v2113
    %6077 = vmatpush1.bf16.msra.mxu0 %v2112
    %6078 = vmatprep.subr.bf16.mxu0 %v2122
    %6079 = vmatpush1.bf16.msra.mxu0 %v2121
    %6080 = vmatprep.subr.bf16.mxu0 %v2131
    %6081 = vmatpush1.bf16.msra.mxu0 %v2130
    %6082 = vmatprep.subr.bf16.mxu0 %v2140
    %6083 = vmatpush1.bf16.msra.mxu0 %v2139
    %6084 = vmatprep.subr.bf16.mxu0 0
    %6085 = vmatpush1.bf16.msra.mxu0 0
    %6086 = vmatprep.subr.bf16.mxu0 0
    %6087 = vmatpush1.bf16.msra.mxu0 0
    %6088 = vmatprep.subr.bf16.mxu0 0
    %6089 = vmatpush1.bf16.msra.mxu0 0
    %6090 = vmatprep.subr.bf16.mxu0 0
    %6091 = vmatpush1.bf16.msra.mxu0 0
    %6092 = vmatprep.subr.bf16.mxu0 0
    %6093 = vmatpush1.bf16.msra.mxu0 0
    %6094 = vmatprep.subr.bf16.mxu0 0
    %6095 = vmatpush1.bf16.msra.mxu0 0
    %6096 = vmatprep.subr.bf16.mxu0 0
    %6097 = vmatpush1.bf16.msra.mxu0 0
    %6098 = vmatprep.subr.bf16.mxu0 0
    %6099 = vmatpush1.bf16.msra.mxu0 0
    %6100 = vmatprep.mubr.bf16.mxu0 0
    %6101 = vmatmul.mubr.bf16.gmra.mrb[0].mxu0 %v5780
    %v6102 = vpop.f32.mrb[0].mxu0
    %v6103 = vadd.f32 %v6062, %v6102
    %v6104 = vpop.f32.mrb[0].mxu0
    %v6105 = vadd.f32 %v6064, %v6104
    %v6106 = vpop.f32.mrb[0].mxu0
    %v6107 = vpop.f32.mrb[0].mxu0
    %6108 = vdwg.mxu0
    %6109 = vmatprep.subr.bf16.mxu0 0
    %6110 = vmatpush1.bf16.msra.mxu0 %v1934
    %6111 = vmatprep.subr.bf16.mxu0 0
    %6112 = vmatpush1.bf16.msra.mxu0 %v1943
    %6113 = vmatprep.subr.bf16.mxu0 0
    %6114 = vmatpush1.bf16.msra.mxu0 %v1952
    %6115 = vmatprep.subr.bf16.mxu0 0
    %6116 = vmatpush1.bf16.msra.mxu0 %v1961
    %6117 = vmatprep.subr.bf16.mxu0 0
    %6118 = vmatpush1.bf16.msra.mxu0 %v1970
    %6119 = vmatprep.subr.bf16.mxu0 0
    %6120 = vmatpush1.bf16.msra.mxu0 %v1979
    %6121 = vmatprep.subr.bf16.mxu0 0
    %6122 = vmatpush1.bf16.msra.mxu0 %v1988
    %6123 = vmatprep.subr.bf16.mxu0 0
    %6124 = vmatpush1.bf16.msra.mxu0 %v1997
    %6125 = vmatprep.subr.bf16.mxu0 0
    %6126 = vmatpush1.bf16.msra.mxu0 %v2006
    %6127 = vmatprep.subr.bf16.mxu0 0
    %6128 = vmatpush1.bf16.msra.mxu0 %v2015
    %6129 = vmatprep.subr.bf16.mxu0 0
    %6130 = vmatpush1.bf16.msra.mxu0 %v2024
    %6131 = vmatprep.subr.bf16.mxu0 0
    %6132 = vmatpush1.bf16.msra.mxu0 %v2033
    %6133 = vmatprep.subr.bf16.mxu0 0
    %6134 = vmatpush1.bf16.msra.mxu0 %v2042
    %6135 = vmatprep.subr.bf16.mxu0 0
    %6136 = vmatpush1.bf16.msra.mxu0 %v2051
    %6137 = vmatprep.subr.bf16.mxu0 0
    %6138 = vmatpush1.bf16.msra.mxu0 %v2060
    %6139 = vmatprep.subr.bf16.mxu0 0
    %6140 = vmatpush1.bf16.msra.mxu0 %v2069
    %6141 = vmatprep.mubr.bf16.mxu0 %v5779
    %6142 = vmatmul.mubr.bf16.gmra.mrb[0].mxu0 %v5778
    %v6143 = vpop.f32.mrb[0].mxu0
    %v6144 = vadd.f32 %v1244, %v6143
    %v6145 = vpop.f32.mrb[0].mxu0
    %v6146 = vpop.f32.mrb[0].mxu0
    %v6147 = vpop.f32.mrb[0].mxu0
    %6148 = vdwg.mxu0
    %6149 = vmatprep.subr.bf16.mxu0 0
    %6150 = vmatpush1.bf16.msra.mxu0 %v2078
    %6151 = vmatprep.subr.bf16.mxu0 0
    %6152 = vmatpush1.bf16.msra.mxu0 %v2087
    %6153 = vmatprep.subr.bf16.mxu0 0
    %6154 = vmatpush1.bf16.msra.mxu0 %v2096
    %6155 = vmatprep.subr.bf16.mxu0 0
    %6156 = vmatpush1.bf16.msra.mxu0 %v2105
    %6157 = vmatprep.subr.bf16.mxu0 0
    %6158 = vmatpush1.bf16.msra.mxu0 %v2114
    %6159 = vmatprep.subr.bf16.mxu0 0
    %6160 = vmatpush1.bf16.msra.mxu0 %v2123
    %6161 = vmatprep.subr.bf16.mxu0 0
    %6162 = vmatpush1.bf16.msra.mxu0 %v2132
    %6163 = vmatprep.subr.bf16.mxu0 0
    %6164 = vmatpush1.bf16.msra.mxu0 %v2141
    %6165 = vmatprep.subr.bf16.mxu0 0
    %6166 = vmatpush1.bf16.msra.mxu0 0
    %6167 = vmatprep.subr.bf16.mxu0 0
    %6168 = vmatpush1.bf16.msra.mxu0 0
    %6169 = vmatprep.subr.bf16.mxu0 0
    %6170 = vmatpush1.bf16.msra.mxu0 0
    %6171 = vmatprep.subr.bf16.mxu0 0
    %6172 = vmatpush1.bf16.msra.mxu0 0
    %6173 = vmatprep.subr.bf16.mxu0 0
    %6174 = vmatpush1.bf16.msra.mxu0 0
    %6175 = vmatprep.subr.bf16.mxu0 0
    %6176 = vmatpush1.bf16.msra.mxu0 0
    %6177 = vmatprep.subr.bf16.mxu0 0
    %6178 = vmatpush1.bf16.msra.mxu0 0
    %6179 = vmatprep.subr.bf16.mxu0 0
    %6180 = vmatpush1.bf16.msra.mxu0 0
    %6181 = vmatprep.mubr.bf16.mxu0 0
    %6182 = vmatmul.mubr.bf16.gmra.mrb[0].mxu0 %v5780
    %v6183 = vpop.f32.mrb[0].mxu0
    %v6184 = vadd.f32 %v6144, %v6183
    %v6185 = vpop.f32.mrb[0].mxu0
    %v6186 = vpop.f32.mrb[0].mxu0
    %v6187 = vpop.f32.mrb[0].mxu0
    %6188 = vdwg.mxu0
    %v6189 = vadd.f32 %v5769, %v5857
    %v6190 = vadd.f32 %v5770, %v5859
    %v6191 = vadd.f32 %v5771, %v5939
    %v6192 = vxor.u32 %v6189, 2147483648
    %v6193 = vxor.u32 %v6190, 2147483648
    %v6194 = vxor.u32 %v6191, 2147483648
    %v6195 = vmul.f32 %v6192, 1.442695
    %v6196 = vpow.pop %v6195
    %v6197 = vmul.f32 %v6193, 1.442695
    %v6198 = vpow.pop %v6197
    %v6199 = vmul.f32 %v6194, 1.442695
    %v6200 = vpow.pop %v6199
    %v6201 = vadd.f32 %v6196, 1.0
    %v6202 = vadd.f32 %v6198, 1.0
    %v6203 = vadd.f32 %v6200, 1.0
    %v6204 = vrcp.pop %v6201
    %v6205 = vmul.f32 1.0, %v6204
    %v6206 = vrcp.pop %v6202
    %v6207 = vmul.f32 1.0, %v6206
    %v6208 = vrcp.pop %v6203
    %v6209 = vmul.f32 1.0, %v6208
    %v6210 = vadd.f32 %v5772, %v5941
    %v6211 = vadd.f32 %v5773, %v6021
    %v6212 = vadd.f32 %v5774, %v6023
    %v6213 = vxor.u32 %v6210, 2147483648
    %v6214 = vxor.u32 %v6211, 2147483648
    %v6215 = vxor.u32 %v6212, 2147483648
    %v6216 = vmul.f32 %v6213, 1.442695
    %v6217 = vpow.pop %v6216
    %v6218 = vmul.f32 %v6214, 1.442695
    %v6219 = vpow.pop %v6218
    %v6220 = vmul.f32 %v6215, 1.442695
    %v6221 = vpow.pop %v6220
    %v6222 = vadd.f32 %v6217, 1.0
    %v6223 = vadd.f32 %v6219, 1.0
    %v6224 = vadd.f32 %v6221, 1.0
    %v6225 = vrcp.pop %v6222
    %v6226 = vmul.f32 1.0, %v6225
    %v6227 = vrcp.pop %v6223
    %v6228 = vmul.f32 1.0, %v6227
    %v6229 = vrcp.pop %v6224
    %v6230 = vmul.f32 1.0, %v6229
    %v6231 = vmul.f32 %v6205, %v6103
    %v6232 = vmul.f32 %v6207, %v6105
    %v6233 = vmul.f32 %v6209, %v6184
    %v6234 = vadd.f32 %v5775, %v6231
    %v6235 = vadd.f32 %v5776, %v6232
    %v6236 = vadd.f32 %v5777, %v6233
    %v6237 = vtanh.pop %v6234
    %v6238 = vtanh.pop %v6235
    %v6239 = vtanh.pop %v6236
    %v6240 = vsub.f32 1.0, %v6226
    %v6241 = vsub.f32 1.0, %v6228
    %v6242 = vsub.f32 1.0, %v6230
    %v6243 = vmul.f32 %v6240, %v6237
    %v6244 = vmul.f32 %v6241, %v6238
    %v6245 = vmul.f32 %v6242, %v6239
    %v6246 = vmul.f32 %v6226, %v5760
    %v6247 = vmul.f32 %v6228, %v5761
    %v6248 = vmul.f32 %v6230, %v5762
    %v6249 = vadd.f32 %v6243, %v6246
    %v6250 = vadd.f32 %v6244, %v6247
    %v6251 = vadd.f32 %v6245, %v6248
    %v6252 = vmul.f32 %v6249, %v57
    %v6253 = vmul.f32 %v6250, %v58
    %v6254 = vmul.f32 %v6251, %v59
    %6255 = vst [vmem:[#allocation3 + $0xa8] sm:$0xff] %v6252
    %6256 = vst [vmem:[#allocation3 + $0xb0] sm:$0xff] %v6253
    %6257 = vst [vmem:[#allocation3 + $0xb8] sm:$0xff] %v6254
    %v6258 = vld [vmem:[#allocation2 + $0x240] sm:$0xff]
    %v6259 = vld [vmem:[#allocation2 + $0x248] sm:$0xff]
    %v6260 = vld [vmem:[#allocation2 + $0x250] sm:$0xff]
    %v6261 = vld [vmem:[#allocation2 + $0x258] sm:$0xff]
    %v6262 = vld [vmem:[#allocation2 + $0x260] sm:$0xff]
    %v6263 = vld [vmem:[#allocation2 + $0x268] sm:$0xff]
    %v6264 = vld [vmem:[#allocation2 + $0x270] sm:$0xff]
    %v6265 = vld [vmem:[#allocation2 + $0x278] sm:$0xff]
    %v6266 = vld [vmem:[#allocation2 + $0x280] sm:$0xff]
    %v6267 = vpack.c.bf16 %v6249, %v6249
    %v6268 = vpack.c.bf16 %v6250, %v6250
    %v6269 = vpack.c.bf16 %v6251, %v6251
    %6270 = vmatprep.subr.bf16.mxu0 %v1927
    %6271 = vmatpush1.bf16.msra.mxu0 %v1926
    %6272 = vmatprep.subr.bf16.mxu0 %v1936
    %6273 = vmatpush1.bf16.msra.mxu0 %v1935
    %6274 = vmatprep.subr.bf16.mxu0 %v1945
    %6275 = vmatpush1.bf16.msra.mxu0 %v1944
    %6276 = vmatprep.subr.bf16.mxu0 %v1954
    %6277 = vmatpush1.bf16.msra.mxu0 %v1953
    %6278 = vmatprep.subr.bf16.mxu0 %v1963
    %6279 = vmatpush1.bf16.msra.mxu0 %v1962
    %6280 = vmatprep.subr.bf16.mxu0 %v1972
    %6281 = vmatpush1.bf16.msra.mxu0 %v1971
    %6282 = vmatprep.subr.bf16.mxu0 %v1981
    %6283 = vmatpush1.bf16.msra.mxu0 %v1980
    %6284 = vmatprep.subr.bf16.mxu0 %v1990
    %6285 = vmatpush1.bf16.msra.mxu0 %v1989
    %6286 = vmatprep.subr.bf16.mxu0 %v1999
    %6287 = vmatpush1.bf16.msra.mxu0 %v1998
    %6288 = vmatprep.subr.bf16.mxu0 %v2008
    %6289 = vmatpush1.bf16.msra.mxu0 %v2007
    %6290 = vmatprep.subr.bf16.mxu0 %v2017
    %6291 = vmatpush1.bf16.msra.mxu0 %v2016
    %6292 = vmatprep.subr.bf16.mxu0 %v2026
    %6293 = vmatpush1.bf16.msra.mxu0 %v2025
    %6294 = vmatprep.subr.bf16.mxu0 %v2035
    %6295 = vmatpush1.bf16.msra.mxu0 %v2034
    %6296 = vmatprep.subr.bf16.mxu0 %v2044
    %6297 = vmatpush1.bf16.msra.mxu0 %v2043
    %6298 = vmatprep.subr.bf16.mxu0 %v2053
    %6299 = vmatpush1.bf16.msra.mxu0 %v2052
    %6300 = vmatprep.subr.bf16.mxu0 %v2062
    %6301 = vmatpush1.bf16.msra.mxu0 %v2061
    %6302 = vmatprep.mubr.bf16.mxu0 %v6268
    %6303 = vmatmul.mubr.bf16.gmra.mrb[0].mxu0 %v6267
    %v6304 = vpop.f32.mrb[0].mxu0
    %v6305 = vadd.f32 %v1212, %v6304
    %v6306 = vpop.f32.mrb[0].mxu0
    %v6307 = vadd.f32 %v1216, %v6306
    %v6308 = vpop.f32.mrb[0].mxu0
    %v6309 = vpop.f32.mrb[0].mxu0
    %6310 = vdwg.mxu0
    %6311 = vmatprep.subr.bf16.mxu0 %v2071
    %6312 = vmatpush1.bf16.msra.mxu0 %v2070
    %6313 = vmatprep.subr.bf16.mxu0 %v2080
    %6314 = vmatpush1.bf16.msra.mxu0 %v2079
    %6315 = vmatprep.subr.bf16.mxu0 %v2089
    %6316 = vmatpush1.bf16.msra.mxu0 %v2088
    %6317 = vmatprep.subr.bf16.mxu0 %v2098
    %6318 = vmatpush1.bf16.msra.mxu0 %v2097
    %6319 = vmatprep.subr.bf16.mxu0 %v2107
    %6320 = vmatpush1.bf16.msra.mxu0 %v2106
    %6321 = vmatprep.subr.bf16.mxu0 %v2116
    %6322 = vmatpush1.bf16.msra.mxu0 %v2115
    %6323 = vmatprep.subr.bf16.mxu0 %v2125
    %6324 = vmatpush1.bf16.msra.mxu0 %v2124
    %6325 = vmatprep.subr.bf16.mxu0 %v2134
    %6326 = vmatpush1.bf16.msra.mxu0 %v2133
    %6327 = vmatprep.subr.bf16.mxu0 0
    %6328 = vmatpush1.bf16.msra.mxu0 0
    %6329 = vmatprep.subr.bf16.mxu0 0
    %6330 = vmatpush1.bf16.msra.mxu0 0
    %6331 = vmatprep.subr.bf16.mxu0 0
    %6332 = vmatpush1.bf16.msra.mxu0 0
    %6333 = vmatprep.subr.bf16.mxu0 0
    %6334 = vmatpush1.bf16.msra.mxu0 0
    %6335 = vmatprep.subr.bf16.mxu0 0
    %6336 = vmatpush1.bf16.msra.mxu0 0
    %6337 = vmatprep.subr.bf16.mxu0 0
    %6338 = vmatpush1.bf16.msra.mxu0 0
    %6339 = vmatprep.subr.bf16.mxu0 0
    %6340 = vmatpush1.bf16.msra.mxu0 0
    %6341 = vmatprep.subr.bf16.mxu0 0
    %6342 = vmatpush1.bf16.msra.mxu0 0
    %6343 = vmatprep.mubr.bf16.mxu0 0
    %6344 = vmatmul.mubr.bf16.gmra.mrb[0].mxu0 %v6269
    %v6345 = vpop.f32.mrb[0].mxu0
    %v6346 = vadd.f32 %v6305, %v6345
    %v6347 = vpop.f32.mrb[0].mxu0
    %v6348 = vadd.f32 %v6307, %v6347
    %v6349 = vpop.f32.mrb[0].mxu0
    %v6350 = vpop.f32.mrb[0].mxu0
    %6351 = vdwg.mxu0
    %6352 = vmatprep.subr.bf16.mxu0 %v1929
    %6353 = vmatpush1.bf16.msra.mxu0 %v1928
    %6354 = vmatprep.subr.bf16.mxu0 %v1938
    %6355 = vmatpush1.bf16.msra.mxu0 %v1937
    %6356 = vmatprep.subr.bf16.mxu0 %v1947
    %6357 = vmatpush1.bf16.msra.mxu0 %v1946
    %6358 = vmatprep.subr.bf16.mxu0 %v1956
    %6359 = vmatpush1.bf16.msra.mxu0 %v1955
    %6360 = vmatprep.subr.bf16.mxu0 %v1965
    %6361 = vmatpush1.bf16.msra.mxu0 %v1964
    %6362 = vmatprep.subr.bf16.mxu0 %v1974
    %6363 = vmatpush1.bf16.msra.mxu0 %v1973
    %6364 = vmatprep.subr.bf16.mxu0 %v1983
    %6365 = vmatpush1.bf16.msra.mxu0 %v1982
    %6366 = vmatprep.subr.bf16.mxu0 %v1992
    %6367 = vmatpush1.bf16.msra.mxu0 %v1991
    %6368 = vmatprep.subr.bf16.mxu0 %v2001
    %6369 = vmatpush1.bf16.msra.mxu0 %v2000
    %6370 = vmatprep.subr.bf16.mxu0 %v2010
    %6371 = vmatpush1.bf16.msra.mxu0 %v2009
    %6372 = vmatprep.subr.bf16.mxu0 %v2019
    %6373 = vmatpush1.bf16.msra.mxu0 %v2018
    %6374 = vmatprep.subr.bf16.mxu0 %v2028
    %6375 = vmatpush1.bf16.msra.mxu0 %v2027
    %6376 = vmatprep.subr.bf16.mxu0 %v2037
    %6377 = vmatpush1.bf16.msra.mxu0 %v2036
    %6378 = vmatprep.subr.bf16.mxu0 %v2046
    %6379 = vmatpush1.bf16.msra.mxu0 %v2045
    %6380 = vmatprep.subr.bf16.mxu0 %v2055
    %6381 = vmatpush1.bf16.msra.mxu0 %v2054
    %6382 = vmatprep.subr.bf16.mxu0 %v2064
    %6383 = vmatpush1.bf16.msra.mxu0 %v2063
    %6384 = vmatprep.mubr.bf16.mxu0 %v6268
    %6385 = vmatmul.mubr.bf16.gmra.mrb[0].mxu0 %v6267
    %v6386 = vpop.f32.mrb[0].mxu0
    %v6387 = vadd.f32 %v1220, %v6386
    %v6388 = vpop.f32.mrb[0].mxu0
    %v6389 = vadd.f32 %v1224, %v6388
    %v6390 = vpop.f32.mrb[0].mxu0
    %v6391 = vpop.f32.mrb[0].mxu0
    %6392 = vdwg.mxu0
    %6393 = vmatprep.subr.bf16.mxu0 %v2073
    %6394 = vmatpush1.bf16.msra.mxu0 %v2072
    %6395 = vmatprep.subr.bf16.mxu0 %v2082
    %6396 = vmatpush1.bf16.msra.mxu0 %v2081
    %6397 = vmatprep.subr.bf16.mxu0 %v2091
    %6398 = vmatpush1.bf16.msra.mxu0 %v2090
    %6399 = vmatprep.subr.bf16.mxu0 %v2100
    %6400 = vmatpush1.bf16.msra.mxu0 %v2099
    %6401 = vmatprep.subr.bf16.mxu0 %v2109
    %6402 = vmatpush1.bf16.msra.mxu0 %v2108
    %6403 = vmatprep.subr.bf16.mxu0 %v2118
    %6404 = vmatpush1.bf16.msra.mxu0 %v2117
    %6405 = vmatprep.subr.bf16.mxu0 %v2127
    %6406 = vmatpush1.bf16.msra.mxu0 %v2126
    %6407 = vmatprep.subr.bf16.mxu0 %v2136
    %6408 = vmatpush1.bf16.msra.mxu0 %v2135
    %6409 = vmatprep.subr.bf16.mxu0 0
    %6410 = vmatpush1.bf16.msra.mxu0 0
    %6411 = vmatprep.subr.bf16.mxu0 0
    %6412 = vmatpush1.bf16.msra.mxu0 0
    %6413 = vmatprep.subr.bf16.mxu0 0
    %6414 = vmatpush1.bf16.msra.mxu0 0
    %6415 = vmatprep.subr.bf16.mxu0 0
    %6416 = vmatpush1.bf16.msra.mxu0 0
    %6417 = vmatprep.subr.bf16.mxu0 0
    %6418 = vmatpush1.bf16.msra.mxu0 0
    %6419 = vmatprep.subr.bf16.mxu0 0
    %6420 = vmatpush1.bf16.msra.mxu0 0
    %6421 = vmatprep.subr.bf16.mxu0 0
    %6422 = vmatpush1.bf16.msra.mxu0 0
    %6423 = vmatprep.subr.bf16.mxu0 0
    %6424 = vmatpush1.bf16.msra.mxu0 0
    %6425 = vmatprep.mubr.bf16.mxu0 0
    %6426 = vmatmul.mubr.bf16.gmra.mrb[0].mxu0 %v6269
    %v6427 = vpop.f32.mrb[0].mxu0
    %v6428 = vadd.f32 %v6387, %v6427
    %v6429 = vpop.f32.mrb[0].mxu0
    %v6430 = vadd.f32 %v6389, %v6429
    %v6431 = vpop.f32.mrb[0].mxu0
    %v6432 = vpop.f32.mrb[0].mxu0
    %6433 = vdwg.mxu0
    %6434 = vmatprep.subr.bf16.mxu0 %v1931
    %6435 = vmatpush1.bf16.msra.mxu0 %v1930
    %6436 = vmatprep.subr.bf16.mxu0 %v1940
    %6437 = vmatpush1.bf16.msra.mxu0 %v1939
    %6438 = vmatprep.subr.bf16.mxu0 %v1949
    %6439 = vmatpush1.bf16.msra.mxu0 %v1948
    %6440 = vmatprep.subr.bf16.mxu0 %v1958
    %6441 = vmatpush1.bf16.msra.mxu0 %v1957
    %6442 = vmatprep.subr.bf16.mxu0 %v1967
    %6443 = vmatpush1.bf16.msra.mxu0 %v1966
    %6444 = vmatprep.subr.bf16.mxu0 %v1976
    %6445 = vmatpush1.bf16.msra.mxu0 %v1975
    %6446 = vmatprep.subr.bf16.mxu0 %v1985
    %6447 = vmatpush1.bf16.msra.mxu0 %v1984
    %6448 = vmatprep.subr.bf16.mxu0 %v1994
    %6449 = vmatpush1.bf16.msra.mxu0 %v1993
    %6450 = vmatprep.subr.bf16.mxu0 %v2003
    %6451 = vmatpush1.bf16.msra.mxu0 %v2002
    %6452 = vmatprep.subr.bf16.mxu0 %v2012
    %6453 = vmatpush1.bf16.msra.mxu0 %v2011
    %6454 = vmatprep.subr.bf16.mxu0 %v2021
    %6455 = vmatpush1.bf16.msra.mxu0 %v2020
    %6456 = vmatprep.subr.bf16.mxu0 %v2030
    %6457 = vmatpush1.bf16.msra.mxu0 %v2029
    %6458 = vmatprep.subr.bf16.mxu0 %v2039
    %6459 = vmatpush1.bf16.msra.mxu0 %v2038
    %6460 = vmatprep.subr.bf16.mxu0 %v2048
    %6461 = vmatpush1.bf16.msra.mxu0 %v2047
    %6462 = vmatprep.subr.bf16.mxu0 %v2057
    %6463 = vmatpush1.bf16.msra.mxu0 %v2056
    %6464 = vmatprep.subr.bf16.mxu0 %v2066
    %6465 = vmatpush1.bf16.msra.mxu0 %v2065
    %6466 = vmatprep.mubr.bf16.mxu0 %v6268
    %6467 = vmatmul.mubr.bf16.gmra.mrb[0].mxu0 %v6267
    %v6468 = vpop.f32.mrb[0].mxu0
    %v6469 = vadd.f32 %v1228, %v6468
    %v6470 = vpop.f32.mrb[0].mxu0
    %v6471 = vadd.f32 %v1232, %v6470
    %v6472 = vpop.f32.mrb[0].mxu0
    %v6473 = vpop.f32.mrb[0].mxu0
    %6474 = vdwg.mxu0
    %6475 = vmatprep.subr.bf16.mxu0 %v2075
    %6476 = vmatpush1.bf16.msra.mxu0 %v2074
    %6477 = vmatprep.subr.bf16.mxu0 %v2084
    %6478 = vmatpush1.bf16.msra.mxu0 %v2083
    %6479 = vmatprep.subr.bf16.mxu0 %v2093
    %6480 = vmatpush1.bf16.msra.mxu0 %v2092
    %6481 = vmatprep.subr.bf16.mxu0 %v2102
    %6482 = vmatpush1.bf16.msra.mxu0 %v2101
    %6483 = vmatprep.subr.bf16.mxu0 %v2111
    %6484 = vmatpush1.bf16.msra.mxu0 %v2110
    %6485 = vmatprep.subr.bf16.mxu0 %v2120
    %6486 = vmatpush1.bf16.msra.mxu0 %v2119
    %6487 = vmatprep.subr.bf16.mxu0 %v2129
    %6488 = vmatpush1.bf16.msra.mxu0 %v2128
    %6489 = vmatprep.subr.bf16.mxu0 %v2138
    %6490 = vmatpush1.bf16.msra.mxu0 %v2137
    %6491 = vmatprep.subr.bf16.mxu0 0
    %6492 = vmatpush1.bf16.msra.mxu0 0
    %6493 = vmatprep.subr.bf16.mxu0 0
    %6494 = vmatpush1.bf16.msra.mxu0 0
    %6495 = vmatprep.subr.bf16.mxu0 0
    %6496 = vmatpush1.bf16.msra.mxu0 0
    %6497 = vmatprep.subr.bf16.mxu0 0
    %6498 = vmatpush1.bf16.msra.mxu0 0
    %6499 = vmatprep.subr.bf16.mxu0 0
    %6500 = vmatpush1.bf16.msra.mxu0 0
    %6501 = vmatprep.subr.bf16.mxu0 0
    %6502 = vmatpush1.bf16.msra.mxu0 0
    %6503 = vmatprep.subr.bf16.mxu0 0
    %6504 = vmatpush1.bf16.msra.mxu0 0
    %6505 = vmatprep.subr.bf16.mxu0 0
    %6506 = vmatpush1.bf16.msra.mxu0 0
    %6507 = vmatprep.mubr.bf16.mxu0 0
    %6508 = vmatmul.mubr.bf16.gmra.mrb[0].mxu0 %v6269
    %v6509 = vpop.f32.mrb[0].mxu0
    %v6510 = vadd.f32 %v6469, %v6509
    %v6511 = vpop.f32.mrb[0].mxu0
    %v6512 = vadd.f32 %v6471, %v6511
    %v6513 = vpop.f32.mrb[0].mxu0
    %v6514 = vpop.f32.mrb[0].mxu0
    %6515 = vdwg.mxu0
    %6516 = vmatprep.subr.bf16.mxu0 %v1933
    %6517 = vmatpush1.bf16.msra.mxu0 %v1932
    %6518 = vmatprep.subr.bf16.mxu0 %v1942
    %6519 = vmatpush1.bf16.msra.mxu0 %v1941
    %6520 = vmatprep.subr.bf16.mxu0 %v1951
    %6521 = vmatpush1.bf16.msra.mxu0 %v1950
    %6522 = vmatprep.subr.bf16.mxu0 %v1960
    %6523 = vmatpush1.bf16.msra.mxu0 %v1959
    %6524 = vmatprep.subr.bf16.mxu0 %v1969
    %6525 = vmatpush1.bf16.msra.mxu0 %v1968
    %6526 = vmatprep.subr.bf16.mxu0 %v1978
    %6527 = vmatpush1.bf16.msra.mxu0 %v1977
    %6528 = vmatprep.subr.bf16.mxu0 %v1987
    %6529 = vmatpush1.bf16.msra.mxu0 %v1986
    %6530 = vmatprep.subr.bf16.mxu0 %v1996
    %6531 = vmatpush1.bf16.msra.mxu0 %v1995
    %6532 = vmatprep.subr.bf16.mxu0 %v2005
    %6533 = vmatpush1.bf16.msra.mxu0 %v2004
    %6534 = vmatprep.subr.bf16.mxu0 %v2014
    %6535 = vmatpush1.bf16.msra.mxu0 %v2013
    %6536 = vmatprep.subr.bf16.mxu0 %v2023
    %6537 = vmatpush1.bf16.msra.mxu0 %v2022
    %6538 = vmatprep.subr.bf16.mxu0 %v2032
    %6539 = vmatpush1.bf16.msra.mxu0 %v2031
    %6540 = vmatprep.subr.bf16.mxu0 %v2041
    %6541 = vmatpush1.bf16.msra.mxu0 %v2040
    %6542 = vmatprep.subr.bf16.mxu0 %v2050
    %6543 = vmatpush1.bf16.msra.mxu0 %v2049
    %6544 = vmatprep.subr.bf16.mxu0 %v2059
    %6545 = vmatpush1.bf16.msra.mxu0 %v2058
    %6546 = vmatprep.subr.bf16.mxu0 %v2068
    %6547 = vmatpush1.bf16.msra.mxu0 %v2067
    %6548 = vmatprep.mubr.bf16.mxu0 %v6268
    %6549 = vmatmul.mubr.bf16.gmra.mrb[0].mxu0 %v6267
    %v6550 = vpop.f32.mrb[0].mxu0
    %v6551 = vadd.f32 %v1236, %v6550
    %v6552 = vpop.f32.mrb[0].mxu0
    %v6553 = vadd.f32 %v1240, %v6552
    %v6554 = vpop.f32.mrb[0].mxu0
    %v6555 = vpop.f32.mrb[0].mxu0
    %6556 = vdwg.mxu0
    %6557 = vmatprep.subr.bf16.mxu0 %v2077
    %6558 = vmatpush1.bf16.msra.mxu0 %v2076
    %6559 = vmatprep.subr.bf16.mxu0 %v2086
    %6560 = vmatpush1.bf16.msra.mxu0 %v2085
    %6561 = vmatprep.subr.bf16.mxu0 %v2095
    %6562 = vmatpush1.bf16.msra.mxu0 %v2094
    %6563 = vmatprep.subr.bf16.mxu0 %v2104
    %6564 = vmatpush1.bf16.msra.mxu0 %v2103
    %6565 = vmatprep.subr.bf16.mxu0 %v2113
    %6566 = vmatpush1.bf16.msra.mxu0 %v2112
    %6567 = vmatprep.subr.bf16.mxu0 %v2122
    %6568 = vmatpush1.bf16.msra.mxu0 %v2121
    %6569 = vmatprep.subr.bf16.mxu0 %v2131
    %6570 = vmatpush1.bf16.msra.mxu0 %v2130
    %6571 = vmatprep.subr.bf16.mxu0 %v2140
    %6572 = vmatpush1.bf16.msra.mxu0 %v2139
    %6573 = vmatprep.subr.bf16.mxu0 0
    %6574 = vmatpush1.bf16.msra.mxu0 0
    %6575 = vmatprep.subr.bf16.mxu0 0
    %6576 = vmatpush1.bf16.msra.mxu0 0
    %6577 = vmatprep.subr.bf16.mxu0 0
    %6578 = vmatpush1.bf16.msra.mxu0 0
    %6579 = vmatprep.subr.bf16.mxu0 0
    %6580 = vmatpush1.bf16.msra.mxu0 0
    %6581 = vmatprep.subr.bf16.mxu0 0
    %6582 = vmatpush1.bf16.msra.mxu0 0
    %6583 = vmatprep.subr.bf16.mxu0 0
    %6584 = vmatpush1.bf16.msra.mxu0 0
    %6585 = vmatprep.subr.bf16.mxu0 0
    %6586 = vmatpush1.bf16.msra.mxu0 0
    %6587 = vmatprep.subr.bf16.mxu0 0
    %6588 = vmatpush1.bf16.msra.mxu0 0
    %6589 = vmatprep.mubr.bf16.mxu0 0
    %6590 = vmatmul.mubr.bf16.gmra.mrb[0].mxu0 %v6269
    %v6591 = vpop.f32.mrb[0].mxu0
    %v6592 = vadd.f32 %v6551, %v6591
    %v6593 = vpop.f32.mrb[0].mxu0
    %v6594 = vadd.f32 %v6553, %v6593
    %v6595 = vpop.f32.mrb[0].mxu0
    %v6596 = vpop.f32.mrb[0].mxu0
    %6597 = vdwg.mxu0
    %6598 = vmatprep.subr.bf16.mxu0 0
    %6599 = vmatpush1.bf16.msra.mxu0 %v1934
    %6600 = vmatprep.subr.bf16.mxu0 0
    %6601 = vmatpush1.bf16.msra.mxu0 %v1943
    %6602 = vmatprep.subr.bf16.mxu0 0
    %6603 = vmatpush1.bf16.msra.mxu0 %v1952
    %6604 = vmatprep.subr.bf16.mxu0 0
    %6605 = vmatpush1.bf16.msra.mxu0 %v1961
    %6606 = vmatprep.subr.bf16.mxu0 0
    %6607 = vmatpush1.bf16.msra.mxu0 %v1970
    %6608 = vmatprep.subr.bf16.mxu0 0
    %6609 = vmatpush1.bf16.msra.mxu0 %v1979
    %6610 = vmatprep.subr.bf16.mxu0 0
    %6611 = vmatpush1.bf16.msra.mxu0 %v1988
    %6612 = vmatprep.subr.bf16.mxu0 0
    %6613 = vmatpush1.bf16.msra.mxu0 %v1997
    %6614 = vmatprep.subr.bf16.mxu0 0
    %6615 = vmatpush1.bf16.msra.mxu0 %v2006
    %6616 = vmatprep.subr.bf16.mxu0 0
    %6617 = vmatpush1.bf16.msra.mxu0 %v2015
    %6618 = vmatprep.subr.bf16.mxu0 0
    %6619 = vmatpush1.bf16.msra.mxu0 %v2024
    %6620 = vmatprep.subr.bf16.mxu0 0
    %6621 = vmatpush1.bf16.msra.mxu0 %v2033
    %6622 = vmatprep.subr.bf16.mxu0 0
    %6623 = vmatpush1.bf16.msra.mxu0 %v2042
    %6624 = vmatprep.subr.bf16.mxu0 0
    %6625 = vmatpush1.bf16.msra.mxu0 %v2051
    %6626 = vmatprep.subr.bf16.mxu0 0
    %6627 = vmatpush1.bf16.msra.mxu0 %v2060
    %6628 = vmatprep.subr.bf16.mxu0 0
    %6629 = vmatpush1.bf16.msra.mxu0 %v2069
    %6630 = vmatprep.mubr.bf16.mxu0 %v6268
    %6631 = vmatmul.mubr.bf16.gmra.mrb[0].mxu0 %v6267
    %v6632 = vpop.f32.mrb[0].mxu0
    %v6633 = vadd.f32 %v1244, %v6632
    %v6634 = vpop.f32.mrb[0].mxu0
    %v6635 = vpop.f32.mrb[0].mxu0
    %v6636 = vpop.f32.mrb[0].mxu0
    %6637 = vdwg.mxu0
    %6638 = vmatprep.subr.bf16.mxu0 0
    %6639 = vmatpush1.bf16.msra.mxu0 %v2078
    %6640 = vmatprep.subr.bf16.mxu0 0
    %6641 = vmatpush1.bf16.msra.mxu0 %v2087
    %6642 = vmatprep.subr.bf16.mxu0 0
    %6643 = vmatpush1.bf16.msra.mxu0 %v2096
    %6644 = vmatprep.subr.bf16.mxu0 0
    %6645 = vmatpush1.bf16.msra.mxu0 %v2105
    %6646 = vmatprep.subr.bf16.mxu0 0
    %6647 = vmatpush1.bf16.msra.mxu0 %v2114
    %6648 = vmatprep.subr.bf16.mxu0 0
    %6649 = vmatpush1.bf16.msra.mxu0 %v2123
    %6650 = vmatprep.subr.bf16.mxu0 0
    %6651 = vmatpush1.bf16.msra.mxu0 %v2132
    %6652 = vmatprep.subr.bf16.mxu0 0
    %6653 = vmatpush1.bf16.msra.mxu0 %v2141
    %6654 = vmatprep.subr.bf16.mxu0 0
    %6655 = vmatpush1.bf16.msra.mxu0 0
    %6656 = vmatprep.subr.bf16.mxu0 0
    %6657 = vmatpush1.bf16.msra.mxu0 0
    %6658 = vmatprep.subr.bf16.mxu0 0
    %6659 = vmatpush1.bf16.msra.mxu0 0
    %6660 = vmatprep.subr.bf16.mxu0 0
    %6661 = vmatpush1.bf16.msra.mxu0 0
    %6662 = vmatprep.subr.bf16.mxu0 0
    %6663 = vmatpush1.bf16.msra.mxu0 0
    %6664 = vmatprep.subr.bf16.mxu0 0
    %6665 = vmatpush1.bf16.msra.mxu0 0
    %6666 = vmatprep.subr.bf16.mxu0 0
    %6667 = vmatpush1.bf16.msra.mxu0 0
    %6668 = vmatprep.subr.bf16.mxu0 0
    %6669 = vmatpush1.bf16.msra.mxu0 0
    %6670 = vmatprep.mubr.bf16.mxu0 0
    %6671 = vmatmul.mubr.bf16.gmra.mrb[0].mxu0 %v6269
    %v6672 = vpop.f32.mrb[0].mxu0
    %v6673 = vadd.f32 %v6633, %v6672
    %v6674 = vpop.f32.mrb[0].mxu0
    %v6675 = vpop.f32.mrb[0].mxu0
    %v6676 = vpop.f32.mrb[0].mxu0
    %6677 = vdwg.mxu0
    %v6678 = vadd.f32 %v6258, %v6346
    %v6679 = vadd.f32 %v6259, %v6348
    %v6680 = vadd.f32 %v6260, %v6428
    %v6681 = vxor.u32 %v6678, 2147483648
    %v6682 = vxor.u32 %v6679, 2147483648
    %v6683 = vxor.u32 %v6680, 2147483648
    %v6684 = vmul.f32 %v6681, 1.442695
    %v6685 = vpow.pop %v6684
    %v6686 = vmul.f32 %v6682, 1.442695
    %v6687 = vpow.pop %v6686
    %v6688 = vmul.f32 %v6683, 1.442695
    %v6689 = vpow.pop %v6688
    %v6690 = vadd.f32 %v6685, 1.0
    %v6691 = vadd.f32 %v6687, 1.0
    %v6692 = vadd.f32 %v6689, 1.0
    %v6693 = vrcp.pop %v6690
    %v6694 = vmul.f32 1.0, %v6693
    %v6695 = vrcp.pop %v6691
    %v6696 = vmul.f32 1.0, %v6695
    %v6697 = vrcp.pop %v6692
    %v6698 = vmul.f32 1.0, %v6697
    %v6699 = vadd.f32 %v6261, %v6430
    %v6700 = vadd.f32 %v6262, %v6510
    %v6701 = vadd.f32 %v6263, %v6512
    %v6702 = vxor.u32 %v6699, 2147483648
    %v6703 = vxor.u32 %v6700, 2147483648
    %v6704 = vxor.u32 %v6701, 2147483648
    %v6705 = vmul.f32 %v6702, 1.442695
    %v6706 = vpow.pop %v6705
    %v6707 = vmul.f32 %v6703, 1.442695
    %v6708 = vpow.pop %v6707
    %v6709 = vmul.f32 %v6704, 1.442695
    %v6710 = vpow.pop %v6709
    %v6711 = vadd.f32 %v6706, 1.0
    %v6712 = vadd.f32 %v6708, 1.0
    %v6713 = vadd.f32 %v6710, 1.0
    %v6714 = vrcp.pop %v6711
    %v6715 = vmul.f32 1.0, %v6714
    %v6716 = vrcp.pop %v6712
    %v6717 = vmul.f32 1.0, %v6716
    %v6718 = vrcp.pop %v6713
    %v6719 = vmul.f32 1.0, %v6718
    %v6720 = vmul.f32 %v6694, %v6592
    %v6721 = vmul.f32 %v6696, %v6594
    %v6722 = vmul.f32 %v6698, %v6673
    %v6723 = vadd.f32 %v6264, %v6720
    %v6724 = vadd.f32 %v6265, %v6721
    %v6725 = vadd.f32 %v6266, %v6722
    %v6726 = vtanh.pop %v6723
    %v6727 = vtanh.pop %v6724
    %v6728 = vtanh.pop %v6725
    %v6729 = vsub.f32 1.0, %v6715
    %v6730 = vsub.f32 1.0, %v6717
    %v6731 = vsub.f32 1.0, %v6719
    %v6732 = vmul.f32 %v6729, %v6726
    %v6733 = vmul.f32 %v6730, %v6727
    %v6734 = vmul.f32 %v6731, %v6728
    %v6735 = vmul.f32 %v6715, %v6249
    %v6736 = vmul.f32 %v6717, %v6250
    %v6737 = vmul.f32 %v6719, %v6251
    %v6738 = vadd.f32 %v6732, %v6735
    %v6739 = vadd.f32 %v6733, %v6736
    %v6740 = vadd.f32 %v6734, %v6737
    %v6741 = vmul.f32 %v6738, %v57
    %v6742 = vmul.f32 %v6739, %v58
    %v6743 = vmul.f32 %v6740, %v59
    %6744 = vst [vmem:[#allocation3 + $0xc0] sm:$0xff] %v6741
    %6745 = vst [vmem:[#allocation3 + $0xc8] sm:$0xff] %v6742
    %6746 = vst [vmem:[#allocation3 + $0xd0] sm:$0xff] %v6743
    %v6747 = vld [vmem:[#allocation2 + $0x288] sm:$0xff]
    %v6748 = vld [vmem:[#allocation2 + $0x290] sm:$0xff]
    %v6749 = vld [vmem:[#allocation2 + $0x298] sm:$0xff]
    %v6750 = vld [vmem:[#allocation2 + $0x2a0] sm:$0xff]
    %v6751 = vld [vmem:[#allocation2 + $0x2a8] sm:$0xff]
    %v6752 = vld [vmem:[#allocation2 + $0x2b0] sm:$0xff]
    %v6753 = vld [vmem:[#allocation2 + $0x2b8] sm:$0xff]
    %v6754 = vld [vmem:[#allocation2 + $0x2c0] sm:$0xff]
    %v6755 = vld [vmem:[#allocation2 + $0x2c8] sm:$0xff]
    %v6756 = vpack.c.bf16 %v6738, %v6738
    %v6757 = vpack.c.bf16 %v6739, %v6739
    %v6758 = vpack.c.bf16 %v6740, %v6740
    %6759 = vmatprep.subr.bf16.mxu0 %v1927
    %6760 = vmatpush1.bf16.msra.mxu0 %v1926
    %6761 = vmatprep.subr.bf16.mxu0 %v1936
    %6762 = vmatpush1.bf16.msra.mxu0 %v1935
    %6763 = vmatprep.subr.bf16.mxu0 %v1945
    %6764 = vmatpush1.bf16.msra.mxu0 %v1944
    %6765 = vmatprep.subr.bf16.mxu0 %v1954
    %6766 = vmatpush1.bf16.msra.mxu0 %v1953
    %6767 = vmatprep.subr.bf16.mxu0 %v1963
    %6768 = vmatpush1.bf16.msra.mxu0 %v1962
    %6769 = vmatprep.subr.bf16.mxu0 %v1972
    %6770 = vmatpush1.bf16.msra.mxu0 %v1971
    %6771 = vmatprep.subr.bf16.mxu0 %v1981
    %6772 = vmatpush1.bf16.msra.mxu0 %v1980
    %6773 = vmatprep.subr.bf16.mxu0 %v1990
    %6774 = vmatpush1.bf16.msra.mxu0 %v1989
    %6775 = vmatprep.subr.bf16.mxu0 %v1999
    %6776 = vmatpush1.bf16.msra.mxu0 %v1998
    %6777 = vmatprep.subr.bf16.mxu0 %v2008
    %6778 = vmatpush1.bf16.msra.mxu0 %v2007
    %6779 = vmatprep.subr.bf16.mxu0 %v2017
    %6780 = vmatpush1.bf16.msra.mxu0 %v2016
    %6781 = vmatprep.subr.bf16.mxu0 %v2026
    %6782 = vmatpush1.bf16.msra.mxu0 %v2025
    %6783 = vmatprep.subr.bf16.mxu0 %v2035
    %6784 = vmatpush1.bf16.msra.mxu0 %v2034
    %6785 = vmatprep.subr.bf16.mxu0 %v2044
    %6786 = vmatpush1.bf16.msra.mxu0 %v2043
    %6787 = vmatprep.subr.bf16.mxu0 %v2053
    %6788 = vmatpush1.bf16.msra.mxu0 %v2052
    %6789 = vmatprep.subr.bf16.mxu0 %v2062
    %6790 = vmatpush1.bf16.msra.mxu0 %v2061
    %6791 = vmatprep.mubr.bf16.mxu0 %v6757
    %6792 = vmatmul.mubr.bf16.gmra.mrb[0].mxu0 %v6756
    %v6793 = vpop.f32.mrb[0].mxu0
    %v6794 = vadd.f32 %v1212, %v6793
    %v6795 = vpop.f32.mrb[0].mxu0
    %v6796 = vadd.f32 %v1216, %v6795
    %v6797 = vpop.f32.mrb[0].mxu0
    %v6798 = vpop.f32.mrb[0].mxu0
    %6799 = vdwg.mxu0
    %6800 = vmatprep.subr.bf16.mxu0 %v2071
    %6801 = vmatpush1.bf16.msra.mxu0 %v2070
    %6802 = vmatprep.subr.bf16.mxu0 %v2080
    %6803 = vmatpush1.bf16.msra.mxu0 %v2079
    %6804 = vmatprep.subr.bf16.mxu0 %v2089
    %6805 = vmatpush1.bf16.msra.mxu0 %v2088
    %6806 = vmatprep.subr.bf16.mxu0 %v2098
    %6807 = vmatpush1.bf16.msra.mxu0 %v2097
    %6808 = vmatprep.subr.bf16.mxu0 %v2107
    %6809 = vmatpush1.bf16.msra.mxu0 %v2106
    %6810 = vmatprep.subr.bf16.mxu0 %v2116
    %6811 = vmatpush1.bf16.msra.mxu0 %v2115
    %6812 = vmatprep.subr.bf16.mxu0 %v2125
    %6813 = vmatpush1.bf16.msra.mxu0 %v2124
    %6814 = vmatprep.subr.bf16.mxu0 %v2134
    %6815 = vmatpush1.bf16.msra.mxu0 %v2133
    %6816 = vmatprep.subr.bf16.mxu0 0
    %6817 = vmatpush1.bf16.msra.mxu0 0
    %6818 = vmatprep.subr.bf16.mxu0 0
    %6819 = vmatpush1.bf16.msra.mxu0 0
    %6820 = vmatprep.subr.bf16.mxu0 0
    %6821 = vmatpush1.bf16.msra.mxu0 0
    %6822 = vmatprep.subr.bf16.mxu0 0
    %6823 = vmatpush1.bf16.msra.mxu0 0
    %6824 = vmatprep.subr.bf16.mxu0 0
    %6825 = vmatpush1.bf16.msra.mxu0 0
    %6826 = vmatprep.subr.bf16.mxu0 0
    %6827 = vmatpush1.bf16.msra.mxu0 0
    %6828 = vmatprep.subr.bf16.mxu0 0
    %6829 = vmatpush1.bf16.msra.mxu0 0
    %6830 = vmatprep.subr.bf16.mxu0 0
    %6831 = vmatpush1.bf16.msra.mxu0 0
    %6832 = vmatprep.mubr.bf16.mxu0 0
    %6833 = vmatmul.mubr.bf16.gmra.mrb[0].mxu0 %v6758
    %v6834 = vpop.f32.mrb[0].mxu0
    %v6835 = vadd.f32 %v6794, %v6834
    %v6836 = vpop.f32.mrb[0].mxu0
    %v6837 = vadd.f32 %v6796, %v6836
    %v6838 = vpop.f32.mrb[0].mxu0
    %v6839 = vpop.f32.mrb[0].mxu0
    %6840 = vdwg.mxu0
    %6841 = vmatprep.subr.bf16.mxu0 %v1929
    %6842 = vmatpush1.bf16.msra.mxu0 %v1928
    %6843 = vmatprep.subr.bf16.mxu0 %v1938
    %6844 = vmatpush1.bf16.msra.mxu0 %v1937
    %6845 = vmatprep.subr.bf16.mxu0 %v1947
    %6846 = vmatpush1.bf16.msra.mxu0 %v1946
    %6847 = vmatprep.subr.bf16.mxu0 %v1956
    %6848 = vmatpush1.bf16.msra.mxu0 %v1955
    %6849 = vmatprep.subr.bf16.mxu0 %v1965
    %6850 = vmatpush1.bf16.msra.mxu0 %v1964
    %6851 = vmatprep.subr.bf16.mxu0 %v1974
    %6852 = vmatpush1.bf16.msra.mxu0 %v1973
    %6853 = vmatprep.subr.bf16.mxu0 %v1983
    %6854 = vmatpush1.bf16.msra.mxu0 %v1982
    %6855 = vmatprep.subr.bf16.mxu0 %v1992
    %6856 = vmatpush1.bf16.msra.mxu0 %v1991
    %6857 = vmatprep.subr.bf16.mxu0 %v2001
    %6858 = vmatpush1.bf16.msra.mxu0 %v2000
    %6859 = vmatprep.subr.bf16.mxu0 %v2010
    %6860 = vmatpush1.bf16.msra.mxu0 %v2009
    %6861 = vmatprep.subr.bf16.mxu0 %v2019
    %6862 = vmatpush1.bf16.msra.mxu0 %v2018
    %6863 = vmatprep.subr.bf16.mxu0 %v2028
    %6864 = vmatpush1.bf16.msra.mxu0 %v2027
    %6865 = vmatprep.subr.bf16.mxu0 %v2037
    %6866 = vmatpush1.bf16.msra.mxu0 %v2036
    %6867 = vmatprep.subr.bf16.mxu0 %v2046
    %6868 = vmatpush1.bf16.msra.mxu0 %v2045
    %6869 = vmatprep.subr.bf16.mxu0 %v2055
    %6870 = vmatpush1.bf16.msra.mxu0 %v2054
    %6871 = vmatprep.subr.bf16.mxu0 %v2064
    %6872 = vmatpush1.bf16.msra.mxu0 %v2063
    %6873 = vmatprep.mubr.bf16.mxu0 %v6757
    %6874 = vmatmul.mubr.bf16.gmra.mrb[0].mxu0 %v6756
    %v6875 = vpop.f32.mrb[0].mxu0
    %v6876 = vadd.f32 %v1220, %v6875
    %v6877 = vpop.f32.mrb[0].mxu0
    %v6878 = vadd.f32 %v1224, %v6877
    %v6879 = vpop.f32.mrb[0].mxu0
    %v6880 = vpop.f32.mrb[0].mxu0
    %6881 = vdwg.mxu0
    %6882 = vmatprep.subr.bf16.mxu0 %v2073
    %6883 = vmatpush1.bf16.msra.mxu0 %v2072
    %6884 = vmatprep.subr.bf16.mxu0 %v2082
    %6885 = vmatpush1.bf16.msra.mxu0 %v2081
    %6886 = vmatprep.subr.bf16.mxu0 %v2091
    %6887 = vmatpush1.bf16.msra.mxu0 %v2090
    %6888 = vmatprep.subr.bf16.mxu0 %v2100
    %6889 = vmatpush1.bf16.msra.mxu0 %v2099
    %6890 = vmatprep.subr.bf16.mxu0 %v2109
    %6891 = vmatpush1.bf16.msra.mxu0 %v2108
    %6892 = vmatprep.subr.bf16.mxu0 %v2118
    %6893 = vmatpush1.bf16.msra.mxu0 %v2117
    %6894 = vmatprep.subr.bf16.mxu0 %v2127
    %6895 = vmatpush1.bf16.msra.mxu0 %v2126
    %6896 = vmatprep.subr.bf16.mxu0 %v2136
    %6897 = vmatpush1.bf16.msra.mxu0 %v2135
    %6898 = vmatprep.subr.bf16.mxu0 0
    %6899 = vmatpush1.bf16.msra.mxu0 0
    %6900 = vmatprep.subr.bf16.mxu0 0
    %6901 = vmatpush1.bf16.msra.mxu0 0
    %6902 = vmatprep.subr.bf16.mxu0 0
    %6903 = vmatpush1.bf16.msra.mxu0 0
    %6904 = vmatprep.subr.bf16.mxu0 0
    %6905 = vmatpush1.bf16.msra.mxu0 0
    %6906 = vmatprep.subr.bf16.mxu0 0
    %6907 = vmatpush1.bf16.msra.mxu0 0
    %6908 = vmatprep.subr.bf16.mxu0 0
    %6909 = vmatpush1.bf16.msra.mxu0 0
    %6910 = vmatprep.subr.bf16.mxu0 0
    %6911 = vmatpush1.bf16.msra.mxu0 0
    %6912 = vmatprep.subr.bf16.mxu0 0
    %6913 = vmatpush1.bf16.msra.mxu0 0
    %6914 = vmatprep.mubr.bf16.mxu0 0
    %6915 = vmatmul.mubr.bf16.gmra.mrb[0].mxu0 %v6758
    %v6916 = vpop.f32.mrb[0].mxu0
    %v6917 = vadd.f32 %v6876, %v6916
    %v6918 = vpop.f32.mrb[0].mxu0
    %v6919 = vadd.f32 %v6878, %v6918
    %v6920 = vpop.f32.mrb[0].mxu0
    %v6921 = vpop.f32.mrb[0].mxu0
    %6922 = vdwg.mxu0
    %6923 = vmatprep.subr.bf16.mxu0 %v1931
    %6924 = vmatpush1.bf16.msra.mxu0 %v1930
    %6925 = vmatprep.subr.bf16.mxu0 %v1940
    %6926 = vmatpush1.bf16.msra.mxu0 %v1939
    %6927 = vmatprep.subr.bf16.mxu0 %v1949
    %6928 = vmatpush1.bf16.msra.mxu0 %v1948
    %6929 = vmatprep.subr.bf16.mxu0 %v1958
    %6930 = vmatpush1.bf16.msra.mxu0 %v1957
    %6931 = vmatprep.subr.bf16.mxu0 %v1967
    %6932 = vmatpush1.bf16.msra.mxu0 %v1966
    %6933 = vmatprep.subr.bf16.mxu0 %v1976
    %6934 = vmatpush1.bf16.msra.mxu0 %v1975
    %6935 = vmatprep.subr.bf16.mxu0 %v1985
    %6936 = vmatpush1.bf16.msra.mxu0 %v1984
    %6937 = vmatprep.subr.bf16.mxu0 %v1994
    %6938 = vmatpush1.bf16.msra.mxu0 %v1993
    %6939 = vmatprep.subr.bf16.mxu0 %v2003
    %6940 = vmatpush1.bf16.msra.mxu0 %v2002
    %6941 = vmatprep.subr.bf16.mxu0 %v2012
    %6942 = vmatpush1.bf16.msra.mxu0 %v2011
    %6943 = vmatprep.subr.bf16.mxu0 %v2021
    %6944 = vmatpush1.bf16.msra.mxu0 %v2020
    %6945 = vmatprep.subr.bf16.mxu0 %v2030
    %6946 = vmatpush1.bf16.msra.mxu0 %v2029
    %6947 = vmatprep.subr.bf16.mxu0 %v2039
    %6948 = vmatpush1.bf16.msra.mxu0 %v2038
    %6949 = vmatprep.subr.bf16.mxu0 %v2048
    %6950 = vmatpush1.bf16.msra.mxu0 %v2047
    %6951 = vmatprep.subr.bf16.mxu0 %v2057
    %6952 = vmatpush1.bf16.msra.mxu0 %v2056
    %6953 = vmatprep.subr.bf16.mxu0 %v2066
    %6954 = vmatpush1.bf16.msra.mxu0 %v2065
    %6955 = vmatprep.mubr.bf16.mxu0 %v6757
    %6956 = vmatmul.mubr.bf16.gmra.mrb[0].mxu0 %v6756
    %v6957 = vpop.f32.mrb[0].mxu0
    %v6958 = vadd.f32 %v1228, %v6957
    %v6959 = vpop.f32.mrb[0].mxu0
    %v6960 = vadd.f32 %v1232, %v6959
    %v6961 = vpop.f32.mrb[0].mxu0
    %v6962 = vpop.f32.mrb[0].mxu0
    %6963 = vdwg.mxu0
    %6964 = vmatprep.subr.bf16.mxu0 %v2075
    %6965 = vmatpush1.bf16.msra.mxu0 %v2074
    %6966 = vmatprep.subr.bf16.mxu0 %v2084
    %6967 = vmatpush1.bf16.msra.mxu0 %v2083
    %6968 = vmatprep.subr.bf16.mxu0 %v2093
    %6969 = vmatpush1.bf16.msra.mxu0 %v2092
    %6970 = vmatprep.subr.bf16.mxu0 %v2102
    %6971 = vmatpush1.bf16.msra.mxu0 %v2101
    %6972 = vmatprep.subr.bf16.mxu0 %v2111
    %6973 = vmatpush1.bf16.msra.mxu0 %v2110
    %6974 = vmatprep.subr.bf16.mxu0 %v2120
    %6975 = vmatpush1.bf16.msra.mxu0 %v2119
    %6976 = vmatprep.subr.bf16.mxu0 %v2129
    %6977 = vmatpush1.bf16.msra.mxu0 %v2128
    %6978 = vmatprep.subr.bf16.mxu0 %v2138
    %6979 = vmatpush1.bf16.msra.mxu0 %v2137
    %6980 = vmatprep.subr.bf16.mxu0 0
    %6981 = vmatpush1.bf16.msra.mxu0 0
    %6982 = vmatprep.subr.bf16.mxu0 0
    %6983 = vmatpush1.bf16.msra.mxu0 0
    %6984 = vmatprep.subr.bf16.mxu0 0
    %6985 = vmatpush1.bf16.msra.mxu0 0
    %6986 = vmatprep.subr.bf16.mxu0 0
    %6987 = vmatpush1.bf16.msra.mxu0 0
    %6988 = vmatprep.subr.bf16.mxu0 0
    %6989 = vmatpush1.bf16.msra.mxu0 0
    %6990 = vmatprep.subr.bf16.mxu0 0
    %6991 = vmatpush1.bf16.msra.mxu0 0
    %6992 = vmatprep.subr.bf16.mxu0 0
    %6993 = vmatpush1.bf16.msra.mxu0 0
    %6994 = vmatprep.subr.bf16.mxu0 0
    %6995 = vmatpush1.bf16.msra.mxu0 0
    %6996 = vmatprep.mubr.bf16.mxu0 0
    %6997 = vmatmul.mubr.bf16.gmra.mrb[0].mxu0 %v6758
    %v6998 = vpop.f32.mrb[0].mxu0
    %v6999 = vadd.f32 %v6958, %v6998
    %v7000 = vpop.f32.mrb[0].mxu0
    %v7001 = vadd.f32 %v6960, %v7000
    %v7002 = vpop.f32.mrb[0].mxu0
    %v7003 = vpop.f32.mrb[0].mxu0
    %7004 = vdwg.mxu0
    %7005 = vmatprep.subr.bf16.mxu0 %v1933
    %7006 = vmatpush1.bf16.msra.mxu0 %v1932
    %7007 = vmatprep.subr.bf16.mxu0 %v1942
    %7008 = vmatpush1.bf16.msra.mxu0 %v1941
    %7009 = vmatprep.subr.bf16.mxu0 %v1951
    %7010 = vmatpush1.bf16.msra.mxu0 %v1950
    %7011 = vmatprep.subr.bf16.mxu0 %v1960
    %7012 = vmatpush1.bf16.msra.mxu0 %v1959
    %7013 = vmatprep.subr.bf16.mxu0 %v1969
    %7014 = vmatpush1.bf16.msra.mxu0 %v1968
    %7015 = vmatprep.subr.bf16.mxu0 %v1978
    %7016 = vmatpush1.bf16.msra.mxu0 %v1977
    %7017 = vmatprep.subr.bf16.mxu0 %v1987
    %7018 = vmatpush1.bf16.msra.mxu0 %v1986
    %7019 = vmatprep.subr.bf16.mxu0 %v1996
    %7020 = vmatpush1.bf16.msra.mxu0 %v1995
    %7021 = vmatprep.subr.bf16.mxu0 %v2005
    %7022 = vmatpush1.bf16.msra.mxu0 %v2004
    %7023 = vmatprep.subr.bf16.mxu0 %v2014
    %7024 = vmatpush1.bf16.msra.mxu0 %v2013
    %7025 = vmatprep.subr.bf16.mxu0 %v2023
    %7026 = vmatpush1.bf16.msra.mxu0 %v2022
    %7027 = vmatprep.subr.bf16.mxu0 %v2032
    %7028 = vmatpush1.bf16.msra.mxu0 %v2031
    %7029 = vmatprep.subr.bf16.mxu0 %v2041
    %7030 = vmatpush1.bf16.msra.mxu0 %v2040
    %7031 = vmatprep.subr.bf16.mxu0 %v2050
    %7032 = vmatpush1.bf16.msra.mxu0 %v2049
    %7033 = vmatprep.subr.bf16.mxu0 %v2059
    %7034 = vmatpush1.bf16.msra.mxu0 %v2058
    %7035 = vmatprep.subr.bf16.mxu0 %v2068
    %7036 = vmatpush1.bf16.msra.mxu0 %v2067
    %7037 = vmatprep.mubr.bf16.mxu0 %v6757
    %7038 = vmatmul.mubr.bf16.gmra.mrb[0].mxu0 %v6756
    %v7039 = vpop.f32.mrb[0].mxu0
    %v7040 = vadd.f32 %v1236, %v7039
    %v7041 = vpop.f32.mrb[0].mxu0
    %v7042 = vadd.f32 %v1240, %v7041
    %v7043 = vpop.f32.mrb[0].mxu0
    %v7044 = vpop.f32.mrb[0].mxu0
    %7045 = vdwg.mxu0
    %7046 = vmatprep.subr.bf16.mxu0 %v2077
    %7047 = vmatpush1.bf16.msra.mxu0 %v2076
    %7048 = vmatprep.subr.bf16.mxu0 %v2086
    %7049 = vmatpush1.bf16.msra.mxu0 %v2085
    %7050 = vmatprep.subr.bf16.mxu0 %v2095
    %7051 = vmatpush1.bf16.msra.mxu0 %v2094
    %7052 = vmatprep.subr.bf16.mxu0 %v2104
    %7053 = vmatpush1.bf16.msra.mxu0 %v2103
    %7054 = vmatprep.subr.bf16.mxu0 %v2113
    %7055 = vmatpush1.bf16.msra.mxu0 %v2112
    %7056 = vmatprep.subr.bf16.mxu0 %v2122
    %7057 = vmatpush1.bf16.msra.mxu0 %v2121
    %7058 = vmatprep.subr.bf16.mxu0 %v2131
    %7059 = vmatpush1.bf16.msra.mxu0 %v2130
    %7060 = vmatprep.subr.bf16.mxu0 %v2140
    %7061 = vmatpush1.bf16.msra.mxu0 %v2139
    %7062 = vmatprep.subr.bf16.mxu0 0
    %7063 = vmatpush1.bf16.msra.mxu0 0
    %7064 = vmatprep.subr.bf16.mxu0 0
    %7065 = vmatpush1.bf16.msra.mxu0 0
    %7066 = vmatprep.subr.bf16.mxu0 0
    %7067 = vmatpush1.bf16.msra.mxu0 0
    %7068 = vmatprep.subr.bf16.mxu0 0
    %7069 = vmatpush1.bf16.msra.mxu0 0
    %7070 = vmatprep.subr.bf16.mxu0 0
    %7071 = vmatpush1.bf16.msra.mxu0 0
    %7072 = vmatprep.subr.bf16.mxu0 0
    %7073 = vmatpush1.bf16.msra.mxu0 0
    %7074 = vmatprep.subr.bf16.mxu0 0
    %7075 = vmatpush1.bf16.msra.mxu0 0
    %7076 = vmatprep.subr.bf16.mxu0 0
    %7077 = vmatpush1.bf16.msra.mxu0 0
    %7078 = vmatprep.mubr.bf16.mxu0 0
    %7079 = vmatmul.mubr.bf16.gmra.mrb[0].mxu0 %v6758
    %v7080 = vpop.f32.mrb[0].mxu0
    %v7081 = vadd.f32 %v7040, %v7080
    %v7082 = vpop.f32.mrb[0].mxu0
    %v7083 = vadd.f32 %v7042, %v7082
    %v7084 = vpop.f32.mrb[0].mxu0
    %v7085 = vpop.f32.mrb[0].mxu0
    %7086 = vdwg.mxu0
    %7087 = vmatprep.subr.bf16.mxu0 0
    %7088 = vmatpush1.bf16.msra.mxu0 %v1934
    %7089 = vmatprep.subr.bf16.mxu0 0
    %7090 = vmatpush1.bf16.msra.mxu0 %v1943
    %7091 = vmatprep.subr.bf16.mxu0 0
    %7092 = vmatpush1.bf16.msra.mxu0 %v1952
    %7093 = vmatprep.subr.bf16.mxu0 0
    %7094 = vmatpush1.bf16.msra.mxu0 %v1961
    %7095 = vmatprep.subr.bf16.mxu0 0
    %7096 = vmatpush1.bf16.msra.mxu0 %v1970
    %7097 = vmatprep.subr.bf16.mxu0 0
    %7098 = vmatpush1.bf16.msra.mxu0 %v1979
    %7099 = vmatprep.subr.bf16.mxu0 0
    %7100 = vmatpush1.bf16.msra.mxu0 %v1988
    %7101 = vmatprep.subr.bf16.mxu0 0
    %7102 = vmatpush1.bf16.msra.mxu0 %v1997
    %7103 = vmatprep.subr.bf16.mxu0 0
    %7104 = vmatpush1.bf16.msra.mxu0 %v2006
    %7105 = vmatprep.subr.bf16.mxu0 0
    %7106 = vmatpush1.bf16.msra.mxu0 %v2015
    %7107 = vmatprep.subr.bf16.mxu0 0
    %7108 = vmatpush1.bf16.msra.mxu0 %v2024
    %7109 = vmatprep.subr.bf16.mxu0 0
    %7110 = vmatpush1.bf16.msra.mxu0 %v2033
    %7111 = vmatprep.subr.bf16.mxu0 0
    %7112 = vmatpush1.bf16.msra.mxu0 %v2042
    %7113 = vmatprep.subr.bf16.mxu0 0
    %7114 = vmatpush1.bf16.msra.mxu0 %v2051
    %7115 = vmatprep.subr.bf16.mxu0 0
    %7116 = vmatpush1.bf16.msra.mxu0 %v2060
    %7117 = vmatprep.subr.bf16.mxu0 0
    %7118 = vmatpush1.bf16.msra.mxu0 %v2069
    %7119 = vmatprep.mubr.bf16.mxu0 %v6757
    %7120 = vmatmul.mubr.bf16.gmra.mrb[0].mxu0 %v6756
    %v7121 = vpop.f32.mrb[0].mxu0
    %v7122 = vadd.f32 %v1244, %v7121
    %v7123 = vpop.f32.mrb[0].mxu0
    %v7124 = vpop.f32.mrb[0].mxu0
    %v7125 = vpop.f32.mrb[0].mxu0
    %7126 = vdwg.mxu0
    %7127 = vmatprep.subr.bf16.mxu0 0
    %7128 = vmatpush1.bf16.msra.mxu0 %v2078
    %7129 = vmatprep.subr.bf16.mxu0 0
    %7130 = vmatpush1.bf16.msra.mxu0 %v2087
    %7131 = vmatprep.subr.bf16.mxu0 0
    %7132 = vmatpush1.bf16.msra.mxu0 %v2096
    %7133 = vmatprep.subr.bf16.mxu0 0
    %7134 = vmatpush1.bf16.msra.mxu0 %v2105
    %7135 = vmatprep.subr.bf16.mxu0 0
    %7136 = vmatpush1.bf16.msra.mxu0 %v2114
    %7137 = vmatprep.subr.bf16.mxu0 0
    %7138 = vmatpush1.bf16.msra.mxu0 %v2123
    %7139 = vmatprep.subr.bf16.mxu0 0
    %7140 = vmatpush1.bf16.msra.mxu0 %v2132
    %7141 = vmatprep.subr.bf16.mxu0 0
    %7142 = vmatpush1.bf16.msra.mxu0 %v2141
    %7143 = vmatprep.subr.bf16.mxu0 0
    %7144 = vmatpush1.bf16.msra.mxu0 0
    %7145 = vmatprep.subr.bf16.mxu0 0
    %7146 = vmatpush1.bf16.msra.mxu0 0
    %7147 = vmatprep.subr.bf16.mxu0 0
    %7148 = vmatpush1.bf16.msra.mxu0 0
    %7149 = vmatprep.subr.bf16.mxu0 0
    %7150 = vmatpush1.bf16.msra.mxu0 0
    %7151 = vmatprep.subr.bf16.mxu0 0
    %7152 = vmatpush1.bf16.msra.mxu0 0
    %7153 = vmatprep.subr.bf16.mxu0 0
    %7154 = vmatpush1.bf16.msra.mxu0 0
    %7155 = vmatprep.subr.bf16.mxu0 0
    %7156 = vmatpush1.bf16.msra.mxu0 0
    %7157 = vmatprep.subr.bf16.mxu0 0
    %7158 = vmatpush1.bf16.msra.mxu0 0
    %7159 = vmatprep.mubr.bf16.mxu0 0
    %7160 = vmatmul.mubr.bf16.gmra.mrb[0].mxu0 %v6758
    %v7161 = vpop.f32.mrb[0].mxu0
    %v7162 = vadd.f32 %v7122, %v7161
    %v7163 = vpop.f32.mrb[0].mxu0
    %v7164 = vpop.f32.mrb[0].mxu0
    %v7165 = vpop.f32.mrb[0].mxu0
    %7166 = vdwg.mxu0
    %v7167 = vadd.f32 %v6747, %v6835
    %v7168 = vadd.f32 %v6748, %v6837
    %v7169 = vadd.f32 %v6749, %v6917
    %v7170 = vxor.u32 %v7167, 2147483648
    %v7171 = vxor.u32 %v7168, 2147483648
    %v7172 = vxor.u32 %v7169, 2147483648
    %v7173 = vmul.f32 %v7170, 1.442695
    %v7174 = vpow.pop %v7173
    %v7175 = vmul.f32 %v7171, 1.442695
    %v7176 = vpow.pop %v7175
    %v7177 = vmul.f32 %v7172, 1.442695
    %v7178 = vpow.pop %v7177
    %v7179 = vadd.f32 %v7174, 1.0
    %v7180 = vadd.f32 %v7176, 1.0
    %v7181 = vadd.f32 %v7178, 1.0
    %v7182 = vrcp.pop %v7179
    %v7183 = vmul.f32 1.0, %v7182
    %v7184 = vrcp.pop %v7180
    %v7185 = vmul.f32 1.0, %v7184
    %v7186 = vrcp.pop %v7181
    %v7187 = vmul.f32 1.0, %v7186
    %v7188 = vadd.f32 %v6750, %v6919
    %v7189 = vadd.f32 %v6751, %v6999
    %v7190 = vadd.f32 %v6752, %v7001
    %v7191 = vxor.u32 %v7188, 2147483648
    %v7192 = vxor.u32 %v7189, 2147483648
    %v7193 = vxor.u32 %v7190, 2147483648
    %v7194 = vmul.f32 %v7191, 1.442695
    %v7195 = vpow.pop %v7194
    %v7196 = vmul.f32 %v7192, 1.442695
    %v7197 = vpow.pop %v7196
    %v7198 = vmul.f32 %v7193, 1.442695
    %v7199 = vpow.pop %v7198
    %v7200 = vadd.f32 %v7195, 1.0
    %v7201 = vadd.f32 %v7197, 1.0
    %v7202 = vadd.f32 %v7199, 1.0
    %v7203 = vrcp.pop %v7200
    %v7204 = vmul.f32 1.0, %v7203
    %v7205 = vrcp.pop %v7201
    %v7206 = vmul.f32 1.0, %v7205
    %v7207 = vrcp.pop %v7202
    %v7208 = vmul.f32 1.0, %v7207
    %v7209 = vmul.f32 %v7183, %v7081
    %v7210 = vmul.f32 %v7185, %v7083
    %v7211 = vmul.f32 %v7187, %v7162
    %v7212 = vadd.f32 %v6753, %v7209
    %v7213 = vadd.f32 %v6754, %v7210
    %v7214 = vadd.f32 %v6755, %v7211
    %v7215 = vtanh.pop %v7212
    %v7216 = vtanh.pop %v7213
    %v7217 = vtanh.pop %v7214
    %v7218 = vsub.f32 1.0, %v7204
    %v7219 = vsub.f32 1.0, %v7206
    %v7220 = vsub.f32 1.0, %v7208
    %v7221 = vmul.f32 %v7218, %v7215
    %v7222 = vmul.f32 %v7219, %v7216
    %v7223 = vmul.f32 %v7220, %v7217
    %v7224 = vmul.f32 %v7204, %v6738
    %v7225 = vmul.f32 %v7206, %v6739
    %v7226 = vmul.f32 %v7208, %v6740
    %v7227 = vadd.f32 %v7221, %v7224
    %v7228 = vadd.f32 %v7222, %v7225
    %v7229 = vadd.f32 %v7223, %v7226
    %v7230 = vmul.f32 %v7227, %v57
    %v7231 = vmul.f32 %v7228, %v58
    %v7232 = vmul.f32 %v7229, %v59
    %7233 = vst [vmem:[#allocation3 + $0xd8] sm:$0xff] %v7230
    %7234 = vst [vmem:[#allocation3 + $0xe0] sm:$0xff] %v7231
    %7235 = vst [vmem:[#allocation3 + $0xe8] sm:$0xff] %v7232
    %v7236 = vld [vmem:[#allocation3] sm:$0xff]
    %v7237 = vld [vmem:[#allocation3 + $0x8] sm:$0xff]
    %v7238 = vld [vmem:[#allocation3 + $0x10] sm:$0xff]
    %v7239 = vld [vmem:[#allocation3 + $0x18] sm:$0xff]
    %v7240 = vld [vmem:[#allocation3 + $0x20] sm:$0xff]
    %v7241 = vld [vmem:[#allocation3 + $0x28] sm:$0xff]
    %v7242 = vld [vmem:[#allocation3 + $0x30] sm:$0xff]
    %v7243 = vld [vmem:[#allocation3 + $0x38] sm:$0xff]
    %v7244 = vld [vmem:[#allocation3 + $0x40] sm:$0xff]
    %v7245 = vld [vmem:[#allocation3 + $0x48] sm:$0xff]
    %v7246 = vld [vmem:[#allocation3 + $0x50] sm:$0xff]
    %v7247 = vld [vmem:[#allocation3 + $0x58] sm:$0xff]
    %v7248 = vld [vmem:[#allocation3 + $0x60] sm:$0xff]
    %v7249 = vld [vmem:[#allocation3 + $0x68] sm:$0xff]
    %v7250 = vld [vmem:[#allocation3 + $0x70] sm:$0xff]
    %v7251 = vld [vmem:[#allocation3 + $0x78] sm:$0xff]
    %v7252 = vld [vmem:[#allocation3 + $0x80] sm:$0xff]
    %v7253 = vld [vmem:[#allocation3 + $0x88] sm:$0xff]
    %v7254 = vld [vmem:[#allocation3 + $0x90] sm:$0xff]
    %v7255 = vld [vmem:[#allocation3 + $0x98] sm:$0xff]
    %v7256 = vld [vmem:[#allocation3 + $0xa0] sm:$0xff]
    %v7257 = vld [vmem:[#allocation3 + $0xa8] sm:$0xff]
    %v7258 = vld [vmem:[#allocation3 + $0xb0] sm:$0xff]
    %v7259 = vld [vmem:[#allocation3 + $0xb8] sm:$0xff]
    %v7260 = vld [vmem:[#allocation3 + $0xc0] sm:$0xff]
    %v7261 = vld [vmem:[#allocation3 + $0xc8] sm:$0xff]
    %v7262 = vld [vmem:[#allocation3 + $0xd0] sm:$0xff]
    %v7263 = vld [vmem:[#allocation3 + $0xd8] sm:$0xff]
    %v7264 = vld [vmem:[#allocation3 + $0xe0] sm:$0xff]
    %v7265 = vld [vmem:[#allocation3 + $0xe8] sm:$0xff]
    %v7266 = vpack.c.bf16 %v7239, %v7236
    %v7267 = vpack.c.bf16 %v7240, %v7237
    %v7268 = vpack.c.bf16 %v7241, %v7238
    %v7269 = vpack.c.bf16 %v7245, %v7242
    %v7270 = vpack.c.bf16 %v7246, %v7243
    %v7271 = vpack.c.bf16 %v7247, %v7244
    %v7272 = vpack.c.bf16 %v7251, %v7248
    %v7273 = vpack.c.bf16 %v7252, %v7249
    %v7274 = vpack.c.bf16 %v7253, %v7250
    %v7275 = vpack.c.bf16 %v7257, %v7254
    %v7276 = vpack.c.bf16 %v7258, %v7255
    %v7277 = vpack.c.bf16 %v7259, %v7256
    %v7278 = vpack.c.bf16 %v7263, %v7260
    %v7279 = vpack.c.bf16 %v7264, %v7261
    %v7280 = vpack.c.bf16 %v7265, %v7262
    %v7281 = vld [vmem:[%s11] sm:$0xf]
    %v7282 = vld [vmem:[%s11 + $0x4] sm:$0xf]
    %v7283 = vld [vmem:[%s11 + $0x8] sm:$0xf]
    %v7284 = vld [vmem:[%s11 + $0xc] sm:$0xf]
    %v7285 = vld [vmem:[%s11 + $0x10] sm:$0xf]
    %v7286 = vld [vmem:[%s11 + $0x14] sm:$0xf]
    %v7287 = vld [vmem:[%s11 + $0x18] sm:$0xf]
    %v7288 = vld [vmem:[%s11 + $0x1c] sm:$0xf]
    %v7289 = vld [vmem:[%s11 + $0x20] sm:$0xf]
    %v7290 = vld [vmem:[%s11 + $0x24] sm:$0xf]
    %v7291 = vld [vmem:[%s11 + $0x28] sm:$0xf]
    %v7292 = vld [vmem:[%s11 + $0x2c] sm:$0xf]
    %v7293 = vld [vmem:[%s11 + $0x30] sm:$0xf]
    %v7294 = vld [vmem:[%s11 + $0x34] sm:$0xf]
    %v7295 = vld [vmem:[%s11 + $0x38] sm:$0xf]
    %v7296 = vld [vmem:[%s11 + $0x3c] sm:$0xf]
    %v7297 = vld [vmem:[%s11 + $0x40] sm:$0xf]
    %v7298 = vld [vmem:[%s11 + $0x44] sm:$0xf]
    %v7299 = vld [vmem:[%s11 + $0x48] sm:$0xf]
    %v7300 = vld [vmem:[%s11 + $0x4c] sm:$0xf]
    %v7301 = vld [vmem:[%s11 + $0x50] sm:$0xf]
    %v7302 = vld [vmem:[%s11 + $0x54] sm:$0xf]
    %v7303 = vld [vmem:[%s11 + $0x58] sm:$0xf]
    %v7304 = vld [vmem:[%s11 + $0x5c] sm:$0xf]
    %v7305 = vld [vmem:[%s11 + $0x60] sm:$0xf]
    %v7306 = vld [vmem:[%s11 + $0x64] sm:$0xf]
    %v7307 = vld [vmem:[%s11 + $0x68] sm:$0xf]
    %v7308 = vld [vmem:[%s11 + $0x6c] sm:$0xf]
    %v7309 = vld [vmem:[%s11 + $0x70] sm:$0xf]
    %v7310 = vld [vmem:[%s11 + $0x74] sm:$0xf]
    %v7311 = vld [vmem:[%s11 + $0x78] sm:$0xf]
    %v7312 = vld [vmem:[%s11 + $0x7c] sm:$0xf]
    %v7313 = vld [vmem:[%s11 + $0x80] sm:$0xf]
    %v7314 = vld [vmem:[%s11 + $0x84] sm:$0xf]
    %v7315 = vld [vmem:[%s11 + $0x88] sm:$0xf]
    %v7316 = vld [vmem:[%s11 + $0x8c] sm:$0xf]
    %v7317 = vld [vmem:[%s11 + $0x90] sm:$0xf]
    %v7318 = vld [vmem:[%s11 + $0x94] sm:$0xf]
    %v7319 = vld [vmem:[%s11 + $0x98] sm:$0xf]
    %v7320 = vld [vmem:[%s11 + $0x9c] sm:$0xf]
    %v7321 = vld [vmem:[%s11 + $0xa0] sm:$0xf]
    %v7322 = vld [vmem:[%s11 + $0xa4] sm:$0xf]
    %v7323 = vld [vmem:[%s11 + $0xa8] sm:$0xf]
    %v7324 = vld [vmem:[%s11 + $0xac] sm:$0xf]
    %v7325 = vld [vmem:[%s11 + $0xb0] sm:$0xf]
    %v7326 = vld [vmem:[%s11 + $0xb4] sm:$0xf]
    %v7327 = vld [vmem:[%s11 + $0xb8] sm:$0xf]
    %v7328 = vld [vmem:[%s11 + $0xbc] sm:$0xf]
    %v7329 = vld [vmem:[%s3] sm:$0xff]
    %v7330 = vld [vmem:[%s3 + $0x8] sm:$0xff]
    %v7331 = vld [vmem:[%s3 + $0x10] sm:$0xff]
    %v7332 = vld [vmem:[%s3 + $0x18] sm:$0xff]
    %v7333 = vld [vmem:[%s3 + $0x20] sm:$0xff]
    %v7334 = vld [vmem:[%s3 + $0x28] sm:$0xff]
    %v7335 = vld [vmem:[%s3 + $0x30] sm:$0xff]
    %v7336 = vld [vmem:[%s3 + $0x38] sm:$0xff]
    %v7337 = vld [vmem:[%s3 + $0x40] sm:$0xff]
    %v7338 = vld [vmem:[%s3 + $0x48] sm:$0xff]
    %v7387 = vunpack.c.l.b16 %v7281
    %v7388 = vunpack.c.l.b16 %v7282
    %v7389 = vunpack.c.l.b16 %v7283
    %v7390 = vunpack.c.l.b16 %v7284
    %v7391 = vunpack.c.l.b16 %v7285
    %v7392 = vunpack.c.l.b16 %v7286
    %v7393 = vunpack.c.l.b16 %v7287
    %v7394 = vunpack.c.l.b16 %v7288
    %v7395 = vunpack.c.l.b16 %v7289
    %v7396 = vunpack.c.l.b16 %v7290
    %v7397 = vunpack.c.l.b16 %v7291
    %v7398 = vunpack.c.l.b16 %v7292
    %v7399 = vunpack.c.l.b16 %v7293
    %v7400 = vunpack.c.l.b16 %v7294
    %v7401 = vunpack.c.l.b16 %v7295
    %v7402 = vunpack.c.l.b16 %v7296
    %v7403 = vunpack.c.l.b16 %v7297
    %v7404 = vunpack.c.l.b16 %v7298
    %v7405 = vunpack.c.l.b16 %v7299
    %v7406 = vunpack.c.l.b16 %v7300
    %v7407 = vunpack.c.l.b16 %v7301
    %v7408 = vunpack.c.l.b16 %v7302
    %v7409 = vunpack.c.l.b16 %v7303
    %v7410 = vunpack.c.l.b16 %v7304
    %v7411 = vunpack.c.l.b16 %v7305
    %v7412 = vunpack.c.l.b16 %v7306
    %v7413 = vunpack.c.l.b16 %v7307
    %v7414 = vunpack.c.l.b16 %v7308
    %v7415 = vunpack.c.l.b16 %v7309
    %v7416 = vunpack.c.l.b16 %v7310
    %v7417 = vunpack.c.l.b16 %v7311
    %v7418 = vunpack.c.l.b16 %v7312
    %v7419 = vunpack.c.l.b16 %v7313
    %v7420 = vunpack.c.l.b16 %v7314
    %v7421 = vunpack.c.l.b16 %v7315
    %v7422 = vunpack.c.l.b16 %v7316
    %v7423 = vunpack.c.l.b16 %v7317
    %v7424 = vunpack.c.l.b16 %v7318
    %v7425 = vunpack.c.l.b16 %v7319
    %v7426 = vunpack.c.l.b16 %v7320
    %v7427 = vunpack.c.l.b16 %v7321
    %v7428 = vunpack.c.l.b16 %v7322
    %v7429 = vunpack.c.l.b16 %v7323
    %v7430 = vunpack.c.l.b16 %v7324
    %v7431 = vunpack.c.l.b16 %v7325
    %v7432 = vunpack.c.l.b16 %v7326
    %v7433 = vunpack.c.l.b16 %v7327
    %v7434 = vunpack.c.l.b16 %v7328
    %v7435 = vpack.c.b16 %v7388, %v7387
    %v7436 = vpack.c.b16 %v7390, %v7389
    %v7437 = vpack.c.b16 %v7392, %v7391
    %v7438 = vpack.c.b16 %v7394, %v7393
    %v7439 = vpack.c.b16 %v7396, %v7395
    %v7440 = vpack.c.b16 %v7398, %v7397
    %v7441 = vpack.c.b16 %v7400, %v7399
    %v7442 = vpack.c.b16 %v7402, %v7401
    %v7443 = vpack.c.b16 %v7404, %v7403
    %v7444 = vpack.c.b16 %v7406, %v7405
    %v7445 = vpack.c.b16 %v7408, %v7407
    %v7446 = vpack.c.b16 %v7410, %v7409
    %v7447 = vpack.c.b16 %v7412, %v7411
    %v7448 = vpack.c.b16 %v7414, %v7413
    %v7449 = vpack.c.b16 %v7416, %v7415
    %v7450 = vpack.c.b16 %v7418, %v7417
    %v7451 = vpack.c.b16 %v7420, %v7419
    %v7452 = vpack.c.b16 %v7422, %v7421
    %v7453 = vpack.c.b16 %v7424, %v7423
    %v7454 = vpack.c.b16 %v7426, %v7425
    %v7455 = vpack.c.b16 %v7428, %v7427
    %v7456 = vpack.c.b16 %v7430, %v7429
    %v7457 = vpack.c.b16 %v7432, %v7431
    %v7458 = vpack.c.b16 %v7434, %v7433
    %7483 = vmatprep.subr.bf16.mxu0 0
    %7484 = vmatpush1.bf16.msra.mxu0 %v7435
    %7485 = vmatprep.subr.bf16.mxu0 0
    %7486 = vmatpush1.bf16.msra.mxu0 %v7436
    %7487 = vmatprep.subr.bf16.mxu0 0
    %7488 = vmatpush1.bf16.msra.mxu0 %v7437
    %7489 = vmatprep.subr.bf16.mxu0 0
    %7490 = vmatpush1.bf16.msra.mxu0 %v7438
    %7491 = vmatprep.subr.bf16.mxu0 0
    %7492 = vmatpush1.bf16.msra.mxu0 %v7439
    %7493 = vmatprep.subr.bf16.mxu0 0
    %7494 = vmatpush1.bf16.msra.mxu0 %v7440
    %7495 = vmatprep.subr.bf16.mxu0 0
    %7496 = vmatpush1.bf16.msra.mxu0 %v7441
    %7497 = vmatprep.subr.bf16.mxu0 0
    %7498 = vmatpush1.bf16.msra.mxu0 %v7442
    %7499 = vmatprep.subr.bf16.mxu0 0
    %7500 = vmatpush1.bf16.msra.mxu0 %v7443
    %7501 = vmatprep.subr.bf16.mxu0 0
    %7502 = vmatpush1.bf16.msra.mxu0 %v7444
    %7503 = vmatprep.subr.bf16.mxu0 0
    %7504 = vmatpush1.bf16.msra.mxu0 %v7445
    %7505 = vmatprep.subr.bf16.mxu0 0
    %7506 = vmatpush1.bf16.msra.mxu0 %v7446
    %7507 = vmatprep.subr.bf16.mxu0 0
    %7508 = vmatpush1.bf16.msra.mxu0 %v7447
    %7509 = vmatprep.subr.bf16.mxu0 0
    %7510 = vmatpush1.bf16.msra.mxu0 %v7448
    %7511 = vmatprep.subr.bf16.mxu0 0
    %7512 = vmatpush1.bf16.msra.mxu0 %v7449
    %7513 = vmatprep.subr.bf16.mxu0 0
    %7514 = vmatpush1.bf16.msra.mxu0 %v7450
    %7515 = vmatprep.mubr.bf16.mxu0 %v7267
    %7516 = vmatmul.mubr.bf16.gmra.mrb[0].mxu0 %v7266
    %v7517 = vpop.f32.mrb[0].mxu0
    %v7518 = vadd.f32 %v7329, %v7517
    %v7519 = vpop.f32.mrb[0].mxu0
    %v7520 = vpop.f32.mrb[0].mxu0
    %v7521 = vadd.f32 %v7330, %v7520
    %v7522 = vpop.f32.mrb[0].mxu0
    %7523 = vmatprep.mubr.bf16.mxu0 %v7270
    %7524 = vmatmul.mubr.bf16.gmra.mrb[0].mxu0 %v7269
    %v7525 = vpop.f32.mrb[0].mxu0
    %v7526 = vadd.f32 %v7331, %v7525
    %v7527 = vpop.f32.mrb[0].mxu0
    %v7528 = vpop.f32.mrb[0].mxu0
    %v7529 = vadd.f32 %v7332, %v7528
    %v7530 = vpop.f32.mrb[0].mxu0
    %7531 = vmatprep.mubr.bf16.mxu0 %v7273
    %7532 = vmatmul.mubr.bf16.gmra.mrb[0].mxu0 %v7272
    %v7533 = vpop.f32.mrb[0].mxu0
    %v7534 = vadd.f32 %v7333, %v7533
    %v7535 = vpop.f32.mrb[0].mxu0
    %v7536 = vpop.f32.mrb[0].mxu0
    %v7537 = vadd.f32 %v7334, %v7536
    %v7538 = vpop.f32.mrb[0].mxu0
    %7539 = vmatprep.mubr.bf16.mxu0 %v7276
    %7540 = vmatmul.mubr.bf16.gmra.mrb[0].mxu0 %v7275
    %v7541 = vpop.f32.mrb[0].mxu0
    %v7542 = vadd.f32 %v7335, %v7541
    %v7543 = vpop.f32.mrb[0].mxu0
    %v7544 = vpop.f32.mrb[0].mxu0
    %v7545 = vadd.f32 %v7336, %v7544
    %v7546 = vpop.f32.mrb[0].mxu0
    %7547 = vmatprep.mubr.bf16.mxu0 %v7279
    %7548 = vmatmul.mubr.bf16.gmra.mrb[0].mxu0 %v7278
    %v7549 = vpop.f32.mrb[0].mxu0
    %v7550 = vadd.f32 %v7337, %v7549
    %v7551 = vpop.f32.mrb[0].mxu0
    %v7552 = vpop.f32.mrb[0].mxu0
    %v7553 = vadd.f32 %v7338, %v7552
    %v7554 = vpop.f32.mrb[0].mxu0
    %7555 = vdwg.mxu0
    %7556 = vmatprep.subr.bf16.mxu0 0
    %7557 = vmatpush1.bf16.msra.mxu0 %v7451
    %7558 = vmatprep.subr.bf16.mxu0 0
    %7559 = vmatpush1.bf16.msra.mxu0 %v7452
    %7560 = vmatprep.subr.bf16.mxu0 0
    %7561 = vmatpush1.bf16.msra.mxu0 %v7453
    %7562 = vmatprep.subr.bf16.mxu0 0
    %7563 = vmatpush1.bf16.msra.mxu0 %v7454
    %7564 = vmatprep.subr.bf16.mxu0 0
    %7565 = vmatpush1.bf16.msra.mxu0 %v7455
    %7566 = vmatprep.subr.bf16.mxu0 0
    %7567 = vmatpush1.bf16.msra.mxu0 %v7456
    %7568 = vmatprep.subr.bf16.mxu0 0
    %7569 = vmatpush1.bf16.msra.mxu0 %v7457
    %7570 = vmatprep.subr.bf16.mxu0 0
    %7571 = vmatpush1.bf16.msra.mxu0 %v7458
    %7572 = vmatprep.subr.bf16.mxu0 0
    %7573 = vmatpush1.bf16.msra.mxu0 0
    %7574 = vmatprep.subr.bf16.mxu0 0
    %7575 = vmatpush1.bf16.msra.mxu0 0
    %7576 = vmatprep.subr.bf16.mxu0 0
    %7577 = vmatpush1.bf16.msra.mxu0 0
    %7578 = vmatprep.subr.bf16.mxu0 0
    %7579 = vmatpush1.bf16.msra.mxu0 0
    %7580 = vmatprep.subr.bf16.mxu0 0
    %7581 = vmatpush1.bf16.msra.mxu0 0
    %7582 = vmatprep.subr.bf16.mxu0 0
    %7583 = vmatpush1.bf16.msra.mxu0 0
    %7584 = vmatprep.subr.bf16.mxu0 0
    %7585 = vmatpush1.bf16.msra.mxu0 0
    %7586 = vmatprep.subr.bf16.mxu0 0
    %7587 = vmatpush1.bf16.msra.mxu0 0
    %7588 = vmatprep.mubr.bf16.mxu0 0
    %7589 = vmatmul.mubr.bf16.gmra.mrb[0].mxu0 %v7268
    %v7590 = vpop.f32.mrb[0].mxu0
    %v7591 = vadd.f32 %v7518, %v7590
    %v7592 = vpop.f32.mrb[0].mxu0
    %v7593 = vpop.f32.mrb[0].mxu0
    %v7594 = vadd.f32 %v7521, %v7593
    %v7595 = vpop.f32.mrb[0].mxu0
    %7596 = vmatprep.mubr.bf16.mxu0 0
    %7597 = vmatmul.mubr.bf16.gmra.mrb[0].mxu0 %v7271
    %v7598 = vpop.f32.mrb[0].mxu0
    %v7599 = vadd.f32 %v7526, %v7598
    %v7600 = vpop.f32.mrb[0].mxu0
    %v7601 = vpop.f32.mrb[0].mxu0
    %v7602 = vadd.f32 %v7529, %v7601
    %v7603 = vpop.f32.mrb[0].mxu0
    %7604 = vmatprep.mubr.bf16.mxu0 0
    %7605 = vmatmul.mubr.bf16.gmra.mrb[0].mxu0 %v7274
    %v7606 = vpop.f32.mrb[0].mxu0
    %v7607 = vadd.f32 %v7534, %v7606
    %v7608 = vpop.f32.mrb[0].mxu0
    %v7609 = vpop.f32.mrb[0].mxu0
    %v7610 = vadd.f32 %v7537, %v7609
    %v7611 = vpop.f32.mrb[0].mxu0
    %7612 = vmatprep.mubr.bf16.mxu0 0
    %7613 = vmatmul.mubr.bf16.gmra.mrb[0].mxu0 %v7277
    %v7614 = vpop.f32.mrb[0].mxu0
    %v7615 = vadd.f32 %v7542, %v7614
    %v7616 = vpop.f32.mrb[0].mxu0
    %v7617 = vpop.f32.mrb[0].mxu0
    %v7618 = vadd.f32 %v7545, %v7617
    %v7619 = vpop.f32.mrb[0].mxu0
    %7620 = vmatprep.mubr.bf16.mxu0 0
    %7621 = vmatmul.mubr.bf16.gmra.mrb[0].mxu0 %v7280
    %v7622 = vpop.f32.mrb[0].mxu0
    %v7623 = vadd.f32 %v7550, %v7622
    %v7624 = vpop.f32.mrb[0].mxu0
    %v7625 = vpop.f32.mrb[0].mxu0
    %v7626 = vadd.f32 %v7553, %v7625
    %v7627 = vpop.f32.mrb[0].mxu0
    %7628 = vdwg.mxu0
    %v7629 = vld [vmem:[%s4] sm:$0xff]
    %v7630 = vld [vmem:[%s4 + $0x8] sm:$0xff]
    %v7631 = vld [vmem:[%s4 + $0x10] sm:$0xff]
    %v7632 = vld [vmem:[%s4 + $0x18] sm:$0xff]
    %v7633 = vld [vmem:[%s4 + $0x20] sm:$0xff]
    %v7634 = vld [vmem:[%s4 + $0x28] sm:$0xff]
    %v7635 = vld [vmem:[%s4 + $0x30] sm:$0xff]
    %v7636 = vld [vmem:[%s4 + $0x38] sm:$0xff]
    %v7637 = vld [vmem:[%s4 + $0x40] sm:$0xff]
    %v7638 = vld [vmem:[%s4 + $0x48] sm:$0xff]
    %vm7639 = vcmask 654336
    %v7641 = vsel %vm7639, %v7629, 0
    %v7644 = vsel %vm7639, %v7630, 0
    %v7647 = vsel %vm7639, %v7631, 0
    %v7650 = vsel %vm7639, %v7632, 0
    %v7653 = vsel %vm7639, %v7633, 0
    %v7656 = vsel %vm7639, %v7634, 0
    %v7659 = vsel %vm7639, %v7635, 0
    %v7662 = vsel %vm7639, %v7636, 0
    %v7665 = vsel %vm7639, %v7637, 0
    %v7668 = vsel %vm7639, %v7638, 0
    %7670 = vmatprep.subr.mxu0 0.0
    %7671 = vmatpush1.msra.mxu0 %v7591
    %7672 = vmatprep.subr.mxu0 0.0
    %7673 = vmatpush1.msra.mxu0 %v7594
    %7674 = vmatprep.subr.mxu0 0.0
    %7675 = vmatpush1.msra.mxu0 %v7599
    %7676 = vmatprep.subr.mxu0 0.0
    %7677 = vmatpush1.msra.mxu0 %v7602
    %7678 = vmatprep.subr.mxu0 0.0
    %7679 = vmatpush1.msra.mxu0 %v7607
    %7680 = vmatprep.subr.mxu0 0.0
    %7681 = vmatpush1.msra.mxu0 %v7610
    %7682 = vmatprep.subr.mxu0 0.0
    %7683 = vmatpush1.msra.mxu0 %v7615
    %7684 = vmatprep.subr.mxu0 0.0
    %7685 = vmatpush1.msra.mxu0 %v7618
    %7686 = vmatprep.subr.mxu0 0.0
    %7687 = vmatpush1.msra.mxu0 %v7623
    %7688 = vmatprep.subr.mxu0 0.0
    %7689 = vmatpush1.msra.mxu0 %v7626
    %7690 = vmatprep.subr.mxu0 0.0
    %7691 = vmatpush1.msra.mxu0 0.0
    %7692 = vmatprep.subr.mxu0 0.0
    %7693 = vmatpush1.msra.mxu0 0.0
    %7694 = vmatprep.subr.mxu0 0.0
    %7695 = vmatpush1.msra.mxu0 0.0
    %7696 = vmatprep.subr.mxu0 0.0
    %7697 = vmatpush1.msra.mxu0 0.0
    %7698 = vmatprep.subr.mxu0 0.0
    %7699 = vmatpush1.msra.mxu0 0.0
    %7700 = vmatprep.subr.mxu0 0.0
    %7701 = vmatpush1.msra.mxu0 0.0
    %7702 = vmatprep.subr.mxu0 0.0
    %7703 = vmatpush1.msra.mxu0 0.0
    %7704 = vmatprep.subr.mxu0 0.0
    %7705 = vmatpush1.msra.mxu0 0.0
    %7706 = vmatprep.subr.mxu0 0.0
    %7707 = vmatpush1.msra.mxu0 0.0
    %7708 = vmatprep.subr.mxu0 0.0
    %7709 = vmatpush1.msra.mxu0 0.0
    %7710 = vmatprep.subr.mxu0 0.0
    %7711 = vmatpush1.msra.mxu0 0.0
    %7712 = vmatprep.subr.mxu0 0.0
    %7713 = vmatpush1.msra.mxu0 0.0
    %7714 = vmatprep.subr.mxu0 0.0
    %7715 = vmatpush1.msra.mxu0 0.0
    %7716 = vmatprep.subr.mxu0 0.0
    %7717 = vmatpush1.msra.mxu0 0.0
    %7718 = vmatprep.subr.mxu0 0.0
    %7719 = vmatpush1.msra.mxu0 0.0
    %7720 = vmatprep.subr.mxu0 0.0
    %7721 = vmatpush1.msra.mxu0 0.0
    %7722 = vmatprep.subr.mxu0 0.0
    %7723 = vmatpush1.msra.mxu0 0.0
    %7724 = vmatprep.subr.mxu0 0.0
    %7725 = vmatpush1.msra.mxu0 0.0
    %7726 = vmatprep.subr.mxu0 0.0
    %7727 = vmatpush1.msra.mxu0 0.0
    %7728 = vmatprep.subr.mxu0 0.0
    %7729 = vmatpush1.msra.mxu0 0.0
    %7730 = vmatprep.subr.mxu0 0.0
    %7731 = vmatpush1.msra.mxu0 0.0
    %7732 = vmatprep.subr.mxu0 0.0
    %7733 = vmatpush1.msra.mxu0 0.0
    %7734 = vmatprep.mubr.f32.mxu0 0.0
    %7735 = vmatmul.mubr.f32.gmra.mrb[0].mxu0 %v7641
    %v7736 = vpop.f32.mrb[0].mxu0
    %v7737 = vadd.f32 0.0, %v7736
    %v7738 = vpop.f32.mrb[0].mxu0
    %7739 = vmatprep.mubr.f32.mxu0 0.0
    %7740 = vmatmul.mubr.f32.gmra.mrb[0].mxu0 %v7644
    %v7741 = vpop.f32.mrb[0].mxu0
    %v7742 = vadd.f32 0.0, %v7741
    %v7743 = vpop.f32.mrb[0].mxu0
    %7744 = vmatprep.mubr.f32.mxu0 0.0
    %7745 = vmatmul.mubr.f32.gmra.mrb[0].mxu0 %v7647
    %v7746 = vpop.f32.mrb[0].mxu0
    %v7747 = vadd.f32 0.0, %v7746
    %v7748 = vpop.f32.mrb[0].mxu0
    %7749 = vmatprep.mubr.f32.mxu0 0.0
    %7750 = vmatmul.mubr.f32.gmra.mrb[0].mxu0 %v7650
    %v7751 = vpop.f32.mrb[0].mxu0
    %v7752 = vadd.f32 0.0, %v7751
    %v7753 = vpop.f32.mrb[0].mxu0
    %7754 = vmatprep.mubr.f32.mxu0 0.0
    %7755 = vmatmul.mubr.f32.gmra.mrb[0].mxu0 %v7653
    %v7756 = vpop.f32.mrb[0].mxu0
    %v7757 = vadd.f32 0.0, %v7756
    %v7758 = vpop.f32.mrb[0].mxu0
    %7759 = vmatprep.mubr.f32.mxu0 0.0
    %7760 = vmatmul.mubr.f32.gmra.mrb[0].mxu0 %v7656
    %v7761 = vpop.f32.mrb[0].mxu0
    %v7762 = vadd.f32 0.0, %v7761
    %v7763 = vpop.f32.mrb[0].mxu0
    %7764 = vmatprep.mubr.f32.mxu0 0.0
    %7765 = vmatmul.mubr.f32.gmra.mrb[0].mxu0 %v7659
    %v7766 = vpop.f32.mrb[0].mxu0
    %v7767 = vadd.f32 0.0, %v7766
    %v7768 = vpop.f32.mrb[0].mxu0
    %7769 = vmatprep.mubr.f32.mxu0 0.0
    %7770 = vmatmul.mubr.f32.gmra.mrb[0].mxu0 %v7662
    %v7771 = vpop.f32.mrb[0].mxu0
    %v7772 = vadd.f32 0.0, %v7771
    %v7773 = vpop.f32.mrb[0].mxu0
    %7774 = vmatprep.mubr.f32.mxu0 0.0
    %7775 = vmatmul.mubr.f32.gmra.mrb[0].mxu0 %v7665
    %v7776 = vpop.f32.mrb[0].mxu0
    %v7777 = vadd.f32 0.0, %v7776
    %v7778 = vpop.f32.mrb[0].mxu0
    %7779 = vmatprep.mubr.f32.mxu0 0.0
    %7780 = vmatmul.mubr.f32.gmra.mrb[0].mxu0 %v7668
    %v7781 = vpop.f32.mrb[0].mxu0
    %v7782 = vadd.f32 0.0, %v7781
    %v7783 = vpop.f32.mrb[0].mxu0
    %7784 = vdwg.mxu0
    %vm7785 = vcmask 15360
    %7786 = vst.msk [vmem:[%s12] sm:$0xff] %vm7785, %v7737
    %7787 = vst.msk [vmem:[%s12 + $0x8] sm:$0xff] %vm7785, %v7742
    %7788 = vst.msk [vmem:[%s12 + $0x10] sm:$0xff] %vm7785, %v7747
    %7789 = vst.msk [vmem:[%s12 + $0x18] sm:$0xff] %vm7785, %v7752
    %7790 = vst.msk [vmem:[%s12 + $0x20] sm:$0xff] %vm7785, %v7757
    %7791 = vst.msk [vmem:[%s12 + $0x28] sm:$0xff] %vm7785, %v7762
    %7792 = vst.msk [vmem:[%s12 + $0x30] sm:$0xff] %vm7785, %v7767
    %7793 = vst.msk [vmem:[%s12 + $0x38] sm:$0xff] %vm7785, %v7772
    %7794 = vst.msk [vmem:[%s12 + $0x40] sm:$0xff] %vm7785, %v7777
    %7795 = vst.msk [vmem:[%s12 + $0x48] sm:$0xff] %vm7785, %v7782
    // Predicated region
    $region54: #{gru_waypoints_predictor.1} parent=1 // pred_check
      _
    $region55: #{gru_waypoints_predictor.1} parent=1 // pred_check_branch
      %7797 = sbr.rel (0) target = $region57
    $region56: #{gru_waypoints_predictor.1} parent=1 // pred_region
      _
    $region57: #{gru_waypoints_predictor.1} parent=1 // pred_fallthru
      _
    // Predicated region
    $region58: #{gru_waypoints_predictor.1} parent=1 // pred_check
      _
    $region59: #{gru_waypoints_predictor.1} parent=1 // pred_check_branch
      %7799 = sbr.rel (0) target = $region61
    $region60: #{gru_waypoints_predictor.1} parent=1 // pred_region
      _
    $region61: #{gru_waypoints_predictor.1} parent=1 // pred_fallthru
      _
    %7800 = vsyncpa [#allocation5], 1

</llo_original>
